<compile_context>
chip_gen: v7x
topology: tpu7x:2x2x1
jax: 0.10.0
libtpu: 0.0.40
codegen_flags: <defaults>
</compile_context>

<pallas_src>
import jax
import jax.numpy as jnp
from jax.experimental import pallas as pl
from jax.experimental.pallas import tpu as pltpu

M_FEAT = 32          # m in the reference module
N_CLASSES = 20       # linear output features
C_IN = 3             # input point features (rgb)
BN_EPS = 1e-4        # scn.BatchNormReLU default eps
CHUNK = 512          # lane strip width inside a tile (multiple of 128)
MAX_TILE = 16384     # cap on the per-step tile width (lanes)
TARGET_STEPS = 8     # aim for >= 8 grid steps (>= 4 per TC on v7x)
VMEM_LIMIT = 32 * 1024 * 1024

_HIGHEST = jax.lax.Precision.HIGHEST


def _round_up(a, b):
    return (a + b - 1) // b * b


def _choose_tile(n):
    """Tile width multiple of CHUNK, sized so the grid has ~TARGET_STEPS steps."""
    tn = _round_up(max(-(-n // TARGET_STEPS), CHUNK), CHUNK)
    tn = min(tn, MAX_TILE)
    n_pad = _round_up(n, tn)
    return tn, n_pad


def _stats_kernel(x_ref, wct_ref, psum_ref, psumsq_ref):
    # x_ref   : [3, TN]   channel-major point features (zero-padded tail cols)
    # wct_ref : [M, 3]    center-tap weight, transposed
    # psum_ref / psumsq_ref : [1, M, 1] per-tile partial sums of h / h^2
    wct = wct_ref[...]
    n_chunks = x_ref.shape[1] // CHUNK

    def body(c, carry):
        s_vec, ss_vec = carry
        j = pl.multiple_of(c * CHUNK, CHUNK)
        xb = x_ref[:, pl.ds(j, CHUNK)]                              # [3, CHUNK]
        # Center tap on the MXU.  DEFAULT matmul precision is plenty for
        # batch statistics (averages over N >> 1 points).
        h = jnp.dot(wct, xb, preferred_element_type=jnp.float32)    # [M, CHUNK]
        hh = h * h
        # Fold CHUNK lanes down to one 128-lane vreg group with static,
        # vreg-aligned slices; the cross-lane reduction happens once at the
        # end of the tile (keeps XLU work off the per-chunk path and the
        # carries at 8 vregs -> no spill).
        for off in range(0, CHUNK, 128):
            s_vec = s_vec + h[:, off:off + 128]
            ss_vec = ss_vec + hh[:, off:off + 128]
        return s_vec, ss_vec

    zero = jnp.zeros((M_FEAT, 128), jnp.float32)
    s_vec, ss_vec = jax.lax.fori_loop(0, n_chunks, body, (zero, zero),
                                      unroll=True)
    psum_ref[0] = jnp.sum(s_vec, axis=1, keepdims=True)             # [M, 1]
    psumsq_ref[0] = jnp.sum(ss_vec, axis=1, keepdims=True)          # [M, 1]


def _apply_kernel(x_ref, wcs_ref, shift_ref, wlt_ref, blt_ref, out_ref):
    # x_ref    : [3, TN]   channel-major point features
    # wcs_ref  : [M, 3]    center-tap weight with the BN scale folded in
    # shift_ref: [M, 1]    folded BN shift (beta - mean*scale)
    # wlt_ref  : [20, M]   linear weight, transposed;  blt_ref: [20, 1] bias
    # out_ref  : [20, TN]  class-major logits (lane-dense, unmasked stores)
    wcs = wcs_ref[...]
    shift = shift_ref[...]
    wlt = wlt_ref[...]
    blt = blt_ref[...]
    n_chunks = x_ref.shape[1] // CHUNK

    def body(c, carry):
        j = pl.multiple_of(c * CHUNK, CHUNK)
        xb = x_ref[:, pl.ds(j, CHUNK)]                              # [3, CHUNK]
        h = jnp.dot(wcs, xb, preferred_element_type=jnp.float32,
                    precision=_HIGHEST)                             # [M, CHUNK]
        h = jnp.maximum(h + shift, 0.0)                             # BN + ReLU
        y = jnp.dot(wlt, h, preferred_element_type=jnp.float32,
                    precision=_HIGHEST) + blt                       # [20, CHUNK]
        out_ref[:, pl.ds(j, CHUNK)] = y
        return carry

    jax.lax.fori_loop(0, n_chunks, body, 0, unroll=True)


def model_forward(x, wc, gamma, beta, wl, bl):
    """x: [N, 3] float32 point features -> [N, 20] float32 logits."""
    n = x.shape[0]
    tn, n_pad = _choose_tile(n)
    nt = n_pad // tn

    # Channel-major, lane-dense layout [3, n_pad]; zero-pad the tail columns
    # (they contribute exactly 0 to the BN sums and are sliced off at the end).
    x_t = x.T
    x_cm = x_t if n_pad == n else jnp.pad(x_t, ((0, 0), (0, n_pad - n)))
    wct = wc.T                                                      # [M, 3]

    x_spec = pl.BlockSpec((C_IN, tn), lambda i: (0, i))
    wct_spec = pl.BlockSpec((M_FEAT, C_IN), lambda i: (0, 0))
    col_m_spec = pl.BlockSpec((M_FEAT, 1), lambda i: (0, 0))
    wlt_spec = pl.BlockSpec((N_CLASSES, M_FEAT), lambda i: (0, 0))
    col_c_spec = pl.BlockSpec((N_CLASSES, 1), lambda i: (0, 0))
    out_spec = pl.BlockSpec((N_CLASSES, tn), lambda i: (0, i))
    stat_spec = pl.BlockSpec((1, M_FEAT, 1), lambda i: (i, 0, 0))

    # ---- phase 1: per-tile partial sums for BatchNorm statistics ----
    stats_cost = pl.CostEstimate(
        flops=n_pad * (2 * C_IN * M_FEAT + 3 * M_FEAT),
        transcendentals=0,
        bytes_accessed=(n_pad * C_IN + M_FEAT * C_IN + 2 * nt * M_FEAT) * 4,
    )
    psum, psumsq = pl.pallas_call(
        _stats_kernel,
        out_shape=(jax.ShapeDtypeStruct((nt, M_FEAT, 1), jnp.float32),
                   jax.ShapeDtypeStruct((nt, M_FEAT, 1), jnp.float32)),
        grid=(nt,),
        in_specs=[x_spec, wct_spec],
        out_specs=(stat_spec, stat_spec),
        compiler_params=pltpu.CompilerParams(
            dimension_semantics=("parallel",),
            vmem_limit_bytes=VMEM_LIMIT),
        cost_estimate=stats_cost,
    )(x_cm, wct)

    # ---- fold BN into per-channel scale / shift (tiny [M] math in JAX) ----
    # Padded columns contribute 0 to the sums; divide by the REAL point count.
    inv_n = 1.0 / float(n)
    h_sum = jnp.sum(psum[:, :, 0], axis=0)                          # [M]
    h_sumsq = jnp.sum(psumsq[:, :, 0], axis=0)                      # [M]
    mean = h_sum * inv_n
    # NOTE: one-pass moments (E[h^2] - mean^2) can cancel in f32 when
    # |mean| >> std; an exact fix needs a second, centered pass over x.
    # TODO(synk): centered / Welford-merged variance if input features are
    # far from zero-mean.
    var = jnp.maximum(h_sumsq * inv_n - mean * mean, 0.0)
    scale = gamma.reshape(-1) * jax.lax.rsqrt(var + BN_EPS)
    shift = beta.reshape(-1) - mean * scale

    wcs_t = (wc * scale[None, :]).T                                 # [M, 3]
    shift_col = shift[:, None]                                      # [M, 1]
    wlt = wl.T                                                      # [20, M]
    blt = bl.reshape(N_CLASSES, 1)                                  # [20, 1]

    # ---- phase 2: recompute h (MXU), +shift, ReLU, Linear (MXU) ----
    apply_cost = pl.CostEstimate(
        flops=n_pad * (2 * C_IN * M_FEAT + 2 * M_FEAT * N_CLASSES
                       + 2 * M_FEAT + N_CLASSES),
        transcendentals=0,
        bytes_accessed=n_pad * (C_IN + N_CLASSES) * 4
        + (M_FEAT * C_IN + M_FEAT + N_CLASSES * M_FEAT + N_CLASSES) * 4,
    )
    out_cm = pl.pallas_call(
        _apply_kernel,
        out_shape=jax.ShapeDtypeStruct((N_CLASSES, n_pad), jnp.float32),
        grid=(nt,),
        in_specs=[x_spec, wct_spec, col_m_spec, wlt_spec, col_c_spec],
        out_specs=out_spec,
        compiler_params=pltpu.CompilerParams(
            dimension_semantics=("parallel",),
            vmem_limit_bytes=VMEM_LIMIT),
        cost_estimate=apply_cost,
    )(x_cm, wcs_t, shift_col, wlt, blt)

    # Class-major -> point-major (layout plumbing, like scn.OutputLayer).
    return out_cm[:, :n].T


def init_params(key):
    k1, k2, k3 = jax.random.split(key, 3)
    # SubmanifoldConvolution weight (center tap), no bias.
    wc = jax.random.normal(k1, (C_IN, M_FEAT), jnp.float32) * (1.0 / jnp.sqrt(C_IN))
    # BatchNormReLU affine params.
    gamma = jnp.ones((1, M_FEAT), jnp.float32)
    beta = jnp.zeros((1, M_FEAT), jnp.float32)
    # nn.Linear(m, 20): weight stored as [in, out], bias [1, out].
    wl = jax.random.normal(k2, (M_FEAT, N_CLASSES), jnp.float32) * (1.0 / jnp.sqrt(M_FEAT))
    bl = jax.random.normal(k3, (1, N_CLASSES), jnp.float32) * 0.01
    return wc, gamma, beta, wl, bl


def _reference(x, wc, gamma, beta, wl, bl):
    hp = jax.lax.Precision.HIGHEST
    h = jnp.dot(x, wc, precision=hp)
    mean = jnp.mean(h, axis=0, keepdims=True)
    var = jnp.mean((h - mean) ** 2, axis=0, keepdims=True)
    h = (h - mean) * jax.lax.rsqrt(var + BN_EPS) * gamma + beta
    h = jnp.maximum(h, 0.0)
    return jnp.dot(h, wl, precision=hp) + bl


if __name__ == "__main__":
    key = jax.random.PRNGKey(0)
    kx, kp = jax.random.split(key)

    # Synthetic "sparse point cloud": not a tile multiple -> exercises padding
    # and the multi-tile grid (10000 -> 7 tiles of 1536, padded to 10752).
    N_POINTS = 10000
    x = jax.random.normal(kx, (N_POINTS, C_IN), jnp.float32)

    params = init_params(kp)

    fwd = jax.jit(model_forward)
    out = jax.block_until_ready(fwd(x, *params))

    assert out.shape == (N_POINTS, N_CLASSES)
    assert bool(jnp.all(jnp.isfinite(out)))

    ref = _reference(x, *params)
    max_err = float(jnp.max(jnp.abs(out - ref)))
    assert max_err < 3e-2, f"mismatch vs reference: max abs err {max_err}"

    print("KERNEL_OK")
</pallas_src>

<mosaic_0001>
module attributes {stable_mosaic.version = 11 : i64} {
  func.func @_stats_kernel(%arg0: i32, %arg1: memref<3x1536xf32, #tpu.memory_space<vmem>>, %arg2: memref<32x3xf32, #tpu.memory_space<vmem>>, %arg3: memref<1x32x1xf32, #tpu.memory_space<vmem>>, %arg4: memref<1x32x1xf32, #tpu.memory_space<vmem>>) attributes {dimension_semantics = [#tpu.dimension_semantics<parallel>], iteration_bounds = array<i64: 7>, scalar_prefetch = 0 : i64, scratch_operands = 0 : i64, tpu.core_type = #tpu.core_type<tc>, window_params = [{transform_indices = @transform_0, window_bounds = array<i64: 3, 1536>}, {pipeline_mode = #tpu.pipeline_mode<synchronous>, transform_indices = @transform_1, window_bounds = array<i64: 32, 3>}, {transform_indices = @transform_2, window_bounds = array<i64: 1, 32, 1>}, {transform_indices = @transform_3, window_bounds = array<i64: 1, 32, 1>}]} {
    %c0 = arith.constant 0 : index
    %c0_0 = arith.constant 0 : index
    %0 = vector.load %arg2[%c0, %c0_0] : memref<32x3xf32, #tpu.memory_space<vmem>>, vector<32x3xf32>
    %cst = arith.constant 0.000000e+00 : f32
    %1 = vector.broadcast %cst : f32 to vector<32x128xf32>
    %c0_i32 = arith.constant 0 : i32
    %c512_i32 = arith.constant 512 : i32
    %2 = arith.muli %c0_i32, %c512_i32 : i32
    %3 = tpu.assume_multiple %2, 512 : i32
    %c0_1 = arith.constant 0 : index
    %4 = arith.index_cast %3 : i32 to index
    %5 = vector.load %arg1[%c0_1, %4] : memref<3x1536xf32, #tpu.memory_space<vmem>>, vector<3x512xf32>
    %cst_2 = arith.constant dense<0.000000e+00> : vector<32x512xf32>
    %6 = tpu.matmul %0, %5, %cst_2 {dimension_numbers = #tpu.dot_dimension_numbers<[1], [0], [0], [1], [0, 0, 1, 1], [], []>} : vector<32x3xf32>, vector<3x512xf32>, vector<32x512xf32> -> vector<32x512xf32>
    %7 = arith.mulf %6, %6 : vector<32x512xf32>
    %8 = vector.extract_strided_slice %6 {offsets = [0, 0], sizes = [32, 128], strides = [1, 1]} : vector<32x512xf32> to vector<32x128xf32>
    %9 = arith.addf %1, %8 : vector<32x128xf32>
    %10 = vector.extract_strided_slice %7 {offsets = [0, 0], sizes = [32, 128], strides = [1, 1]} : vector<32x512xf32> to vector<32x128xf32>
    %11 = arith.addf %1, %10 : vector<32x128xf32>
    %12 = vector.extract_strided_slice %6 {offsets = [0, 128], sizes = [32, 128], strides = [1, 1]} : vector<32x512xf32> to vector<32x128xf32>
    %13 = arith.addf %9, %12 : vector<32x128xf32>
    %14 = vector.extract_strided_slice %7 {offsets = [0, 128], sizes = [32, 128], strides = [1, 1]} : vector<32x512xf32> to vector<32x128xf32>
    %15 = arith.addf %11, %14 : vector<32x128xf32>
    %16 = vector.extract_strided_slice %6 {offsets = [0, 256], sizes = [32, 128], strides = [1, 1]} : vector<32x512xf32> to vector<32x128xf32>
    %17 = arith.addf %13, %16 : vector<32x128xf32>
    %18 = vector.extract_strided_slice %7 {offsets = [0, 256], sizes = [32, 128], strides = [1, 1]} : vector<32x512xf32> to vector<32x128xf32>
    %19 = arith.addf %15, %18 : vector<32x128xf32>
    %20 = vector.extract_strided_slice %6 {offsets = [0, 384], sizes = [32, 128], strides = [1, 1]} : vector<32x512xf32> to vector<32x128xf32>
    %21 = arith.addf %17, %20 : vector<32x128xf32>
    %22 = vector.extract_strided_slice %7 {offsets = [0, 384], sizes = [32, 128], strides = [1, 1]} : vector<32x512xf32> to vector<32x128xf32>
    %23 = arith.addf %19, %22 : vector<32x128xf32>
    %c1_i32 = arith.constant 1 : i32
    %c512_i32_3 = arith.constant 512 : i32
    %24 = arith.muli %c1_i32, %c512_i32_3 : i32
    %25 = tpu.assume_multiple %24, 512 : i32
    %c0_4 = arith.constant 0 : index
    %26 = arith.index_cast %25 : i32 to index
    %27 = vector.load %arg1[%c0_4, %26] : memref<3x1536xf32, #tpu.memory_space<vmem>>, vector<3x512xf32>
    %cst_5 = arith.constant dense<0.000000e+00> : vector<32x512xf32>
    %28 = tpu.matmul %0, %27, %cst_5 {dimension_numbers = #tpu.dot_dimension_numbers<[1], [0], [0], [1], [0, 0, 1, 1], [], []>} : vector<32x3xf32>, vector<3x512xf32>, vector<32x512xf32> -> vector<32x512xf32>
    %29 = arith.mulf %28, %28 : vector<32x512xf32>
    %30 = vector.extract_strided_slice %28 {offsets = [0, 0], sizes = [32, 128], strides = [1, 1]} : vector<32x512xf32> to vector<32x128xf32>
    %31 = arith.addf %21, %30 : vector<32x128xf32>
    %32 = vector.extract_strided_slice %29 {offsets = [0, 0], sizes = [32, 128], strides = [1, 1]} : vector<32x512xf32> to vector<32x128xf32>
    %33 = arith.addf %23, %32 : vector<32x128xf32>
    %34 = vector.extract_strided_slice %28 {offsets = [0, 128], sizes = [32, 128], strides = [1, 1]} : vector<32x512xf32> to vector<32x128xf32>
    %35 = arith.addf %31, %34 : vector<32x128xf32>
    %36 = vector.extract_strided_slice %29 {offsets = [0, 128], sizes = [32, 128], strides = [1, 1]} : vector<32x512xf32> to vector<32x128xf32>
    %37 = arith.addf %33, %36 : vector<32x128xf32>
    %38 = vector.extract_strided_slice %28 {offsets = [0, 256], sizes = [32, 128], strides = [1, 1]} : vector<32x512xf32> to vector<32x128xf32>
    %39 = arith.addf %35, %38 : vector<32x128xf32>
    %40 = vector.extract_strided_slice %29 {offsets = [0, 256], sizes = [32, 128], strides = [1, 1]} : vector<32x512xf32> to vector<32x128xf32>
    %41 = arith.addf %37, %40 : vector<32x128xf32>
    %42 = vector.extract_strided_slice %28 {offsets = [0, 384], sizes = [32, 128], strides = [1, 1]} : vector<32x512xf32> to vector<32x128xf32>
    %43 = arith.addf %39, %42 : vector<32x128xf32>
    %44 = vector.extract_strided_slice %29 {offsets = [0, 384], sizes = [32, 128], strides = [1, 1]} : vector<32x512xf32> to vector<32x128xf32>
    %45 = arith.addf %41, %44 : vector<32x128xf32>
    %c2_i32 = arith.constant 2 : i32
    %c512_i32_6 = arith.constant 512 : i32
    %46 = arith.muli %c2_i32, %c512_i32_6 : i32
    %47 = tpu.assume_multiple %46, 512 : i32
    %c0_7 = arith.constant 0 : index
    %48 = arith.index_cast %47 : i32 to index
    %49 = vector.load %arg1[%c0_7, %48] : memref<3x1536xf32, #tpu.memory_space<vmem>>, vector<3x512xf32>
    %cst_8 = arith.constant dense<0.000000e+00> : vector<32x512xf32>
    %50 = tpu.matmul %0, %49, %cst_8 {dimension_numbers = #tpu.dot_dimension_numbers<[1], [0], [0], [1], [0, 0, 1, 1], [], []>} : vector<32x3xf32>, vector<3x512xf32>, vector<32x512xf32> -> vector<32x512xf32>
    %51 = arith.mulf %50, %50 : vector<32x512xf32>
    %52 = vector.extract_strided_slice %50 {offsets = [0, 0], sizes = [32, 128], strides = [1, 1]} : vector<32x512xf32> to vector<32x128xf32>
    %53 = arith.addf %43, %52 : vector<32x128xf32>
    %54 = vector.extract_strided_slice %51 {offsets = [0, 0], sizes = [32, 128], strides = [1, 1]} : vector<32x512xf32> to vector<32x128xf32>
    %55 = arith.addf %45, %54 : vector<32x128xf32>
    %56 = vector.extract_strided_slice %50 {offsets = [0, 128], sizes = [32, 128], strides = [1, 1]} : vector<32x512xf32> to vector<32x128xf32>
    %57 = arith.addf %53, %56 : vector<32x128xf32>
    %58 = vector.extract_strided_slice %51 {offsets = [0, 128], sizes = [32, 128], strides = [1, 1]} : vector<32x512xf32> to vector<32x128xf32>
    %59 = arith.addf %55, %58 : vector<32x128xf32>
    %60 = vector.extract_strided_slice %50 {offsets = [0, 256], sizes = [32, 128], strides = [1, 1]} : vector<32x512xf32> to vector<32x128xf32>
    %61 = arith.addf %57, %60 : vector<32x128xf32>
    %62 = vector.extract_strided_slice %51 {offsets = [0, 256], sizes = [32, 128], strides = [1, 1]} : vector<32x512xf32> to vector<32x128xf32>
    %63 = arith.addf %59, %62 : vector<32x128xf32>
    %64 = vector.extract_strided_slice %50 {offsets = [0, 384], sizes = [32, 128], strides = [1, 1]} : vector<32x512xf32> to vector<32x128xf32>
    %65 = arith.addf %61, %64 : vector<32x128xf32>
    %66 = vector.extract_strided_slice %51 {offsets = [0, 384], sizes = [32, 128], strides = [1, 1]} : vector<32x512xf32> to vector<32x128xf32>
    %67 = arith.addf %63, %66 : vector<32x128xf32>
    %c3_i32 = arith.constant 3 : i32
    %cst_9 = arith.constant dense<0.000000e+00> : vector<32xf32>
    %68 = vector.multi_reduction <add>, %65, %cst_9 [1] : vector<32x128xf32> to vector<32xf32>
    %69 = vector.shape_cast %68 : vector<32xf32> to vector<32x1xf32>
    %c0_10 = arith.constant 0 : index
    %c0_11 = arith.constant 0 : index
    %c0_12 = arith.constant 0 : index
    %70 = vector.load %arg3[%c0_10, %c0_11, %c0_12] : memref<1x32x1xf32, #tpu.memory_space<vmem>>, vector<1x32x1xf32>
    %71 = vector.shape_cast %70 : vector<1x32x1xf32> to vector<32x1xf32>
    %72 = vector.shape_cast %69 : vector<32x1xf32> to vector<1x32x1xf32>
    tpu.vector_store %arg3[%c0_10, %c0_11, %c0_12], %72 {strides = array<i32>} : memref<1x32x1xf32, #tpu.memory_space<vmem>>, vector<1x32x1xf32>,
    %cst_13 = arith.constant dense<0.000000e+00> : vector<32xf32>
    %73 = vector.multi_reduction <add>, %67, %cst_13 [1] : vector<32x128xf32> to vector<32xf32>
    %74 = vector.shape_cast %73 : vector<32xf32> to vector<32x1xf32>
    %c0_14 = arith.constant 0 : index
    %c0_15 = arith.constant 0 : index
    %c0_16 = arith.constant 0 : index
    %75 = vector.load %arg4[%c0_14, %c0_15, %c0_16] : memref<1x32x1xf32, #tpu.memory_space<vmem>>, vector<1x32x1xf32>
    %76 = vector.shape_cast %75 : vector<1x32x1xf32> to vector<32x1xf32>
    %77 = vector.shape_cast %74 : vector<32x1xf32> to vector<1x32x1xf32>
    tpu.vector_store %arg4[%c0_14, %c0_15, %c0_16], %77 {strides = array<i32>} : memref<1x32x1xf32, #tpu.memory_space<vmem>>, vector<1x32x1xf32>,
    return
  }
  func.func @transform_0(%arg0: i32) -> (i32, i32) {
    %c0_i32 = arith.constant 0 : i32
    %c0_i32_0 = arith.constant 0 : i32
    return %c0_i32, %arg0 : i32, i32
  }
  func.func @transform_1(%arg0: i32) -> (i32, i32) {
    %c0_i32 = arith.constant 0 : i32
    %c0_i32_0 = arith.constant 0 : i32
    %c0_i32_1 = arith.constant 0 : i32
    return %c0_i32, %c0_i32_0 : i32, i32
  }
  func.func @transform_2(%arg0: i32) -> (i32, i32, i32) {
    %c0_i32 = arith.constant 0 : i32
    %c0_i32_0 = arith.constant 0 : i32
    %c0_i32_1 = arith.constant 0 : i32
    return %arg0, %c0_i32, %c0_i32_0 : i32, i32, i32
  }
  func.func @transform_3(%arg0: i32) -> (i32, i32, i32) {
    %c0_i32 = arith.constant 0 : i32
    %c0_i32_0 = arith.constant 0 : i32
    %c0_i32_1 = arith.constant 0 : i32
    return %arg0, %c0_i32, %c0_i32_0 : i32, i32, i32
  }
}

module attributes {stable_mosaic.version = 11 : i64} {
  func.func @_apply_kernel(%arg0: i32, %arg1: memref<3x1536xf32, #tpu.memory_space<vmem>>, %arg2: memref<32x3xf32, #tpu.memory_space<vmem>>, %arg3: memref<32x1xf32, #tpu.memory_space<vmem>>, %arg4: memref<20x32xf32, #tpu.memory_space<vmem>>, %arg5: memref<20x1xf32, #tpu.memory_space<vmem>>, %arg6: memref<20x1536xf32, #tpu.memory_space<vmem>>) attributes {dimension_semantics = [#tpu.dimension_semantics<parallel>], iteration_bounds = array<i64: 7>, scalar_prefetch = 0 : i64, scratch_operands = 0 : i64, tpu.core_type = #tpu.core_type<tc>, window_params = [{transform_indices = @transform_0, window_bounds = array<i64: 3, 1536>}, {pipeline_mode = #tpu.pipeline_mode<synchronous>, transform_indices = @transform_1, window_bounds = array<i64: 32, 3>}, {pipeline_mode = #tpu.pipeline_mode<synchronous>, transform_indices = @transform_2, window_bounds = array<i64: 32, 1>}, {pipeline_mode = #tpu.pipeline_mode<synchronous>, transform_indices = @transform_3, window_bounds = array<i64: 20, 32>}, {pipeline_mode = #tpu.pipeline_mode<synchronous>, transform_indices = @transform_4, window_bounds = array<i64: 20, 1>}, {transform_indices = @transform_5, window_bounds = array<i64: 20, 1536>}]} {
    %c0 = arith.constant 0 : index
    %c0_0 = arith.constant 0 : index
    %0 = vector.load %arg2[%c0, %c0_0] : memref<32x3xf32, #tpu.memory_space<vmem>>, vector<32x3xf32>
    %c0_1 = arith.constant 0 : index
    %c0_2 = arith.constant 0 : index
    %1 = vector.load %arg3[%c0_1, %c0_2] : memref<32x1xf32, #tpu.memory_space<vmem>>, vector<32x1xf32>
    %c0_3 = arith.constant 0 : index
    %c0_4 = arith.constant 0 : index
    %2 = vector.load %arg4[%c0_3, %c0_4] : memref<20x32xf32, #tpu.memory_space<vmem>>, vector<20x32xf32>
    %c0_5 = arith.constant 0 : index
    %c0_6 = arith.constant 0 : index
    %3 = vector.load %arg5[%c0_5, %c0_6] : memref<20x1xf32, #tpu.memory_space<vmem>>, vector<20x1xf32>
    %c0_i32 = arith.constant 0 : i32
    %c512_i32 = arith.constant 512 : i32
    %4 = arith.muli %c0_i32, %c512_i32 : i32
    %5 = tpu.assume_multiple %4, 512 : i32
    %c0_7 = arith.constant 0 : index
    %6 = arith.index_cast %5 : i32 to index
    %7 = vector.load %arg1[%c0_7, %6] : memref<3x1536xf32, #tpu.memory_space<vmem>>, vector<3x512xf32>
    %cst = arith.constant dense<0.000000e+00> : vector<32x512xf32>
    %8 = tpu.matmul %0, %7, %cst {dimension_numbers = #tpu.dot_dimension_numbers<[1], [0], [0], [1], [0, 0, 1, 1], [], []>, precision = #tpu.contract_precision<fp32>} : vector<32x3xf32>, vector<3x512xf32>, vector<32x512xf32> -> vector<32x512xf32>
    %9 = vector.broadcast %1 : vector<32x1xf32> to vector<32x512xf32>
    %10 = arith.addf %8, %9 : vector<32x512xf32>
    %cst_8 = arith.constant 0.000000e+00 : f32
    %11 = vector.broadcast %cst_8 : f32 to vector<32x512xf32>
    %12 = arith.maximumf %10, %11 : vector<32x512xf32>
    %cst_9 = arith.constant dense<0.000000e+00> : vector<20x512xf32>
    %13 = tpu.matmul %2, %12, %cst_9 {dimension_numbers = #tpu.dot_dimension_numbers<[1], [0], [0], [1], [0, 0, 1, 1], [], []>, precision = #tpu.contract_precision<fp32>} : vector<20x32xf32>, vector<32x512xf32>, vector<20x512xf32> -> vector<20x512xf32>
    %14 = vector.broadcast %3 : vector<20x1xf32> to vector<20x512xf32>
    %15 = arith.addf %13, %14 : vector<20x512xf32>
    %c0_10 = arith.constant 0 : index
    %16 = arith.index_cast %5 : i32 to index
    %17 = vector.load %arg6[%c0_10, %16] : memref<20x1536xf32, #tpu.memory_space<vmem>>, vector<20x512xf32>
    tpu.vector_store %arg6[%c0_10, %16], %15 {strides = array<i32>} : memref<20x1536xf32, #tpu.memory_space<vmem>>, vector<20x512xf32>,
    %c1_i32 = arith.constant 1 : i32
    %c512_i32_11 = arith.constant 512 : i32
    %18 = arith.muli %c1_i32, %c512_i32_11 : i32
    %19 = tpu.assume_multiple %18, 512 : i32
    %c0_12 = arith.constant 0 : index
    %20 = arith.index_cast %19 : i32 to index
    %21 = vector.load %arg1[%c0_12, %20] : memref<3x1536xf32, #tpu.memory_space<vmem>>, vector<3x512xf32>
    %cst_13 = arith.constant dense<0.000000e+00> : vector<32x512xf32>
    %22 = tpu.matmul %0, %21, %cst_13 {dimension_numbers = #tpu.dot_dimension_numbers<[1], [0], [0], [1], [0, 0, 1, 1], [], []>, precision = #tpu.contract_precision<fp32>} : vector<32x3xf32>, vector<3x512xf32>, vector<32x512xf32> -> vector<32x512xf32>
    %23 = vector.broadcast %1 : vector<32x1xf32> to vector<32x512xf32>
    %24 = arith.addf %22, %23 : vector<32x512xf32>
    %cst_14 = arith.constant 0.000000e+00 : f32
    %25 = vector.broadcast %cst_14 : f32 to vector<32x512xf32>
    %26 = arith.maximumf %24, %25 : vector<32x512xf32>
    %cst_15 = arith.constant dense<0.000000e+00> : vector<20x512xf32>
    %27 = tpu.matmul %2, %26, %cst_15 {dimension_numbers = #tpu.dot_dimension_numbers<[1], [0], [0], [1], [0, 0, 1, 1], [], []>, precision = #tpu.contract_precision<fp32>} : vector<20x32xf32>, vector<32x512xf32>, vector<20x512xf32> -> vector<20x512xf32>
    %28 = vector.broadcast %3 : vector<20x1xf32> to vector<20x512xf32>
    %29 = arith.addf %27, %28 : vector<20x512xf32>
    %c0_16 = arith.constant 0 : index
    %30 = arith.index_cast %19 : i32 to index
    %31 = vector.load %arg6[%c0_16, %30] : memref<20x1536xf32, #tpu.memory_space<vmem>>, vector<20x512xf32>
    tpu.vector_store %arg6[%c0_16, %30], %29 {strides = array<i32>} : memref<20x1536xf32, #tpu.memory_space<vmem>>, vector<20x512xf32>,
    %c2_i32 = arith.constant 2 : i32
    %c512_i32_17 = arith.constant 512 : i32
    %32 = arith.muli %c2_i32, %c512_i32_17 : i32
    %33 = tpu.assume_multiple %32, 512 : i32
    %c0_18 = arith.constant 0 : index
    %34 = arith.index_cast %33 : i32 to index
    %35 = vector.load %arg1[%c0_18, %34] : memref<3x1536xf32, #tpu.memory_space<vmem>>, vector<3x512xf32>
    %cst_19 = arith.constant dense<0.000000e+00> : vector<32x512xf32>
    %36 = tpu.matmul %0, %35, %cst_19 {dimension_numbers = #tpu.dot_dimension_numbers<[1], [0], [0], [1], [0, 0, 1, 1], [], []>, precision = #tpu.contract_precision<fp32>} : vector<32x3xf32>, vector<3x512xf32>, vector<32x512xf32> -> vector<32x512xf32>
    %37 = vector.broadcast %1 : vector<32x1xf32> to vector<32x512xf32>
    %38 = arith.addf %36, %37 : vector<32x512xf32>
    %cst_20 = arith.constant 0.000000e+00 : f32
    %39 = vector.broadcast %cst_20 : f32 to vector<32x512xf32>
    %40 = arith.maximumf %38, %39 : vector<32x512xf32>
    %cst_21 = arith.constant dense<0.000000e+00> : vector<20x512xf32>
    %41 = tpu.matmul %2, %40, %cst_21 {dimension_numbers = #tpu.dot_dimension_numbers<[1], [0], [0], [1], [0, 0, 1, 1], [], []>, precision = #tpu.contract_precision<fp32>} : vector<20x32xf32>, vector<32x512xf32>, vector<20x512xf32> -> vector<20x512xf32>
    %42 = vector.broadcast %3 : vector<20x1xf32> to vector<20x512xf32>
    %43 = arith.addf %41, %42 : vector<20x512xf32>
    %c0_22 = arith.constant 0 : index
    %44 = arith.index_cast %33 : i32 to index
    %45 = vector.load %arg6[%c0_22, %44] : memref<20x1536xf32, #tpu.memory_space<vmem>>, vector<20x512xf32>
    tpu.vector_store %arg6[%c0_22, %44], %43 {strides = array<i32>} : memref<20x1536xf32, #tpu.memory_space<vmem>>, vector<20x512xf32>,
    %c3_i32 = arith.constant 3 : i32
    return
  }
  func.func @transform_0(%arg0: i32) -> (i32, i32) {
    %c0_i32 = arith.constant 0 : i32
    %c0_i32_0 = arith.constant 0 : i32
    return %c0_i32, %arg0 : i32, i32
  }
  func.func @transform_1(%arg0: i32) -> (i32, i32) {
    %c0_i32 = arith.constant 0 : i32
    %c0_i32_0 = arith.constant 0 : i32
    %c0_i32_1 = arith.constant 0 : i32
    return %c0_i32, %c0_i32_0 : i32, i32
  }
  func.func @transform_2(%arg0: i32) -> (i32, i32) {
    %c0_i32 = arith.constant 0 : i32
    %c0_i32_0 = arith.constant 0 : i32
    %c0_i32_1 = arith.constant 0 : i32
    return %c0_i32, %c0_i32_0 : i32, i32
  }
  func.func @transform_3(%arg0: i32) -> (i32, i32) {
    %c0_i32 = arith.constant 0 : i32
    %c0_i32_0 = arith.constant 0 : i32
    %c0_i32_1 = arith.constant 0 : i32
    return %c0_i32, %c0_i32_0 : i32, i32
  }
  func.func @transform_4(%arg0: i32) -> (i32, i32) {
    %c0_i32 = arith.constant 0 : i32
    %c0_i32_0 = arith.constant 0 : i32
    %c0_i32_1 = arith.constant 0 : i32
    return %c0_i32, %c0_i32_0 : i32, i32
  }
  func.func @transform_5(%arg0: i32) -> (i32, i32) {
    %c0_i32 = arith.constant 0 : i32
    %c0_i32_0 = arith.constant 0 : i32
    return %c0_i32, %arg0 : i32, i32
  }
}

</mosaic_0001>

<llo_original>
// kernel: model_forward.2
$region0: #{model_forward.2}
  #allocation0 [shape = 'u32[]', space=smem, size = 0x4, offset = 0x4, fixed_abs, tag = 'smem constant byte address 0x4 - core index']
  #allocation1 [shape = 'u32[144,128]{1,0:T(1,128)}', space=vmem, size = 0x12000, scoped, tag = 'internal scratch']
  %s0 = inlined_call_operand.vmem [shape: f32[3,10752], index: 0, kind: input, shape index: {}]
  %s1 = inlined_call_operand.vmem [shape: f32[32,3], index: 1, kind: input, shape index: {}]
  %s2 = inlined_call_operand.vmem [shape: f32[7,32,1], index: 2, kind: output, shape index: {0}]
  %s3 = inlined_call_operand.vmem [shape: f32[7,32,1], index: 3, kind: output, shape index: {1}]
  %4 = xla_tuple %s2, %s3
  %s5 = sld [smem:[#allocation0]]
  $region49: #{model_forward.2} parent=0
    _
  %s7 = ssub.s32 1, %s5
  %s8 = scalar_select 0, %s7, %s5
  loop: start=0, step=1, limit=9
  $region2: #{model_forward.2} parent=0 // loop_pre_header
    _
  $region3: #{model_forward.2} parent=0 // loop_header
    %s10 = sphi 0, %s14
    %p11 = scmp.ge.s32.totalorder %s10, 9
    %s20 = sphi 0, %s22
    %s23 = sphi 0, %s20
    %s24 = sphi 0, %s23
    %s40 = sphi 0, %s24
    %s44 = sphi 0, %s44
    %s46 = sphi 0, %s44
    %s47 = sphi 0, %s46
    %s61 = sphi 0, %s47
    %s67 = sphi 0, %s69
    %s70 = sphi 0, %s67
    %s71 = sphi 0, %s70
    %s87 = sphi 0, %s71
    %s93 = sphi 0, %s95
    %s96 = sphi 0, %s93
    %s97 = sphi 0, %s96
    %s113 = sphi 0, %s97
  $region4: #{model_forward.2} parent=0 // loop_header_branch
    %13 = sbr.rel (%p11) target = $region8
  $region5: #{model_forward.2} parent=0 // loop_body
    %s15 = ssub.s32 %s10, 1
    %s16 = ssub.s32 %s10, 2
    %s17 = sadd.s32 %s10, 1
    %s18 = ssub.s32 %s10, %s17
    %p19 = scmp.eq.s32.totalorder %s18, 0
    %s21 = sadd.s32 %s20, 1
    %s22 = scalar_select %p19, %s20, %s21
    %p25 = pneg %p19
    %p26 = scmp.eq.s32.totalorder %s10, 6
    %p27 = por %p25, %p26
    %p28 = scmp.ne.s32.totalorder %s20, %s23
    %p29 = scmp.eq.s32.totalorder %s10, 0
    %p30 = por %p28, %p29
    %p31 = scmp.ne.s32.totalorder %s20, %s23
    %p32 = scmp.eq.s32.totalorder %s15, 6
    %p33 = por %p31, %p32
    %p34 = scmp.ne.s32.totalorder %s23, %s24
    %p35 = scmp.eq.s32.totalorder %s15, 0
    %p36 = por %p34, %p35
    %p37 = scmp.ne.s32.totalorder %s23, %s24
    %p38 = scmp.eq.s32.totalorder %s16, 6
    %p39 = por %p37, %p38
    %p41 = scmp.ne.s32.totalorder %s24, %s40
    %p42 = scmp.eq.s32.totalorder %s16, 0
    %p43 = por %p41, %p42
    %s45 = sadd.s32 %s44, 1
    %p48 = scmp.eq.s32.totalorder %s10, 6
    %p49 = scmp.ne.s32.totalorder %s44, %s46
    %p50 = scmp.eq.s32.totalorder %s10, 0
    %p51 = por %p49, %p50
    %p52 = scmp.ne.s32.totalorder %s44, %s46
    %p53 = scmp.eq.s32.totalorder %s15, 6
    %p54 = por %p52, %p53
    %p55 = scmp.ne.s32.totalorder %s46, %s47
    %p56 = scmp.eq.s32.totalorder %s15, 0
    %p57 = por %p55, %p56
    %p58 = scmp.ne.s32.totalorder %s46, %s47
    %p59 = scmp.eq.s32.totalorder %s16, 6
    %p60 = por %p58, %p59
    %p62 = scmp.ne.s32.totalorder %s47, %s61
    %p63 = scmp.eq.s32.totalorder %s16, 0
    %p64 = por %p62, %p63
    %s65 = ssub.s32 %s10, %s17
    %p66 = scmp.eq.s32.totalorder %s65, 0
    %s68 = sadd.s32 %s67, 1
    %s69 = scalar_select %p66, %s67, %s68
    %p72 = pneg %p66
    %p73 = scmp.eq.s32.totalorder %s10, 6
    %p74 = por %p72, %p73
    %p75 = scmp.ne.s32.totalorder %s67, %s70
    %p76 = scmp.eq.s32.totalorder %s10, 0
    %p77 = por %p75, %p76
    %p78 = scmp.ne.s32.totalorder %s67, %s70
    %p79 = scmp.eq.s32.totalorder %s15, 6
    %p80 = por %p78, %p79
    %p81 = scmp.ne.s32.totalorder %s70, %s71
    %p82 = scmp.eq.s32.totalorder %s15, 0
    %p83 = por %p81, %p82
    %p84 = scmp.ne.s32.totalorder %s70, %s71
    %p85 = scmp.eq.s32.totalorder %s16, 6
    %p86 = por %p84, %p85
    %p88 = scmp.ne.s32.totalorder %s71, %s87
    %p89 = scmp.eq.s32.totalorder %s16, 0
    %p90 = por %p88, %p89
    %s91 = ssub.s32 %s10, %s17
    %p92 = scmp.eq.s32.totalorder %s91, 0
    %s94 = sadd.s32 %s93, 1
    %s95 = scalar_select %p92, %s93, %s94
    %p98 = pneg %p92
    %p99 = scmp.eq.s32.totalorder %s10, 6
    %p100 = por %p98, %p99
    %p101 = scmp.ne.s32.totalorder %s93, %s96
    %p102 = scmp.eq.s32.totalorder %s10, 0
    %p103 = por %p101, %p102
    %p104 = scmp.ne.s32.totalorder %s93, %s96
    %p105 = scmp.eq.s32.totalorder %s15, 6
    %p106 = por %p104, %p105
    %p107 = scmp.ne.s32.totalorder %s96, %s97
    %p108 = scmp.eq.s32.totalorder %s15, 0
    %p109 = por %p107, %p108
    %p110 = scmp.ne.s32.totalorder %s96, %s97
    %p111 = scmp.eq.s32.totalorder %s16, 6
    %p112 = por %p110, %p111
    %p114 = scmp.ne.s32.totalorder %s97, %s113
    %p115 = scmp.eq.s32.totalorder %s16, 0
    %p116 = por %p114, %p115
    %p117 = scmp.le.s32.totalorder 1, %s10
    %p118 = scmp.lt.s32.totalorder %s10, 8
    %p119 = pnand %p117, %p118
    %p120 = pneg %p119
    // Predicated region
    $region9: #{model_forward.2} parent=5 // pred_check
      _
    $region10: #{model_forward.2} parent=5 // pred_check_branch
      %122 = sbr.rel (%p119) target = $region12
    $region11: #{model_forward.2} parent=5 // pred_region
      %s123 = ssub.s32 %s10, 1
      // Predicated region
      $region13: #{model_forward.2} parent=11 // pred_check
        %p124 = pneg %p57
      $region14: #{model_forward.2} parent=11 // pred_check_branch
        %126 = sbr.rel (%p124) target = $region16
      $region15: #{model_forward.2} parent=11 // pred_region
        _
      $region16: #{model_forward.2} parent=11 // pred_fallthru
        _
    $region12: #{model_forward.2} parent=5 // pred_fallthru
      _
    %p127 = scmp.lt.s32.totalorder %s10, 7
    // Predicated region
    $region17: #{model_forward.2} parent=5 // pred_check
      %p128 = pneg %p127
    $region18: #{model_forward.2} parent=5 // pred_check_branch
      %130 = sbr.rel (%p128) target = $region20
    $region19: #{model_forward.2} parent=5 // pred_region
      // Predicated region
      $region21: #{model_forward.2} parent=19 // pred_check
        %p131 = pneg %p30
      $region22: #{model_forward.2} parent=19 // pred_check_branch
        %133 = sbr.rel (%p131) target = $region24
      $region23: #{model_forward.2} parent=19 // pred_region
        %s134 = smul.u32 12, %s10
        %p135 = scmp.lt.s32.totalorder %s134, 83
        %s136 = scalar_select %p135, %s134, 83
        %s137 = smul.addr %s136, 4
        %s138 = scalar_lea.vmem %s0, %s137
        %s139 = smul.u32 12, %s10
      $region24: #{model_forward.2} parent=19 // pred_fallthru
        _
    $region20: #{model_forward.2} parent=5 // pred_fallthru
      _
    %p140 = scmp.le.s32.totalorder 1, %s10
    %p141 = scmp.lt.s32.totalorder %s10, 8
    %p142 = pnand %p140, %p141
    %p143 = pneg %p142
    // Predicated region
    $region25: #{model_forward.2} parent=5 // pred_check
      _
    $region26: #{model_forward.2} parent=5 // pred_check_branch
      %145 = sbr.rel (%p142) target = $region28
    $region27: #{model_forward.2} parent=5 // pred_region
      %s146 = ssub.s32 %s10, 1
      %s147 = smul.u32 12, %s15
      %p148 = scmp.lt.s32.totalorder %s147, 83
      %s149 = scalar_select %p148, %s147, 83
      %s150 = smul.addr %s149, 4
      %s151 = scalar_lea.vmem %s0, %s150
      %p152 = pneg %p36
      %p153 = pneg %p33
      %p154 = pneg %p57
      %p155 = pneg %p54
      %p156 = pneg %p83
      %p157 = pneg %p80
      %p158 = scmp.lt.s32.totalorder %s15, 6
      %s159 = scalar_select %p158, %s15, 6
      %s160 = smul.addr %s159, 4
      %s161 = smul.addr %s160, 8
      %s162 = scalar_lea.vmem %s2, %s161
      %p163 = pneg %p109
      %p164 = pneg %p106
      %p165 = scmp.lt.s32.totalorder %s15, 6
      %s166 = scalar_select %p165, %s15, 6
      %s167 = smul.addr %s166, 4
      %s168 = smul.addr %s167, 8
      %s169 = scalar_lea.vmem %s3, %s168
      %s170 = smul.u32 12, %s15
      %p171 = scmp.lt.s32.totalorder %s170, 83
      %s172 = scalar_select %p171, %s170, 83
      %s173 = smul.addr %s172, 4
      %s174 = scalar_lea.vmem %s0, %s173
      %s175 = smul.u32 12, %s15
      %p176 = scmp.lt.s32.totalorder %s15, 6
      %s177 = scalar_select %p176, %s15, 6
      %s178 = smul.addr %s177, 4
      %s179 = smul.addr %s178, 8
      %s180 = scalar_lea.vmem %s2, %s179
      %p181 = scmp.lt.s32.totalorder %s15, 6
      %s182 = scalar_select %p181, %s15, 6
      %s183 = smul.addr %s182, 4
      %s184 = smul.addr %s183, 8
      %s185 = scalar_lea.vmem %s3, %s184
      %v186 = vld [vmem:[%s1] sm:$0xff]
      %v187 = vld [vmem:[%s1 + $0x8] sm:$0xff]
      %v188 = vld [vmem:[%s1 + $0x10] sm:$0xff]
      %v189 = vld [vmem:[%s1 + $0x18] sm:$0xff]
      %v190 = vld [vmem:[%s174] sm:$0x77]
      %v191 = vld [vmem:[%s174 + $0x8] sm:$0x77]
      %v194 = vcombine.high %v190, %v190
      %v195 = vcombine.high %v191, %v191
      %vm196 = vcmask 23552
      %v198 = vsel %vm196, %v186, 0
      %v201 = vsel %vm196, %v187, 0
      %v204 = vsel %vm196, %v188, 0
      %v207 = vsel %vm196, %v189, 0
      %vm209 = vcmask 1042432
      %v210 = vsel %vm209, %v190, 0
      %v212 = vsel %vm209, %v194, 0
      %v214 = vsel %vm209, %v191, 0
      %v216 = vsel %vm209, %v195, 0
      %218 = vmatprep.subr.mxu0 %v212
      %219 = vmatpush1.msra.mxu0 %v210
      %220 = vmatprep.subr.mxu0 0.0
      %221 = vmatpush1.msra.mxu0 0.0
      %222 = vmatprep.subr.mxu0 0.0
      %223 = vmatpush1.msra.mxu0 0.0
      %224 = vmatprep.subr.mxu0 0.0
      %225 = vmatpush1.msra.mxu0 0.0
      %226 = vmatprep.subr.mxu0 0.0
      %227 = vmatpush1.msra.mxu0 0.0
      %228 = vmatprep.subr.mxu0 0.0
      %229 = vmatpush1.msra.mxu0 0.0
      %230 = vmatprep.subr.mxu0 0.0
      %231 = vmatpush1.msra.mxu0 0.0
      %232 = vmatprep.subr.mxu0 0.0
      %233 = vmatpush1.msra.mxu0 0.0
      %234 = vmatprep.subr.mxu0 0.0
      %235 = vmatpush1.msra.mxu0 0.0
      %236 = vmatprep.subr.mxu0 0.0
      %237 = vmatpush1.msra.mxu0 0.0
      %238 = vmatprep.subr.mxu0 0.0
      %239 = vmatpush1.msra.mxu0 0.0
      %240 = vmatprep.subr.mxu0 0.0
      %241 = vmatpush1.msra.mxu0 0.0
      %242 = vmatprep.subr.mxu0 0.0
      %243 = vmatpush1.msra.mxu0 0.0
      %244 = vmatprep.subr.mxu0 0.0
      %245 = vmatpush1.msra.mxu0 0.0
      %246 = vmatprep.subr.mxu0 0.0
      %247 = vmatpush1.msra.mxu0 0.0
      %248 = vmatprep.subr.mxu0 0.0
      %249 = vmatpush1.msra.mxu0 0.0
      %250 = vmatprep.subr.mxu0 0.0
      %251 = vmatpush1.msra.mxu0 0.0
      %252 = vmatprep.subr.mxu0 0.0
      %253 = vmatpush1.msra.mxu0 0.0
      %254 = vmatprep.subr.mxu0 0.0
      %255 = vmatpush1.msra.mxu0 0.0
      %256 = vmatprep.subr.mxu0 0.0
      %257 = vmatpush1.msra.mxu0 0.0
      %258 = vmatprep.subr.mxu0 0.0
      %259 = vmatpush1.msra.mxu0 0.0
      %260 = vmatprep.subr.mxu0 0.0
      %261 = vmatpush1.msra.mxu0 0.0
      %262 = vmatprep.subr.mxu0 0.0
      %263 = vmatpush1.msra.mxu0 0.0
      %264 = vmatprep.subr.mxu0 0.0
      %265 = vmatpush1.msra.mxu0 0.0
      %266 = vmatprep.subr.mxu0 0.0
      %267 = vmatpush1.msra.mxu0 0.0
      %268 = vmatprep.subr.mxu0 0.0
      %269 = vmatpush1.msra.mxu0 0.0
      %270 = vmatprep.subr.mxu0 0.0
      %271 = vmatpush1.msra.mxu0 0.0
      %272 = vmatprep.subr.mxu0 0.0
      %273 = vmatpush1.msra.mxu0 0.0
      %274 = vmatprep.subr.mxu0 0.0
      %275 = vmatpush1.msra.mxu0 0.0
      %276 = vmatprep.subr.mxu0 0.0
      %277 = vmatpush1.msra.mxu0 0.0
      %278 = vmatprep.subr.mxu0 0.0
      %279 = vmatpush1.msra.mxu0 0.0
      %280 = vmatprep.subr.mxu0 0.0
      %281 = vmatpush1.msra.mxu0 0.0
      %282 = vmatprep.mubr.f32.mxu0 0.0
      %283 = vmatmul.mubr.f32.gmra.mrb[0].mxu0 %v198
      %v284 = vpop.f32.mrb[0].mxu0
      %v285 = vadd.f32 0.0, %v284
      %v286 = vpop.f32.mrb[0].mxu0
      %v287 = vadd.f32 0.0, %v286
      %288 = vmatprep.mubr.f32.mxu0 0.0
      %289 = vmatmul.mubr.f32.gmra.mrb[0].mxu0 %v201
      %v290 = vpop.f32.mrb[0].mxu0
      %v291 = vadd.f32 0.0, %v290
      %v292 = vpop.f32.mrb[0].mxu0
      %v293 = vadd.f32 0.0, %v292
      %294 = vmatprep.mubr.f32.mxu0 0.0
      %295 = vmatmul.mubr.f32.gmra.mrb[0].mxu0 %v204
      %v296 = vpop.f32.mrb[0].mxu0
      %v297 = vadd.f32 0.0, %v296
      %v298 = vpop.f32.mrb[0].mxu0
      %v299 = vadd.f32 0.0, %v298
      %300 = vmatprep.mubr.f32.mxu0 0.0
      %301 = vmatmul.mubr.f32.gmra.mrb[0].mxu0 %v207
      %v302 = vpop.f32.mrb[0].mxu0
      %v303 = vadd.f32 0.0, %v302
      %v304 = vpop.f32.mrb[0].mxu0
      %v305 = vadd.f32 0.0, %v304
      %306 = vdwg.mxu0
      %307 = vmatprep.subr.mxu0 %v216
      %308 = vmatpush1.msra.mxu0 %v214
      %309 = vmatprep.subr.mxu0 0.0
      %310 = vmatpush1.msra.mxu0 0.0
      %311 = vmatprep.subr.mxu0 0.0
      %312 = vmatpush1.msra.mxu0 0.0
      %313 = vmatprep.subr.mxu0 0.0
      %314 = vmatpush1.msra.mxu0 0.0
      %315 = vmatprep.subr.mxu0 0.0
      %316 = vmatpush1.msra.mxu0 0.0
      %317 = vmatprep.subr.mxu0 0.0
      %318 = vmatpush1.msra.mxu0 0.0
      %319 = vmatprep.subr.mxu0 0.0
      %320 = vmatpush1.msra.mxu0 0.0
      %321 = vmatprep.subr.mxu0 0.0
      %322 = vmatpush1.msra.mxu0 0.0
      %323 = vmatprep.subr.mxu0 0.0
      %324 = vmatpush1.msra.mxu0 0.0
      %325 = vmatprep.subr.mxu0 0.0
      %326 = vmatpush1.msra.mxu0 0.0
      %327 = vmatprep.subr.mxu0 0.0
      %328 = vmatpush1.msra.mxu0 0.0
      %329 = vmatprep.subr.mxu0 0.0
      %330 = vmatpush1.msra.mxu0 0.0
      %331 = vmatprep.subr.mxu0 0.0
      %332 = vmatpush1.msra.mxu0 0.0
      %333 = vmatprep.subr.mxu0 0.0
      %334 = vmatpush1.msra.mxu0 0.0
      %335 = vmatprep.subr.mxu0 0.0
      %336 = vmatpush1.msra.mxu0 0.0
      %337 = vmatprep.subr.mxu0 0.0
      %338 = vmatpush1.msra.mxu0 0.0
      %339 = vmatprep.subr.mxu0 0.0
      %340 = vmatpush1.msra.mxu0 0.0
      %341 = vmatprep.subr.mxu0 0.0
      %342 = vmatpush1.msra.mxu0 0.0
      %343 = vmatprep.subr.mxu0 0.0
      %344 = vmatpush1.msra.mxu0 0.0
      %345 = vmatprep.subr.mxu0 0.0
      %346 = vmatpush1.msra.mxu0 0.0
      %347 = vmatprep.subr.mxu0 0.0
      %348 = vmatpush1.msra.mxu0 0.0
      %349 = vmatprep.subr.mxu0 0.0
      %350 = vmatpush1.msra.mxu0 0.0
      %351 = vmatprep.subr.mxu0 0.0
      %352 = vmatpush1.msra.mxu0 0.0
      %353 = vmatprep.subr.mxu0 0.0
      %354 = vmatpush1.msra.mxu0 0.0
      %355 = vmatprep.subr.mxu0 0.0
      %356 = vmatpush1.msra.mxu0 0.0
      %357 = vmatprep.subr.mxu0 0.0
      %358 = vmatpush1.msra.mxu0 0.0
      %359 = vmatprep.subr.mxu0 0.0
      %360 = vmatpush1.msra.mxu0 0.0
      %361 = vmatprep.subr.mxu0 0.0
      %362 = vmatpush1.msra.mxu0 0.0
      %363 = vmatprep.subr.mxu0 0.0
      %364 = vmatpush1.msra.mxu0 0.0
      %365 = vmatprep.subr.mxu0 0.0
      %366 = vmatpush1.msra.mxu0 0.0
      %367 = vmatprep.subr.mxu0 0.0
      %368 = vmatpush1.msra.mxu0 0.0
      %369 = vmatprep.subr.mxu0 0.0
      %370 = vmatpush1.msra.mxu0 0.0
      %371 = vmatprep.mubr.f32.mxu0 0.0
      %372 = vmatmul.mubr.f32.gmra.mrb[0].mxu0 %v198
      %v373 = vpop.f32.mrb[0].mxu0
      %v374 = vadd.f32 0.0, %v373
      %v375 = vpop.f32.mrb[0].mxu0
      %v376 = vadd.f32 0.0, %v375
      %377 = vmatprep.mubr.f32.mxu0 0.0
      %378 = vmatmul.mubr.f32.gmra.mrb[0].mxu0 %v201
      %v379 = vpop.f32.mrb[0].mxu0
      %v380 = vadd.f32 0.0, %v379
      %v381 = vpop.f32.mrb[0].mxu0
      %v382 = vadd.f32 0.0, %v381
      %383 = vmatprep.mubr.f32.mxu0 0.0
      %384 = vmatmul.mubr.f32.gmra.mrb[0].mxu0 %v204
      %v385 = vpop.f32.mrb[0].mxu0
      %v386 = vadd.f32 0.0, %v385
      %v387 = vpop.f32.mrb[0].mxu0
      %v388 = vadd.f32 0.0, %v387
      %389 = vmatprep.mubr.f32.mxu0 0.0
      %390 = vmatmul.mubr.f32.gmra.mrb[0].mxu0 %v207
      %v391 = vpop.f32.mrb[0].mxu0
      %v392 = vadd.f32 0.0, %v391
      %v393 = vpop.f32.mrb[0].mxu0
      %v394 = vadd.f32 0.0, %v393
      %395 = vdwg.mxu0
      %v396 = vmul.f32 %v285, %v285
      %v397 = vmul.f32 %v287, %v287
      %v398 = vmul.f32 %v374, %v374
      %v399 = vmul.f32 %v376, %v376
      %v400 = vmul.f32 %v291, %v291
      %v401 = vmul.f32 %v293, %v293
      %v402 = vmul.f32 %v380, %v380
      %v403 = vmul.f32 %v382, %v382
      %v404 = vmul.f32 %v297, %v297
      %v405 = vmul.f32 %v299, %v299
      %v406 = vmul.f32 %v386, %v386
      %v407 = vmul.f32 %v388, %v388
      %v408 = vmul.f32 %v303, %v303
      %v409 = vmul.f32 %v305, %v305
      %v410 = vmul.f32 %v392, %v392
      %v411 = vmul.f32 %v394, %v394
      %v412 = vadd.f32 %v285, 0.0
      %v413 = vadd.f32 %v291, 0.0
      %v414 = vadd.f32 %v297, 0.0
      %v415 = vadd.f32 %v303, 0.0
      %v416 = vadd.f32 %v396, 0.0
      %v417 = vadd.f32 %v400, 0.0
      %v418 = vadd.f32 %v404, 0.0
      %v419 = vadd.f32 %v408, 0.0
      %v420 = vadd.f32 %v412, %v287
      %v421 = vadd.f32 %v413, %v293
      %v422 = vadd.f32 %v414, %v299
      %v423 = vadd.f32 %v415, %v305
      %v424 = vadd.f32 %v416, %v397
      %v425 = vadd.f32 %v417, %v401
      %v426 = vadd.f32 %v418, %v405
      %v427 = vadd.f32 %v419, %v409
      %v428 = vadd.f32 %v420, %v374
      %v429 = vadd.f32 %v421, %v380
      %v430 = vadd.f32 %v422, %v386
      %v431 = vadd.f32 %v423, %v392
      %v432 = vadd.f32 %v424, %v398
      %v433 = vadd.f32 %v425, %v402
      %v434 = vadd.f32 %v426, %v406
      %v435 = vadd.f32 %v427, %v410
      %v436 = vadd.f32 %v428, %v376
      %v437 = vadd.f32 %v429, %v382
      %v438 = vadd.f32 %v430, %v388
      %v439 = vadd.f32 %v431, %v394
      %v440 = vadd.f32 %v432, %v399
      %v441 = vadd.f32 %v433, %v403
      %v442 = vadd.f32 %v434, %v407
      %v443 = vadd.f32 %v435, %v411
      %s444 = scalar_lea.vmem %s174, 16
      %v445 = vld [vmem:[%s444] sm:$0x77]
      %v446 = vld [vmem:[%s444 + $0x8] sm:$0x77]
      %v449 = vcombine.high %v445, %v445
      %v450 = vcombine.high %v446, %v446
      %v451 = vsel %vm209, %v445, 0
      %v453 = vsel %vm209, %v449, 0
      %v455 = vsel %vm209, %v446, 0
      %v457 = vsel %vm209, %v450, 0
      %459 = vmatprep.subr.mxu0 %v453
      %460 = vmatpush1.msra.mxu0 %v451
      %461 = vmatprep.subr.mxu0 0.0
      %462 = vmatpush1.msra.mxu0 0.0
      %463 = vmatprep.subr.mxu0 0.0
      %464 = vmatpush1.msra.mxu0 0.0
      %465 = vmatprep.subr.mxu0 0.0
      %466 = vmatpush1.msra.mxu0 0.0
      %467 = vmatprep.subr.mxu0 0.0
      %468 = vmatpush1.msra.mxu0 0.0
      %469 = vmatprep.subr.mxu0 0.0
      %470 = vmatpush1.msra.mxu0 0.0
      %471 = vmatprep.subr.mxu0 0.0
      %472 = vmatpush1.msra.mxu0 0.0
      %473 = vmatprep.subr.mxu0 0.0
      %474 = vmatpush1.msra.mxu0 0.0
      %475 = vmatprep.subr.mxu0 0.0
      %476 = vmatpush1.msra.mxu0 0.0
      %477 = vmatprep.subr.mxu0 0.0
      %478 = vmatpush1.msra.mxu0 0.0
      %479 = vmatprep.subr.mxu0 0.0
      %480 = vmatpush1.msra.mxu0 0.0
      %481 = vmatprep.subr.mxu0 0.0
      %482 = vmatpush1.msra.mxu0 0.0
      %483 = vmatprep.subr.mxu0 0.0
      %484 = vmatpush1.msra.mxu0 0.0
      %485 = vmatprep.subr.mxu0 0.0
      %486 = vmatpush1.msra.mxu0 0.0
      %487 = vmatprep.subr.mxu0 0.0
      %488 = vmatpush1.msra.mxu0 0.0
      %489 = vmatprep.subr.mxu0 0.0
      %490 = vmatpush1.msra.mxu0 0.0
      %491 = vmatprep.subr.mxu0 0.0
      %492 = vmatpush1.msra.mxu0 0.0
      %493 = vmatprep.subr.mxu0 0.0
      %494 = vmatpush1.msra.mxu0 0.0
      %495 = vmatprep.subr.mxu0 0.0
      %496 = vmatpush1.msra.mxu0 0.0
      %497 = vmatprep.subr.mxu0 0.0
      %498 = vmatpush1.msra.mxu0 0.0
      %499 = vmatprep.subr.mxu0 0.0
      %500 = vmatpush1.msra.mxu0 0.0
      %501 = vmatprep.subr.mxu0 0.0
      %502 = vmatpush1.msra.mxu0 0.0
      %503 = vmatprep.subr.mxu0 0.0
      %504 = vmatpush1.msra.mxu0 0.0
      %505 = vmatprep.subr.mxu0 0.0
      %506 = vmatpush1.msra.mxu0 0.0
      %507 = vmatprep.subr.mxu0 0.0
      %508 = vmatpush1.msra.mxu0 0.0
      %509 = vmatprep.subr.mxu0 0.0
      %510 = vmatpush1.msra.mxu0 0.0
      %511 = vmatprep.subr.mxu0 0.0
      %512 = vmatpush1.msra.mxu0 0.0
      %513 = vmatprep.subr.mxu0 0.0
      %514 = vmatpush1.msra.mxu0 0.0
      %515 = vmatprep.subr.mxu0 0.0
      %516 = vmatpush1.msra.mxu0 0.0
      %517 = vmatprep.subr.mxu0 0.0
      %518 = vmatpush1.msra.mxu0 0.0
      %519 = vmatprep.subr.mxu0 0.0
      %520 = vmatpush1.msra.mxu0 0.0
      %521 = vmatprep.subr.mxu0 0.0
      %522 = vmatpush1.msra.mxu0 0.0
      %523 = vmatprep.mubr.f32.mxu0 0.0
      %524 = vmatmul.mubr.f32.gmra.mrb[0].mxu0 %v198
      %v525 = vpop.f32.mrb[0].mxu0
      %v526 = vadd.f32 0.0, %v525
      %v527 = vpop.f32.mrb[0].mxu0
      %v528 = vadd.f32 0.0, %v527
      %529 = vmatprep.mubr.f32.mxu0 0.0
      %530 = vmatmul.mubr.f32.gmra.mrb[0].mxu0 %v201
      %v531 = vpop.f32.mrb[0].mxu0
      %v532 = vadd.f32 0.0, %v531
      %v533 = vpop.f32.mrb[0].mxu0
      %v534 = vadd.f32 0.0, %v533
      %535 = vmatprep.mubr.f32.mxu0 0.0
      %536 = vmatmul.mubr.f32.gmra.mrb[0].mxu0 %v204
      %v537 = vpop.f32.mrb[0].mxu0
      %v538 = vadd.f32 0.0, %v537
      %v539 = vpop.f32.mrb[0].mxu0
      %v540 = vadd.f32 0.0, %v539
      %541 = vmatprep.mubr.f32.mxu0 0.0
      %542 = vmatmul.mubr.f32.gmra.mrb[0].mxu0 %v207
      %v543 = vpop.f32.mrb[0].mxu0
      %v544 = vadd.f32 0.0, %v543
      %v545 = vpop.f32.mrb[0].mxu0
      %v546 = vadd.f32 0.0, %v545
      %547 = vdwg.mxu0
      %548 = vmatprep.subr.mxu0 %v457
      %549 = vmatpush1.msra.mxu0 %v455
      %550 = vmatprep.subr.mxu0 0.0
      %551 = vmatpush1.msra.mxu0 0.0
      %552 = vmatprep.subr.mxu0 0.0
      %553 = vmatpush1.msra.mxu0 0.0
      %554 = vmatprep.subr.mxu0 0.0
      %555 = vmatpush1.msra.mxu0 0.0
      %556 = vmatprep.subr.mxu0 0.0
      %557 = vmatpush1.msra.mxu0 0.0
      %558 = vmatprep.subr.mxu0 0.0
      %559 = vmatpush1.msra.mxu0 0.0
      %560 = vmatprep.subr.mxu0 0.0
      %561 = vmatpush1.msra.mxu0 0.0
      %562 = vmatprep.subr.mxu0 0.0
      %563 = vmatpush1.msra.mxu0 0.0
      %564 = vmatprep.subr.mxu0 0.0
      %565 = vmatpush1.msra.mxu0 0.0
      %566 = vmatprep.subr.mxu0 0.0
      %567 = vmatpush1.msra.mxu0 0.0
      %568 = vmatprep.subr.mxu0 0.0
      %569 = vmatpush1.msra.mxu0 0.0
      %570 = vmatprep.subr.mxu0 0.0
      %571 = vmatpush1.msra.mxu0 0.0
      %572 = vmatprep.subr.mxu0 0.0
      %573 = vmatpush1.msra.mxu0 0.0
      %574 = vmatprep.subr.mxu0 0.0
      %575 = vmatpush1.msra.mxu0 0.0
      %576 = vmatprep.subr.mxu0 0.0
      %577 = vmatpush1.msra.mxu0 0.0
      %578 = vmatprep.subr.mxu0 0.0
      %579 = vmatpush1.msra.mxu0 0.0
      %580 = vmatprep.subr.mxu0 0.0
      %581 = vmatpush1.msra.mxu0 0.0
      %582 = vmatprep.subr.mxu0 0.0
      %583 = vmatpush1.msra.mxu0 0.0
      %584 = vmatprep.subr.mxu0 0.0
      %585 = vmatpush1.msra.mxu0 0.0
      %586 = vmatprep.subr.mxu0 0.0
      %587 = vmatpush1.msra.mxu0 0.0
      %588 = vmatprep.subr.mxu0 0.0
      %589 = vmatpush1.msra.mxu0 0.0
      %590 = vmatprep.subr.mxu0 0.0
      %591 = vmatpush1.msra.mxu0 0.0
      %592 = vmatprep.subr.mxu0 0.0
      %593 = vmatpush1.msra.mxu0 0.0
      %594 = vmatprep.subr.mxu0 0.0
      %595 = vmatpush1.msra.mxu0 0.0
      %596 = vmatprep.subr.mxu0 0.0
      %597 = vmatpush1.msra.mxu0 0.0
      %598 = vmatprep.subr.mxu0 0.0
      %599 = vmatpush1.msra.mxu0 0.0
      %600 = vmatprep.subr.mxu0 0.0
      %601 = vmatpush1.msra.mxu0 0.0
      %602 = vmatprep.subr.mxu0 0.0
      %603 = vmatpush1.msra.mxu0 0.0
      %604 = vmatprep.subr.mxu0 0.0
      %605 = vmatpush1.msra.mxu0 0.0
      %606 = vmatprep.subr.mxu0 0.0
      %607 = vmatpush1.msra.mxu0 0.0
      %608 = vmatprep.subr.mxu0 0.0
      %609 = vmatpush1.msra.mxu0 0.0
      %610 = vmatprep.subr.mxu0 0.0
      %611 = vmatpush1.msra.mxu0 0.0
      %612 = vmatprep.mubr.f32.mxu0 0.0
      %613 = vmatmul.mubr.f32.gmra.mrb[0].mxu0 %v198
      %v614 = vpop.f32.mrb[0].mxu0
      %v615 = vadd.f32 0.0, %v614
      %v616 = vpop.f32.mrb[0].mxu0
      %v617 = vadd.f32 0.0, %v616
      %618 = vmatprep.mubr.f32.mxu0 0.0
      %619 = vmatmul.mubr.f32.gmra.mrb[0].mxu0 %v201
      %v620 = vpop.f32.mrb[0].mxu0
      %v621 = vadd.f32 0.0, %v620
      %v622 = vpop.f32.mrb[0].mxu0
      %v623 = vadd.f32 0.0, %v622
      %624 = vmatprep.mubr.f32.mxu0 0.0
      %625 = vmatmul.mubr.f32.gmra.mrb[0].mxu0 %v204
      %v626 = vpop.f32.mrb[0].mxu0
      %v627 = vadd.f32 0.0, %v626
      %v628 = vpop.f32.mrb[0].mxu0
      %v629 = vadd.f32 0.0, %v628
      %630 = vmatprep.mubr.f32.mxu0 0.0
      %631 = vmatmul.mubr.f32.gmra.mrb[0].mxu0 %v207
      %v632 = vpop.f32.mrb[0].mxu0
      %v633 = vadd.f32 0.0, %v632
      %v634 = vpop.f32.mrb[0].mxu0
      %v635 = vadd.f32 0.0, %v634
      %636 = vdwg.mxu0
      %v637 = vmul.f32 %v526, %v526
      %v638 = vmul.f32 %v528, %v528
      %v639 = vmul.f32 %v615, %v615
      %v640 = vmul.f32 %v617, %v617
      %v641 = vmul.f32 %v532, %v532
      %v642 = vmul.f32 %v534, %v534
      %v643 = vmul.f32 %v621, %v621
      %v644 = vmul.f32 %v623, %v623
      %v645 = vmul.f32 %v538, %v538
      %v646 = vmul.f32 %v540, %v540
      %v647 = vmul.f32 %v627, %v627
      %v648 = vmul.f32 %v629, %v629
      %v649 = vmul.f32 %v544, %v544
      %v650 = vmul.f32 %v546, %v546
      %v651 = vmul.f32 %v633, %v633
      %v652 = vmul.f32 %v635, %v635
      %v653 = vadd.f32 %v436, %v526
      %v654 = vadd.f32 %v437, %v532
      %v655 = vadd.f32 %v438, %v538
      %v656 = vadd.f32 %v439, %v544
      %v657 = vadd.f32 %v440, %v637
      %v658 = vadd.f32 %v441, %v641
      %v659 = vadd.f32 %v442, %v645
      %v660 = vadd.f32 %v443, %v649
      %v661 = vadd.f32 %v653, %v528
      %v662 = vadd.f32 %v654, %v534
      %v663 = vadd.f32 %v655, %v540
      %v664 = vadd.f32 %v656, %v546
      %v665 = vadd.f32 %v657, %v638
      %v666 = vadd.f32 %v658, %v642
      %v667 = vadd.f32 %v659, %v646
      %v668 = vadd.f32 %v660, %v650
      %v669 = vadd.f32 %v661, %v615
      %v670 = vadd.f32 %v662, %v621
      %v671 = vadd.f32 %v663, %v627
      %v672 = vadd.f32 %v664, %v633
      %v673 = vadd.f32 %v665, %v639
      %v674 = vadd.f32 %v666, %v643
      %v675 = vadd.f32 %v667, %v647
      %v676 = vadd.f32 %v668, %v651
      %v677 = vadd.f32 %v669, %v617
      %v678 = vadd.f32 %v670, %v623
      %v679 = vadd.f32 %v671, %v629
      %v680 = vadd.f32 %v672, %v635
      %v681 = vadd.f32 %v673, %v640
      %v682 = vadd.f32 %v674, %v644
      %v683 = vadd.f32 %v675, %v648
      %v684 = vadd.f32 %v676, %v652
      %s685 = scalar_lea.vmem %s174, 32
      %v686 = vld [vmem:[%s685] sm:$0x77]
      %v687 = vld [vmem:[%s685 + $0x8] sm:$0x77]
      %v690 = vcombine.high %v686, %v686
      %v691 = vcombine.high %v687, %v687
      %v692 = vsel %vm209, %v686, 0
      %v694 = vsel %vm209, %v690, 0
      %v696 = vsel %vm209, %v687, 0
      %v698 = vsel %vm209, %v691, 0
      %700 = vmatprep.subr.mxu0 %v694
      %701 = vmatpush1.msra.mxu0 %v692
      %702 = vmatprep.subr.mxu0 0.0
      %703 = vmatpush1.msra.mxu0 0.0
      %704 = vmatprep.subr.mxu0 0.0
      %705 = vmatpush1.msra.mxu0 0.0
      %706 = vmatprep.subr.mxu0 0.0
      %707 = vmatpush1.msra.mxu0 0.0
      %708 = vmatprep.subr.mxu0 0.0
      %709 = vmatpush1.msra.mxu0 0.0
      %710 = vmatprep.subr.mxu0 0.0
      %711 = vmatpush1.msra.mxu0 0.0
      %712 = vmatprep.subr.mxu0 0.0
      %713 = vmatpush1.msra.mxu0 0.0
      %714 = vmatprep.subr.mxu0 0.0
      %715 = vmatpush1.msra.mxu0 0.0
      %716 = vmatprep.subr.mxu0 0.0
      %717 = vmatpush1.msra.mxu0 0.0
      %718 = vmatprep.subr.mxu0 0.0
      %719 = vmatpush1.msra.mxu0 0.0
      %720 = vmatprep.subr.mxu0 0.0
      %721 = vmatpush1.msra.mxu0 0.0
      %722 = vmatprep.subr.mxu0 0.0
      %723 = vmatpush1.msra.mxu0 0.0
      %724 = vmatprep.subr.mxu0 0.0
      %725 = vmatpush1.msra.mxu0 0.0
      %726 = vmatprep.subr.mxu0 0.0
      %727 = vmatpush1.msra.mxu0 0.0
      %728 = vmatprep.subr.mxu0 0.0
      %729 = vmatpush1.msra.mxu0 0.0
      %730 = vmatprep.subr.mxu0 0.0
      %731 = vmatpush1.msra.mxu0 0.0
      %732 = vmatprep.subr.mxu0 0.0
      %733 = vmatpush1.msra.mxu0 0.0
      %734 = vmatprep.subr.mxu0 0.0
      %735 = vmatpush1.msra.mxu0 0.0
      %736 = vmatprep.subr.mxu0 0.0
      %737 = vmatpush1.msra.mxu0 0.0
      %738 = vmatprep.subr.mxu0 0.0
      %739 = vmatpush1.msra.mxu0 0.0
      %740 = vmatprep.subr.mxu0 0.0
      %741 = vmatpush1.msra.mxu0 0.0
      %742 = vmatprep.subr.mxu0 0.0
      %743 = vmatpush1.msra.mxu0 0.0
      %744 = vmatprep.subr.mxu0 0.0
      %745 = vmatpush1.msra.mxu0 0.0
      %746 = vmatprep.subr.mxu0 0.0
      %747 = vmatpush1.msra.mxu0 0.0
      %748 = vmatprep.subr.mxu0 0.0
      %749 = vmatpush1.msra.mxu0 0.0
      %750 = vmatprep.subr.mxu0 0.0
      %751 = vmatpush1.msra.mxu0 0.0
      %752 = vmatprep.subr.mxu0 0.0
      %753 = vmatpush1.msra.mxu0 0.0
      %754 = vmatprep.subr.mxu0 0.0
      %755 = vmatpush1.msra.mxu0 0.0
      %756 = vmatprep.subr.mxu0 0.0
      %757 = vmatpush1.msra.mxu0 0.0
      %758 = vmatprep.subr.mxu0 0.0
      %759 = vmatpush1.msra.mxu0 0.0
      %760 = vmatprep.subr.mxu0 0.0
      %761 = vmatpush1.msra.mxu0 0.0
      %762 = vmatprep.subr.mxu0 0.0
      %763 = vmatpush1.msra.mxu0 0.0
      %764 = vmatprep.mubr.f32.mxu0 0.0
      %765 = vmatmul.mubr.f32.gmra.mrb[0].mxu0 %v198
      %v766 = vpop.f32.mrb[0].mxu0
      %v767 = vadd.f32 0.0, %v766
      %v768 = vpop.f32.mrb[0].mxu0
      %v769 = vadd.f32 0.0, %v768
      %770 = vmatprep.mubr.f32.mxu0 0.0
      %771 = vmatmul.mubr.f32.gmra.mrb[0].mxu0 %v201
      %v772 = vpop.f32.mrb[0].mxu0
      %v773 = vadd.f32 0.0, %v772
      %v774 = vpop.f32.mrb[0].mxu0
      %v775 = vadd.f32 0.0, %v774
      %776 = vmatprep.mubr.f32.mxu0 0.0
      %777 = vmatmul.mubr.f32.gmra.mrb[0].mxu0 %v204
      %v778 = vpop.f32.mrb[0].mxu0
      %v779 = vadd.f32 0.0, %v778
      %v780 = vpop.f32.mrb[0].mxu0
      %v781 = vadd.f32 0.0, %v780
      %782 = vmatprep.mubr.f32.mxu0 0.0
      %783 = vmatmul.mubr.f32.gmra.mrb[0].mxu0 %v207
      %v784 = vpop.f32.mrb[0].mxu0
      %v785 = vadd.f32 0.0, %v784
      %v786 = vpop.f32.mrb[0].mxu0
      %v787 = vadd.f32 0.0, %v786
      %788 = vdwg.mxu0
      %789 = vmatprep.subr.mxu0 %v698
      %790 = vmatpush1.msra.mxu0 %v696
      %791 = vmatprep.subr.mxu0 0.0
      %792 = vmatpush1.msra.mxu0 0.0
      %793 = vmatprep.subr.mxu0 0.0
      %794 = vmatpush1.msra.mxu0 0.0
      %795 = vmatprep.subr.mxu0 0.0
      %796 = vmatpush1.msra.mxu0 0.0
      %797 = vmatprep.subr.mxu0 0.0
      %798 = vmatpush1.msra.mxu0 0.0
      %799 = vmatprep.subr.mxu0 0.0
      %800 = vmatpush1.msra.mxu0 0.0
      %801 = vmatprep.subr.mxu0 0.0
      %802 = vmatpush1.msra.mxu0 0.0
      %803 = vmatprep.subr.mxu0 0.0
      %804 = vmatpush1.msra.mxu0 0.0
      %805 = vmatprep.subr.mxu0 0.0
      %806 = vmatpush1.msra.mxu0 0.0
      %807 = vmatprep.subr.mxu0 0.0
      %808 = vmatpush1.msra.mxu0 0.0
      %809 = vmatprep.subr.mxu0 0.0
      %810 = vmatpush1.msra.mxu0 0.0
      %811 = vmatprep.subr.mxu0 0.0
      %812 = vmatpush1.msra.mxu0 0.0
      %813 = vmatprep.subr.mxu0 0.0
      %814 = vmatpush1.msra.mxu0 0.0
      %815 = vmatprep.subr.mxu0 0.0
      %816 = vmatpush1.msra.mxu0 0.0
      %817 = vmatprep.subr.mxu0 0.0
      %818 = vmatpush1.msra.mxu0 0.0
      %819 = vmatprep.subr.mxu0 0.0
      %820 = vmatpush1.msra.mxu0 0.0
      %821 = vmatprep.subr.mxu0 0.0
      %822 = vmatpush1.msra.mxu0 0.0
      %823 = vmatprep.subr.mxu0 0.0
      %824 = vmatpush1.msra.mxu0 0.0
      %825 = vmatprep.subr.mxu0 0.0
      %826 = vmatpush1.msra.mxu0 0.0
      %827 = vmatprep.subr.mxu0 0.0
      %828 = vmatpush1.msra.mxu0 0.0
      %829 = vmatprep.subr.mxu0 0.0
      %830 = vmatpush1.msra.mxu0 0.0
      %831 = vmatprep.subr.mxu0 0.0
      %832 = vmatpush1.msra.mxu0 0.0
      %833 = vmatprep.subr.mxu0 0.0
      %834 = vmatpush1.msra.mxu0 0.0
      %835 = vmatprep.subr.mxu0 0.0
      %836 = vmatpush1.msra.mxu0 0.0
      %837 = vmatprep.subr.mxu0 0.0
      %838 = vmatpush1.msra.mxu0 0.0
      %839 = vmatprep.subr.mxu0 0.0
      %840 = vmatpush1.msra.mxu0 0.0
      %841 = vmatprep.subr.mxu0 0.0
      %842 = vmatpush1.msra.mxu0 0.0
      %843 = vmatprep.subr.mxu0 0.0
      %844 = vmatpush1.msra.mxu0 0.0
      %845 = vmatprep.subr.mxu0 0.0
      %846 = vmatpush1.msra.mxu0 0.0
      %847 = vmatprep.subr.mxu0 0.0
      %848 = vmatpush1.msra.mxu0 0.0
      %849 = vmatprep.subr.mxu0 0.0
      %850 = vmatpush1.msra.mxu0 0.0
      %851 = vmatprep.subr.mxu0 0.0
      %852 = vmatpush1.msra.mxu0 0.0
      %853 = vmatprep.mubr.f32.mxu0 0.0
      %854 = vmatmul.mubr.f32.gmra.mrb[0].mxu0 %v198
      %v855 = vpop.f32.mrb[0].mxu0
      %v856 = vadd.f32 0.0, %v855
      %v857 = vpop.f32.mrb[0].mxu0
      %v858 = vadd.f32 0.0, %v857
      %859 = vmatprep.mubr.f32.mxu0 0.0
      %860 = vmatmul.mubr.f32.gmra.mrb[0].mxu0 %v201
      %v861 = vpop.f32.mrb[0].mxu0
      %v862 = vadd.f32 0.0, %v861
      %v863 = vpop.f32.mrb[0].mxu0
      %v864 = vadd.f32 0.0, %v863
      %865 = vmatprep.mubr.f32.mxu0 0.0
      %866 = vmatmul.mubr.f32.gmra.mrb[0].mxu0 %v204
      %v867 = vpop.f32.mrb[0].mxu0
      %v868 = vadd.f32 0.0, %v867
      %v869 = vpop.f32.mrb[0].mxu0
      %v870 = vadd.f32 0.0, %v869
      %871 = vmatprep.mubr.f32.mxu0 0.0
      %872 = vmatmul.mubr.f32.gmra.mrb[0].mxu0 %v207
      %v873 = vpop.f32.mrb[0].mxu0
      %v874 = vadd.f32 0.0, %v873
      %v875 = vpop.f32.mrb[0].mxu0
      %v876 = vadd.f32 0.0, %v875
      %877 = vdwg.mxu0
      %v878 = vmul.f32 %v767, %v767
      %v879 = vmul.f32 %v769, %v769
      %v880 = vmul.f32 %v856, %v856
      %v881 = vmul.f32 %v858, %v858
      %v882 = vmul.f32 %v773, %v773
      %v883 = vmul.f32 %v775, %v775
      %v884 = vmul.f32 %v862, %v862
      %v885 = vmul.f32 %v864, %v864
      %v886 = vmul.f32 %v779, %v779
      %v887 = vmul.f32 %v781, %v781
      %v888 = vmul.f32 %v868, %v868
      %v889 = vmul.f32 %v870, %v870
      %v890 = vmul.f32 %v785, %v785
      %v891 = vmul.f32 %v787, %v787
      %v892 = vmul.f32 %v874, %v874
      %v893 = vmul.f32 %v876, %v876
      %v894 = vadd.f32 %v677, %v767
      %v895 = vadd.f32 %v678, %v773
      %v896 = vadd.f32 %v679, %v779
      %v897 = vadd.f32 %v680, %v785
      %v898 = vadd.f32 %v681, %v878
      %v899 = vadd.f32 %v682, %v882
      %v900 = vadd.f32 %v683, %v886
      %v901 = vadd.f32 %v684, %v890
      %v902 = vadd.f32 %v894, %v769
      %v903 = vadd.f32 %v895, %v775
      %v904 = vadd.f32 %v896, %v781
      %v905 = vadd.f32 %v897, %v787
      %v906 = vadd.f32 %v898, %v879
      %v907 = vadd.f32 %v899, %v883
      %v908 = vadd.f32 %v900, %v887
      %v909 = vadd.f32 %v901, %v891
      %v910 = vadd.f32 %v902, %v856
      %v911 = vadd.f32 %v903, %v862
      %v912 = vadd.f32 %v904, %v868
      %v913 = vadd.f32 %v905, %v874
      %v914 = vadd.f32 %v906, %v880
      %v915 = vadd.f32 %v907, %v884
      %v916 = vadd.f32 %v908, %v888
      %v917 = vadd.f32 %v909, %v892
      %v918 = vadd.f32 %v910, %v858
      %v919 = vadd.f32 %v911, %v864
      %v920 = vadd.f32 %v912, %v870
      %v921 = vadd.f32 %v913, %v876
      %v922 = vadd.f32 %v914, %v881
      %v923 = vadd.f32 %v915, %v885
      %v924 = vadd.f32 %v916, %v889
      %v925 = vadd.f32 %v917, %v893
      %926 = vadd.xlane.f32.xlu0 %v918
      %v927 = vpop.xlane.xlu0 %926
      %928 = vadd.xlane.f32.xlu0 %v919
      %v929 = vpop.xlane.xlu0 %928
      %930 = vadd.xlane.f32.xlu0 %v920
      %v931 = vpop.xlane.xlu0 %930
      %932 = vadd.xlane.f32.xlu0 %v921
      %v933 = vpop.xlane.xlu0 %932
      %vm934 = vcmask 7168
      %935 = vst.msk [vmem:[%s180] sm:$0xff] %vm934, %v927
      %936 = vst.msk [vmem:[%s180 + $0x8] sm:$0xff] %vm934, %v929
      %937 = vst.msk [vmem:[%s180 + $0x10] sm:$0xff] %vm934, %v931
      %938 = vst.msk [vmem:[%s180 + $0x18] sm:$0xff] %vm934, %v933
      %939 = vadd.xlane.f32.xlu0 %v922
      %v940 = vpop.xlane.xlu0 %939
      %941 = vadd.xlane.f32.xlu0 %v923
      %v942 = vpop.xlane.xlu0 %941
      %943 = vadd.xlane.f32.xlu0 %v924
      %v944 = vpop.xlane.xlu0 %943
      %945 = vadd.xlane.f32.xlu0 %v925
      %v946 = vpop.xlane.xlu0 %945
      %947 = vst.msk [vmem:[%s185] sm:$0xff] %vm934, %v940
      %948 = vst.msk [vmem:[%s185 + $0x8] sm:$0xff] %vm934, %v942
      %949 = vst.msk [vmem:[%s185 + $0x10] sm:$0xff] %vm934, %v944
      %950 = vst.msk [vmem:[%s185 + $0x18] sm:$0xff] %vm934, %v946
      %p951 = scmp.lt.s32.totalorder %s15, 6
      %s952 = scalar_select %p951, %s15, 6
      %s953 = smul.addr %s952, 4
      %s954 = smul.addr %s953, 8
      %s955 = scalar_lea.vmem %s2, %s954
      %p956 = scmp.lt.s32.totalorder %s15, 6
      %s957 = scalar_select %p956, %s15, 6
      %s958 = smul.addr %s957, 4
      %s959 = smul.addr %s958, 8
      %s960 = scalar_lea.vmem %s3, %s959
      // Predicated region
      $region29: #{model_forward.2} parent=27 // pred_check
        %p961 = pneg %p80
      $region30: #{model_forward.2} parent=27 // pred_check_branch
        %963 = sbr.rel (%p961) target = $region32
      $region31: #{model_forward.2} parent=27 // pred_region
        _
      $region32: #{model_forward.2} parent=27 // pred_fallthru
        _
      // Predicated region
      $region33: #{model_forward.2} parent=27 // pred_check
        %p964 = pneg %p106
      $region34: #{model_forward.2} parent=27 // pred_check_branch
        %966 = sbr.rel (%p964) target = $region36
      $region35: #{model_forward.2} parent=27 // pred_region
        _
      $region36: #{model_forward.2} parent=27 // pred_fallthru
        _
    $region28: #{model_forward.2} parent=5 // pred_fallthru
      _
    %p967 = scmp.le.s32.totalorder 2, %s10
    // Predicated region
    $region37: #{model_forward.2} parent=5 // pred_check
      %p968 = pneg %p967
    $region38: #{model_forward.2} parent=5 // pred_check_branch
      %970 = sbr.rel (%p968) target = $region40
    $region39: #{model_forward.2} parent=5 // pred_region
      %s971 = ssub.s32 %s10, 2
      // Predicated region
      $region41: #{model_forward.2} parent=39 // pred_check
        %p972 = pneg %p86
      $region42: #{model_forward.2} parent=39 // pred_check_branch
        %974 = sbr.rel (%p972) target = $region44
      $region43: #{model_forward.2} parent=39 // pred_region
        %p975 = scmp.lt.s32.totalorder %s16, 6
        %s976 = scalar_select %p975, %s16, 6
        %s977 = smul.addr %s976, 4
        %s978 = smul.addr %s977, 8
        %s979 = scalar_lea.vmem %s2, %s978
      $region44: #{model_forward.2} parent=39 // pred_fallthru
        _
      // Predicated region
      $region45: #{model_forward.2} parent=39 // pred_check
        %p980 = pneg %p112
      $region46: #{model_forward.2} parent=39 // pred_check_branch
        %982 = sbr.rel (%p980) target = $region48
      $region47: #{model_forward.2} parent=39 // pred_region
        %p983 = scmp.lt.s32.totalorder %s16, 6
        %s984 = scalar_select %p983, %s16, 6
        %s985 = smul.addr %s984, 4
        %s986 = smul.addr %s985, 8
        %s987 = scalar_lea.vmem %s3, %s986
      $region48: #{model_forward.2} parent=39 // pred_fallthru
        _
    $region40: #{model_forward.2} parent=5 // pred_fallthru
      _
  $region6: #{model_forward.2} parent=0 // loop_footer
    %s14 = sadd.s32 1, %s10
  $region7: #{model_forward.2} parent=0 // loop_footer_branch
    %9 = sbr.rel target = $region3
  $region8: #{model_forward.2} parent=0 // loop_exit
    _

// kernel: model_forward.3
$region0: #{model_forward.3}
  #allocation0 [shape = 'u32[]', space=smem, size = 0x4, offset = 0x4, fixed_abs, tag = 'smem constant byte address 0x4 - core index']
  #allocation1 [shape = 'u32[144,128]{1,0:T(1,128)}', space=vmem, size = 0x12000, scoped, tag = 'internal scratch']
  %s0 = inlined_call_operand.vmem [shape: f32[3,10752], index: 0, kind: input, shape index: {}]
  %s1 = inlined_call_operand.vmem [shape: f32[32,3], index: 1, kind: input, shape index: {}]
  %s2 = inlined_call_operand.vmem [shape: f32[32,1], index: 2, kind: input, shape index: {}]
  %s3 = inlined_call_operand.vmem [shape: f32[20,32], index: 3, kind: input, shape index: {}]
  %s4 = inlined_call_operand.vmem [shape: f32[20,1], index: 4, kind: input, shape index: {}]
  %s5 = inlined_call_operand.vmem [shape: f32[20,10752], index: 5, kind: output, shape index: {}]
  %s6 = sld [smem:[#allocation0]]
  $region72: #{model_forward.3} parent=0
    _
  %s8 = ssub.s32 1, %s6
  %s9 = scalar_select 0, %s8, %s6
  $region1: #{model_forward.3} parent=0
    #allocation2 [shape = 'u8[294912]{0}', space=vmem, size = 0x48000, scoped, tag = 'output window, operand 0']
    loop: start=0, step=1, limit=9
    $region2: #{model_forward.3} parent=1 // loop_pre_header
      _
    $region3: #{model_forward.3} parent=1 // loop_header
      %s11 = sphi 0, %s15
      %p12 = scmp.ge.s32.totalorder %s11, 9
      %s21 = sphi 0, %s23
      %s24 = sphi 0, %s21
      %s25 = sphi 0, %s24
      %s41 = sphi 0, %s25
      %s45 = sphi 0, %s45
      %s47 = sphi 0, %s45
      %s48 = sphi 0, %s47
      %s62 = sphi 0, %s48
      %s66 = sphi 0, %s66
      %s68 = sphi 0, %s66
      %s69 = sphi 0, %s68
      %s83 = sphi 0, %s69
      %s87 = sphi 0, %s87
      %s89 = sphi 0, %s87
      %s90 = sphi 0, %s89
      %s104 = sphi 0, %s90
      %s108 = sphi 0, %s108
      %s110 = sphi 0, %s108
      %s111 = sphi 0, %s110
      %s125 = sphi 0, %s111
      %s131 = sphi 0, %s133
      %s134 = sphi 0, %s131
      %s135 = sphi 0, %s134
      %s151 = sphi 0, %s135
    $region4: #{model_forward.3} parent=1 // loop_header_branch
      %14 = sbr.rel (%p12) target = $region8
    $region5: #{model_forward.3} parent=1 // loop_body
      %s16 = ssub.s32 %s11, 1
      %s17 = ssub.s32 %s11, 2
      %s18 = sadd.s32 %s11, 1
      %s19 = ssub.s32 %s11, %s18
      %p20 = scmp.eq.s32.totalorder %s19, 0
      %s22 = sadd.s32 %s21, 1
      %s23 = scalar_select %p20, %s21, %s22
      %p26 = pneg %p20
      %p27 = scmp.eq.s32.totalorder %s11, 6
      %p28 = por %p26, %p27
      %p29 = scmp.ne.s32.totalorder %s21, %s24
      %p30 = scmp.eq.s32.totalorder %s11, 0
      %p31 = por %p29, %p30
      %p32 = scmp.ne.s32.totalorder %s21, %s24
      %p33 = scmp.eq.s32.totalorder %s16, 6
      %p34 = por %p32, %p33
      %p35 = scmp.ne.s32.totalorder %s24, %s25
      %p36 = scmp.eq.s32.totalorder %s16, 0
      %p37 = por %p35, %p36
      %p38 = scmp.ne.s32.totalorder %s24, %s25
      %p39 = scmp.eq.s32.totalorder %s17, 6
      %p40 = por %p38, %p39
      %p42 = scmp.ne.s32.totalorder %s25, %s41
      %p43 = scmp.eq.s32.totalorder %s17, 0
      %p44 = por %p42, %p43
      %s46 = sadd.s32 %s45, 1
      %p49 = scmp.eq.s32.totalorder %s11, 6
      %p50 = scmp.ne.s32.totalorder %s45, %s47
      %p51 = scmp.eq.s32.totalorder %s11, 0
      %p52 = por %p50, %p51
      %p53 = scmp.ne.s32.totalorder %s45, %s47
      %p54 = scmp.eq.s32.totalorder %s16, 6
      %p55 = por %p53, %p54
      %p56 = scmp.ne.s32.totalorder %s47, %s48
      %p57 = scmp.eq.s32.totalorder %s16, 0
      %p58 = por %p56, %p57
      %p59 = scmp.ne.s32.totalorder %s47, %s48
      %p60 = scmp.eq.s32.totalorder %s17, 6
      %p61 = por %p59, %p60
      %p63 = scmp.ne.s32.totalorder %s48, %s62
      %p64 = scmp.eq.s32.totalorder %s17, 0
      %p65 = por %p63, %p64
      %s67 = sadd.s32 %s66, 1
      %p70 = scmp.eq.s32.totalorder %s11, 6
      %p71 = scmp.ne.s32.totalorder %s66, %s68
      %p72 = scmp.eq.s32.totalorder %s11, 0
      %p73 = por %p71, %p72
      %p74 = scmp.ne.s32.totalorder %s66, %s68
      %p75 = scmp.eq.s32.totalorder %s16, 6
      %p76 = por %p74, %p75
      %p77 = scmp.ne.s32.totalorder %s68, %s69
      %p78 = scmp.eq.s32.totalorder %s16, 0
      %p79 = por %p77, %p78
      %p80 = scmp.ne.s32.totalorder %s68, %s69
      %p81 = scmp.eq.s32.totalorder %s17, 6
      %p82 = por %p80, %p81
      %p84 = scmp.ne.s32.totalorder %s69, %s83
      %p85 = scmp.eq.s32.totalorder %s17, 0
      %p86 = por %p84, %p85
      %s88 = sadd.s32 %s87, 1
      %p91 = scmp.eq.s32.totalorder %s11, 6
      %p92 = scmp.ne.s32.totalorder %s87, %s89
      %p93 = scmp.eq.s32.totalorder %s11, 0
      %p94 = por %p92, %p93
      %p95 = scmp.ne.s32.totalorder %s87, %s89
      %p96 = scmp.eq.s32.totalorder %s16, 6
      %p97 = por %p95, %p96
      %p98 = scmp.ne.s32.totalorder %s89, %s90
      %p99 = scmp.eq.s32.totalorder %s16, 0
      %p100 = por %p98, %p99
      %p101 = scmp.ne.s32.totalorder %s89, %s90
      %p102 = scmp.eq.s32.totalorder %s17, 6
      %p103 = por %p101, %p102
      %p105 = scmp.ne.s32.totalorder %s90, %s104
      %p106 = scmp.eq.s32.totalorder %s17, 0
      %p107 = por %p105, %p106
      %s109 = sadd.s32 %s108, 1
      %p112 = scmp.eq.s32.totalorder %s11, 6
      %p113 = scmp.ne.s32.totalorder %s108, %s110
      %p114 = scmp.eq.s32.totalorder %s11, 0
      %p115 = por %p113, %p114
      %p116 = scmp.ne.s32.totalorder %s108, %s110
      %p117 = scmp.eq.s32.totalorder %s16, 6
      %p118 = por %p116, %p117
      %p119 = scmp.ne.s32.totalorder %s110, %s111
      %p120 = scmp.eq.s32.totalorder %s16, 0
      %p121 = por %p119, %p120
      %p122 = scmp.ne.s32.totalorder %s110, %s111
      %p123 = scmp.eq.s32.totalorder %s17, 6
      %p124 = por %p122, %p123
      %p126 = scmp.ne.s32.totalorder %s111, %s125
      %p127 = scmp.eq.s32.totalorder %s17, 0
      %p128 = por %p126, %p127
      %s129 = ssub.s32 %s11, %s18
      %p130 = scmp.eq.s32.totalorder %s129, 0
      %s132 = sadd.s32 %s131, 1
      %s133 = scalar_select %p130, %s131, %s132
      %p136 = pneg %p130
      %p137 = scmp.eq.s32.totalorder %s11, 6
      %p138 = por %p136, %p137
      %p139 = scmp.ne.s32.totalorder %s131, %s134
      %p140 = scmp.eq.s32.totalorder %s11, 0
      %p141 = por %p139, %p140
      %p142 = scmp.ne.s32.totalorder %s131, %s134
      %p143 = scmp.eq.s32.totalorder %s16, 6
      %p144 = por %p142, %p143
      %p145 = scmp.ne.s32.totalorder %s134, %s135
      %p146 = scmp.eq.s32.totalorder %s16, 0
      %p147 = por %p145, %p146
      %p148 = scmp.ne.s32.totalorder %s134, %s135
      %p149 = scmp.eq.s32.totalorder %s17, 6
      %p150 = por %p148, %p149
      %p152 = scmp.ne.s32.totalorder %s135, %s151
      %p153 = scmp.eq.s32.totalorder %s17, 0
      %p154 = por %p152, %p153
      %p155 = scmp.le.s32.totalorder 1, %s11
      %p156 = scmp.lt.s32.totalorder %s11, 8
      %p157 = pnand %p155, %p156
      %p158 = pneg %p157
      // Predicated region
      $region9: #{model_forward.3} parent=5 // pred_check
        _
      $region10: #{model_forward.3} parent=5 // pred_check_branch
        %160 = sbr.rel (%p157) target = $region12
      $region11: #{model_forward.3} parent=5 // pred_region
        %s161 = ssub.s32 %s11, 1
        // Predicated region
        $region13: #{model_forward.3} parent=11 // pred_check
          %p162 = pneg %p58
        $region14: #{model_forward.3} parent=11 // pred_check_branch
          %164 = sbr.rel (%p162) target = $region16
        $region15: #{model_forward.3} parent=11 // pred_region
          _
        $region16: #{model_forward.3} parent=11 // pred_fallthru
          _
        // Predicated region
        $region17: #{model_forward.3} parent=11 // pred_check
          %p165 = pneg %p79
        $region18: #{model_forward.3} parent=11 // pred_check_branch
          %167 = sbr.rel (%p165) target = $region20
        $region19: #{model_forward.3} parent=11 // pred_region
          _
        $region20: #{model_forward.3} parent=11 // pred_fallthru
          _
        // Predicated region
        $region21: #{model_forward.3} parent=11 // pred_check
          %p168 = pneg %p100
        $region22: #{model_forward.3} parent=11 // pred_check_branch
          %170 = sbr.rel (%p168) target = $region24
        $region23: #{model_forward.3} parent=11 // pred_region
          _
        $region24: #{model_forward.3} parent=11 // pred_fallthru
          _
        // Predicated region
        $region25: #{model_forward.3} parent=11 // pred_check
          %p171 = pneg %p121
        $region26: #{model_forward.3} parent=11 // pred_check_branch
          %173 = sbr.rel (%p171) target = $region28
        $region27: #{model_forward.3} parent=11 // pred_region
          _
        $region28: #{model_forward.3} parent=11 // pred_fallthru
          _
      $region12: #{model_forward.3} parent=5 // pred_fallthru
        _
      %p174 = scmp.lt.s32.totalorder %s11, 7
      // Predicated region
      $region29: #{model_forward.3} parent=5 // pred_check
        %p175 = pneg %p174
      $region30: #{model_forward.3} parent=5 // pred_check_branch
        %177 = sbr.rel (%p175) target = $region32
      $region31: #{model_forward.3} parent=5 // pred_region
        // Predicated region
        $region33: #{model_forward.3} parent=31 // pred_check
          %p178 = pneg %p31
        $region34: #{model_forward.3} parent=31 // pred_check_branch
          %180 = sbr.rel (%p178) target = $region36
        $region35: #{model_forward.3} parent=31 // pred_region
          %s181 = smul.u32 12, %s11
          %p182 = scmp.lt.s32.totalorder %s181, 83
          %s183 = scalar_select %p182, %s181, 83
          %s184 = smul.addr %s183, 4
          %s185 = scalar_lea.vmem %s0, %s184
          %s186 = smul.u32 12, %s11
        $region36: #{model_forward.3} parent=31 // pred_fallthru
          _
      $region32: #{model_forward.3} parent=5 // pred_fallthru
        _
      %p187 = scmp.le.s32.totalorder 1, %s11
      %p188 = scmp.lt.s32.totalorder %s11, 8
      %p189 = pnand %p187, %p188
      %p190 = pneg %p189
      // Predicated region
      $region37: #{model_forward.3} parent=5 // pred_check
        _
      $region38: #{model_forward.3} parent=5 // pred_check_branch
        %192 = sbr.rel (%p189) target = $region40
      $region39: #{model_forward.3} parent=5 // pred_region
        %s193 = ssub.s32 %s11, 1
        %s194 = smul.u32 12, %s16
        %p195 = scmp.lt.s32.totalorder %s194, 83
        %s196 = scalar_select %p195, %s194, 83
        %s197 = smul.addr %s196, 4
        %s198 = scalar_lea.vmem %s0, %s197
        %p199 = pneg %p37
        %p200 = pneg %p34
        %p201 = pneg %p58
        %p202 = pneg %p55
        %p203 = pneg %p79
        %p204 = pneg %p76
        %p205 = pneg %p100
        %p206 = pneg %p97
        %p207 = pneg %p121
        %p208 = pneg %p118
        %p209 = pneg %p147
        %p210 = pneg %p144
        %s211 = sand.u32 %s134, 1
        %s212 = sand.u32 %s134, 1
        %s213 = smul.addr %s212, 288
        %s214 = scalar_lea.vmem [#allocation2], %s213
        %s215 = smul.u32 12, %s16
        %p216 = scmp.lt.s32.totalorder %s215, 83
        %s217 = scalar_select %p216, %s215, 83
        %s218 = smul.addr %s217, 4
        %s219 = scalar_lea.vmem %s0, %s218
        %s220 = smul.u32 12, %s16
        %s221 = smul.u32 12, %s16
        %v222 = vld [vmem:[%s1] sm:$0xff]
        %v223 = vld [vmem:[%s1 + $0x8] sm:$0xff]
        %v224 = vld [vmem:[%s1 + $0x10] sm:$0xff]
        %v225 = vld [vmem:[%s1 + $0x18] sm:$0xff]
        %v226 = vld [vmem:[%s2] sm:$0xff]
        %v227 = vld [vmem:[%s2 + $0x8] sm:$0xff]
        %v228 = vld [vmem:[%s2 + $0x10] sm:$0xff]
        %v229 = vld [vmem:[%s2 + $0x18] sm:$0xff]
        %v230 = vld [vmem:[%s3] sm:$0xff]
        %v231 = vld [vmem:[%s3 + $0x8] sm:$0xff]
        %v232 = vld [vmem:[%s3 + $0x10] sm:$0xf]
        %v233 = vld [vmem:[%s4] sm:$0xff]
        %v234 = vld [vmem:[%s4 + $0x8] sm:$0xff]
        %v235 = vld [vmem:[%s4 + $0x10] sm:$0xf]
        %v236 = vld [vmem:[%s219] sm:$0x77]
        %v237 = vld [vmem:[%s219 + $0x8] sm:$0x77]
        %239 = vset.pattern.permute.xlu0 0
        %240 = vperm.xlu0 %239, %v226
        %v241 = vpop.permute.xlu0 %240
        %244 = vset.pattern.permute.xlu0 0
        %245 = vperm.xlu0 %244, %v227
        %v246 = vpop.permute.xlu0 %245
        %249 = vset.pattern.permute.xlu0 0
        %250 = vperm.xlu0 %249, %v228
        %v251 = vpop.permute.xlu0 %250
        %254 = vset.pattern.permute.xlu0 0
        %255 = vperm.xlu0 %254, %v229
        %v256 = vpop.permute.xlu0 %255
        %v260 = vcombine.high %v236, %v236
        %v261 = vcombine.high %v237, %v237
        %vm262 = vcmask 23552
        %v264 = vsel %vm262, %v222, 0
        %v267 = vsel %vm262, %v223, 0
        %v270 = vsel %vm262, %v224, 0
        %v273 = vsel %vm262, %v225, 0
        %vm275 = vcmask 1042432
        %v276 = vsel %vm275, %v236, 0
        %v278 = vsel %vm275, %v260, 0
        %v280 = vsel %vm275, %v237, 0
        %v282 = vsel %vm275, %v261, 0
        %v284 = vand.u32 %v278, 4294901760
        %285 = vmatprep.subr.mxu0 %v284
        %v286 = vand.u32 %v276, 4294901760
        %287 = vmatpush1.msra.mxu0 %v286
        %288 = vmatprep.subr.mxu0 0.0
        %289 = vmatpush1.msra.mxu0 0.0
        %290 = vmatprep.subr.mxu0 0.0
        %291 = vmatpush1.msra.mxu0 0.0
        %292 = vmatprep.subr.mxu0 0.0
        %293 = vmatpush1.msra.mxu0 0.0
        %294 = vmatprep.subr.mxu0 0.0
        %295 = vmatpush1.msra.mxu0 0.0
        %296 = vmatprep.subr.mxu0 0.0
        %297 = vmatpush1.msra.mxu0 0.0
        %298 = vmatprep.subr.mxu0 0.0
        %299 = vmatpush1.msra.mxu0 0.0
        %300 = vmatprep.subr.mxu0 0.0
        %301 = vmatpush1.msra.mxu0 0.0
        %302 = vmatprep.subr.mxu0 0.0
        %303 = vmatpush1.msra.mxu0 0.0
        %304 = vmatprep.subr.mxu0 0.0
        %305 = vmatpush1.msra.mxu0 0.0
        %306 = vmatprep.subr.mxu0 0.0
        %307 = vmatpush1.msra.mxu0 0.0
        %308 = vmatprep.subr.mxu0 0.0
        %309 = vmatpush1.msra.mxu0 0.0
        %310 = vmatprep.subr.mxu0 0.0
        %311 = vmatpush1.msra.mxu0 0.0
        %312 = vmatprep.subr.mxu0 0.0
        %313 = vmatpush1.msra.mxu0 0.0
        %314 = vmatprep.subr.mxu0 0.0
        %315 = vmatpush1.msra.mxu0 0.0
        %316 = vmatprep.subr.mxu0 0.0
        %317 = vmatpush1.msra.mxu0 0.0
        %318 = vmatprep.subr.mxu0 0.0
        %319 = vmatpush1.msra.mxu0 0.0
        %320 = vmatprep.subr.mxu0 0.0
        %321 = vmatpush1.msra.mxu0 0.0
        %322 = vmatprep.subr.mxu0 0.0
        %323 = vmatpush1.msra.mxu0 0.0
        %324 = vmatprep.subr.mxu0 0.0
        %325 = vmatpush1.msra.mxu0 0.0
        %326 = vmatprep.subr.mxu0 0.0
        %327 = vmatpush1.msra.mxu0 0.0
        %328 = vmatprep.subr.mxu0 0.0
        %329 = vmatpush1.msra.mxu0 0.0
        %330 = vmatprep.subr.mxu0 0.0
        %331 = vmatpush1.msra.mxu0 0.0
        %332 = vmatprep.subr.mxu0 0.0
        %333 = vmatpush1.msra.mxu0 0.0
        %334 = vmatprep.subr.mxu0 0.0
        %335 = vmatpush1.msra.mxu0 0.0
        %336 = vmatprep.subr.mxu0 0.0
        %337 = vmatpush1.msra.mxu0 0.0
        %338 = vmatprep.subr.mxu0 0.0
        %339 = vmatpush1.msra.mxu0 0.0
        %340 = vmatprep.subr.mxu0 0.0
        %341 = vmatpush1.msra.mxu0 0.0
        %342 = vmatprep.subr.mxu0 0.0
        %343 = vmatpush1.msra.mxu0 0.0
        %344 = vmatprep.subr.mxu0 0.0
        %345 = vmatpush1.msra.mxu0 0.0
        %346 = vmatprep.subr.mxu0 0.0
        %347 = vmatpush1.msra.mxu0 0.0
        %348 = vmatprep.subr.mxu0 0.0
        %349 = vmatpush1.msra.mxu0 0.0
        %350 = vmatprep.mubr.f32.mxu0 0.0
        %v351 = vand.u32 %v264, 4294901760
        %v352 = vsub.f32 %v264, %v351
        %v353 = vand.u32 %v352, 4294901760
        %v354 = vsub.f32 %v352, %v353
        %v355 = vand.u32 %v354, 4294901760
        %356 = vmatmul.mubr.f32.gmra.mrb[0].mxu0 %v355
        %v357 = vpop.f32.mrb[0].mxu0
        %v358 = vadd.f32 %v241, %v357
        %v359 = vpop.f32.mrb[0].mxu0
        %v360 = vadd.f32 %v241, %v359
        %361 = vmatprep.mubr.f32.mxu0 0.0
        %v362 = vand.u32 %v267, 4294901760
        %v363 = vsub.f32 %v267, %v362
        %v364 = vand.u32 %v363, 4294901760
        %v365 = vsub.f32 %v363, %v364
        %v366 = vand.u32 %v365, 4294901760
        %367 = vmatmul.mubr.f32.gmra.mrb[0].mxu0 %v366
        %v368 = vpop.f32.mrb[0].mxu0
        %v369 = vadd.f32 %v246, %v368
        %v370 = vpop.f32.mrb[0].mxu0
        %v371 = vadd.f32 %v246, %v370
        %372 = vmatprep.mubr.f32.mxu0 0.0
        %v373 = vand.u32 %v270, 4294901760
        %v374 = vsub.f32 %v270, %v373
        %v375 = vand.u32 %v374, 4294901760
        %v376 = vsub.f32 %v374, %v375
        %v377 = vand.u32 %v376, 4294901760
        %378 = vmatmul.mubr.f32.gmra.mrb[0].mxu0 %v377
        %v379 = vpop.f32.mrb[0].mxu0
        %v380 = vadd.f32 %v251, %v379
        %v381 = vpop.f32.mrb[0].mxu0
        %v382 = vadd.f32 %v251, %v381
        %383 = vmatprep.mubr.f32.mxu0 0.0
        %v384 = vand.u32 %v273, 4294901760
        %v385 = vsub.f32 %v273, %v384
        %v386 = vand.u32 %v385, 4294901760
        %v387 = vsub.f32 %v385, %v386
        %v388 = vand.u32 %v387, 4294901760
        %389 = vmatmul.mubr.f32.gmra.mrb[0].mxu0 %v388
        %v390 = vpop.f32.mrb[0].mxu0
        %v391 = vadd.f32 %v256, %v390
        %v392 = vpop.f32.mrb[0].mxu0
        %v393 = vadd.f32 %v256, %v392
        %394 = vdwg.mxu0
        %v395 = vand.u32 %v278, 4294901760
        %v396 = vsub.f32 %v278, %v395
        %v397 = vand.u32 %v396, 4294901760
        %v398 = vsub.f32 %v396, %v397
        %v399 = vand.u32 %v398, 4294901760
        %400 = vmatprep.subr.mxu0 %v399
        %v401 = vand.u32 %v276, 4294901760
        %v402 = vsub.f32 %v276, %v401
        %v403 = vand.u32 %v402, 4294901760
        %v404 = vsub.f32 %v402, %v403
        %v405 = vand.u32 %v404, 4294901760
        %406 = vmatpush1.msra.mxu0 %v405
        %407 = vmatprep.subr.mxu0 0.0
        %408 = vmatpush1.msra.mxu0 0.0
        %409 = vmatprep.subr.mxu0 0.0
        %410 = vmatpush1.msra.mxu0 0.0
        %411 = vmatprep.subr.mxu0 0.0
        %412 = vmatpush1.msra.mxu0 0.0
        %413 = vmatprep.subr.mxu0 0.0
        %414 = vmatpush1.msra.mxu0 0.0
        %415 = vmatprep.subr.mxu0 0.0
        %416 = vmatpush1.msra.mxu0 0.0
        %417 = vmatprep.subr.mxu0 0.0
        %418 = vmatpush1.msra.mxu0 0.0
        %419 = vmatprep.subr.mxu0 0.0
        %420 = vmatpush1.msra.mxu0 0.0
        %421 = vmatprep.subr.mxu0 0.0
        %422 = vmatpush1.msra.mxu0 0.0
        %423 = vmatprep.subr.mxu0 0.0
        %424 = vmatpush1.msra.mxu0 0.0
        %425 = vmatprep.subr.mxu0 0.0
        %426 = vmatpush1.msra.mxu0 0.0
        %427 = vmatprep.subr.mxu0 0.0
        %428 = vmatpush1.msra.mxu0 0.0
        %429 = vmatprep.subr.mxu0 0.0
        %430 = vmatpush1.msra.mxu0 0.0
        %431 = vmatprep.subr.mxu0 0.0
        %432 = vmatpush1.msra.mxu0 0.0
        %433 = vmatprep.subr.mxu0 0.0
        %434 = vmatpush1.msra.mxu0 0.0
        %435 = vmatprep.subr.mxu0 0.0
        %436 = vmatpush1.msra.mxu0 0.0
        %437 = vmatprep.subr.mxu0 0.0
        %438 = vmatpush1.msra.mxu0 0.0
        %439 = vmatprep.subr.mxu0 0.0
        %440 = vmatpush1.msra.mxu0 0.0
        %441 = vmatprep.subr.mxu0 0.0
        %442 = vmatpush1.msra.mxu0 0.0
        %443 = vmatprep.subr.mxu0 0.0
        %444 = vmatpush1.msra.mxu0 0.0
        %445 = vmatprep.subr.mxu0 0.0
        %446 = vmatpush1.msra.mxu0 0.0
        %447 = vmatprep.subr.mxu0 0.0
        %448 = vmatpush1.msra.mxu0 0.0
        %449 = vmatprep.subr.mxu0 0.0
        %450 = vmatpush1.msra.mxu0 0.0
        %451 = vmatprep.subr.mxu0 0.0
        %452 = vmatpush1.msra.mxu0 0.0
        %453 = vmatprep.subr.mxu0 0.0
        %454 = vmatpush1.msra.mxu0 0.0
        %455 = vmatprep.subr.mxu0 0.0
        %456 = vmatpush1.msra.mxu0 0.0
        %457 = vmatprep.subr.mxu0 0.0
        %458 = vmatpush1.msra.mxu0 0.0
        %459 = vmatprep.subr.mxu0 0.0
        %460 = vmatpush1.msra.mxu0 0.0
        %461 = vmatprep.subr.mxu0 0.0
        %462 = vmatpush1.msra.mxu0 0.0
        %463 = vmatprep.subr.mxu0 0.0
        %464 = vmatpush1.msra.mxu0 0.0
        %465 = vmatprep.subr.mxu0 0.0
        %466 = vmatpush1.msra.mxu0 0.0
        %467 = vmatprep.subr.mxu0 0.0
        %468 = vmatpush1.msra.mxu0 0.0
        %469 = vmatprep.mubr.f32.mxu0 0.0
        %v470 = vand.u32 %v264, 4294901760
        %471 = vmatmul.mubr.f32.gmra.mrb[0].mxu0 %v470
        %v472 = vpop.f32.mrb[0].mxu0
        %v473 = vadd.f32 %v358, %v472
        %v474 = vpop.f32.mrb[0].mxu0
        %v475 = vadd.f32 %v360, %v474
        %476 = vmatprep.mubr.f32.mxu0 0.0
        %v477 = vand.u32 %v267, 4294901760
        %478 = vmatmul.mubr.f32.gmra.mrb[0].mxu0 %v477
        %v479 = vpop.f32.mrb[0].mxu0
        %v480 = vadd.f32 %v369, %v479
        %v481 = vpop.f32.mrb[0].mxu0
        %v482 = vadd.f32 %v371, %v481
        %483 = vmatprep.mubr.f32.mxu0 0.0
        %v484 = vand.u32 %v270, 4294901760
        %485 = vmatmul.mubr.f32.gmra.mrb[0].mxu0 %v484
        %v486 = vpop.f32.mrb[0].mxu0
        %v487 = vadd.f32 %v380, %v486
        %v488 = vpop.f32.mrb[0].mxu0
        %v489 = vadd.f32 %v382, %v488
        %490 = vmatprep.mubr.f32.mxu0 0.0
        %v491 = vand.u32 %v273, 4294901760
        %492 = vmatmul.mubr.f32.gmra.mrb[0].mxu0 %v491
        %v493 = vpop.f32.mrb[0].mxu0
        %v494 = vadd.f32 %v391, %v493
        %v495 = vpop.f32.mrb[0].mxu0
        %v496 = vadd.f32 %v393, %v495
        %497 = vdwg.mxu0
        %v498 = vand.u32 %v278, 4294901760
        %v499 = vsub.f32 %v278, %v498
        %500 = vmatprep.subr.mxu0 %v499
        %v501 = vand.u32 %v276, 4294901760
        %v502 = vsub.f32 %v276, %v501
        %503 = vmatpush1.msra.mxu0 %v502
        %504 = vmatprep.subr.mxu0 0.0
        %505 = vmatpush1.msra.mxu0 0.0
        %506 = vmatprep.subr.mxu0 0.0
        %507 = vmatpush1.msra.mxu0 0.0
        %508 = vmatprep.subr.mxu0 0.0
        %509 = vmatpush1.msra.mxu0 0.0
        %510 = vmatprep.subr.mxu0 0.0
        %511 = vmatpush1.msra.mxu0 0.0
        %512 = vmatprep.subr.mxu0 0.0
        %513 = vmatpush1.msra.mxu0 0.0
        %514 = vmatprep.subr.mxu0 0.0
        %515 = vmatpush1.msra.mxu0 0.0
        %516 = vmatprep.subr.mxu0 0.0
        %517 = vmatpush1.msra.mxu0 0.0
        %518 = vmatprep.subr.mxu0 0.0
        %519 = vmatpush1.msra.mxu0 0.0
        %520 = vmatprep.subr.mxu0 0.0
        %521 = vmatpush1.msra.mxu0 0.0
        %522 = vmatprep.subr.mxu0 0.0
        %523 = vmatpush1.msra.mxu0 0.0
        %524 = vmatprep.subr.mxu0 0.0
        %525 = vmatpush1.msra.mxu0 0.0
        %526 = vmatprep.subr.mxu0 0.0
        %527 = vmatpush1.msra.mxu0 0.0
        %528 = vmatprep.subr.mxu0 0.0
        %529 = vmatpush1.msra.mxu0 0.0
        %530 = vmatprep.subr.mxu0 0.0
        %531 = vmatpush1.msra.mxu0 0.0
        %532 = vmatprep.subr.mxu0 0.0
        %533 = vmatpush1.msra.mxu0 0.0
        %534 = vmatprep.subr.mxu0 0.0
        %535 = vmatpush1.msra.mxu0 0.0
        %536 = vmatprep.subr.mxu0 0.0
        %537 = vmatpush1.msra.mxu0 0.0
        %538 = vmatprep.subr.mxu0 0.0
        %539 = vmatpush1.msra.mxu0 0.0
        %540 = vmatprep.subr.mxu0 0.0
        %541 = vmatpush1.msra.mxu0 0.0
        %542 = vmatprep.subr.mxu0 0.0
        %543 = vmatpush1.msra.mxu0 0.0
        %544 = vmatprep.subr.mxu0 0.0
        %545 = vmatpush1.msra.mxu0 0.0
        %546 = vmatprep.subr.mxu0 0.0
        %547 = vmatpush1.msra.mxu0 0.0
        %548 = vmatprep.subr.mxu0 0.0
        %549 = vmatpush1.msra.mxu0 0.0
        %550 = vmatprep.subr.mxu0 0.0
        %551 = vmatpush1.msra.mxu0 0.0
        %552 = vmatprep.subr.mxu0 0.0
        %553 = vmatpush1.msra.mxu0 0.0
        %554 = vmatprep.subr.mxu0 0.0
        %555 = vmatpush1.msra.mxu0 0.0
        %556 = vmatprep.subr.mxu0 0.0
        %557 = vmatpush1.msra.mxu0 0.0
        %558 = vmatprep.subr.mxu0 0.0
        %559 = vmatpush1.msra.mxu0 0.0
        %560 = vmatprep.subr.mxu0 0.0
        %561 = vmatpush1.msra.mxu0 0.0
        %562 = vmatprep.subr.mxu0 0.0
        %563 = vmatpush1.msra.mxu0 0.0
        %564 = vmatprep.subr.mxu0 0.0
        %565 = vmatpush1.msra.mxu0 0.0
        %566 = vmatprep.mubr.f32.mxu0 0.0
        %v567 = vand.u32 %v264, 4294901760
        %v568 = vsub.f32 %v264, %v567
        %569 = vmatmul.mubr.f32.gmra.mrb[0].mxu0 %v568
        %v570 = vpop.f32.mrb[0].mxu0
        %v571 = vadd.f32 %v473, %v570
        %v572 = vpop.f32.mrb[0].mxu0
        %v573 = vadd.f32 %v475, %v572
        %574 = vmatprep.mubr.f32.mxu0 0.0
        %v575 = vand.u32 %v267, 4294901760
        %v576 = vsub.f32 %v267, %v575
        %577 = vmatmul.mubr.f32.gmra.mrb[0].mxu0 %v576
        %v578 = vpop.f32.mrb[0].mxu0
        %v579 = vadd.f32 %v480, %v578
        %v580 = vpop.f32.mrb[0].mxu0
        %v581 = vadd.f32 %v482, %v580
        %582 = vmatprep.mubr.f32.mxu0 0.0
        %v583 = vand.u32 %v270, 4294901760
        %v584 = vsub.f32 %v270, %v583
        %585 = vmatmul.mubr.f32.gmra.mrb[0].mxu0 %v584
        %v586 = vpop.f32.mrb[0].mxu0
        %v587 = vadd.f32 %v487, %v586
        %v588 = vpop.f32.mrb[0].mxu0
        %v589 = vadd.f32 %v489, %v588
        %590 = vmatprep.mubr.f32.mxu0 0.0
        %v591 = vand.u32 %v273, 4294901760
        %v592 = vsub.f32 %v273, %v591
        %593 = vmatmul.mubr.f32.gmra.mrb[0].mxu0 %v592
        %v594 = vpop.f32.mrb[0].mxu0
        %v595 = vadd.f32 %v494, %v594
        %v596 = vpop.f32.mrb[0].mxu0
        %v597 = vadd.f32 %v496, %v596
        %598 = vdwg.mxu0
        %v599 = vand.u32 %v278, 4294901760
        %600 = vmatprep.subr.mxu0 %v599
        %v601 = vand.u32 %v276, 4294901760
        %602 = vmatpush1.msra.mxu0 %v601
        %603 = vmatprep.subr.mxu0 0.0
        %604 = vmatpush1.msra.mxu0 0.0
        %605 = vmatprep.subr.mxu0 0.0
        %606 = vmatpush1.msra.mxu0 0.0
        %607 = vmatprep.subr.mxu0 0.0
        %608 = vmatpush1.msra.mxu0 0.0
        %609 = vmatprep.subr.mxu0 0.0
        %610 = vmatpush1.msra.mxu0 0.0
        %611 = vmatprep.subr.mxu0 0.0
        %612 = vmatpush1.msra.mxu0 0.0
        %613 = vmatprep.subr.mxu0 0.0
        %614 = vmatpush1.msra.mxu0 0.0
        %615 = vmatprep.subr.mxu0 0.0
        %616 = vmatpush1.msra.mxu0 0.0
        %617 = vmatprep.subr.mxu0 0.0
        %618 = vmatpush1.msra.mxu0 0.0
        %619 = vmatprep.subr.mxu0 0.0
        %620 = vmatpush1.msra.mxu0 0.0
        %621 = vmatprep.subr.mxu0 0.0
        %622 = vmatpush1.msra.mxu0 0.0
        %623 = vmatprep.subr.mxu0 0.0
        %624 = vmatpush1.msra.mxu0 0.0
        %625 = vmatprep.subr.mxu0 0.0
        %626 = vmatpush1.msra.mxu0 0.0
        %627 = vmatprep.subr.mxu0 0.0
        %628 = vmatpush1.msra.mxu0 0.0
        %629 = vmatprep.subr.mxu0 0.0
        %630 = vmatpush1.msra.mxu0 0.0
        %631 = vmatprep.subr.mxu0 0.0
        %632 = vmatpush1.msra.mxu0 0.0
        %633 = vmatprep.subr.mxu0 0.0
        %634 = vmatpush1.msra.mxu0 0.0
        %635 = vmatprep.subr.mxu0 0.0
        %636 = vmatpush1.msra.mxu0 0.0
        %637 = vmatprep.subr.mxu0 0.0
        %638 = vmatpush1.msra.mxu0 0.0
        %639 = vmatprep.subr.mxu0 0.0
        %640 = vmatpush1.msra.mxu0 0.0
        %641 = vmatprep.subr.mxu0 0.0
        %642 = vmatpush1.msra.mxu0 0.0
        %643 = vmatprep.subr.mxu0 0.0
        %644 = vmatpush1.msra.mxu0 0.0
        %645 = vmatprep.subr.mxu0 0.0
        %646 = vmatpush1.msra.mxu0 0.0
        %647 = vmatprep.subr.mxu0 0.0
        %648 = vmatpush1.msra.mxu0 0.0
        %649 = vmatprep.subr.mxu0 0.0
        %650 = vmatpush1.msra.mxu0 0.0
        %651 = vmatprep.subr.mxu0 0.0
        %652 = vmatpush1.msra.mxu0 0.0
        %653 = vmatprep.subr.mxu0 0.0
        %654 = vmatpush1.msra.mxu0 0.0
        %655 = vmatprep.subr.mxu0 0.0
        %656 = vmatpush1.msra.mxu0 0.0
        %657 = vmatprep.subr.mxu0 0.0
        %658 = vmatpush1.msra.mxu0 0.0
        %659 = vmatprep.subr.mxu0 0.0
        %660 = vmatpush1.msra.mxu0 0.0
        %661 = vmatprep.subr.mxu0 0.0
        %662 = vmatpush1.msra.mxu0 0.0
        %663 = vmatprep.subr.mxu0 0.0
        %664 = vmatpush1.msra.mxu0 0.0
        %665 = vmatprep.mubr.f32.mxu0 0.0
        %v666 = vand.u32 %v264, 4294901760
        %v667 = vsub.f32 %v264, %v666
        %v668 = vand.u32 %v667, 4294901760
        %669 = vmatmul.mubr.f32.gmra.mrb[0].mxu0 %v668
        %v670 = vpop.f32.mrb[0].mxu0
        %v671 = vadd.f32 %v571, %v670
        %v672 = vpop.f32.mrb[0].mxu0
        %v673 = vadd.f32 %v573, %v672
        %674 = vmatprep.mubr.f32.mxu0 0.0
        %v675 = vand.u32 %v267, 4294901760
        %v676 = vsub.f32 %v267, %v675
        %v677 = vand.u32 %v676, 4294901760
        %678 = vmatmul.mubr.f32.gmra.mrb[0].mxu0 %v677
        %v679 = vpop.f32.mrb[0].mxu0
        %v680 = vadd.f32 %v579, %v679
        %v681 = vpop.f32.mrb[0].mxu0
        %v682 = vadd.f32 %v581, %v681
        %683 = vmatprep.mubr.f32.mxu0 0.0
        %v684 = vand.u32 %v270, 4294901760
        %v685 = vsub.f32 %v270, %v684
        %v686 = vand.u32 %v685, 4294901760
        %687 = vmatmul.mubr.f32.gmra.mrb[0].mxu0 %v686
        %v688 = vpop.f32.mrb[0].mxu0
        %v689 = vadd.f32 %v587, %v688
        %v690 = vpop.f32.mrb[0].mxu0
        %v691 = vadd.f32 %v589, %v690
        %692 = vmatprep.mubr.f32.mxu0 0.0
        %v693 = vand.u32 %v273, 4294901760
        %v694 = vsub.f32 %v273, %v693
        %v695 = vand.u32 %v694, 4294901760
        %696 = vmatmul.mubr.f32.gmra.mrb[0].mxu0 %v695
        %v697 = vpop.f32.mrb[0].mxu0
        %v698 = vadd.f32 %v595, %v697
        %v699 = vpop.f32.mrb[0].mxu0
        %v700 = vadd.f32 %v597, %v699
        %701 = vdwg.mxu0
        %v702 = vand.u32 %v278, 4294901760
        %v703 = vsub.f32 %v278, %v702
        %v704 = vand.u32 %v703, 4294901760
        %705 = vmatprep.subr.mxu0 %v704
        %v706 = vand.u32 %v276, 4294901760
        %v707 = vsub.f32 %v276, %v706
        %v708 = vand.u32 %v707, 4294901760
        %709 = vmatpush1.msra.mxu0 %v708
        %710 = vmatprep.subr.mxu0 0.0
        %711 = vmatpush1.msra.mxu0 0.0
        %712 = vmatprep.subr.mxu0 0.0
        %713 = vmatpush1.msra.mxu0 0.0
        %714 = vmatprep.subr.mxu0 0.0
        %715 = vmatpush1.msra.mxu0 0.0
        %716 = vmatprep.subr.mxu0 0.0
        %717 = vmatpush1.msra.mxu0 0.0
        %718 = vmatprep.subr.mxu0 0.0
        %719 = vmatpush1.msra.mxu0 0.0
        %720 = vmatprep.subr.mxu0 0.0
        %721 = vmatpush1.msra.mxu0 0.0
        %722 = vmatprep.subr.mxu0 0.0
        %723 = vmatpush1.msra.mxu0 0.0
        %724 = vmatprep.subr.mxu0 0.0
        %725 = vmatpush1.msra.mxu0 0.0
        %726 = vmatprep.subr.mxu0 0.0
        %727 = vmatpush1.msra.mxu0 0.0
        %728 = vmatprep.subr.mxu0 0.0
        %729 = vmatpush1.msra.mxu0 0.0
        %730 = vmatprep.subr.mxu0 0.0
        %731 = vmatpush1.msra.mxu0 0.0
        %732 = vmatprep.subr.mxu0 0.0
        %733 = vmatpush1.msra.mxu0 0.0
        %734 = vmatprep.subr.mxu0 0.0
        %735 = vmatpush1.msra.mxu0 0.0
        %736 = vmatprep.subr.mxu0 0.0
        %737 = vmatpush1.msra.mxu0 0.0
        %738 = vmatprep.subr.mxu0 0.0
        %739 = vmatpush1.msra.mxu0 0.0
        %740 = vmatprep.subr.mxu0 0.0
        %741 = vmatpush1.msra.mxu0 0.0
        %742 = vmatprep.subr.mxu0 0.0
        %743 = vmatpush1.msra.mxu0 0.0
        %744 = vmatprep.subr.mxu0 0.0
        %745 = vmatpush1.msra.mxu0 0.0
        %746 = vmatprep.subr.mxu0 0.0
        %747 = vmatpush1.msra.mxu0 0.0
        %748 = vmatprep.subr.mxu0 0.0
        %749 = vmatpush1.msra.mxu0 0.0
        %750 = vmatprep.subr.mxu0 0.0
        %751 = vmatpush1.msra.mxu0 0.0
        %752 = vmatprep.subr.mxu0 0.0
        %753 = vmatpush1.msra.mxu0 0.0
        %754 = vmatprep.subr.mxu0 0.0
        %755 = vmatpush1.msra.mxu0 0.0
        %756 = vmatprep.subr.mxu0 0.0
        %757 = vmatpush1.msra.mxu0 0.0
        %758 = vmatprep.subr.mxu0 0.0
        %759 = vmatpush1.msra.mxu0 0.0
        %760 = vmatprep.subr.mxu0 0.0
        %761 = vmatpush1.msra.mxu0 0.0
        %762 = vmatprep.subr.mxu0 0.0
        %763 = vmatpush1.msra.mxu0 0.0
        %764 = vmatprep.subr.mxu0 0.0
        %765 = vmatpush1.msra.mxu0 0.0
        %766 = vmatprep.subr.mxu0 0.0
        %767 = vmatpush1.msra.mxu0 0.0
        %768 = vmatprep.subr.mxu0 0.0
        %769 = vmatpush1.msra.mxu0 0.0
        %770 = vmatprep.subr.mxu0 0.0
        %771 = vmatpush1.msra.mxu0 0.0
        %772 = vmatprep.mubr.f32.mxu0 0.0
        %v773 = vand.u32 %v264, 4294901760
        %774 = vmatmul.mubr.f32.gmra.mrb[0].mxu0 %v773
        %v775 = vpop.f32.mrb[0].mxu0
        %v776 = vadd.f32 %v671, %v775
        %v777 = vpop.f32.mrb[0].mxu0
        %v778 = vadd.f32 %v673, %v777
        %779 = vmatprep.mubr.f32.mxu0 0.0
        %v780 = vand.u32 %v267, 4294901760
        %781 = vmatmul.mubr.f32.gmra.mrb[0].mxu0 %v780
        %v782 = vpop.f32.mrb[0].mxu0
        %v783 = vadd.f32 %v680, %v782
        %v784 = vpop.f32.mrb[0].mxu0
        %v785 = vadd.f32 %v682, %v784
        %786 = vmatprep.mubr.f32.mxu0 0.0
        %v787 = vand.u32 %v270, 4294901760
        %788 = vmatmul.mubr.f32.gmra.mrb[0].mxu0 %v787
        %v789 = vpop.f32.mrb[0].mxu0
        %v790 = vadd.f32 %v689, %v789
        %v791 = vpop.f32.mrb[0].mxu0
        %v792 = vadd.f32 %v691, %v791
        %793 = vmatprep.mubr.f32.mxu0 0.0
        %v794 = vand.u32 %v273, 4294901760
        %795 = vmatmul.mubr.f32.gmra.mrb[0].mxu0 %v794
        %v796 = vpop.f32.mrb[0].mxu0
        %v797 = vadd.f32 %v698, %v796
        %v798 = vpop.f32.mrb[0].mxu0
        %v799 = vadd.f32 %v700, %v798
        %800 = vdwg.mxu0
        %v801 = vand.u32 %v278, 4294901760
        %802 = vmatprep.subr.mxu0 %v801
        %v803 = vand.u32 %v276, 4294901760
        %804 = vmatpush1.msra.mxu0 %v803
        %805 = vmatprep.subr.mxu0 0.0
        %806 = vmatpush1.msra.mxu0 0.0
        %807 = vmatprep.subr.mxu0 0.0
        %808 = vmatpush1.msra.mxu0 0.0
        %809 = vmatprep.subr.mxu0 0.0
        %810 = vmatpush1.msra.mxu0 0.0
        %811 = vmatprep.subr.mxu0 0.0
        %812 = vmatpush1.msra.mxu0 0.0
        %813 = vmatprep.subr.mxu0 0.0
        %814 = vmatpush1.msra.mxu0 0.0
        %815 = vmatprep.subr.mxu0 0.0
        %816 = vmatpush1.msra.mxu0 0.0
        %817 = vmatprep.subr.mxu0 0.0
        %818 = vmatpush1.msra.mxu0 0.0
        %819 = vmatprep.subr.mxu0 0.0
        %820 = vmatpush1.msra.mxu0 0.0
        %821 = vmatprep.subr.mxu0 0.0
        %822 = vmatpush1.msra.mxu0 0.0
        %823 = vmatprep.subr.mxu0 0.0
        %824 = vmatpush1.msra.mxu0 0.0
        %825 = vmatprep.subr.mxu0 0.0
        %826 = vmatpush1.msra.mxu0 0.0
        %827 = vmatprep.subr.mxu0 0.0
        %828 = vmatpush1.msra.mxu0 0.0
        %829 = vmatprep.subr.mxu0 0.0
        %830 = vmatpush1.msra.mxu0 0.0
        %831 = vmatprep.subr.mxu0 0.0
        %832 = vmatpush1.msra.mxu0 0.0
        %833 = vmatprep.subr.mxu0 0.0
        %834 = vmatpush1.msra.mxu0 0.0
        %835 = vmatprep.subr.mxu0 0.0
        %836 = vmatpush1.msra.mxu0 0.0
        %837 = vmatprep.subr.mxu0 0.0
        %838 = vmatpush1.msra.mxu0 0.0
        %839 = vmatprep.subr.mxu0 0.0
        %840 = vmatpush1.msra.mxu0 0.0
        %841 = vmatprep.subr.mxu0 0.0
        %842 = vmatpush1.msra.mxu0 0.0
        %843 = vmatprep.subr.mxu0 0.0
        %844 = vmatpush1.msra.mxu0 0.0
        %845 = vmatprep.subr.mxu0 0.0
        %846 = vmatpush1.msra.mxu0 0.0
        %847 = vmatprep.subr.mxu0 0.0
        %848 = vmatpush1.msra.mxu0 0.0
        %849 = vmatprep.subr.mxu0 0.0
        %850 = vmatpush1.msra.mxu0 0.0
        %851 = vmatprep.subr.mxu0 0.0
        %852 = vmatpush1.msra.mxu0 0.0
        %853 = vmatprep.subr.mxu0 0.0
        %854 = vmatpush1.msra.mxu0 0.0
        %855 = vmatprep.subr.mxu0 0.0
        %856 = vmatpush1.msra.mxu0 0.0
        %857 = vmatprep.subr.mxu0 0.0
        %858 = vmatpush1.msra.mxu0 0.0
        %859 = vmatprep.subr.mxu0 0.0
        %860 = vmatpush1.msra.mxu0 0.0
        %861 = vmatprep.subr.mxu0 0.0
        %862 = vmatpush1.msra.mxu0 0.0
        %863 = vmatprep.subr.mxu0 0.0
        %864 = vmatpush1.msra.mxu0 0.0
        %865 = vmatprep.subr.mxu0 0.0
        %866 = vmatpush1.msra.mxu0 0.0
        %867 = vmatprep.mubr.f32.mxu0 0.0
        %v868 = vand.u32 %v264, 4294901760
        %869 = vmatmul.mubr.f32.gmra.mrb[0].mxu0 %v868
        %v870 = vpop.f32.mrb[0].mxu0
        %v871 = vadd.f32 %v776, %v870
        %v872 = vpop.f32.mrb[0].mxu0
        %v873 = vadd.f32 %v778, %v872
        %874 = vmatprep.mubr.f32.mxu0 0.0
        %v875 = vand.u32 %v267, 4294901760
        %876 = vmatmul.mubr.f32.gmra.mrb[0].mxu0 %v875
        %v877 = vpop.f32.mrb[0].mxu0
        %v878 = vadd.f32 %v783, %v877
        %v879 = vpop.f32.mrb[0].mxu0
        %v880 = vadd.f32 %v785, %v879
        %881 = vmatprep.mubr.f32.mxu0 0.0
        %v882 = vand.u32 %v270, 4294901760
        %883 = vmatmul.mubr.f32.gmra.mrb[0].mxu0 %v882
        %v884 = vpop.f32.mrb[0].mxu0
        %v885 = vadd.f32 %v790, %v884
        %v886 = vpop.f32.mrb[0].mxu0
        %v887 = vadd.f32 %v792, %v886
        %888 = vmatprep.mubr.f32.mxu0 0.0
        %v889 = vand.u32 %v273, 4294901760
        %890 = vmatmul.mubr.f32.gmra.mrb[0].mxu0 %v889
        %v891 = vpop.f32.mrb[0].mxu0
        %v892 = vadd.f32 %v797, %v891
        %v893 = vpop.f32.mrb[0].mxu0
        %v894 = vadd.f32 %v799, %v893
        %895 = vdwg.mxu0
        %v896 = vand.u32 %v282, 4294901760
        %897 = vmatprep.subr.mxu0 %v896
        %v898 = vand.u32 %v280, 4294901760
        %899 = vmatpush1.msra.mxu0 %v898
        %900 = vmatprep.subr.mxu0 0.0
        %901 = vmatpush1.msra.mxu0 0.0
        %902 = vmatprep.subr.mxu0 0.0
        %903 = vmatpush1.msra.mxu0 0.0
        %904 = vmatprep.subr.mxu0 0.0
        %905 = vmatpush1.msra.mxu0 0.0
        %906 = vmatprep.subr.mxu0 0.0
        %907 = vmatpush1.msra.mxu0 0.0
        %908 = vmatprep.subr.mxu0 0.0
        %909 = vmatpush1.msra.mxu0 0.0
        %910 = vmatprep.subr.mxu0 0.0
        %911 = vmatpush1.msra.mxu0 0.0
        %912 = vmatprep.subr.mxu0 0.0
        %913 = vmatpush1.msra.mxu0 0.0
        %914 = vmatprep.subr.mxu0 0.0
        %915 = vmatpush1.msra.mxu0 0.0
        %916 = vmatprep.subr.mxu0 0.0
        %917 = vmatpush1.msra.mxu0 0.0
        %918 = vmatprep.subr.mxu0 0.0
        %919 = vmatpush1.msra.mxu0 0.0
        %920 = vmatprep.subr.mxu0 0.0
        %921 = vmatpush1.msra.mxu0 0.0
        %922 = vmatprep.subr.mxu0 0.0
        %923 = vmatpush1.msra.mxu0 0.0
        %924 = vmatprep.subr.mxu0 0.0
        %925 = vmatpush1.msra.mxu0 0.0
        %926 = vmatprep.subr.mxu0 0.0
        %927 = vmatpush1.msra.mxu0 0.0
        %928 = vmatprep.subr.mxu0 0.0
        %929 = vmatpush1.msra.mxu0 0.0
        %930 = vmatprep.subr.mxu0 0.0
        %931 = vmatpush1.msra.mxu0 0.0
        %932 = vmatprep.subr.mxu0 0.0
        %933 = vmatpush1.msra.mxu0 0.0
        %934 = vmatprep.subr.mxu0 0.0
        %935 = vmatpush1.msra.mxu0 0.0
        %936 = vmatprep.subr.mxu0 0.0
        %937 = vmatpush1.msra.mxu0 0.0
        %938 = vmatprep.subr.mxu0 0.0
        %939 = vmatpush1.msra.mxu0 0.0
        %940 = vmatprep.subr.mxu0 0.0
        %941 = vmatpush1.msra.mxu0 0.0
        %942 = vmatprep.subr.mxu0 0.0
        %943 = vmatpush1.msra.mxu0 0.0
        %944 = vmatprep.subr.mxu0 0.0
        %945 = vmatpush1.msra.mxu0 0.0
        %946 = vmatprep.subr.mxu0 0.0
        %947 = vmatpush1.msra.mxu0 0.0
        %948 = vmatprep.subr.mxu0 0.0
        %949 = vmatpush1.msra.mxu0 0.0
        %950 = vmatprep.subr.mxu0 0.0
        %951 = vmatpush1.msra.mxu0 0.0
        %952 = vmatprep.subr.mxu0 0.0
        %953 = vmatpush1.msra.mxu0 0.0
        %954 = vmatprep.subr.mxu0 0.0
        %955 = vmatpush1.msra.mxu0 0.0
        %956 = vmatprep.subr.mxu0 0.0
        %957 = vmatpush1.msra.mxu0 0.0
        %958 = vmatprep.subr.mxu0 0.0
        %959 = vmatpush1.msra.mxu0 0.0
        %960 = vmatprep.subr.mxu0 0.0
        %961 = vmatpush1.msra.mxu0 0.0
        %962 = vmatprep.mubr.f32.mxu0 0.0
        %v963 = vand.u32 %v264, 4294901760
        %v964 = vsub.f32 %v264, %v963
        %v965 = vand.u32 %v964, 4294901760
        %v966 = vsub.f32 %v964, %v965
        %v967 = vand.u32 %v966, 4294901760
        %968 = vmatmul.mubr.f32.gmra.mrb[0].mxu0 %v967
        %v969 = vpop.f32.mrb[0].mxu0
        %v970 = vadd.f32 %v241, %v969
        %v971 = vpop.f32.mrb[0].mxu0
        %v972 = vadd.f32 %v241, %v971
        %973 = vmatprep.mubr.f32.mxu0 0.0
        %v974 = vand.u32 %v267, 4294901760
        %v975 = vsub.f32 %v267, %v974
        %v976 = vand.u32 %v975, 4294901760
        %v977 = vsub.f32 %v975, %v976
        %v978 = vand.u32 %v977, 4294901760
        %979 = vmatmul.mubr.f32.gmra.mrb[0].mxu0 %v978
        %v980 = vpop.f32.mrb[0].mxu0
        %v981 = vadd.f32 %v246, %v980
        %v982 = vpop.f32.mrb[0].mxu0
        %v983 = vadd.f32 %v246, %v982
        %984 = vmatprep.mubr.f32.mxu0 0.0
        %v985 = vand.u32 %v270, 4294901760
        %v986 = vsub.f32 %v270, %v985
        %v987 = vand.u32 %v986, 4294901760
        %v988 = vsub.f32 %v986, %v987
        %v989 = vand.u32 %v988, 4294901760
        %990 = vmatmul.mubr.f32.gmra.mrb[0].mxu0 %v989
        %v991 = vpop.f32.mrb[0].mxu0
        %v992 = vadd.f32 %v251, %v991
        %v993 = vpop.f32.mrb[0].mxu0
        %v994 = vadd.f32 %v251, %v993
        %995 = vmatprep.mubr.f32.mxu0 0.0
        %v996 = vand.u32 %v273, 4294901760
        %v997 = vsub.f32 %v273, %v996
        %v998 = vand.u32 %v997, 4294901760
        %v999 = vsub.f32 %v997, %v998
        %v1000 = vand.u32 %v999, 4294901760
        %1001 = vmatmul.mubr.f32.gmra.mrb[0].mxu0 %v1000
        %v1002 = vpop.f32.mrb[0].mxu0
        %v1003 = vadd.f32 %v256, %v1002
        %v1004 = vpop.f32.mrb[0].mxu0
        %v1005 = vadd.f32 %v256, %v1004
        %1006 = vdwg.mxu0
        %v1007 = vand.u32 %v282, 4294901760
        %v1008 = vsub.f32 %v282, %v1007
        %v1009 = vand.u32 %v1008, 4294901760
        %v1010 = vsub.f32 %v1008, %v1009
        %v1011 = vand.u32 %v1010, 4294901760
        %1012 = vmatprep.subr.mxu0 %v1011
        %v1013 = vand.u32 %v280, 4294901760
        %v1014 = vsub.f32 %v280, %v1013
        %v1015 = vand.u32 %v1014, 4294901760
        %v1016 = vsub.f32 %v1014, %v1015
        %v1017 = vand.u32 %v1016, 4294901760
        %1018 = vmatpush1.msra.mxu0 %v1017
        %1019 = vmatprep.subr.mxu0 0.0
        %1020 = vmatpush1.msra.mxu0 0.0
        %1021 = vmatprep.subr.mxu0 0.0
        %1022 = vmatpush1.msra.mxu0 0.0
        %1023 = vmatprep.subr.mxu0 0.0
        %1024 = vmatpush1.msra.mxu0 0.0
        %1025 = vmatprep.subr.mxu0 0.0
        %1026 = vmatpush1.msra.mxu0 0.0
        %1027 = vmatprep.subr.mxu0 0.0
        %1028 = vmatpush1.msra.mxu0 0.0
        %1029 = vmatprep.subr.mxu0 0.0
        %1030 = vmatpush1.msra.mxu0 0.0
        %1031 = vmatprep.subr.mxu0 0.0
        %1032 = vmatpush1.msra.mxu0 0.0
        %1033 = vmatprep.subr.mxu0 0.0
        %1034 = vmatpush1.msra.mxu0 0.0
        %1035 = vmatprep.subr.mxu0 0.0
        %1036 = vmatpush1.msra.mxu0 0.0
        %1037 = vmatprep.subr.mxu0 0.0
        %1038 = vmatpush1.msra.mxu0 0.0
        %1039 = vmatprep.subr.mxu0 0.0
        %1040 = vmatpush1.msra.mxu0 0.0
        %1041 = vmatprep.subr.mxu0 0.0
        %1042 = vmatpush1.msra.mxu0 0.0
        %1043 = vmatprep.subr.mxu0 0.0
        %1044 = vmatpush1.msra.mxu0 0.0
        %1045 = vmatprep.subr.mxu0 0.0
        %1046 = vmatpush1.msra.mxu0 0.0
        %1047 = vmatprep.subr.mxu0 0.0
        %1048 = vmatpush1.msra.mxu0 0.0
        %1049 = vmatprep.subr.mxu0 0.0
        %1050 = vmatpush1.msra.mxu0 0.0
        %1051 = vmatprep.subr.mxu0 0.0
        %1052 = vmatpush1.msra.mxu0 0.0
        %1053 = vmatprep.subr.mxu0 0.0
        %1054 = vmatpush1.msra.mxu0 0.0
        %1055 = vmatprep.subr.mxu0 0.0
        %1056 = vmatpush1.msra.mxu0 0.0
        %1057 = vmatprep.subr.mxu0 0.0
        %1058 = vmatpush1.msra.mxu0 0.0
        %1059 = vmatprep.subr.mxu0 0.0
        %1060 = vmatpush1.msra.mxu0 0.0
        %1061 = vmatprep.subr.mxu0 0.0
        %1062 = vmatpush1.msra.mxu0 0.0
        %1063 = vmatprep.subr.mxu0 0.0
        %1064 = vmatpush1.msra.mxu0 0.0
        %1065 = vmatprep.subr.mxu0 0.0
        %1066 = vmatpush1.msra.mxu0 0.0
        %1067 = vmatprep.subr.mxu0 0.0
        %1068 = vmatpush1.msra.mxu0 0.0
        %1069 = vmatprep.subr.mxu0 0.0
        %1070 = vmatpush1.msra.mxu0 0.0
        %1071 = vmatprep.subr.mxu0 0.0
        %1072 = vmatpush1.msra.mxu0 0.0
        %1073 = vmatprep.subr.mxu0 0.0
        %1074 = vmatpush1.msra.mxu0 0.0
        %1075 = vmatprep.subr.mxu0 0.0
        %1076 = vmatpush1.msra.mxu0 0.0
        %1077 = vmatprep.subr.mxu0 0.0
        %1078 = vmatpush1.msra.mxu0 0.0
        %1079 = vmatprep.subr.mxu0 0.0
        %1080 = vmatpush1.msra.mxu0 0.0
        %1081 = vmatprep.mubr.f32.mxu0 0.0
        %v1082 = vand.u32 %v264, 4294901760
        %1083 = vmatmul.mubr.f32.gmra.mrb[0].mxu0 %v1082
        %v1084 = vpop.f32.mrb[0].mxu0
        %v1085 = vadd.f32 %v970, %v1084
        %v1086 = vpop.f32.mrb[0].mxu0
        %v1087 = vadd.f32 %v972, %v1086
        %1088 = vmatprep.mubr.f32.mxu0 0.0
        %v1089 = vand.u32 %v267, 4294901760
        %1090 = vmatmul.mubr.f32.gmra.mrb[0].mxu0 %v1089
        %v1091 = vpop.f32.mrb[0].mxu0
        %v1092 = vadd.f32 %v981, %v1091
        %v1093 = vpop.f32.mrb[0].mxu0
        %v1094 = vadd.f32 %v983, %v1093
        %1095 = vmatprep.mubr.f32.mxu0 0.0
        %v1096 = vand.u32 %v270, 4294901760
        %1097 = vmatmul.mubr.f32.gmra.mrb[0].mxu0 %v1096
        %v1098 = vpop.f32.mrb[0].mxu0
        %v1099 = vadd.f32 %v992, %v1098
        %v1100 = vpop.f32.mrb[0].mxu0
        %v1101 = vadd.f32 %v994, %v1100
        %1102 = vmatprep.mubr.f32.mxu0 0.0
        %v1103 = vand.u32 %v273, 4294901760
        %1104 = vmatmul.mubr.f32.gmra.mrb[0].mxu0 %v1103
        %v1105 = vpop.f32.mrb[0].mxu0
        %v1106 = vadd.f32 %v1003, %v1105
        %v1107 = vpop.f32.mrb[0].mxu0
        %v1108 = vadd.f32 %v1005, %v1107
        %1109 = vdwg.mxu0
        %v1110 = vand.u32 %v282, 4294901760
        %v1111 = vsub.f32 %v282, %v1110
        %1112 = vmatprep.subr.mxu0 %v1111
        %v1113 = vand.u32 %v280, 4294901760
        %v1114 = vsub.f32 %v280, %v1113
        %1115 = vmatpush1.msra.mxu0 %v1114
        %1116 = vmatprep.subr.mxu0 0.0
        %1117 = vmatpush1.msra.mxu0 0.0
        %1118 = vmatprep.subr.mxu0 0.0
        %1119 = vmatpush1.msra.mxu0 0.0
        %1120 = vmatprep.subr.mxu0 0.0
        %1121 = vmatpush1.msra.mxu0 0.0
        %1122 = vmatprep.subr.mxu0 0.0
        %1123 = vmatpush1.msra.mxu0 0.0
        %1124 = vmatprep.subr.mxu0 0.0
        %1125 = vmatpush1.msra.mxu0 0.0
        %1126 = vmatprep.subr.mxu0 0.0
        %1127 = vmatpush1.msra.mxu0 0.0
        %1128 = vmatprep.subr.mxu0 0.0
        %1129 = vmatpush1.msra.mxu0 0.0
        %1130 = vmatprep.subr.mxu0 0.0
        %1131 = vmatpush1.msra.mxu0 0.0
        %1132 = vmatprep.subr.mxu0 0.0
        %1133 = vmatpush1.msra.mxu0 0.0
        %1134 = vmatprep.subr.mxu0 0.0
        %1135 = vmatpush1.msra.mxu0 0.0
        %1136 = vmatprep.subr.mxu0 0.0
        %1137 = vmatpush1.msra.mxu0 0.0
        %1138 = vmatprep.subr.mxu0 0.0
        %1139 = vmatpush1.msra.mxu0 0.0
        %1140 = vmatprep.subr.mxu0 0.0
        %1141 = vmatpush1.msra.mxu0 0.0
        %1142 = vmatprep.subr.mxu0 0.0
        %1143 = vmatpush1.msra.mxu0 0.0
        %1144 = vmatprep.subr.mxu0 0.0
        %1145 = vmatpush1.msra.mxu0 0.0
        %1146 = vmatprep.subr.mxu0 0.0
        %1147 = vmatpush1.msra.mxu0 0.0
        %1148 = vmatprep.subr.mxu0 0.0
        %1149 = vmatpush1.msra.mxu0 0.0
        %1150 = vmatprep.subr.mxu0 0.0
        %1151 = vmatpush1.msra.mxu0 0.0
        %1152 = vmatprep.subr.mxu0 0.0
        %1153 = vmatpush1.msra.mxu0 0.0
        %1154 = vmatprep.subr.mxu0 0.0
        %1155 = vmatpush1.msra.mxu0 0.0
        %1156 = vmatprep.subr.mxu0 0.0
        %1157 = vmatpush1.msra.mxu0 0.0
        %1158 = vmatprep.subr.mxu0 0.0
        %1159 = vmatpush1.msra.mxu0 0.0
        %1160 = vmatprep.subr.mxu0 0.0
        %1161 = vmatpush1.msra.mxu0 0.0
        %1162 = vmatprep.subr.mxu0 0.0
        %1163 = vmatpush1.msra.mxu0 0.0
        %1164 = vmatprep.subr.mxu0 0.0
        %1165 = vmatpush1.msra.mxu0 0.0
        %1166 = vmatprep.subr.mxu0 0.0
        %1167 = vmatpush1.msra.mxu0 0.0
        %1168 = vmatprep.subr.mxu0 0.0
        %1169 = vmatpush1.msra.mxu0 0.0
        %1170 = vmatprep.subr.mxu0 0.0
        %1171 = vmatpush1.msra.mxu0 0.0
        %1172 = vmatprep.subr.mxu0 0.0
        %1173 = vmatpush1.msra.mxu0 0.0
        %1174 = vmatprep.subr.mxu0 0.0
        %1175 = vmatpush1.msra.mxu0 0.0
        %1176 = vmatprep.subr.mxu0 0.0
        %1177 = vmatpush1.msra.mxu0 0.0
        %1178 = vmatprep.mubr.f32.mxu0 0.0
        %v1179 = vand.u32 %v264, 4294901760
        %v1180 = vsub.f32 %v264, %v1179
        %1181 = vmatmul.mubr.f32.gmra.mrb[0].mxu0 %v1180
        %v1182 = vpop.f32.mrb[0].mxu0
        %v1183 = vadd.f32 %v1085, %v1182
        %v1184 = vpop.f32.mrb[0].mxu0
        %v1185 = vadd.f32 %v1087, %v1184
        %1186 = vmatprep.mubr.f32.mxu0 0.0
        %v1187 = vand.u32 %v267, 4294901760
        %v1188 = vsub.f32 %v267, %v1187
        %1189 = vmatmul.mubr.f32.gmra.mrb[0].mxu0 %v1188
        %v1190 = vpop.f32.mrb[0].mxu0
        %v1191 = vadd.f32 %v1092, %v1190
        %v1192 = vpop.f32.mrb[0].mxu0
        %v1193 = vadd.f32 %v1094, %v1192
        %1194 = vmatprep.mubr.f32.mxu0 0.0
        %v1195 = vand.u32 %v270, 4294901760
        %v1196 = vsub.f32 %v270, %v1195
        %1197 = vmatmul.mubr.f32.gmra.mrb[0].mxu0 %v1196
        %v1198 = vpop.f32.mrb[0].mxu0
        %v1199 = vadd.f32 %v1099, %v1198
        %v1200 = vpop.f32.mrb[0].mxu0
        %v1201 = vadd.f32 %v1101, %v1200
        %1202 = vmatprep.mubr.f32.mxu0 0.0
        %v1203 = vand.u32 %v273, 4294901760
        %v1204 = vsub.f32 %v273, %v1203
        %1205 = vmatmul.mubr.f32.gmra.mrb[0].mxu0 %v1204
        %v1206 = vpop.f32.mrb[0].mxu0
        %v1207 = vadd.f32 %v1106, %v1206
        %v1208 = vpop.f32.mrb[0].mxu0
        %v1209 = vadd.f32 %v1108, %v1208
        %1210 = vdwg.mxu0
        %v1211 = vand.u32 %v282, 4294901760
        %1212 = vmatprep.subr.mxu0 %v1211
        %v1213 = vand.u32 %v280, 4294901760
        %1214 = vmatpush1.msra.mxu0 %v1213
        %1215 = vmatprep.subr.mxu0 0.0
        %1216 = vmatpush1.msra.mxu0 0.0
        %1217 = vmatprep.subr.mxu0 0.0
        %1218 = vmatpush1.msra.mxu0 0.0
        %1219 = vmatprep.subr.mxu0 0.0
        %1220 = vmatpush1.msra.mxu0 0.0
        %1221 = vmatprep.subr.mxu0 0.0
        %1222 = vmatpush1.msra.mxu0 0.0
        %1223 = vmatprep.subr.mxu0 0.0
        %1224 = vmatpush1.msra.mxu0 0.0
        %1225 = vmatprep.subr.mxu0 0.0
        %1226 = vmatpush1.msra.mxu0 0.0
        %1227 = vmatprep.subr.mxu0 0.0
        %1228 = vmatpush1.msra.mxu0 0.0
        %1229 = vmatprep.subr.mxu0 0.0
        %1230 = vmatpush1.msra.mxu0 0.0
        %1231 = vmatprep.subr.mxu0 0.0
        %1232 = vmatpush1.msra.mxu0 0.0
        %1233 = vmatprep.subr.mxu0 0.0
        %1234 = vmatpush1.msra.mxu0 0.0
        %1235 = vmatprep.subr.mxu0 0.0
        %1236 = vmatpush1.msra.mxu0 0.0
        %1237 = vmatprep.subr.mxu0 0.0
        %1238 = vmatpush1.msra.mxu0 0.0
        %1239 = vmatprep.subr.mxu0 0.0
        %1240 = vmatpush1.msra.mxu0 0.0
        %1241 = vmatprep.subr.mxu0 0.0
        %1242 = vmatpush1.msra.mxu0 0.0
        %1243 = vmatprep.subr.mxu0 0.0
        %1244 = vmatpush1.msra.mxu0 0.0
        %1245 = vmatprep.subr.mxu0 0.0
        %1246 = vmatpush1.msra.mxu0 0.0
        %1247 = vmatprep.subr.mxu0 0.0
        %1248 = vmatpush1.msra.mxu0 0.0
        %1249 = vmatprep.subr.mxu0 0.0
        %1250 = vmatpush1.msra.mxu0 0.0
        %1251 = vmatprep.subr.mxu0 0.0
        %1252 = vmatpush1.msra.mxu0 0.0
        %1253 = vmatprep.subr.mxu0 0.0
        %1254 = vmatpush1.msra.mxu0 0.0
        %1255 = vmatprep.subr.mxu0 0.0
        %1256 = vmatpush1.msra.mxu0 0.0
        %1257 = vmatprep.subr.mxu0 0.0
        %1258 = vmatpush1.msra.mxu0 0.0
        %1259 = vmatprep.subr.mxu0 0.0
        %1260 = vmatpush1.msra.mxu0 0.0
        %1261 = vmatprep.subr.mxu0 0.0
        %1262 = vmatpush1.msra.mxu0 0.0
        %1263 = vmatprep.subr.mxu0 0.0
        %1264 = vmatpush1.msra.mxu0 0.0
        %1265 = vmatprep.subr.mxu0 0.0
        %1266 = vmatpush1.msra.mxu0 0.0
        %1267 = vmatprep.subr.mxu0 0.0
        %1268 = vmatpush1.msra.mxu0 0.0
        %1269 = vmatprep.subr.mxu0 0.0
        %1270 = vmatpush1.msra.mxu0 0.0
        %1271 = vmatprep.subr.mxu0 0.0
        %1272 = vmatpush1.msra.mxu0 0.0
        %1273 = vmatprep.subr.mxu0 0.0
        %1274 = vmatpush1.msra.mxu0 0.0
        %1275 = vmatprep.subr.mxu0 0.0
        %1276 = vmatpush1.msra.mxu0 0.0
        %1277 = vmatprep.mubr.f32.mxu0 0.0
        %v1278 = vand.u32 %v264, 4294901760
        %v1279 = vsub.f32 %v264, %v1278
        %v1280 = vand.u32 %v1279, 4294901760
        %1281 = vmatmul.mubr.f32.gmra.mrb[0].mxu0 %v1280
        %v1282 = vpop.f32.mrb[0].mxu0
        %v1283 = vadd.f32 %v1183, %v1282
        %v1284 = vpop.f32.mrb[0].mxu0
        %v1285 = vadd.f32 %v1185, %v1284
        %1286 = vmatprep.mubr.f32.mxu0 0.0
        %v1287 = vand.u32 %v267, 4294901760
        %v1288 = vsub.f32 %v267, %v1287
        %v1289 = vand.u32 %v1288, 4294901760
        %1290 = vmatmul.mubr.f32.gmra.mrb[0].mxu0 %v1289
        %v1291 = vpop.f32.mrb[0].mxu0
        %v1292 = vadd.f32 %v1191, %v1291
        %v1293 = vpop.f32.mrb[0].mxu0
        %v1294 = vadd.f32 %v1193, %v1293
        %1295 = vmatprep.mubr.f32.mxu0 0.0
        %v1296 = vand.u32 %v270, 4294901760
        %v1297 = vsub.f32 %v270, %v1296
        %v1298 = vand.u32 %v1297, 4294901760
        %1299 = vmatmul.mubr.f32.gmra.mrb[0].mxu0 %v1298
        %v1300 = vpop.f32.mrb[0].mxu0
        %v1301 = vadd.f32 %v1199, %v1300
        %v1302 = vpop.f32.mrb[0].mxu0
        %v1303 = vadd.f32 %v1201, %v1302
        %1304 = vmatprep.mubr.f32.mxu0 0.0
        %v1305 = vand.u32 %v273, 4294901760
        %v1306 = vsub.f32 %v273, %v1305
        %v1307 = vand.u32 %v1306, 4294901760
        %1308 = vmatmul.mubr.f32.gmra.mrb[0].mxu0 %v1307
        %v1309 = vpop.f32.mrb[0].mxu0
        %v1310 = vadd.f32 %v1207, %v1309
        %v1311 = vpop.f32.mrb[0].mxu0
        %v1312 = vadd.f32 %v1209, %v1311
        %1313 = vdwg.mxu0
        %v1314 = vand.u32 %v282, 4294901760
        %v1315 = vsub.f32 %v282, %v1314
        %v1316 = vand.u32 %v1315, 4294901760
        %1317 = vmatprep.subr.mxu0 %v1316
        %v1318 = vand.u32 %v280, 4294901760
        %v1319 = vsub.f32 %v280, %v1318
        %v1320 = vand.u32 %v1319, 4294901760
        %1321 = vmatpush1.msra.mxu0 %v1320
        %1322 = vmatprep.subr.mxu0 0.0
        %1323 = vmatpush1.msra.mxu0 0.0
        %1324 = vmatprep.subr.mxu0 0.0
        %1325 = vmatpush1.msra.mxu0 0.0
        %1326 = vmatprep.subr.mxu0 0.0
        %1327 = vmatpush1.msra.mxu0 0.0
        %1328 = vmatprep.subr.mxu0 0.0
        %1329 = vmatpush1.msra.mxu0 0.0
        %1330 = vmatprep.subr.mxu0 0.0
        %1331 = vmatpush1.msra.mxu0 0.0
        %1332 = vmatprep.subr.mxu0 0.0
        %1333 = vmatpush1.msra.mxu0 0.0
        %1334 = vmatprep.subr.mxu0 0.0
        %1335 = vmatpush1.msra.mxu0 0.0
        %1336 = vmatprep.subr.mxu0 0.0
        %1337 = vmatpush1.msra.mxu0 0.0
        %1338 = vmatprep.subr.mxu0 0.0
        %1339 = vmatpush1.msra.mxu0 0.0
        %1340 = vmatprep.subr.mxu0 0.0
        %1341 = vmatpush1.msra.mxu0 0.0
        %1342 = vmatprep.subr.mxu0 0.0
        %1343 = vmatpush1.msra.mxu0 0.0
        %1344 = vmatprep.subr.mxu0 0.0
        %1345 = vmatpush1.msra.mxu0 0.0
        %1346 = vmatprep.subr.mxu0 0.0
        %1347 = vmatpush1.msra.mxu0 0.0
        %1348 = vmatprep.subr.mxu0 0.0
        %1349 = vmatpush1.msra.mxu0 0.0
        %1350 = vmatprep.subr.mxu0 0.0
        %1351 = vmatpush1.msra.mxu0 0.0
        %1352 = vmatprep.subr.mxu0 0.0
        %1353 = vmatpush1.msra.mxu0 0.0
        %1354 = vmatprep.subr.mxu0 0.0
        %1355 = vmatpush1.msra.mxu0 0.0
        %1356 = vmatprep.subr.mxu0 0.0
        %1357 = vmatpush1.msra.mxu0 0.0
        %1358 = vmatprep.subr.mxu0 0.0
        %1359 = vmatpush1.msra.mxu0 0.0
        %1360 = vmatprep.subr.mxu0 0.0
        %1361 = vmatpush1.msra.mxu0 0.0
        %1362 = vmatprep.subr.mxu0 0.0
        %1363 = vmatpush1.msra.mxu0 0.0
        %1364 = vmatprep.subr.mxu0 0.0
        %1365 = vmatpush1.msra.mxu0 0.0
        %1366 = vmatprep.subr.mxu0 0.0
        %1367 = vmatpush1.msra.mxu0 0.0
        %1368 = vmatprep.subr.mxu0 0.0
        %1369 = vmatpush1.msra.mxu0 0.0
        %1370 = vmatprep.subr.mxu0 0.0
        %1371 = vmatpush1.msra.mxu0 0.0
        %1372 = vmatprep.subr.mxu0 0.0
        %1373 = vmatpush1.msra.mxu0 0.0
        %1374 = vmatprep.subr.mxu0 0.0
        %1375 = vmatpush1.msra.mxu0 0.0
        %1376 = vmatprep.subr.mxu0 0.0
        %1377 = vmatpush1.msra.mxu0 0.0
        %1378 = vmatprep.subr.mxu0 0.0
        %1379 = vmatpush1.msra.mxu0 0.0
        %1380 = vmatprep.subr.mxu0 0.0
        %1381 = vmatpush1.msra.mxu0 0.0
        %1382 = vmatprep.subr.mxu0 0.0
        %1383 = vmatpush1.msra.mxu0 0.0
        %1384 = vmatprep.mubr.f32.mxu0 0.0
        %v1385 = vand.u32 %v264, 4294901760
        %1386 = vmatmul.mubr.f32.gmra.mrb[0].mxu0 %v1385
        %v1387 = vpop.f32.mrb[0].mxu0
        %v1388 = vadd.f32 %v1283, %v1387
        %v1389 = vpop.f32.mrb[0].mxu0
        %v1390 = vadd.f32 %v1285, %v1389
        %1391 = vmatprep.mubr.f32.mxu0 0.0
        %v1392 = vand.u32 %v267, 4294901760
        %1393 = vmatmul.mubr.f32.gmra.mrb[0].mxu0 %v1392
        %v1394 = vpop.f32.mrb[0].mxu0
        %v1395 = vadd.f32 %v1292, %v1394
        %v1396 = vpop.f32.mrb[0].mxu0
        %v1397 = vadd.f32 %v1294, %v1396
        %1398 = vmatprep.mubr.f32.mxu0 0.0
        %v1399 = vand.u32 %v270, 4294901760
        %1400 = vmatmul.mubr.f32.gmra.mrb[0].mxu0 %v1399
        %v1401 = vpop.f32.mrb[0].mxu0
        %v1402 = vadd.f32 %v1301, %v1401
        %v1403 = vpop.f32.mrb[0].mxu0
        %v1404 = vadd.f32 %v1303, %v1403
        %1405 = vmatprep.mubr.f32.mxu0 0.0
        %v1406 = vand.u32 %v273, 4294901760
        %1407 = vmatmul.mubr.f32.gmra.mrb[0].mxu0 %v1406
        %v1408 = vpop.f32.mrb[0].mxu0
        %v1409 = vadd.f32 %v1310, %v1408
        %v1410 = vpop.f32.mrb[0].mxu0
        %v1411 = vadd.f32 %v1312, %v1410
        %1412 = vdwg.mxu0
        %v1413 = vand.u32 %v282, 4294901760
        %1414 = vmatprep.subr.mxu0 %v1413
        %v1415 = vand.u32 %v280, 4294901760
        %1416 = vmatpush1.msra.mxu0 %v1415
        %1417 = vmatprep.subr.mxu0 0.0
        %1418 = vmatpush1.msra.mxu0 0.0
        %1419 = vmatprep.subr.mxu0 0.0
        %1420 = vmatpush1.msra.mxu0 0.0
        %1421 = vmatprep.subr.mxu0 0.0
        %1422 = vmatpush1.msra.mxu0 0.0
        %1423 = vmatprep.subr.mxu0 0.0
        %1424 = vmatpush1.msra.mxu0 0.0
        %1425 = vmatprep.subr.mxu0 0.0
        %1426 = vmatpush1.msra.mxu0 0.0
        %1427 = vmatprep.subr.mxu0 0.0
        %1428 = vmatpush1.msra.mxu0 0.0
        %1429 = vmatprep.subr.mxu0 0.0
        %1430 = vmatpush1.msra.mxu0 0.0
        %1431 = vmatprep.subr.mxu0 0.0
        %1432 = vmatpush1.msra.mxu0 0.0
        %1433 = vmatprep.subr.mxu0 0.0
        %1434 = vmatpush1.msra.mxu0 0.0
        %1435 = vmatprep.subr.mxu0 0.0
        %1436 = vmatpush1.msra.mxu0 0.0
        %1437 = vmatprep.subr.mxu0 0.0
        %1438 = vmatpush1.msra.mxu0 0.0
        %1439 = vmatprep.subr.mxu0 0.0
        %1440 = vmatpush1.msra.mxu0 0.0
        %1441 = vmatprep.subr.mxu0 0.0
        %1442 = vmatpush1.msra.mxu0 0.0
        %1443 = vmatprep.subr.mxu0 0.0
        %1444 = vmatpush1.msra.mxu0 0.0
        %1445 = vmatprep.subr.mxu0 0.0
        %1446 = vmatpush1.msra.mxu0 0.0
        %1447 = vmatprep.subr.mxu0 0.0
        %1448 = vmatpush1.msra.mxu0 0.0
        %1449 = vmatprep.subr.mxu0 0.0
        %1450 = vmatpush1.msra.mxu0 0.0
        %1451 = vmatprep.subr.mxu0 0.0
        %1452 = vmatpush1.msra.mxu0 0.0
        %1453 = vmatprep.subr.mxu0 0.0
        %1454 = vmatpush1.msra.mxu0 0.0
        %1455 = vmatprep.subr.mxu0 0.0
        %1456 = vmatpush1.msra.mxu0 0.0
        %1457 = vmatprep.subr.mxu0 0.0
        %1458 = vmatpush1.msra.mxu0 0.0
        %1459 = vmatprep.subr.mxu0 0.0
        %1460 = vmatpush1.msra.mxu0 0.0
        %1461 = vmatprep.subr.mxu0 0.0
        %1462 = vmatpush1.msra.mxu0 0.0
        %1463 = vmatprep.subr.mxu0 0.0
        %1464 = vmatpush1.msra.mxu0 0.0
        %1465 = vmatprep.subr.mxu0 0.0
        %1466 = vmatpush1.msra.mxu0 0.0
        %1467 = vmatprep.subr.mxu0 0.0
        %1468 = vmatpush1.msra.mxu0 0.0
        %1469 = vmatprep.subr.mxu0 0.0
        %1470 = vmatpush1.msra.mxu0 0.0
        %1471 = vmatprep.subr.mxu0 0.0
        %1472 = vmatpush1.msra.mxu0 0.0
        %1473 = vmatprep.subr.mxu0 0.0
        %1474 = vmatpush1.msra.mxu0 0.0
        %1475 = vmatprep.subr.mxu0 0.0
        %1476 = vmatpush1.msra.mxu0 0.0
        %1477 = vmatprep.subr.mxu0 0.0
        %1478 = vmatpush1.msra.mxu0 0.0
        %1479 = vmatprep.mubr.f32.mxu0 0.0
        %v1480 = vand.u32 %v264, 4294901760
        %1481 = vmatmul.mubr.f32.gmra.mrb[0].mxu0 %v1480
        %v1482 = vpop.f32.mrb[0].mxu0
        %v1483 = vadd.f32 %v1388, %v1482
        %v1484 = vpop.f32.mrb[0].mxu0
        %v1485 = vadd.f32 %v1390, %v1484
        %1486 = vmatprep.mubr.f32.mxu0 0.0
        %v1487 = vand.u32 %v267, 4294901760
        %1488 = vmatmul.mubr.f32.gmra.mrb[0].mxu0 %v1487
        %v1489 = vpop.f32.mrb[0].mxu0
        %v1490 = vadd.f32 %v1395, %v1489
        %v1491 = vpop.f32.mrb[0].mxu0
        %v1492 = vadd.f32 %v1397, %v1491
        %1493 = vmatprep.mubr.f32.mxu0 0.0
        %v1494 = vand.u32 %v270, 4294901760
        %1495 = vmatmul.mubr.f32.gmra.mrb[0].mxu0 %v1494
        %v1496 = vpop.f32.mrb[0].mxu0
        %v1497 = vadd.f32 %v1402, %v1496
        %v1498 = vpop.f32.mrb[0].mxu0
        %v1499 = vadd.f32 %v1404, %v1498
        %1500 = vmatprep.mubr.f32.mxu0 0.0
        %v1501 = vand.u32 %v273, 4294901760
        %1502 = vmatmul.mubr.f32.gmra.mrb[0].mxu0 %v1501
        %v1503 = vpop.f32.mrb[0].mxu0
        %v1504 = vadd.f32 %v1409, %v1503
        %v1505 = vpop.f32.mrb[0].mxu0
        %v1506 = vadd.f32 %v1411, %v1505
        %1507 = vdwg.mxu0
        %v1508 = vmax.f32 %v871, 0.0
        %v1509 = vmax.f32 %v873, 0.0
        %v1510 = vmax.f32 %v1483, 0.0
        %v1511 = vmax.f32 %v1485, 0.0
        %v1512 = vmax.f32 %v878, 0.0
        %v1513 = vmax.f32 %v880, 0.0
        %v1514 = vmax.f32 %v1490, 0.0
        %v1515 = vmax.f32 %v1492, 0.0
        %v1516 = vmax.f32 %v885, 0.0
        %v1517 = vmax.f32 %v887, 0.0
        %v1518 = vmax.f32 %v1497, 0.0
        %v1519 = vmax.f32 %v1499, 0.0
        %v1520 = vmax.f32 %v892, 0.0
        %v1521 = vmax.f32 %v894, 0.0
        %v1522 = vmax.f32 %v1504, 0.0
        %v1523 = vmax.f32 %v1506, 0.0
        %1525 = vset.pattern.permute.xlu0 0
        %1526 = vperm.xlu0 %1525, %v233
        %v1527 = vpop.permute.xlu0 %1526
        %1530 = vset.pattern.permute.xlu0 0
        %1531 = vperm.xlu0 %1530, %v234
        %v1532 = vpop.permute.xlu0 %1531
        %1535 = vset.pattern.permute.xlu0 0
        %1536 = vperm.xlu0 %1535, %v235
        %v1537 = vpop.permute.xlu0 %1536
        %vm1539 = vcmask 261120
        %v1541 = vsel %vm1539, %v230, 0
        %v1544 = vsel %vm1539, %v231, 0
        %v1547 = vsel %vm1539, %v232, 0
        %v1549 = vand.u32 %v1509, 4294901760
        %1550 = vmatprep.subr.mxu0 %v1549
        %v1551 = vand.u32 %v1508, 4294901760
        %1552 = vmatpush1.msra.mxu0 %v1551
        %v1553 = vand.u32 %v1513, 4294901760
        %1554 = vmatprep.subr.mxu0 %v1553
        %v1555 = vand.u32 %v1512, 4294901760
        %1556 = vmatpush1.msra.mxu0 %v1555
        %v1557 = vand.u32 %v1517, 4294901760
        %1558 = vmatprep.subr.mxu0 %v1557
        %v1559 = vand.u32 %v1516, 4294901760
        %1560 = vmatpush1.msra.mxu0 %v1559
        %v1561 = vand.u32 %v1521, 4294901760
        %1562 = vmatprep.subr.mxu0 %v1561
        %v1563 = vand.u32 %v1520, 4294901760
        %1564 = vmatpush1.msra.mxu0 %v1563
        %1565 = vmatprep.subr.mxu0 0.0
        %1566 = vmatpush1.msra.mxu0 0.0
        %1567 = vmatprep.subr.mxu0 0.0
        %1568 = vmatpush1.msra.mxu0 0.0
        %1569 = vmatprep.subr.mxu0 0.0
        %1570 = vmatpush1.msra.mxu0 0.0
        %1571 = vmatprep.subr.mxu0 0.0
        %1572 = vmatpush1.msra.mxu0 0.0
        %1573 = vmatprep.subr.mxu0 0.0
        %1574 = vmatpush1.msra.mxu0 0.0
        %1575 = vmatprep.subr.mxu0 0.0
        %1576 = vmatpush1.msra.mxu0 0.0
        %1577 = vmatprep.subr.mxu0 0.0
        %1578 = vmatpush1.msra.mxu0 0.0
        %1579 = vmatprep.subr.mxu0 0.0
        %1580 = vmatpush1.msra.mxu0 0.0
        %1581 = vmatprep.subr.mxu0 0.0
        %1582 = vmatpush1.msra.mxu0 0.0
        %1583 = vmatprep.subr.mxu0 0.0
        %1584 = vmatpush1.msra.mxu0 0.0
        %1585 = vmatprep.subr.mxu0 0.0
        %1586 = vmatpush1.msra.mxu0 0.0
        %1587 = vmatprep.subr.mxu0 0.0
        %1588 = vmatpush1.msra.mxu0 0.0
        %1589 = vmatprep.subr.mxu0 0.0
        %1590 = vmatpush1.msra.mxu0 0.0
        %1591 = vmatprep.subr.mxu0 0.0
        %1592 = vmatpush1.msra.mxu0 0.0
        %1593 = vmatprep.subr.mxu0 0.0
        %1594 = vmatpush1.msra.mxu0 0.0
        %1595 = vmatprep.subr.mxu0 0.0
        %1596 = vmatpush1.msra.mxu0 0.0
        %1597 = vmatprep.subr.mxu0 0.0
        %1598 = vmatpush1.msra.mxu0 0.0
        %1599 = vmatprep.subr.mxu0 0.0
        %1600 = vmatpush1.msra.mxu0 0.0
        %1601 = vmatprep.subr.mxu0 0.0
        %1602 = vmatpush1.msra.mxu0 0.0
        %1603 = vmatprep.subr.mxu0 0.0
        %1604 = vmatpush1.msra.mxu0 0.0
        %1605 = vmatprep.subr.mxu0 0.0
        %1606 = vmatpush1.msra.mxu0 0.0
        %1607 = vmatprep.subr.mxu0 0.0
        %1608 = vmatpush1.msra.mxu0 0.0
        %1609 = vmatprep.subr.mxu0 0.0
        %1610 = vmatpush1.msra.mxu0 0.0
        %1611 = vmatprep.subr.mxu0 0.0
        %1612 = vmatpush1.msra.mxu0 0.0
        %1613 = vmatprep.subr.mxu0 0.0
        %1614 = vmatpush1.msra.mxu0 0.0
        %1615 = vmatprep.subr.mxu0 0.0
        %1616 = vmatpush1.msra.mxu0 0.0
        %1617 = vmatprep.subr.mxu0 0.0
        %1618 = vmatpush1.msra.mxu0 0.0
        %1619 = vmatprep.subr.mxu0 0.0
        %1620 = vmatpush1.msra.mxu0 0.0
        %1621 = vmatprep.mubr.f32.mxu0 0.0
        %v1622 = vand.u32 %v1541, 4294901760
        %v1623 = vsub.f32 %v1541, %v1622
        %v1624 = vand.u32 %v1623, 4294901760
        %v1625 = vsub.f32 %v1623, %v1624
        %v1626 = vand.u32 %v1625, 4294901760
        %1627 = vmatmul.mubr.f32.gmra.mrb[0].mxu0 %v1626
        %v1628 = vpop.f32.mrb[0].mxu0
        %v1629 = vadd.f32 %v1527, %v1628
        %v1630 = vpop.f32.mrb[0].mxu0
        %v1631 = vadd.f32 %v1527, %v1630
        %1632 = vmatprep.mubr.f32.mxu0 0.0
        %v1633 = vand.u32 %v1544, 4294901760
        %v1634 = vsub.f32 %v1544, %v1633
        %v1635 = vand.u32 %v1634, 4294901760
        %v1636 = vsub.f32 %v1634, %v1635
        %v1637 = vand.u32 %v1636, 4294901760
        %1638 = vmatmul.mubr.f32.gmra.mrb[0].mxu0 %v1637
        %v1639 = vpop.f32.mrb[0].mxu0
        %v1640 = vadd.f32 %v1532, %v1639
        %v1641 = vpop.f32.mrb[0].mxu0
        %v1642 = vadd.f32 %v1532, %v1641
        %1643 = vmatprep.mubr.f32.mxu0 0.0
        %v1644 = vand.u32 %v1547, 4294901760
        %v1645 = vsub.f32 %v1547, %v1644
        %v1646 = vand.u32 %v1645, 4294901760
        %v1647 = vsub.f32 %v1645, %v1646
        %v1648 = vand.u32 %v1647, 4294901760
        %1649 = vmatmul.mubr.f32.gmra.mrb[0].mxu0 %v1648
        %v1650 = vpop.f32.mrb[0].mxu0
        %v1651 = vadd.f32 %v1537, %v1650
        %v1652 = vpop.f32.mrb[0].mxu0
        %v1653 = vadd.f32 %v1537, %v1652
        %1654 = vdwg.mxu0
        %v1655 = vand.u32 %v1509, 4294901760
        %v1656 = vsub.f32 %v1509, %v1655
        %v1657 = vand.u32 %v1656, 4294901760
        %v1658 = vsub.f32 %v1656, %v1657
        %v1659 = vand.u32 %v1658, 4294901760
        %1660 = vmatprep.subr.mxu0 %v1659
        %v1661 = vand.u32 %v1508, 4294901760
        %v1662 = vsub.f32 %v1508, %v1661
        %v1663 = vand.u32 %v1662, 4294901760
        %v1664 = vsub.f32 %v1662, %v1663
        %v1665 = vand.u32 %v1664, 4294901760
        %1666 = vmatpush1.msra.mxu0 %v1665
        %v1667 = vand.u32 %v1513, 4294901760
        %v1668 = vsub.f32 %v1513, %v1667
        %v1669 = vand.u32 %v1668, 4294901760
        %v1670 = vsub.f32 %v1668, %v1669
        %v1671 = vand.u32 %v1670, 4294901760
        %1672 = vmatprep.subr.mxu0 %v1671
        %v1673 = vand.u32 %v1512, 4294901760
        %v1674 = vsub.f32 %v1512, %v1673
        %v1675 = vand.u32 %v1674, 4294901760
        %v1676 = vsub.f32 %v1674, %v1675
        %v1677 = vand.u32 %v1676, 4294901760
        %1678 = vmatpush1.msra.mxu0 %v1677
        %v1679 = vand.u32 %v1517, 4294901760
        %v1680 = vsub.f32 %v1517, %v1679
        %v1681 = vand.u32 %v1680, 4294901760
        %v1682 = vsub.f32 %v1680, %v1681
        %v1683 = vand.u32 %v1682, 4294901760
        %1684 = vmatprep.subr.mxu0 %v1683
        %v1685 = vand.u32 %v1516, 4294901760
        %v1686 = vsub.f32 %v1516, %v1685
        %v1687 = vand.u32 %v1686, 4294901760
        %v1688 = vsub.f32 %v1686, %v1687
        %v1689 = vand.u32 %v1688, 4294901760
        %1690 = vmatpush1.msra.mxu0 %v1689
        %v1691 = vand.u32 %v1521, 4294901760
        %v1692 = vsub.f32 %v1521, %v1691
        %v1693 = vand.u32 %v1692, 4294901760
        %v1694 = vsub.f32 %v1692, %v1693
        %v1695 = vand.u32 %v1694, 4294901760
        %1696 = vmatprep.subr.mxu0 %v1695
        %v1697 = vand.u32 %v1520, 4294901760
        %v1698 = vsub.f32 %v1520, %v1697
        %v1699 = vand.u32 %v1698, 4294901760
        %v1700 = vsub.f32 %v1698, %v1699
        %v1701 = vand.u32 %v1700, 4294901760
        %1702 = vmatpush1.msra.mxu0 %v1701
        %1703 = vmatprep.subr.mxu0 0.0
        %1704 = vmatpush1.msra.mxu0 0.0
        %1705 = vmatprep.subr.mxu0 0.0
        %1706 = vmatpush1.msra.mxu0 0.0
        %1707 = vmatprep.subr.mxu0 0.0
        %1708 = vmatpush1.msra.mxu0 0.0
        %1709 = vmatprep.subr.mxu0 0.0
        %1710 = vmatpush1.msra.mxu0 0.0
        %1711 = vmatprep.subr.mxu0 0.0
        %1712 = vmatpush1.msra.mxu0 0.0
        %1713 = vmatprep.subr.mxu0 0.0
        %1714 = vmatpush1.msra.mxu0 0.0
        %1715 = vmatprep.subr.mxu0 0.0
        %1716 = vmatpush1.msra.mxu0 0.0
        %1717 = vmatprep.subr.mxu0 0.0
        %1718 = vmatpush1.msra.mxu0 0.0
        %1719 = vmatprep.subr.mxu0 0.0
        %1720 = vmatpush1.msra.mxu0 0.0
        %1721 = vmatprep.subr.mxu0 0.0
        %1722 = vmatpush1.msra.mxu0 0.0
        %1723 = vmatprep.subr.mxu0 0.0
        %1724 = vmatpush1.msra.mxu0 0.0
        %1725 = vmatprep.subr.mxu0 0.0
        %1726 = vmatpush1.msra.mxu0 0.0
        %1727 = vmatprep.subr.mxu0 0.0
        %1728 = vmatpush1.msra.mxu0 0.0
        %1729 = vmatprep.subr.mxu0 0.0
        %1730 = vmatpush1.msra.mxu0 0.0
        %1731 = vmatprep.subr.mxu0 0.0
        %1732 = vmatpush1.msra.mxu0 0.0
        %1733 = vmatprep.subr.mxu0 0.0
        %1734 = vmatpush1.msra.mxu0 0.0
        %1735 = vmatprep.subr.mxu0 0.0
        %1736 = vmatpush1.msra.mxu0 0.0
        %1737 = vmatprep.subr.mxu0 0.0
        %1738 = vmatpush1.msra.mxu0 0.0
        %1739 = vmatprep.subr.mxu0 0.0
        %1740 = vmatpush1.msra.mxu0 0.0
        %1741 = vmatprep.subr.mxu0 0.0
        %1742 = vmatpush1.msra.mxu0 0.0
        %1743 = vmatprep.subr.mxu0 0.0
        %1744 = vmatpush1.msra.mxu0 0.0
        %1745 = vmatprep.subr.mxu0 0.0
        %1746 = vmatpush1.msra.mxu0 0.0
        %1747 = vmatprep.subr.mxu0 0.0
        %1748 = vmatpush1.msra.mxu0 0.0
        %1749 = vmatprep.subr.mxu0 0.0
        %1750 = vmatpush1.msra.mxu0 0.0
        %1751 = vmatprep.subr.mxu0 0.0
        %1752 = vmatpush1.msra.mxu0 0.0
        %1753 = vmatprep.subr.mxu0 0.0
        %1754 = vmatpush1.msra.mxu0 0.0
        %1755 = vmatprep.subr.mxu0 0.0
        %1756 = vmatpush1.msra.mxu0 0.0
        %1757 = vmatprep.subr.mxu0 0.0
        %1758 = vmatpush1.msra.mxu0 0.0
        %1759 = vmatprep.mubr.f32.mxu0 0.0
        %v1760 = vand.u32 %v1541, 4294901760
        %1761 = vmatmul.mubr.f32.gmra.mrb[0].mxu0 %v1760
        %v1762 = vpop.f32.mrb[0].mxu0
        %v1763 = vadd.f32 %v1629, %v1762
        %v1764 = vpop.f32.mrb[0].mxu0
        %v1765 = vadd.f32 %v1631, %v1764
        %1766 = vmatprep.mubr.f32.mxu0 0.0
        %v1767 = vand.u32 %v1544, 4294901760
        %1768 = vmatmul.mubr.f32.gmra.mrb[0].mxu0 %v1767
        %v1769 = vpop.f32.mrb[0].mxu0
        %v1770 = vadd.f32 %v1640, %v1769
        %v1771 = vpop.f32.mrb[0].mxu0
        %v1772 = vadd.f32 %v1642, %v1771
        %1773 = vmatprep.mubr.f32.mxu0 0.0
        %v1774 = vand.u32 %v1547, 4294901760
        %1775 = vmatmul.mubr.f32.gmra.mrb[0].mxu0 %v1774
        %v1776 = vpop.f32.mrb[0].mxu0
        %v1777 = vadd.f32 %v1651, %v1776
        %v1778 = vpop.f32.mrb[0].mxu0
        %v1779 = vadd.f32 %v1653, %v1778
        %1780 = vdwg.mxu0
        %v1781 = vand.u32 %v1509, 4294901760
        %v1782 = vsub.f32 %v1509, %v1781
        %1783 = vmatprep.subr.mxu0 %v1782
        %v1784 = vand.u32 %v1508, 4294901760
        %v1785 = vsub.f32 %v1508, %v1784
        %1786 = vmatpush1.msra.mxu0 %v1785
        %v1787 = vand.u32 %v1513, 4294901760
        %v1788 = vsub.f32 %v1513, %v1787
        %1789 = vmatprep.subr.mxu0 %v1788
        %v1790 = vand.u32 %v1512, 4294901760
        %v1791 = vsub.f32 %v1512, %v1790
        %1792 = vmatpush1.msra.mxu0 %v1791
        %v1793 = vand.u32 %v1517, 4294901760
        %v1794 = vsub.f32 %v1517, %v1793
        %1795 = vmatprep.subr.mxu0 %v1794
        %v1796 = vand.u32 %v1516, 4294901760
        %v1797 = vsub.f32 %v1516, %v1796
        %1798 = vmatpush1.msra.mxu0 %v1797
        %v1799 = vand.u32 %v1521, 4294901760
        %v1800 = vsub.f32 %v1521, %v1799
        %1801 = vmatprep.subr.mxu0 %v1800
        %v1802 = vand.u32 %v1520, 4294901760
        %v1803 = vsub.f32 %v1520, %v1802
        %1804 = vmatpush1.msra.mxu0 %v1803
        %1805 = vmatprep.subr.mxu0 0.0
        %1806 = vmatpush1.msra.mxu0 0.0
        %1807 = vmatprep.subr.mxu0 0.0
        %1808 = vmatpush1.msra.mxu0 0.0
        %1809 = vmatprep.subr.mxu0 0.0
        %1810 = vmatpush1.msra.mxu0 0.0
        %1811 = vmatprep.subr.mxu0 0.0
        %1812 = vmatpush1.msra.mxu0 0.0
        %1813 = vmatprep.subr.mxu0 0.0
        %1814 = vmatpush1.msra.mxu0 0.0
        %1815 = vmatprep.subr.mxu0 0.0
        %1816 = vmatpush1.msra.mxu0 0.0
        %1817 = vmatprep.subr.mxu0 0.0
        %1818 = vmatpush1.msra.mxu0 0.0
        %1819 = vmatprep.subr.mxu0 0.0
        %1820 = vmatpush1.msra.mxu0 0.0
        %1821 = vmatprep.subr.mxu0 0.0
        %1822 = vmatpush1.msra.mxu0 0.0
        %1823 = vmatprep.subr.mxu0 0.0
        %1824 = vmatpush1.msra.mxu0 0.0
        %1825 = vmatprep.subr.mxu0 0.0
        %1826 = vmatpush1.msra.mxu0 0.0
        %1827 = vmatprep.subr.mxu0 0.0
        %1828 = vmatpush1.msra.mxu0 0.0
        %1829 = vmatprep.subr.mxu0 0.0
        %1830 = vmatpush1.msra.mxu0 0.0
        %1831 = vmatprep.subr.mxu0 0.0
        %1832 = vmatpush1.msra.mxu0 0.0
        %1833 = vmatprep.subr.mxu0 0.0
        %1834 = vmatpush1.msra.mxu0 0.0
        %1835 = vmatprep.subr.mxu0 0.0
        %1836 = vmatpush1.msra.mxu0 0.0
        %1837 = vmatprep.subr.mxu0 0.0
        %1838 = vmatpush1.msra.mxu0 0.0
        %1839 = vmatprep.subr.mxu0 0.0
        %1840 = vmatpush1.msra.mxu0 0.0
        %1841 = vmatprep.subr.mxu0 0.0
        %1842 = vmatpush1.msra.mxu0 0.0
        %1843 = vmatprep.subr.mxu0 0.0
        %1844 = vmatpush1.msra.mxu0 0.0
        %1845 = vmatprep.subr.mxu0 0.0
        %1846 = vmatpush1.msra.mxu0 0.0
        %1847 = vmatprep.subr.mxu0 0.0
        %1848 = vmatpush1.msra.mxu0 0.0
        %1849 = vmatprep.subr.mxu0 0.0
        %1850 = vmatpush1.msra.mxu0 0.0
        %1851 = vmatprep.subr.mxu0 0.0
        %1852 = vmatpush1.msra.mxu0 0.0
        %1853 = vmatprep.subr.mxu0 0.0
        %1854 = vmatpush1.msra.mxu0 0.0
        %1855 = vmatprep.subr.mxu0 0.0
        %1856 = vmatpush1.msra.mxu0 0.0
        %1857 = vmatprep.subr.mxu0 0.0
        %1858 = vmatpush1.msra.mxu0 0.0
        %1859 = vmatprep.subr.mxu0 0.0
        %1860 = vmatpush1.msra.mxu0 0.0
        %1861 = vmatprep.mubr.f32.mxu0 0.0
        %v1862 = vand.u32 %v1541, 4294901760
        %v1863 = vsub.f32 %v1541, %v1862
        %1864 = vmatmul.mubr.f32.gmra.mrb[0].mxu0 %v1863
        %v1865 = vpop.f32.mrb[0].mxu0
        %v1866 = vadd.f32 %v1763, %v1865
        %v1867 = vpop.f32.mrb[0].mxu0
        %v1868 = vadd.f32 %v1765, %v1867
        %1869 = vmatprep.mubr.f32.mxu0 0.0
        %v1870 = vand.u32 %v1544, 4294901760
        %v1871 = vsub.f32 %v1544, %v1870
        %1872 = vmatmul.mubr.f32.gmra.mrb[0].mxu0 %v1871
        %v1873 = vpop.f32.mrb[0].mxu0
        %v1874 = vadd.f32 %v1770, %v1873
        %v1875 = vpop.f32.mrb[0].mxu0
        %v1876 = vadd.f32 %v1772, %v1875
        %1877 = vmatprep.mubr.f32.mxu0 0.0
        %v1878 = vand.u32 %v1547, 4294901760
        %v1879 = vsub.f32 %v1547, %v1878
        %1880 = vmatmul.mubr.f32.gmra.mrb[0].mxu0 %v1879
        %v1881 = vpop.f32.mrb[0].mxu0
        %v1882 = vadd.f32 %v1777, %v1881
        %v1883 = vpop.f32.mrb[0].mxu0
        %v1884 = vadd.f32 %v1779, %v1883
        %1885 = vdwg.mxu0
        %v1886 = vand.u32 %v1509, 4294901760
        %1887 = vmatprep.subr.mxu0 %v1886
        %v1888 = vand.u32 %v1508, 4294901760
        %1889 = vmatpush1.msra.mxu0 %v1888
        %v1890 = vand.u32 %v1513, 4294901760
        %1891 = vmatprep.subr.mxu0 %v1890
        %v1892 = vand.u32 %v1512, 4294901760
        %1893 = vmatpush1.msra.mxu0 %v1892
        %v1894 = vand.u32 %v1517, 4294901760
        %1895 = vmatprep.subr.mxu0 %v1894
        %v1896 = vand.u32 %v1516, 4294901760
        %1897 = vmatpush1.msra.mxu0 %v1896
        %v1898 = vand.u32 %v1521, 4294901760
        %1899 = vmatprep.subr.mxu0 %v1898
        %v1900 = vand.u32 %v1520, 4294901760
        %1901 = vmatpush1.msra.mxu0 %v1900
        %1902 = vmatprep.subr.mxu0 0.0
        %1903 = vmatpush1.msra.mxu0 0.0
        %1904 = vmatprep.subr.mxu0 0.0
        %1905 = vmatpush1.msra.mxu0 0.0
        %1906 = vmatprep.subr.mxu0 0.0
        %1907 = vmatpush1.msra.mxu0 0.0
        %1908 = vmatprep.subr.mxu0 0.0
        %1909 = vmatpush1.msra.mxu0 0.0
        %1910 = vmatprep.subr.mxu0 0.0
        %1911 = vmatpush1.msra.mxu0 0.0
        %1912 = vmatprep.subr.mxu0 0.0
        %1913 = vmatpush1.msra.mxu0 0.0
        %1914 = vmatprep.subr.mxu0 0.0
        %1915 = vmatpush1.msra.mxu0 0.0
        %1916 = vmatprep.subr.mxu0 0.0
        %1917 = vmatpush1.msra.mxu0 0.0
        %1918 = vmatprep.subr.mxu0 0.0
        %1919 = vmatpush1.msra.mxu0 0.0
        %1920 = vmatprep.subr.mxu0 0.0
        %1921 = vmatpush1.msra.mxu0 0.0
        %1922 = vmatprep.subr.mxu0 0.0
        %1923 = vmatpush1.msra.mxu0 0.0
        %1924 = vmatprep.subr.mxu0 0.0
        %1925 = vmatpush1.msra.mxu0 0.0
        %1926 = vmatprep.subr.mxu0 0.0
        %1927 = vmatpush1.msra.mxu0 0.0
        %1928 = vmatprep.subr.mxu0 0.0
        %1929 = vmatpush1.msra.mxu0 0.0
        %1930 = vmatprep.subr.mxu0 0.0
        %1931 = vmatpush1.msra.mxu0 0.0
        %1932 = vmatprep.subr.mxu0 0.0
        %1933 = vmatpush1.msra.mxu0 0.0
        %1934 = vmatprep.subr.mxu0 0.0
        %1935 = vmatpush1.msra.mxu0 0.0
        %1936 = vmatprep.subr.mxu0 0.0
        %1937 = vmatpush1.msra.mxu0 0.0
        %1938 = vmatprep.subr.mxu0 0.0
        %1939 = vmatpush1.msra.mxu0 0.0
        %1940 = vmatprep.subr.mxu0 0.0
        %1941 = vmatpush1.msra.mxu0 0.0
        %1942 = vmatprep.subr.mxu0 0.0
        %1943 = vmatpush1.msra.mxu0 0.0
        %1944 = vmatprep.subr.mxu0 0.0
        %1945 = vmatpush1.msra.mxu0 0.0
        %1946 = vmatprep.subr.mxu0 0.0
        %1947 = vmatpush1.msra.mxu0 0.0
        %1948 = vmatprep.subr.mxu0 0.0
        %1949 = vmatpush1.msra.mxu0 0.0
        %1950 = vmatprep.subr.mxu0 0.0
        %1951 = vmatpush1.msra.mxu0 0.0
        %1952 = vmatprep.subr.mxu0 0.0
        %1953 = vmatpush1.msra.mxu0 0.0
        %1954 = vmatprep.subr.mxu0 0.0
        %1955 = vmatpush1.msra.mxu0 0.0
        %1956 = vmatprep.subr.mxu0 0.0
        %1957 = vmatpush1.msra.mxu0 0.0
        %1958 = vmatprep.mubr.f32.mxu0 0.0
        %v1959 = vand.u32 %v1541, 4294901760
        %v1960 = vsub.f32 %v1541, %v1959
        %v1961 = vand.u32 %v1960, 4294901760
        %1962 = vmatmul.mubr.f32.gmra.mrb[0].mxu0 %v1961
        %v1963 = vpop.f32.mrb[0].mxu0
        %v1964 = vadd.f32 %v1866, %v1963
        %v1965 = vpop.f32.mrb[0].mxu0
        %v1966 = vadd.f32 %v1868, %v1965
        %1967 = vmatprep.mubr.f32.mxu0 0.0
        %v1968 = vand.u32 %v1544, 4294901760
        %v1969 = vsub.f32 %v1544, %v1968
        %v1970 = vand.u32 %v1969, 4294901760
        %1971 = vmatmul.mubr.f32.gmra.mrb[0].mxu0 %v1970
        %v1972 = vpop.f32.mrb[0].mxu0
        %v1973 = vadd.f32 %v1874, %v1972
        %v1974 = vpop.f32.mrb[0].mxu0
        %v1975 = vadd.f32 %v1876, %v1974
        %1976 = vmatprep.mubr.f32.mxu0 0.0
        %v1977 = vand.u32 %v1547, 4294901760
        %v1978 = vsub.f32 %v1547, %v1977
        %v1979 = vand.u32 %v1978, 4294901760
        %1980 = vmatmul.mubr.f32.gmra.mrb[0].mxu0 %v1979
        %v1981 = vpop.f32.mrb[0].mxu0
        %v1982 = vadd.f32 %v1882, %v1981
        %v1983 = vpop.f32.mrb[0].mxu0
        %v1984 = vadd.f32 %v1884, %v1983
        %1985 = vdwg.mxu0
        %v1986 = vand.u32 %v1509, 4294901760
        %v1987 = vsub.f32 %v1509, %v1986
        %v1988 = vand.u32 %v1987, 4294901760
        %1989 = vmatprep.subr.mxu0 %v1988
        %v1990 = vand.u32 %v1508, 4294901760
        %v1991 = vsub.f32 %v1508, %v1990
        %v1992 = vand.u32 %v1991, 4294901760
        %1993 = vmatpush1.msra.mxu0 %v1992
        %v1994 = vand.u32 %v1513, 4294901760
        %v1995 = vsub.f32 %v1513, %v1994
        %v1996 = vand.u32 %v1995, 4294901760
        %1997 = vmatprep.subr.mxu0 %v1996
        %v1998 = vand.u32 %v1512, 4294901760
        %v1999 = vsub.f32 %v1512, %v1998
        %v2000 = vand.u32 %v1999, 4294901760
        %2001 = vmatpush1.msra.mxu0 %v2000
        %v2002 = vand.u32 %v1517, 4294901760
        %v2003 = vsub.f32 %v1517, %v2002
        %v2004 = vand.u32 %v2003, 4294901760
        %2005 = vmatprep.subr.mxu0 %v2004
        %v2006 = vand.u32 %v1516, 4294901760
        %v2007 = vsub.f32 %v1516, %v2006
        %v2008 = vand.u32 %v2007, 4294901760
        %2009 = vmatpush1.msra.mxu0 %v2008
        %v2010 = vand.u32 %v1521, 4294901760
        %v2011 = vsub.f32 %v1521, %v2010
        %v2012 = vand.u32 %v2011, 4294901760
        %2013 = vmatprep.subr.mxu0 %v2012
        %v2014 = vand.u32 %v1520, 4294901760
        %v2015 = vsub.f32 %v1520, %v2014
        %v2016 = vand.u32 %v2015, 4294901760
        %2017 = vmatpush1.msra.mxu0 %v2016
        %2018 = vmatprep.subr.mxu0 0.0
        %2019 = vmatpush1.msra.mxu0 0.0
        %2020 = vmatprep.subr.mxu0 0.0
        %2021 = vmatpush1.msra.mxu0 0.0
        %2022 = vmatprep.subr.mxu0 0.0
        %2023 = vmatpush1.msra.mxu0 0.0
        %2024 = vmatprep.subr.mxu0 0.0
        %2025 = vmatpush1.msra.mxu0 0.0
        %2026 = vmatprep.subr.mxu0 0.0
        %2027 = vmatpush1.msra.mxu0 0.0
        %2028 = vmatprep.subr.mxu0 0.0
        %2029 = vmatpush1.msra.mxu0 0.0
        %2030 = vmatprep.subr.mxu0 0.0
        %2031 = vmatpush1.msra.mxu0 0.0
        %2032 = vmatprep.subr.mxu0 0.0
        %2033 = vmatpush1.msra.mxu0 0.0
        %2034 = vmatprep.subr.mxu0 0.0
        %2035 = vmatpush1.msra.mxu0 0.0
        %2036 = vmatprep.subr.mxu0 0.0
        %2037 = vmatpush1.msra.mxu0 0.0
        %2038 = vmatprep.subr.mxu0 0.0
        %2039 = vmatpush1.msra.mxu0 0.0
        %2040 = vmatprep.subr.mxu0 0.0
        %2041 = vmatpush1.msra.mxu0 0.0
        %2042 = vmatprep.subr.mxu0 0.0
        %2043 = vmatpush1.msra.mxu0 0.0
        %2044 = vmatprep.subr.mxu0 0.0
        %2045 = vmatpush1.msra.mxu0 0.0
        %2046 = vmatprep.subr.mxu0 0.0
        %2047 = vmatpush1.msra.mxu0 0.0
        %2048 = vmatprep.subr.mxu0 0.0
        %2049 = vmatpush1.msra.mxu0 0.0
        %2050 = vmatprep.subr.mxu0 0.0
        %2051 = vmatpush1.msra.mxu0 0.0
        %2052 = vmatprep.subr.mxu0 0.0
        %2053 = vmatpush1.msra.mxu0 0.0
        %2054 = vmatprep.subr.mxu0 0.0
        %2055 = vmatpush1.msra.mxu0 0.0
        %2056 = vmatprep.subr.mxu0 0.0
        %2057 = vmatpush1.msra.mxu0 0.0
        %2058 = vmatprep.subr.mxu0 0.0
        %2059 = vmatpush1.msra.mxu0 0.0
        %2060 = vmatprep.subr.mxu0 0.0
        %2061 = vmatpush1.msra.mxu0 0.0
        %2062 = vmatprep.subr.mxu0 0.0
        %2063 = vmatpush1.msra.mxu0 0.0
        %2064 = vmatprep.subr.mxu0 0.0
        %2065 = vmatpush1.msra.mxu0 0.0
        %2066 = vmatprep.subr.mxu0 0.0
        %2067 = vmatpush1.msra.mxu0 0.0
        %2068 = vmatprep.subr.mxu0 0.0
        %2069 = vmatpush1.msra.mxu0 0.0
        %2070 = vmatprep.subr.mxu0 0.0
        %2071 = vmatpush1.msra.mxu0 0.0
        %2072 = vmatprep.subr.mxu0 0.0
        %2073 = vmatpush1.msra.mxu0 0.0
        %2074 = vmatprep.mubr.f32.mxu0 0.0
        %v2075 = vand.u32 %v1541, 4294901760
        %2076 = vmatmul.mubr.f32.gmra.mrb[0].mxu0 %v2075
        %v2077 = vpop.f32.mrb[0].mxu0
        %v2078 = vadd.f32 %v1964, %v2077
        %v2079 = vpop.f32.mrb[0].mxu0
        %v2080 = vadd.f32 %v1966, %v2079
        %2081 = vmatprep.mubr.f32.mxu0 0.0
        %v2082 = vand.u32 %v1544, 4294901760
        %2083 = vmatmul.mubr.f32.gmra.mrb[0].mxu0 %v2082
        %v2084 = vpop.f32.mrb[0].mxu0
        %v2085 = vadd.f32 %v1973, %v2084
        %v2086 = vpop.f32.mrb[0].mxu0
        %v2087 = vadd.f32 %v1975, %v2086
        %2088 = vmatprep.mubr.f32.mxu0 0.0
        %v2089 = vand.u32 %v1547, 4294901760
        %2090 = vmatmul.mubr.f32.gmra.mrb[0].mxu0 %v2089
        %v2091 = vpop.f32.mrb[0].mxu0
        %v2092 = vadd.f32 %v1982, %v2091
        %v2093 = vpop.f32.mrb[0].mxu0
        %v2094 = vadd.f32 %v1984, %v2093
        %2095 = vdwg.mxu0
        %v2096 = vand.u32 %v1509, 4294901760
        %2097 = vmatprep.subr.mxu0 %v2096
        %v2098 = vand.u32 %v1508, 4294901760
        %2099 = vmatpush1.msra.mxu0 %v2098
        %v2100 = vand.u32 %v1513, 4294901760
        %2101 = vmatprep.subr.mxu0 %v2100
        %v2102 = vand.u32 %v1512, 4294901760
        %2103 = vmatpush1.msra.mxu0 %v2102
        %v2104 = vand.u32 %v1517, 4294901760
        %2105 = vmatprep.subr.mxu0 %v2104
        %v2106 = vand.u32 %v1516, 4294901760
        %2107 = vmatpush1.msra.mxu0 %v2106
        %v2108 = vand.u32 %v1521, 4294901760
        %2109 = vmatprep.subr.mxu0 %v2108
        %v2110 = vand.u32 %v1520, 4294901760
        %2111 = vmatpush1.msra.mxu0 %v2110
        %2112 = vmatprep.subr.mxu0 0.0
        %2113 = vmatpush1.msra.mxu0 0.0
        %2114 = vmatprep.subr.mxu0 0.0
        %2115 = vmatpush1.msra.mxu0 0.0
        %2116 = vmatprep.subr.mxu0 0.0
        %2117 = vmatpush1.msra.mxu0 0.0
        %2118 = vmatprep.subr.mxu0 0.0
        %2119 = vmatpush1.msra.mxu0 0.0
        %2120 = vmatprep.subr.mxu0 0.0
        %2121 = vmatpush1.msra.mxu0 0.0
        %2122 = vmatprep.subr.mxu0 0.0
        %2123 = vmatpush1.msra.mxu0 0.0
        %2124 = vmatprep.subr.mxu0 0.0
        %2125 = vmatpush1.msra.mxu0 0.0
        %2126 = vmatprep.subr.mxu0 0.0
        %2127 = vmatpush1.msra.mxu0 0.0
        %2128 = vmatprep.subr.mxu0 0.0
        %2129 = vmatpush1.msra.mxu0 0.0
        %2130 = vmatprep.subr.mxu0 0.0
        %2131 = vmatpush1.msra.mxu0 0.0
        %2132 = vmatprep.subr.mxu0 0.0
        %2133 = vmatpush1.msra.mxu0 0.0
        %2134 = vmatprep.subr.mxu0 0.0
        %2135 = vmatpush1.msra.mxu0 0.0
        %2136 = vmatprep.subr.mxu0 0.0
        %2137 = vmatpush1.msra.mxu0 0.0
        %2138 = vmatprep.subr.mxu0 0.0
        %2139 = vmatpush1.msra.mxu0 0.0
        %2140 = vmatprep.subr.mxu0 0.0
        %2141 = vmatpush1.msra.mxu0 0.0
        %2142 = vmatprep.subr.mxu0 0.0
        %2143 = vmatpush1.msra.mxu0 0.0
        %2144 = vmatprep.subr.mxu0 0.0
        %2145 = vmatpush1.msra.mxu0 0.0
        %2146 = vmatprep.subr.mxu0 0.0
        %2147 = vmatpush1.msra.mxu0 0.0
        %2148 = vmatprep.subr.mxu0 0.0
        %2149 = vmatpush1.msra.mxu0 0.0
        %2150 = vmatprep.subr.mxu0 0.0
        %2151 = vmatpush1.msra.mxu0 0.0
        %2152 = vmatprep.subr.mxu0 0.0
        %2153 = vmatpush1.msra.mxu0 0.0
        %2154 = vmatprep.subr.mxu0 0.0
        %2155 = vmatpush1.msra.mxu0 0.0
        %2156 = vmatprep.subr.mxu0 0.0
        %2157 = vmatpush1.msra.mxu0 0.0
        %2158 = vmatprep.subr.mxu0 0.0
        %2159 = vmatpush1.msra.mxu0 0.0
        %2160 = vmatprep.subr.mxu0 0.0
        %2161 = vmatpush1.msra.mxu0 0.0
        %2162 = vmatprep.subr.mxu0 0.0
        %2163 = vmatpush1.msra.mxu0 0.0
        %2164 = vmatprep.subr.mxu0 0.0
        %2165 = vmatpush1.msra.mxu0 0.0
        %2166 = vmatprep.subr.mxu0 0.0
        %2167 = vmatpush1.msra.mxu0 0.0
        %2168 = vmatprep.mubr.f32.mxu0 0.0
        %v2169 = vand.u32 %v1541, 4294901760
        %2170 = vmatmul.mubr.f32.gmra.mrb[0].mxu0 %v2169
        %v2171 = vpop.f32.mrb[0].mxu0
        %v2172 = vadd.f32 %v2078, %v2171
        %v2173 = vpop.f32.mrb[0].mxu0
        %v2174 = vadd.f32 %v2080, %v2173
        %2175 = vmatprep.mubr.f32.mxu0 0.0
        %v2176 = vand.u32 %v1544, 4294901760
        %2177 = vmatmul.mubr.f32.gmra.mrb[0].mxu0 %v2176
        %v2178 = vpop.f32.mrb[0].mxu0
        %v2179 = vadd.f32 %v2085, %v2178
        %v2180 = vpop.f32.mrb[0].mxu0
        %v2181 = vadd.f32 %v2087, %v2180
        %2182 = vmatprep.mubr.f32.mxu0 0.0
        %v2183 = vand.u32 %v1547, 4294901760
        %2184 = vmatmul.mubr.f32.gmra.mrb[0].mxu0 %v2183
        %v2185 = vpop.f32.mrb[0].mxu0
        %v2186 = vadd.f32 %v2092, %v2185
        %v2187 = vpop.f32.mrb[0].mxu0
        %v2188 = vadd.f32 %v2094, %v2187
        %2189 = vdwg.mxu0
        %v2190 = vand.u32 %v1511, 4294901760
        %2191 = vmatprep.subr.mxu0 %v2190
        %v2192 = vand.u32 %v1510, 4294901760
        %2193 = vmatpush1.msra.mxu0 %v2192
        %v2194 = vand.u32 %v1515, 4294901760
        %2195 = vmatprep.subr.mxu0 %v2194
        %v2196 = vand.u32 %v1514, 4294901760
        %2197 = vmatpush1.msra.mxu0 %v2196
        %v2198 = vand.u32 %v1519, 4294901760
        %2199 = vmatprep.subr.mxu0 %v2198
        %v2200 = vand.u32 %v1518, 4294901760
        %2201 = vmatpush1.msra.mxu0 %v2200
        %v2202 = vand.u32 %v1523, 4294901760
        %2203 = vmatprep.subr.mxu0 %v2202
        %v2204 = vand.u32 %v1522, 4294901760
        %2205 = vmatpush1.msra.mxu0 %v2204
        %2206 = vmatprep.subr.mxu0 0.0
        %2207 = vmatpush1.msra.mxu0 0.0
        %2208 = vmatprep.subr.mxu0 0.0
        %2209 = vmatpush1.msra.mxu0 0.0
        %2210 = vmatprep.subr.mxu0 0.0
        %2211 = vmatpush1.msra.mxu0 0.0
        %2212 = vmatprep.subr.mxu0 0.0
        %2213 = vmatpush1.msra.mxu0 0.0
        %2214 = vmatprep.subr.mxu0 0.0
        %2215 = vmatpush1.msra.mxu0 0.0
        %2216 = vmatprep.subr.mxu0 0.0
        %2217 = vmatpush1.msra.mxu0 0.0
        %2218 = vmatprep.subr.mxu0 0.0
        %2219 = vmatpush1.msra.mxu0 0.0
        %2220 = vmatprep.subr.mxu0 0.0
        %2221 = vmatpush1.msra.mxu0 0.0
        %2222 = vmatprep.subr.mxu0 0.0
        %2223 = vmatpush1.msra.mxu0 0.0
        %2224 = vmatprep.subr.mxu0 0.0
        %2225 = vmatpush1.msra.mxu0 0.0
        %2226 = vmatprep.subr.mxu0 0.0
        %2227 = vmatpush1.msra.mxu0 0.0
        %2228 = vmatprep.subr.mxu0 0.0
        %2229 = vmatpush1.msra.mxu0 0.0
        %2230 = vmatprep.subr.mxu0 0.0
        %2231 = vmatpush1.msra.mxu0 0.0
        %2232 = vmatprep.subr.mxu0 0.0
        %2233 = vmatpush1.msra.mxu0 0.0
        %2234 = vmatprep.subr.mxu0 0.0
        %2235 = vmatpush1.msra.mxu0 0.0
        %2236 = vmatprep.subr.mxu0 0.0
        %2237 = vmatpush1.msra.mxu0 0.0
        %2238 = vmatprep.subr.mxu0 0.0
        %2239 = vmatpush1.msra.mxu0 0.0
        %2240 = vmatprep.subr.mxu0 0.0
        %2241 = vmatpush1.msra.mxu0 0.0
        %2242 = vmatprep.subr.mxu0 0.0
        %2243 = vmatpush1.msra.mxu0 0.0
        %2244 = vmatprep.subr.mxu0 0.0
        %2245 = vmatpush1.msra.mxu0 0.0
        %2246 = vmatprep.subr.mxu0 0.0
        %2247 = vmatpush1.msra.mxu0 0.0
        %2248 = vmatprep.subr.mxu0 0.0
        %2249 = vmatpush1.msra.mxu0 0.0
        %2250 = vmatprep.subr.mxu0 0.0
        %2251 = vmatpush1.msra.mxu0 0.0
        %2252 = vmatprep.subr.mxu0 0.0
        %2253 = vmatpush1.msra.mxu0 0.0
        %2254 = vmatprep.subr.mxu0 0.0
        %2255 = vmatpush1.msra.mxu0 0.0
        %2256 = vmatprep.subr.mxu0 0.0
        %2257 = vmatpush1.msra.mxu0 0.0
        %2258 = vmatprep.subr.mxu0 0.0
        %2259 = vmatpush1.msra.mxu0 0.0
        %2260 = vmatprep.subr.mxu0 0.0
        %2261 = vmatpush1.msra.mxu0 0.0
        %2262 = vmatprep.mubr.f32.mxu0 0.0
        %v2263 = vand.u32 %v1541, 4294901760
        %v2264 = vsub.f32 %v1541, %v2263
        %v2265 = vand.u32 %v2264, 4294901760
        %v2266 = vsub.f32 %v2264, %v2265
        %v2267 = vand.u32 %v2266, 4294901760
        %2268 = vmatmul.mubr.f32.gmra.mrb[0].mxu0 %v2267
        %v2269 = vpop.f32.mrb[0].mxu0
        %v2270 = vadd.f32 %v1527, %v2269
        %v2271 = vpop.f32.mrb[0].mxu0
        %v2272 = vadd.f32 %v1527, %v2271
        %2273 = vmatprep.mubr.f32.mxu0 0.0
        %v2274 = vand.u32 %v1544, 4294901760
        %v2275 = vsub.f32 %v1544, %v2274
        %v2276 = vand.u32 %v2275, 4294901760
        %v2277 = vsub.f32 %v2275, %v2276
        %v2278 = vand.u32 %v2277, 4294901760
        %2279 = vmatmul.mubr.f32.gmra.mrb[0].mxu0 %v2278
        %v2280 = vpop.f32.mrb[0].mxu0
        %v2281 = vadd.f32 %v1532, %v2280
        %v2282 = vpop.f32.mrb[0].mxu0
        %v2283 = vadd.f32 %v1532, %v2282
        %2284 = vmatprep.mubr.f32.mxu0 0.0
        %v2285 = vand.u32 %v1547, 4294901760
        %v2286 = vsub.f32 %v1547, %v2285
        %v2287 = vand.u32 %v2286, 4294901760
        %v2288 = vsub.f32 %v2286, %v2287
        %v2289 = vand.u32 %v2288, 4294901760
        %2290 = vmatmul.mubr.f32.gmra.mrb[0].mxu0 %v2289
        %v2291 = vpop.f32.mrb[0].mxu0
        %v2292 = vadd.f32 %v1537, %v2291
        %v2293 = vpop.f32.mrb[0].mxu0
        %v2294 = vadd.f32 %v1537, %v2293
        %2295 = vdwg.mxu0
        %v2296 = vand.u32 %v1511, 4294901760
        %v2297 = vsub.f32 %v1511, %v2296
        %v2298 = vand.u32 %v2297, 4294901760
        %v2299 = vsub.f32 %v2297, %v2298
        %v2300 = vand.u32 %v2299, 4294901760
        %2301 = vmatprep.subr.mxu0 %v2300
        %v2302 = vand.u32 %v1510, 4294901760
        %v2303 = vsub.f32 %v1510, %v2302
        %v2304 = vand.u32 %v2303, 4294901760
        %v2305 = vsub.f32 %v2303, %v2304
        %v2306 = vand.u32 %v2305, 4294901760
        %2307 = vmatpush1.msra.mxu0 %v2306
        %v2308 = vand.u32 %v1515, 4294901760
        %v2309 = vsub.f32 %v1515, %v2308
        %v2310 = vand.u32 %v2309, 4294901760
        %v2311 = vsub.f32 %v2309, %v2310
        %v2312 = vand.u32 %v2311, 4294901760
        %2313 = vmatprep.subr.mxu0 %v2312
        %v2314 = vand.u32 %v1514, 4294901760
        %v2315 = vsub.f32 %v1514, %v2314
        %v2316 = vand.u32 %v2315, 4294901760
        %v2317 = vsub.f32 %v2315, %v2316
        %v2318 = vand.u32 %v2317, 4294901760
        %2319 = vmatpush1.msra.mxu0 %v2318
        %v2320 = vand.u32 %v1519, 4294901760
        %v2321 = vsub.f32 %v1519, %v2320
        %v2322 = vand.u32 %v2321, 4294901760
        %v2323 = vsub.f32 %v2321, %v2322
        %v2324 = vand.u32 %v2323, 4294901760
        %2325 = vmatprep.subr.mxu0 %v2324
        %v2326 = vand.u32 %v1518, 4294901760
        %v2327 = vsub.f32 %v1518, %v2326
        %v2328 = vand.u32 %v2327, 4294901760
        %v2329 = vsub.f32 %v2327, %v2328
        %v2330 = vand.u32 %v2329, 4294901760
        %2331 = vmatpush1.msra.mxu0 %v2330
        %v2332 = vand.u32 %v1523, 4294901760
        %v2333 = vsub.f32 %v1523, %v2332
        %v2334 = vand.u32 %v2333, 4294901760
        %v2335 = vsub.f32 %v2333, %v2334
        %v2336 = vand.u32 %v2335, 4294901760
        %2337 = vmatprep.subr.mxu0 %v2336
        %v2338 = vand.u32 %v1522, 4294901760
        %v2339 = vsub.f32 %v1522, %v2338
        %v2340 = vand.u32 %v2339, 4294901760
        %v2341 = vsub.f32 %v2339, %v2340
        %v2342 = vand.u32 %v2341, 4294901760
        %2343 = vmatpush1.msra.mxu0 %v2342
        %2344 = vmatprep.subr.mxu0 0.0
        %2345 = vmatpush1.msra.mxu0 0.0
        %2346 = vmatprep.subr.mxu0 0.0
        %2347 = vmatpush1.msra.mxu0 0.0
        %2348 = vmatprep.subr.mxu0 0.0
        %2349 = vmatpush1.msra.mxu0 0.0
        %2350 = vmatprep.subr.mxu0 0.0
        %2351 = vmatpush1.msra.mxu0 0.0
        %2352 = vmatprep.subr.mxu0 0.0
        %2353 = vmatpush1.msra.mxu0 0.0
        %2354 = vmatprep.subr.mxu0 0.0
        %2355 = vmatpush1.msra.mxu0 0.0
        %2356 = vmatprep.subr.mxu0 0.0
        %2357 = vmatpush1.msra.mxu0 0.0
        %2358 = vmatprep.subr.mxu0 0.0
        %2359 = vmatpush1.msra.mxu0 0.0
        %2360 = vmatprep.subr.mxu0 0.0
        %2361 = vmatpush1.msra.mxu0 0.0
        %2362 = vmatprep.subr.mxu0 0.0
        %2363 = vmatpush1.msra.mxu0 0.0
        %2364 = vmatprep.subr.mxu0 0.0
        %2365 = vmatpush1.msra.mxu0 0.0
        %2366 = vmatprep.subr.mxu0 0.0
        %2367 = vmatpush1.msra.mxu0 0.0
        %2368 = vmatprep.subr.mxu0 0.0
        %2369 = vmatpush1.msra.mxu0 0.0
        %2370 = vmatprep.subr.mxu0 0.0
        %2371 = vmatpush1.msra.mxu0 0.0
        %2372 = vmatprep.subr.mxu0 0.0
        %2373 = vmatpush1.msra.mxu0 0.0
        %2374 = vmatprep.subr.mxu0 0.0
        %2375 = vmatpush1.msra.mxu0 0.0
        %2376 = vmatprep.subr.mxu0 0.0
        %2377 = vmatpush1.msra.mxu0 0.0
        %2378 = vmatprep.subr.mxu0 0.0
        %2379 = vmatpush1.msra.mxu0 0.0
        %2380 = vmatprep.subr.mxu0 0.0
        %2381 = vmatpush1.msra.mxu0 0.0
        %2382 = vmatprep.subr.mxu0 0.0
        %2383 = vmatpush1.msra.mxu0 0.0
        %2384 = vmatprep.subr.mxu0 0.0
        %2385 = vmatpush1.msra.mxu0 0.0
        %2386 = vmatprep.subr.mxu0 0.0
        %2387 = vmatpush1.msra.mxu0 0.0
        %2388 = vmatprep.subr.mxu0 0.0
        %2389 = vmatpush1.msra.mxu0 0.0
        %2390 = vmatprep.subr.mxu0 0.0
        %2391 = vmatpush1.msra.mxu0 0.0
        %2392 = vmatprep.subr.mxu0 0.0
        %2393 = vmatpush1.msra.mxu0 0.0
        %2394 = vmatprep.subr.mxu0 0.0
        %2395 = vmatpush1.msra.mxu0 0.0
        %2396 = vmatprep.subr.mxu0 0.0
        %2397 = vmatpush1.msra.mxu0 0.0
        %2398 = vmatprep.subr.mxu0 0.0
        %2399 = vmatpush1.msra.mxu0 0.0
        %2400 = vmatprep.mubr.f32.mxu0 0.0
        %v2401 = vand.u32 %v1541, 4294901760
        %2402 = vmatmul.mubr.f32.gmra.mrb[0].mxu0 %v2401
        %v2403 = vpop.f32.mrb[0].mxu0
        %v2404 = vadd.f32 %v2270, %v2403
        %v2405 = vpop.f32.mrb[0].mxu0
        %v2406 = vadd.f32 %v2272, %v2405
        %2407 = vmatprep.mubr.f32.mxu0 0.0
        %v2408 = vand.u32 %v1544, 4294901760
        %2409 = vmatmul.mubr.f32.gmra.mrb[0].mxu0 %v2408
        %v2410 = vpop.f32.mrb[0].mxu0
        %v2411 = vadd.f32 %v2281, %v2410
        %v2412 = vpop.f32.mrb[0].mxu0
        %v2413 = vadd.f32 %v2283, %v2412
        %2414 = vmatprep.mubr.f32.mxu0 0.0
        %v2415 = vand.u32 %v1547, 4294901760
        %2416 = vmatmul.mubr.f32.gmra.mrb[0].mxu0 %v2415
        %v2417 = vpop.f32.mrb[0].mxu0
        %v2418 = vadd.f32 %v2292, %v2417
        %v2419 = vpop.f32.mrb[0].mxu0
        %v2420 = vadd.f32 %v2294, %v2419
        %2421 = vdwg.mxu0
        %v2422 = vand.u32 %v1511, 4294901760
        %v2423 = vsub.f32 %v1511, %v2422
        %2424 = vmatprep.subr.mxu0 %v2423
        %v2425 = vand.u32 %v1510, 4294901760
        %v2426 = vsub.f32 %v1510, %v2425
        %2427 = vmatpush1.msra.mxu0 %v2426
        %v2428 = vand.u32 %v1515, 4294901760
        %v2429 = vsub.f32 %v1515, %v2428
        %2430 = vmatprep.subr.mxu0 %v2429
        %v2431 = vand.u32 %v1514, 4294901760
        %v2432 = vsub.f32 %v1514, %v2431
        %2433 = vmatpush1.msra.mxu0 %v2432
        %v2434 = vand.u32 %v1519, 4294901760
        %v2435 = vsub.f32 %v1519, %v2434
        %2436 = vmatprep.subr.mxu0 %v2435
        %v2437 = vand.u32 %v1518, 4294901760
        %v2438 = vsub.f32 %v1518, %v2437
        %2439 = vmatpush1.msra.mxu0 %v2438
        %v2440 = vand.u32 %v1523, 4294901760
        %v2441 = vsub.f32 %v1523, %v2440
        %2442 = vmatprep.subr.mxu0 %v2441
        %v2443 = vand.u32 %v1522, 4294901760
        %v2444 = vsub.f32 %v1522, %v2443
        %2445 = vmatpush1.msra.mxu0 %v2444
        %2446 = vmatprep.subr.mxu0 0.0
        %2447 = vmatpush1.msra.mxu0 0.0
        %2448 = vmatprep.subr.mxu0 0.0
        %2449 = vmatpush1.msra.mxu0 0.0
        %2450 = vmatprep.subr.mxu0 0.0
        %2451 = vmatpush1.msra.mxu0 0.0
        %2452 = vmatprep.subr.mxu0 0.0
        %2453 = vmatpush1.msra.mxu0 0.0
        %2454 = vmatprep.subr.mxu0 0.0
        %2455 = vmatpush1.msra.mxu0 0.0
        %2456 = vmatprep.subr.mxu0 0.0
        %2457 = vmatpush1.msra.mxu0 0.0
        %2458 = vmatprep.subr.mxu0 0.0
        %2459 = vmatpush1.msra.mxu0 0.0
        %2460 = vmatprep.subr.mxu0 0.0
        %2461 = vmatpush1.msra.mxu0 0.0
        %2462 = vmatprep.subr.mxu0 0.0
        %2463 = vmatpush1.msra.mxu0 0.0
        %2464 = vmatprep.subr.mxu0 0.0
        %2465 = vmatpush1.msra.mxu0 0.0
        %2466 = vmatprep.subr.mxu0 0.0
        %2467 = vmatpush1.msra.mxu0 0.0
        %2468 = vmatprep.subr.mxu0 0.0
        %2469 = vmatpush1.msra.mxu0 0.0
        %2470 = vmatprep.subr.mxu0 0.0
        %2471 = vmatpush1.msra.mxu0 0.0
        %2472 = vmatprep.subr.mxu0 0.0
        %2473 = vmatpush1.msra.mxu0 0.0
        %2474 = vmatprep.subr.mxu0 0.0
        %2475 = vmatpush1.msra.mxu0 0.0
        %2476 = vmatprep.subr.mxu0 0.0
        %2477 = vmatpush1.msra.mxu0 0.0
        %2478 = vmatprep.subr.mxu0 0.0
        %2479 = vmatpush1.msra.mxu0 0.0
        %2480 = vmatprep.subr.mxu0 0.0
        %2481 = vmatpush1.msra.mxu0 0.0
        %2482 = vmatprep.subr.mxu0 0.0
        %2483 = vmatpush1.msra.mxu0 0.0
        %2484 = vmatprep.subr.mxu0 0.0
        %2485 = vmatpush1.msra.mxu0 0.0
        %2486 = vmatprep.subr.mxu0 0.0
        %2487 = vmatpush1.msra.mxu0 0.0
        %2488 = vmatprep.subr.mxu0 0.0
        %2489 = vmatpush1.msra.mxu0 0.0
        %2490 = vmatprep.subr.mxu0 0.0
        %2491 = vmatpush1.msra.mxu0 0.0
        %2492 = vmatprep.subr.mxu0 0.0
        %2493 = vmatpush1.msra.mxu0 0.0
        %2494 = vmatprep.subr.mxu0 0.0
        %2495 = vmatpush1.msra.mxu0 0.0
        %2496 = vmatprep.subr.mxu0 0.0
        %2497 = vmatpush1.msra.mxu0 0.0
        %2498 = vmatprep.subr.mxu0 0.0
        %2499 = vmatpush1.msra.mxu0 0.0
        %2500 = vmatprep.subr.mxu0 0.0
        %2501 = vmatpush1.msra.mxu0 0.0
        %2502 = vmatprep.mubr.f32.mxu0 0.0
        %v2503 = vand.u32 %v1541, 4294901760
        %v2504 = vsub.f32 %v1541, %v2503
        %2505 = vmatmul.mubr.f32.gmra.mrb[0].mxu0 %v2504
        %v2506 = vpop.f32.mrb[0].mxu0
        %v2507 = vadd.f32 %v2404, %v2506
        %v2508 = vpop.f32.mrb[0].mxu0
        %v2509 = vadd.f32 %v2406, %v2508
        %2510 = vmatprep.mubr.f32.mxu0 0.0
        %v2511 = vand.u32 %v1544, 4294901760
        %v2512 = vsub.f32 %v1544, %v2511
        %2513 = vmatmul.mubr.f32.gmra.mrb[0].mxu0 %v2512
        %v2514 = vpop.f32.mrb[0].mxu0
        %v2515 = vadd.f32 %v2411, %v2514
        %v2516 = vpop.f32.mrb[0].mxu0
        %v2517 = vadd.f32 %v2413, %v2516
        %2518 = vmatprep.mubr.f32.mxu0 0.0
        %v2519 = vand.u32 %v1547, 4294901760
        %v2520 = vsub.f32 %v1547, %v2519
        %2521 = vmatmul.mubr.f32.gmra.mrb[0].mxu0 %v2520
        %v2522 = vpop.f32.mrb[0].mxu0
        %v2523 = vadd.f32 %v2418, %v2522
        %v2524 = vpop.f32.mrb[0].mxu0
        %v2525 = vadd.f32 %v2420, %v2524
        %2526 = vdwg.mxu0
        %v2527 = vand.u32 %v1511, 4294901760
        %2528 = vmatprep.subr.mxu0 %v2527
        %v2529 = vand.u32 %v1510, 4294901760
        %2530 = vmatpush1.msra.mxu0 %v2529
        %v2531 = vand.u32 %v1515, 4294901760
        %2532 = vmatprep.subr.mxu0 %v2531
        %v2533 = vand.u32 %v1514, 4294901760
        %2534 = vmatpush1.msra.mxu0 %v2533
        %v2535 = vand.u32 %v1519, 4294901760
        %2536 = vmatprep.subr.mxu0 %v2535
        %v2537 = vand.u32 %v1518, 4294901760
        %2538 = vmatpush1.msra.mxu0 %v2537
        %v2539 = vand.u32 %v1523, 4294901760
        %2540 = vmatprep.subr.mxu0 %v2539
        %v2541 = vand.u32 %v1522, 4294901760
        %2542 = vmatpush1.msra.mxu0 %v2541
        %2543 = vmatprep.subr.mxu0 0.0
        %2544 = vmatpush1.msra.mxu0 0.0
        %2545 = vmatprep.subr.mxu0 0.0
        %2546 = vmatpush1.msra.mxu0 0.0
        %2547 = vmatprep.subr.mxu0 0.0
        %2548 = vmatpush1.msra.mxu0 0.0
        %2549 = vmatprep.subr.mxu0 0.0
        %2550 = vmatpush1.msra.mxu0 0.0
        %2551 = vmatprep.subr.mxu0 0.0
        %2552 = vmatpush1.msra.mxu0 0.0
        %2553 = vmatprep.subr.mxu0 0.0
        %2554 = vmatpush1.msra.mxu0 0.0
        %2555 = vmatprep.subr.mxu0 0.0
        %2556 = vmatpush1.msra.mxu0 0.0
        %2557 = vmatprep.subr.mxu0 0.0
        %2558 = vmatpush1.msra.mxu0 0.0
        %2559 = vmatprep.subr.mxu0 0.0
        %2560 = vmatpush1.msra.mxu0 0.0
        %2561 = vmatprep.subr.mxu0 0.0
        %2562 = vmatpush1.msra.mxu0 0.0
        %2563 = vmatprep.subr.mxu0 0.0
        %2564 = vmatpush1.msra.mxu0 0.0
        %2565 = vmatprep.subr.mxu0 0.0
        %2566 = vmatpush1.msra.mxu0 0.0
        %2567 = vmatprep.subr.mxu0 0.0
        %2568 = vmatpush1.msra.mxu0 0.0
        %2569 = vmatprep.subr.mxu0 0.0
        %2570 = vmatpush1.msra.mxu0 0.0
        %2571 = vmatprep.subr.mxu0 0.0
        %2572 = vmatpush1.msra.mxu0 0.0
        %2573 = vmatprep.subr.mxu0 0.0
        %2574 = vmatpush1.msra.mxu0 0.0
        %2575 = vmatprep.subr.mxu0 0.0
        %2576 = vmatpush1.msra.mxu0 0.0
        %2577 = vmatprep.subr.mxu0 0.0
        %2578 = vmatpush1.msra.mxu0 0.0
        %2579 = vmatprep.subr.mxu0 0.0
        %2580 = vmatpush1.msra.mxu0 0.0
        %2581 = vmatprep.subr.mxu0 0.0
        %2582 = vmatpush1.msra.mxu0 0.0
        %2583 = vmatprep.subr.mxu0 0.0
        %2584 = vmatpush1.msra.mxu0 0.0
        %2585 = vmatprep.subr.mxu0 0.0
        %2586 = vmatpush1.msra.mxu0 0.0
        %2587 = vmatprep.subr.mxu0 0.0
        %2588 = vmatpush1.msra.mxu0 0.0
        %2589 = vmatprep.subr.mxu0 0.0
        %2590 = vmatpush1.msra.mxu0 0.0
        %2591 = vmatprep.subr.mxu0 0.0
        %2592 = vmatpush1.msra.mxu0 0.0
        %2593 = vmatprep.subr.mxu0 0.0
        %2594 = vmatpush1.msra.mxu0 0.0
        %2595 = vmatprep.subr.mxu0 0.0
        %2596 = vmatpush1.msra.mxu0 0.0
        %2597 = vmatprep.subr.mxu0 0.0
        %2598 = vmatpush1.msra.mxu0 0.0
        %2599 = vmatprep.mubr.f32.mxu0 0.0
        %v2600 = vand.u32 %v1541, 4294901760
        %v2601 = vsub.f32 %v1541, %v2600
        %v2602 = vand.u32 %v2601, 4294901760
        %2603 = vmatmul.mubr.f32.gmra.mrb[0].mxu0 %v2602
        %v2604 = vpop.f32.mrb[0].mxu0
        %v2605 = vadd.f32 %v2507, %v2604
        %v2606 = vpop.f32.mrb[0].mxu0
        %v2607 = vadd.f32 %v2509, %v2606
        %2608 = vmatprep.mubr.f32.mxu0 0.0
        %v2609 = vand.u32 %v1544, 4294901760
        %v2610 = vsub.f32 %v1544, %v2609
        %v2611 = vand.u32 %v2610, 4294901760
        %2612 = vmatmul.mubr.f32.gmra.mrb[0].mxu0 %v2611
        %v2613 = vpop.f32.mrb[0].mxu0
        %v2614 = vadd.f32 %v2515, %v2613
        %v2615 = vpop.f32.mrb[0].mxu0
        %v2616 = vadd.f32 %v2517, %v2615
        %2617 = vmatprep.mubr.f32.mxu0 0.0
        %v2618 = vand.u32 %v1547, 4294901760
        %v2619 = vsub.f32 %v1547, %v2618
        %v2620 = vand.u32 %v2619, 4294901760
        %2621 = vmatmul.mubr.f32.gmra.mrb[0].mxu0 %v2620
        %v2622 = vpop.f32.mrb[0].mxu0
        %v2623 = vadd.f32 %v2523, %v2622
        %v2624 = vpop.f32.mrb[0].mxu0
        %v2625 = vadd.f32 %v2525, %v2624
        %2626 = vdwg.mxu0
        %v2627 = vand.u32 %v1511, 4294901760
        %v2628 = vsub.f32 %v1511, %v2627
        %v2629 = vand.u32 %v2628, 4294901760
        %2630 = vmatprep.subr.mxu0 %v2629
        %v2631 = vand.u32 %v1510, 4294901760
        %v2632 = vsub.f32 %v1510, %v2631
        %v2633 = vand.u32 %v2632, 4294901760
        %2634 = vmatpush1.msra.mxu0 %v2633
        %v2635 = vand.u32 %v1515, 4294901760
        %v2636 = vsub.f32 %v1515, %v2635
        %v2637 = vand.u32 %v2636, 4294901760
        %2638 = vmatprep.subr.mxu0 %v2637
        %v2639 = vand.u32 %v1514, 4294901760
        %v2640 = vsub.f32 %v1514, %v2639
        %v2641 = vand.u32 %v2640, 4294901760
        %2642 = vmatpush1.msra.mxu0 %v2641
        %v2643 = vand.u32 %v1519, 4294901760
        %v2644 = vsub.f32 %v1519, %v2643
        %v2645 = vand.u32 %v2644, 4294901760
        %2646 = vmatprep.subr.mxu0 %v2645
        %v2647 = vand.u32 %v1518, 4294901760
        %v2648 = vsub.f32 %v1518, %v2647
        %v2649 = vand.u32 %v2648, 4294901760
        %2650 = vmatpush1.msra.mxu0 %v2649
        %v2651 = vand.u32 %v1523, 4294901760
        %v2652 = vsub.f32 %v1523, %v2651
        %v2653 = vand.u32 %v2652, 4294901760
        %2654 = vmatprep.subr.mxu0 %v2653
        %v2655 = vand.u32 %v1522, 4294901760
        %v2656 = vsub.f32 %v1522, %v2655
        %v2657 = vand.u32 %v2656, 4294901760
        %2658 = vmatpush1.msra.mxu0 %v2657
        %2659 = vmatprep.subr.mxu0 0.0
        %2660 = vmatpush1.msra.mxu0 0.0
        %2661 = vmatprep.subr.mxu0 0.0
        %2662 = vmatpush1.msra.mxu0 0.0
        %2663 = vmatprep.subr.mxu0 0.0
        %2664 = vmatpush1.msra.mxu0 0.0
        %2665 = vmatprep.subr.mxu0 0.0
        %2666 = vmatpush1.msra.mxu0 0.0
        %2667 = vmatprep.subr.mxu0 0.0
        %2668 = vmatpush1.msra.mxu0 0.0
        %2669 = vmatprep.subr.mxu0 0.0
        %2670 = vmatpush1.msra.mxu0 0.0
        %2671 = vmatprep.subr.mxu0 0.0
        %2672 = vmatpush1.msra.mxu0 0.0
        %2673 = vmatprep.subr.mxu0 0.0
        %2674 = vmatpush1.msra.mxu0 0.0
        %2675 = vmatprep.subr.mxu0 0.0
        %2676 = vmatpush1.msra.mxu0 0.0
        %2677 = vmatprep.subr.mxu0 0.0
        %2678 = vmatpush1.msra.mxu0 0.0
        %2679 = vmatprep.subr.mxu0 0.0
        %2680 = vmatpush1.msra.mxu0 0.0
        %2681 = vmatprep.subr.mxu0 0.0
        %2682 = vmatpush1.msra.mxu0 0.0
        %2683 = vmatprep.subr.mxu0 0.0
        %2684 = vmatpush1.msra.mxu0 0.0
        %2685 = vmatprep.subr.mxu0 0.0
        %2686 = vmatpush1.msra.mxu0 0.0
        %2687 = vmatprep.subr.mxu0 0.0
        %2688 = vmatpush1.msra.mxu0 0.0
        %2689 = vmatprep.subr.mxu0 0.0
        %2690 = vmatpush1.msra.mxu0 0.0
        %2691 = vmatprep.subr.mxu0 0.0
        %2692 = vmatpush1.msra.mxu0 0.0
        %2693 = vmatprep.subr.mxu0 0.0
        %2694 = vmatpush1.msra.mxu0 0.0
        %2695 = vmatprep.subr.mxu0 0.0
        %2696 = vmatpush1.msra.mxu0 0.0
        %2697 = vmatprep.subr.mxu0 0.0
        %2698 = vmatpush1.msra.mxu0 0.0
        %2699 = vmatprep.subr.mxu0 0.0
        %2700 = vmatpush1.msra.mxu0 0.0
        %2701 = vmatprep.subr.mxu0 0.0
        %2702 = vmatpush1.msra.mxu0 0.0
        %2703 = vmatprep.subr.mxu0 0.0
        %2704 = vmatpush1.msra.mxu0 0.0
        %2705 = vmatprep.subr.mxu0 0.0
        %2706 = vmatpush1.msra.mxu0 0.0
        %2707 = vmatprep.subr.mxu0 0.0
        %2708 = vmatpush1.msra.mxu0 0.0
        %2709 = vmatprep.subr.mxu0 0.0
        %2710 = vmatpush1.msra.mxu0 0.0
        %2711 = vmatprep.subr.mxu0 0.0
        %2712 = vmatpush1.msra.mxu0 0.0
        %2713 = vmatprep.subr.mxu0 0.0
        %2714 = vmatpush1.msra.mxu0 0.0
        %2715 = vmatprep.mubr.f32.mxu0 0.0
        %v2716 = vand.u32 %v1541, 4294901760
        %2717 = vmatmul.mubr.f32.gmra.mrb[0].mxu0 %v2716
        %v2718 = vpop.f32.mrb[0].mxu0
        %v2719 = vadd.f32 %v2605, %v2718
        %v2720 = vpop.f32.mrb[0].mxu0
        %v2721 = vadd.f32 %v2607, %v2720
        %2722 = vmatprep.mubr.f32.mxu0 0.0
        %v2723 = vand.u32 %v1544, 4294901760
        %2724 = vmatmul.mubr.f32.gmra.mrb[0].mxu0 %v2723
        %v2725 = vpop.f32.mrb[0].mxu0
        %v2726 = vadd.f32 %v2614, %v2725
        %v2727 = vpop.f32.mrb[0].mxu0
        %v2728 = vadd.f32 %v2616, %v2727
        %2729 = vmatprep.mubr.f32.mxu0 0.0
        %v2730 = vand.u32 %v1547, 4294901760
        %2731 = vmatmul.mubr.f32.gmra.mrb[0].mxu0 %v2730
        %v2732 = vpop.f32.mrb[0].mxu0
        %v2733 = vadd.f32 %v2623, %v2732
        %v2734 = vpop.f32.mrb[0].mxu0
        %v2735 = vadd.f32 %v2625, %v2734
        %2736 = vdwg.mxu0
        %v2737 = vand.u32 %v1511, 4294901760
        %2738 = vmatprep.subr.mxu0 %v2737
        %v2739 = vand.u32 %v1510, 4294901760
        %2740 = vmatpush1.msra.mxu0 %v2739
        %v2741 = vand.u32 %v1515, 4294901760
        %2742 = vmatprep.subr.mxu0 %v2741
        %v2743 = vand.u32 %v1514, 4294901760
        %2744 = vmatpush1.msra.mxu0 %v2743
        %v2745 = vand.u32 %v1519, 4294901760
        %2746 = vmatprep.subr.mxu0 %v2745
        %v2747 = vand.u32 %v1518, 4294901760
        %2748 = vmatpush1.msra.mxu0 %v2747
        %v2749 = vand.u32 %v1523, 4294901760
        %2750 = vmatprep.subr.mxu0 %v2749
        %v2751 = vand.u32 %v1522, 4294901760
        %2752 = vmatpush1.msra.mxu0 %v2751
        %2753 = vmatprep.subr.mxu0 0.0
        %2754 = vmatpush1.msra.mxu0 0.0
        %2755 = vmatprep.subr.mxu0 0.0
        %2756 = vmatpush1.msra.mxu0 0.0
        %2757 = vmatprep.subr.mxu0 0.0
        %2758 = vmatpush1.msra.mxu0 0.0
        %2759 = vmatprep.subr.mxu0 0.0
        %2760 = vmatpush1.msra.mxu0 0.0
        %2761 = vmatprep.subr.mxu0 0.0
        %2762 = vmatpush1.msra.mxu0 0.0
        %2763 = vmatprep.subr.mxu0 0.0
        %2764 = vmatpush1.msra.mxu0 0.0
        %2765 = vmatprep.subr.mxu0 0.0
        %2766 = vmatpush1.msra.mxu0 0.0
        %2767 = vmatprep.subr.mxu0 0.0
        %2768 = vmatpush1.msra.mxu0 0.0
        %2769 = vmatprep.subr.mxu0 0.0
        %2770 = vmatpush1.msra.mxu0 0.0
        %2771 = vmatprep.subr.mxu0 0.0
        %2772 = vmatpush1.msra.mxu0 0.0
        %2773 = vmatprep.subr.mxu0 0.0
        %2774 = vmatpush1.msra.mxu0 0.0
        %2775 = vmatprep.subr.mxu0 0.0
        %2776 = vmatpush1.msra.mxu0 0.0
        %2777 = vmatprep.subr.mxu0 0.0
        %2778 = vmatpush1.msra.mxu0 0.0
        %2779 = vmatprep.subr.mxu0 0.0
        %2780 = vmatpush1.msra.mxu0 0.0
        %2781 = vmatprep.subr.mxu0 0.0
        %2782 = vmatpush1.msra.mxu0 0.0
        %2783 = vmatprep.subr.mxu0 0.0
        %2784 = vmatpush1.msra.mxu0 0.0
        %2785 = vmatprep.subr.mxu0 0.0
        %2786 = vmatpush1.msra.mxu0 0.0
        %2787 = vmatprep.subr.mxu0 0.0
        %2788 = vmatpush1.msra.mxu0 0.0
        %2789 = vmatprep.subr.mxu0 0.0
        %2790 = vmatpush1.msra.mxu0 0.0
        %2791 = vmatprep.subr.mxu0 0.0
        %2792 = vmatpush1.msra.mxu0 0.0
        %2793 = vmatprep.subr.mxu0 0.0
        %2794 = vmatpush1.msra.mxu0 0.0
        %2795 = vmatprep.subr.mxu0 0.0
        %2796 = vmatpush1.msra.mxu0 0.0
        %2797 = vmatprep.subr.mxu0 0.0
        %2798 = vmatpush1.msra.mxu0 0.0
        %2799 = vmatprep.subr.mxu0 0.0
        %2800 = vmatpush1.msra.mxu0 0.0
        %2801 = vmatprep.subr.mxu0 0.0
        %2802 = vmatpush1.msra.mxu0 0.0
        %2803 = vmatprep.subr.mxu0 0.0
        %2804 = vmatpush1.msra.mxu0 0.0
        %2805 = vmatprep.subr.mxu0 0.0
        %2806 = vmatpush1.msra.mxu0 0.0
        %2807 = vmatprep.subr.mxu0 0.0
        %2808 = vmatpush1.msra.mxu0 0.0
        %2809 = vmatprep.mubr.f32.mxu0 0.0
        %v2810 = vand.u32 %v1541, 4294901760
        %2811 = vmatmul.mubr.f32.gmra.mrb[0].mxu0 %v2810
        %v2812 = vpop.f32.mrb[0].mxu0
        %v2813 = vadd.f32 %v2719, %v2812
        %v2814 = vpop.f32.mrb[0].mxu0
        %v2815 = vadd.f32 %v2721, %v2814
        %2816 = vmatprep.mubr.f32.mxu0 0.0
        %v2817 = vand.u32 %v1544, 4294901760
        %2818 = vmatmul.mubr.f32.gmra.mrb[0].mxu0 %v2817
        %v2819 = vpop.f32.mrb[0].mxu0
        %v2820 = vadd.f32 %v2726, %v2819
        %v2821 = vpop.f32.mrb[0].mxu0
        %v2822 = vadd.f32 %v2728, %v2821
        %2823 = vmatprep.mubr.f32.mxu0 0.0
        %v2824 = vand.u32 %v1547, 4294901760
        %2825 = vmatmul.mubr.f32.gmra.mrb[0].mxu0 %v2824
        %v2826 = vpop.f32.mrb[0].mxu0
        %v2827 = vadd.f32 %v2733, %v2826
        %v2828 = vpop.f32.mrb[0].mxu0
        %v2829 = vadd.f32 %v2735, %v2828
        %2830 = vdwg.mxu0
        %2831 = vst [vmem:[%s214] sm:$0xff] %v2172
        %2832 = vst [vmem:[%s214 + $0x8] sm:$0xff] %v2174
        %2833 = vst [vmem:[%s214 + $0x10] sm:$0xff] %v2813
        %2834 = vst [vmem:[%s214 + $0x18] sm:$0xff] %v2815
        %2835 = vst [vmem:[%s214 + $0x60] sm:$0xff] %v2179
        %2836 = vst [vmem:[%s214 + $0x68] sm:$0xff] %v2181
        %2837 = vst [vmem:[%s214 + $0x70] sm:$0xff] %v2820
        %2838 = vst [vmem:[%s214 + $0x78] sm:$0xff] %v2822
        %2839 = vst [vmem:[%s214 + $0xc0] sm:$0xf] %v2186
        %2840 = vst [vmem:[%s214 + $0xc8] sm:$0xf] %v2188
        %2841 = vst [vmem:[%s214 + $0xd0] sm:$0xf] %v2827
        %2842 = vst [vmem:[%s214 + $0xd8] sm:$0xf] %v2829
        %s2843 = scalar_lea.vmem %s219, 16
        %v2844 = vld [vmem:[%s2843] sm:$0x77]
        %v2845 = vld [vmem:[%s2843 + $0x8] sm:$0x77]
        %v2848 = vcombine.high %v2844, %v2844
        %v2849 = vcombine.high %v2845, %v2845
        %v2850 = vsel %vm275, %v2844, 0
        %v2852 = vsel %vm275, %v2848, 0
        %v2854 = vsel %vm275, %v2845, 0
        %v2856 = vsel %vm275, %v2849, 0
        %v2858 = vand.u32 %v2852, 4294901760
        %2859 = vmatprep.subr.mxu0 %v2858
        %v2860 = vand.u32 %v2850, 4294901760
        %2861 = vmatpush1.msra.mxu0 %v2860
        %2862 = vmatprep.subr.mxu0 0.0
        %2863 = vmatpush1.msra.mxu0 0.0
        %2864 = vmatprep.subr.mxu0 0.0
        %2865 = vmatpush1.msra.mxu0 0.0
        %2866 = vmatprep.subr.mxu0 0.0
        %2867 = vmatpush1.msra.mxu0 0.0
        %2868 = vmatprep.subr.mxu0 0.0
        %2869 = vmatpush1.msra.mxu0 0.0
        %2870 = vmatprep.subr.mxu0 0.0
        %2871 = vmatpush1.msra.mxu0 0.0
        %2872 = vmatprep.subr.mxu0 0.0
        %2873 = vmatpush1.msra.mxu0 0.0
        %2874 = vmatprep.subr.mxu0 0.0
        %2875 = vmatpush1.msra.mxu0 0.0
        %2876 = vmatprep.subr.mxu0 0.0
        %2877 = vmatpush1.msra.mxu0 0.0
        %2878 = vmatprep.subr.mxu0 0.0
        %2879 = vmatpush1.msra.mxu0 0.0
        %2880 = vmatprep.subr.mxu0 0.0
        %2881 = vmatpush1.msra.mxu0 0.0
        %2882 = vmatprep.subr.mxu0 0.0
        %2883 = vmatpush1.msra.mxu0 0.0
        %2884 = vmatprep.subr.mxu0 0.0
        %2885 = vmatpush1.msra.mxu0 0.0
        %2886 = vmatprep.subr.mxu0 0.0
        %2887 = vmatpush1.msra.mxu0 0.0
        %2888 = vmatprep.subr.mxu0 0.0
        %2889 = vmatpush1.msra.mxu0 0.0
        %2890 = vmatprep.subr.mxu0 0.0
        %2891 = vmatpush1.msra.mxu0 0.0
        %2892 = vmatprep.subr.mxu0 0.0
        %2893 = vmatpush1.msra.mxu0 0.0
        %2894 = vmatprep.subr.mxu0 0.0
        %2895 = vmatpush1.msra.mxu0 0.0
        %2896 = vmatprep.subr.mxu0 0.0
        %2897 = vmatpush1.msra.mxu0 0.0
        %2898 = vmatprep.subr.mxu0 0.0
        %2899 = vmatpush1.msra.mxu0 0.0
        %2900 = vmatprep.subr.mxu0 0.0
        %2901 = vmatpush1.msra.mxu0 0.0
        %2902 = vmatprep.subr.mxu0 0.0
        %2903 = vmatpush1.msra.mxu0 0.0
        %2904 = vmatprep.subr.mxu0 0.0
        %2905 = vmatpush1.msra.mxu0 0.0
        %2906 = vmatprep.subr.mxu0 0.0
        %2907 = vmatpush1.msra.mxu0 0.0
        %2908 = vmatprep.subr.mxu0 0.0
        %2909 = vmatpush1.msra.mxu0 0.0
        %2910 = vmatprep.subr.mxu0 0.0
        %2911 = vmatpush1.msra.mxu0 0.0
        %2912 = vmatprep.subr.mxu0 0.0
        %2913 = vmatpush1.msra.mxu0 0.0
        %2914 = vmatprep.subr.mxu0 0.0
        %2915 = vmatpush1.msra.mxu0 0.0
        %2916 = vmatprep.subr.mxu0 0.0
        %2917 = vmatpush1.msra.mxu0 0.0
        %2918 = vmatprep.subr.mxu0 0.0
        %2919 = vmatpush1.msra.mxu0 0.0
        %2920 = vmatprep.subr.mxu0 0.0
        %2921 = vmatpush1.msra.mxu0 0.0
        %2922 = vmatprep.subr.mxu0 0.0
        %2923 = vmatpush1.msra.mxu0 0.0
        %2924 = vmatprep.mubr.f32.mxu0 0.0
        %v2925 = vand.u32 %v264, 4294901760
        %v2926 = vsub.f32 %v264, %v2925
        %v2927 = vand.u32 %v2926, 4294901760
        %v2928 = vsub.f32 %v2926, %v2927
        %v2929 = vand.u32 %v2928, 4294901760
        %2930 = vmatmul.mubr.f32.gmra.mrb[0].mxu0 %v2929
        %v2931 = vpop.f32.mrb[0].mxu0
        %v2932 = vadd.f32 %v241, %v2931
        %v2933 = vpop.f32.mrb[0].mxu0
        %v2934 = vadd.f32 %v241, %v2933
        %2935 = vmatprep.mubr.f32.mxu0 0.0
        %v2936 = vand.u32 %v267, 4294901760
        %v2937 = vsub.f32 %v267, %v2936
        %v2938 = vand.u32 %v2937, 4294901760
        %v2939 = vsub.f32 %v2937, %v2938
        %v2940 = vand.u32 %v2939, 4294901760
        %2941 = vmatmul.mubr.f32.gmra.mrb[0].mxu0 %v2940
        %v2942 = vpop.f32.mrb[0].mxu0
        %v2943 = vadd.f32 %v246, %v2942
        %v2944 = vpop.f32.mrb[0].mxu0
        %v2945 = vadd.f32 %v246, %v2944
        %2946 = vmatprep.mubr.f32.mxu0 0.0
        %v2947 = vand.u32 %v270, 4294901760
        %v2948 = vsub.f32 %v270, %v2947
        %v2949 = vand.u32 %v2948, 4294901760
        %v2950 = vsub.f32 %v2948, %v2949
        %v2951 = vand.u32 %v2950, 4294901760
        %2952 = vmatmul.mubr.f32.gmra.mrb[0].mxu0 %v2951
        %v2953 = vpop.f32.mrb[0].mxu0
        %v2954 = vadd.f32 %v251, %v2953
        %v2955 = vpop.f32.mrb[0].mxu0
        %v2956 = vadd.f32 %v251, %v2955
        %2957 = vmatprep.mubr.f32.mxu0 0.0
        %v2958 = vand.u32 %v273, 4294901760
        %v2959 = vsub.f32 %v273, %v2958
        %v2960 = vand.u32 %v2959, 4294901760
        %v2961 = vsub.f32 %v2959, %v2960
        %v2962 = vand.u32 %v2961, 4294901760
        %2963 = vmatmul.mubr.f32.gmra.mrb[0].mxu0 %v2962
        %v2964 = vpop.f32.mrb[0].mxu0
        %v2965 = vadd.f32 %v256, %v2964
        %v2966 = vpop.f32.mrb[0].mxu0
        %v2967 = vadd.f32 %v256, %v2966
        %2968 = vdwg.mxu0
        %v2969 = vand.u32 %v2852, 4294901760
        %v2970 = vsub.f32 %v2852, %v2969
        %v2971 = vand.u32 %v2970, 4294901760
        %v2972 = vsub.f32 %v2970, %v2971
        %v2973 = vand.u32 %v2972, 4294901760
        %2974 = vmatprep.subr.mxu0 %v2973
        %v2975 = vand.u32 %v2850, 4294901760
        %v2976 = vsub.f32 %v2850, %v2975
        %v2977 = vand.u32 %v2976, 4294901760
        %v2978 = vsub.f32 %v2976, %v2977
        %v2979 = vand.u32 %v2978, 4294901760
        %2980 = vmatpush1.msra.mxu0 %v2979
        %2981 = vmatprep.subr.mxu0 0.0
        %2982 = vmatpush1.msra.mxu0 0.0
        %2983 = vmatprep.subr.mxu0 0.0
        %2984 = vmatpush1.msra.mxu0 0.0
        %2985 = vmatprep.subr.mxu0 0.0
        %2986 = vmatpush1.msra.mxu0 0.0
        %2987 = vmatprep.subr.mxu0 0.0
        %2988 = vmatpush1.msra.mxu0 0.0
        %2989 = vmatprep.subr.mxu0 0.0
        %2990 = vmatpush1.msra.mxu0 0.0
        %2991 = vmatprep.subr.mxu0 0.0
        %2992 = vmatpush1.msra.mxu0 0.0
        %2993 = vmatprep.subr.mxu0 0.0
        %2994 = vmatpush1.msra.mxu0 0.0
        %2995 = vmatprep.subr.mxu0 0.0
        %2996 = vmatpush1.msra.mxu0 0.0
        %2997 = vmatprep.subr.mxu0 0.0
        %2998 = vmatpush1.msra.mxu0 0.0
        %2999 = vmatprep.subr.mxu0 0.0
        %3000 = vmatpush1.msra.mxu0 0.0
        %3001 = vmatprep.subr.mxu0 0.0
        %3002 = vmatpush1.msra.mxu0 0.0
        %3003 = vmatprep.subr.mxu0 0.0
        %3004 = vmatpush1.msra.mxu0 0.0
        %3005 = vmatprep.subr.mxu0 0.0
        %3006 = vmatpush1.msra.mxu0 0.0
        %3007 = vmatprep.subr.mxu0 0.0
        %3008 = vmatpush1.msra.mxu0 0.0
        %3009 = vmatprep.subr.mxu0 0.0
        %3010 = vmatpush1.msra.mxu0 0.0
        %3011 = vmatprep.subr.mxu0 0.0
        %3012 = vmatpush1.msra.mxu0 0.0
        %3013 = vmatprep.subr.mxu0 0.0
        %3014 = vmatpush1.msra.mxu0 0.0
        %3015 = vmatprep.subr.mxu0 0.0
        %3016 = vmatpush1.msra.mxu0 0.0
        %3017 = vmatprep.subr.mxu0 0.0
        %3018 = vmatpush1.msra.mxu0 0.0
        %3019 = vmatprep.subr.mxu0 0.0
        %3020 = vmatpush1.msra.mxu0 0.0
        %3021 = vmatprep.subr.mxu0 0.0
        %3022 = vmatpush1.msra.mxu0 0.0
        %3023 = vmatprep.subr.mxu0 0.0
        %3024 = vmatpush1.msra.mxu0 0.0
        %3025 = vmatprep.subr.mxu0 0.0
        %3026 = vmatpush1.msra.mxu0 0.0
        %3027 = vmatprep.subr.mxu0 0.0
        %3028 = vmatpush1.msra.mxu0 0.0
        %3029 = vmatprep.subr.mxu0 0.0
        %3030 = vmatpush1.msra.mxu0 0.0
        %3031 = vmatprep.subr.mxu0 0.0
        %3032 = vmatpush1.msra.mxu0 0.0
        %3033 = vmatprep.subr.mxu0 0.0
        %3034 = vmatpush1.msra.mxu0 0.0
        %3035 = vmatprep.subr.mxu0 0.0
        %3036 = vmatpush1.msra.mxu0 0.0
        %3037 = vmatprep.subr.mxu0 0.0
        %3038 = vmatpush1.msra.mxu0 0.0
        %3039 = vmatprep.subr.mxu0 0.0
        %3040 = vmatpush1.msra.mxu0 0.0
        %3041 = vmatprep.subr.mxu0 0.0
        %3042 = vmatpush1.msra.mxu0 0.0
        %3043 = vmatprep.mubr.f32.mxu0 0.0
        %v3044 = vand.u32 %v264, 4294901760
        %3045 = vmatmul.mubr.f32.gmra.mrb[0].mxu0 %v3044
        %v3046 = vpop.f32.mrb[0].mxu0
        %v3047 = vadd.f32 %v2932, %v3046
        %v3048 = vpop.f32.mrb[0].mxu0
        %v3049 = vadd.f32 %v2934, %v3048
        %3050 = vmatprep.mubr.f32.mxu0 0.0
        %v3051 = vand.u32 %v267, 4294901760
        %3052 = vmatmul.mubr.f32.gmra.mrb[0].mxu0 %v3051
        %v3053 = vpop.f32.mrb[0].mxu0
        %v3054 = vadd.f32 %v2943, %v3053
        %v3055 = vpop.f32.mrb[0].mxu0
        %v3056 = vadd.f32 %v2945, %v3055
        %3057 = vmatprep.mubr.f32.mxu0 0.0
        %v3058 = vand.u32 %v270, 4294901760
        %3059 = vmatmul.mubr.f32.gmra.mrb[0].mxu0 %v3058
        %v3060 = vpop.f32.mrb[0].mxu0
        %v3061 = vadd.f32 %v2954, %v3060
        %v3062 = vpop.f32.mrb[0].mxu0
        %v3063 = vadd.f32 %v2956, %v3062
        %3064 = vmatprep.mubr.f32.mxu0 0.0
        %v3065 = vand.u32 %v273, 4294901760
        %3066 = vmatmul.mubr.f32.gmra.mrb[0].mxu0 %v3065
        %v3067 = vpop.f32.mrb[0].mxu0
        %v3068 = vadd.f32 %v2965, %v3067
        %v3069 = vpop.f32.mrb[0].mxu0
        %v3070 = vadd.f32 %v2967, %v3069
        %3071 = vdwg.mxu0
        %v3072 = vand.u32 %v2852, 4294901760
        %v3073 = vsub.f32 %v2852, %v3072
        %3074 = vmatprep.subr.mxu0 %v3073
        %v3075 = vand.u32 %v2850, 4294901760
        %v3076 = vsub.f32 %v2850, %v3075
        %3077 = vmatpush1.msra.mxu0 %v3076
        %3078 = vmatprep.subr.mxu0 0.0
        %3079 = vmatpush1.msra.mxu0 0.0
        %3080 = vmatprep.subr.mxu0 0.0
        %3081 = vmatpush1.msra.mxu0 0.0
        %3082 = vmatprep.subr.mxu0 0.0
        %3083 = vmatpush1.msra.mxu0 0.0
        %3084 = vmatprep.subr.mxu0 0.0
        %3085 = vmatpush1.msra.mxu0 0.0
        %3086 = vmatprep.subr.mxu0 0.0
        %3087 = vmatpush1.msra.mxu0 0.0
        %3088 = vmatprep.subr.mxu0 0.0
        %3089 = vmatpush1.msra.mxu0 0.0
        %3090 = vmatprep.subr.mxu0 0.0
        %3091 = vmatpush1.msra.mxu0 0.0
        %3092 = vmatprep.subr.mxu0 0.0
        %3093 = vmatpush1.msra.mxu0 0.0
        %3094 = vmatprep.subr.mxu0 0.0
        %3095 = vmatpush1.msra.mxu0 0.0
        %3096 = vmatprep.subr.mxu0 0.0
        %3097 = vmatpush1.msra.mxu0 0.0
        %3098 = vmatprep.subr.mxu0 0.0
        %3099 = vmatpush1.msra.mxu0 0.0
        %3100 = vmatprep.subr.mxu0 0.0
        %3101 = vmatpush1.msra.mxu0 0.0
        %3102 = vmatprep.subr.mxu0 0.0
        %3103 = vmatpush1.msra.mxu0 0.0
        %3104 = vmatprep.subr.mxu0 0.0
        %3105 = vmatpush1.msra.mxu0 0.0
        %3106 = vmatprep.subr.mxu0 0.0
        %3107 = vmatpush1.msra.mxu0 0.0
        %3108 = vmatprep.subr.mxu0 0.0
        %3109 = vmatpush1.msra.mxu0 0.0
        %3110 = vmatprep.subr.mxu0 0.0
        %3111 = vmatpush1.msra.mxu0 0.0
        %3112 = vmatprep.subr.mxu0 0.0
        %3113 = vmatpush1.msra.mxu0 0.0
        %3114 = vmatprep.subr.mxu0 0.0
        %3115 = vmatpush1.msra.mxu0 0.0
        %3116 = vmatprep.subr.mxu0 0.0
        %3117 = vmatpush1.msra.mxu0 0.0
        %3118 = vmatprep.subr.mxu0 0.0
        %3119 = vmatpush1.msra.mxu0 0.0
        %3120 = vmatprep.subr.mxu0 0.0
        %3121 = vmatpush1.msra.mxu0 0.0
        %3122 = vmatprep.subr.mxu0 0.0
        %3123 = vmatpush1.msra.mxu0 0.0
        %3124 = vmatprep.subr.mxu0 0.0
        %3125 = vmatpush1.msra.mxu0 0.0
        %3126 = vmatprep.subr.mxu0 0.0
        %3127 = vmatpush1.msra.mxu0 0.0
        %3128 = vmatprep.subr.mxu0 0.0
        %3129 = vmatpush1.msra.mxu0 0.0
        %3130 = vmatprep.subr.mxu0 0.0
        %3131 = vmatpush1.msra.mxu0 0.0
        %3132 = vmatprep.subr.mxu0 0.0
        %3133 = vmatpush1.msra.mxu0 0.0
        %3134 = vmatprep.subr.mxu0 0.0
        %3135 = vmatpush1.msra.mxu0 0.0
        %3136 = vmatprep.subr.mxu0 0.0
        %3137 = vmatpush1.msra.mxu0 0.0
        %3138 = vmatprep.subr.mxu0 0.0
        %3139 = vmatpush1.msra.mxu0 0.0
        %3140 = vmatprep.mubr.f32.mxu0 0.0
        %v3141 = vand.u32 %v264, 4294901760
        %v3142 = vsub.f32 %v264, %v3141
        %3143 = vmatmul.mubr.f32.gmra.mrb[0].mxu0 %v3142
        %v3144 = vpop.f32.mrb[0].mxu0
        %v3145 = vadd.f32 %v3047, %v3144
        %v3146 = vpop.f32.mrb[0].mxu0
        %v3147 = vadd.f32 %v3049, %v3146
        %3148 = vmatprep.mubr.f32.mxu0 0.0
        %v3149 = vand.u32 %v267, 4294901760
        %v3150 = vsub.f32 %v267, %v3149
        %3151 = vmatmul.mubr.f32.gmra.mrb[0].mxu0 %v3150
        %v3152 = vpop.f32.mrb[0].mxu0
        %v3153 = vadd.f32 %v3054, %v3152
        %v3154 = vpop.f32.mrb[0].mxu0
        %v3155 = vadd.f32 %v3056, %v3154
        %3156 = vmatprep.mubr.f32.mxu0 0.0
        %v3157 = vand.u32 %v270, 4294901760
        %v3158 = vsub.f32 %v270, %v3157
        %3159 = vmatmul.mubr.f32.gmra.mrb[0].mxu0 %v3158
        %v3160 = vpop.f32.mrb[0].mxu0
        %v3161 = vadd.f32 %v3061, %v3160
        %v3162 = vpop.f32.mrb[0].mxu0
        %v3163 = vadd.f32 %v3063, %v3162
        %3164 = vmatprep.mubr.f32.mxu0 0.0
        %v3165 = vand.u32 %v273, 4294901760
        %v3166 = vsub.f32 %v273, %v3165
        %3167 = vmatmul.mubr.f32.gmra.mrb[0].mxu0 %v3166
        %v3168 = vpop.f32.mrb[0].mxu0
        %v3169 = vadd.f32 %v3068, %v3168
        %v3170 = vpop.f32.mrb[0].mxu0
        %v3171 = vadd.f32 %v3070, %v3170
        %3172 = vdwg.mxu0
        %v3173 = vand.u32 %v2852, 4294901760
        %3174 = vmatprep.subr.mxu0 %v3173
        %v3175 = vand.u32 %v2850, 4294901760
        %3176 = vmatpush1.msra.mxu0 %v3175
        %3177 = vmatprep.subr.mxu0 0.0
        %3178 = vmatpush1.msra.mxu0 0.0
        %3179 = vmatprep.subr.mxu0 0.0
        %3180 = vmatpush1.msra.mxu0 0.0
        %3181 = vmatprep.subr.mxu0 0.0
        %3182 = vmatpush1.msra.mxu0 0.0
        %3183 = vmatprep.subr.mxu0 0.0
        %3184 = vmatpush1.msra.mxu0 0.0
        %3185 = vmatprep.subr.mxu0 0.0
        %3186 = vmatpush1.msra.mxu0 0.0
        %3187 = vmatprep.subr.mxu0 0.0
        %3188 = vmatpush1.msra.mxu0 0.0
        %3189 = vmatprep.subr.mxu0 0.0
        %3190 = vmatpush1.msra.mxu0 0.0
        %3191 = vmatprep.subr.mxu0 0.0
        %3192 = vmatpush1.msra.mxu0 0.0
        %3193 = vmatprep.subr.mxu0 0.0
        %3194 = vmatpush1.msra.mxu0 0.0
        %3195 = vmatprep.subr.mxu0 0.0
        %3196 = vmatpush1.msra.mxu0 0.0
        %3197 = vmatprep.subr.mxu0 0.0
        %3198 = vmatpush1.msra.mxu0 0.0
        %3199 = vmatprep.subr.mxu0 0.0
        %3200 = vmatpush1.msra.mxu0 0.0
        %3201 = vmatprep.subr.mxu0 0.0
        %3202 = vmatpush1.msra.mxu0 0.0
        %3203 = vmatprep.subr.mxu0 0.0
        %3204 = vmatpush1.msra.mxu0 0.0
        %3205 = vmatprep.subr.mxu0 0.0
        %3206 = vmatpush1.msra.mxu0 0.0
        %3207 = vmatprep.subr.mxu0 0.0
        %3208 = vmatpush1.msra.mxu0 0.0
        %3209 = vmatprep.subr.mxu0 0.0
        %3210 = vmatpush1.msra.mxu0 0.0
        %3211 = vmatprep.subr.mxu0 0.0
        %3212 = vmatpush1.msra.mxu0 0.0
        %3213 = vmatprep.subr.mxu0 0.0
        %3214 = vmatpush1.msra.mxu0 0.0
        %3215 = vmatprep.subr.mxu0 0.0
        %3216 = vmatpush1.msra.mxu0 0.0
        %3217 = vmatprep.subr.mxu0 0.0
        %3218 = vmatpush1.msra.mxu0 0.0
        %3219 = vmatprep.subr.mxu0 0.0
        %3220 = vmatpush1.msra.mxu0 0.0
        %3221 = vmatprep.subr.mxu0 0.0
        %3222 = vmatpush1.msra.mxu0 0.0
        %3223 = vmatprep.subr.mxu0 0.0
        %3224 = vmatpush1.msra.mxu0 0.0
        %3225 = vmatprep.subr.mxu0 0.0
        %3226 = vmatpush1.msra.mxu0 0.0
        %3227 = vmatprep.subr.mxu0 0.0
        %3228 = vmatpush1.msra.mxu0 0.0
        %3229 = vmatprep.subr.mxu0 0.0
        %3230 = vmatpush1.msra.mxu0 0.0
        %3231 = vmatprep.subr.mxu0 0.0
        %3232 = vmatpush1.msra.mxu0 0.0
        %3233 = vmatprep.subr.mxu0 0.0
        %3234 = vmatpush1.msra.mxu0 0.0
        %3235 = vmatprep.subr.mxu0 0.0
        %3236 = vmatpush1.msra.mxu0 0.0
        %3237 = vmatprep.subr.mxu0 0.0
        %3238 = vmatpush1.msra.mxu0 0.0
        %3239 = vmatprep.mubr.f32.mxu0 0.0
        %v3240 = vand.u32 %v264, 4294901760
        %v3241 = vsub.f32 %v264, %v3240
        %v3242 = vand.u32 %v3241, 4294901760
        %3243 = vmatmul.mubr.f32.gmra.mrb[0].mxu0 %v3242
        %v3244 = vpop.f32.mrb[0].mxu0
        %v3245 = vadd.f32 %v3145, %v3244
        %v3246 = vpop.f32.mrb[0].mxu0
        %v3247 = vadd.f32 %v3147, %v3246
        %3248 = vmatprep.mubr.f32.mxu0 0.0
        %v3249 = vand.u32 %v267, 4294901760
        %v3250 = vsub.f32 %v267, %v3249
        %v3251 = vand.u32 %v3250, 4294901760
        %3252 = vmatmul.mubr.f32.gmra.mrb[0].mxu0 %v3251
        %v3253 = vpop.f32.mrb[0].mxu0
        %v3254 = vadd.f32 %v3153, %v3253
        %v3255 = vpop.f32.mrb[0].mxu0
        %v3256 = vadd.f32 %v3155, %v3255
        %3257 = vmatprep.mubr.f32.mxu0 0.0
        %v3258 = vand.u32 %v270, 4294901760
        %v3259 = vsub.f32 %v270, %v3258
        %v3260 = vand.u32 %v3259, 4294901760
        %3261 = vmatmul.mubr.f32.gmra.mrb[0].mxu0 %v3260
        %v3262 = vpop.f32.mrb[0].mxu0
        %v3263 = vadd.f32 %v3161, %v3262
        %v3264 = vpop.f32.mrb[0].mxu0
        %v3265 = vadd.f32 %v3163, %v3264
        %3266 = vmatprep.mubr.f32.mxu0 0.0
        %v3267 = vand.u32 %v273, 4294901760
        %v3268 = vsub.f32 %v273, %v3267
        %v3269 = vand.u32 %v3268, 4294901760
        %3270 = vmatmul.mubr.f32.gmra.mrb[0].mxu0 %v3269
        %v3271 = vpop.f32.mrb[0].mxu0
        %v3272 = vadd.f32 %v3169, %v3271
        %v3273 = vpop.f32.mrb[0].mxu0
        %v3274 = vadd.f32 %v3171, %v3273
        %3275 = vdwg.mxu0
        %v3276 = vand.u32 %v2852, 4294901760
        %v3277 = vsub.f32 %v2852, %v3276
        %v3278 = vand.u32 %v3277, 4294901760
        %3279 = vmatprep.subr.mxu0 %v3278
        %v3280 = vand.u32 %v2850, 4294901760
        %v3281 = vsub.f32 %v2850, %v3280
        %v3282 = vand.u32 %v3281, 4294901760
        %3283 = vmatpush1.msra.mxu0 %v3282
        %3284 = vmatprep.subr.mxu0 0.0
        %3285 = vmatpush1.msra.mxu0 0.0
        %3286 = vmatprep.subr.mxu0 0.0
        %3287 = vmatpush1.msra.mxu0 0.0
        %3288 = vmatprep.subr.mxu0 0.0
        %3289 = vmatpush1.msra.mxu0 0.0
        %3290 = vmatprep.subr.mxu0 0.0
        %3291 = vmatpush1.msra.mxu0 0.0
        %3292 = vmatprep.subr.mxu0 0.0
        %3293 = vmatpush1.msra.mxu0 0.0
        %3294 = vmatprep.subr.mxu0 0.0
        %3295 = vmatpush1.msra.mxu0 0.0
        %3296 = vmatprep.subr.mxu0 0.0
        %3297 = vmatpush1.msra.mxu0 0.0
        %3298 = vmatprep.subr.mxu0 0.0
        %3299 = vmatpush1.msra.mxu0 0.0
        %3300 = vmatprep.subr.mxu0 0.0
        %3301 = vmatpush1.msra.mxu0 0.0
        %3302 = vmatprep.subr.mxu0 0.0
        %3303 = vmatpush1.msra.mxu0 0.0
        %3304 = vmatprep.subr.mxu0 0.0
        %3305 = vmatpush1.msra.mxu0 0.0
        %3306 = vmatprep.subr.mxu0 0.0
        %3307 = vmatpush1.msra.mxu0 0.0
        %3308 = vmatprep.subr.mxu0 0.0
        %3309 = vmatpush1.msra.mxu0 0.0
        %3310 = vmatprep.subr.mxu0 0.0
        %3311 = vmatpush1.msra.mxu0 0.0
        %3312 = vmatprep.subr.mxu0 0.0
        %3313 = vmatpush1.msra.mxu0 0.0
        %3314 = vmatprep.subr.mxu0 0.0
        %3315 = vmatpush1.msra.mxu0 0.0
        %3316 = vmatprep.subr.mxu0 0.0
        %3317 = vmatpush1.msra.mxu0 0.0
        %3318 = vmatprep.subr.mxu0 0.0
        %3319 = vmatpush1.msra.mxu0 0.0
        %3320 = vmatprep.subr.mxu0 0.0
        %3321 = vmatpush1.msra.mxu0 0.0
        %3322 = vmatprep.subr.mxu0 0.0
        %3323 = vmatpush1.msra.mxu0 0.0
        %3324 = vmatprep.subr.mxu0 0.0
        %3325 = vmatpush1.msra.mxu0 0.0
        %3326 = vmatprep.subr.mxu0 0.0
        %3327 = vmatpush1.msra.mxu0 0.0
        %3328 = vmatprep.subr.mxu0 0.0
        %3329 = vmatpush1.msra.mxu0 0.0
        %3330 = vmatprep.subr.mxu0 0.0
        %3331 = vmatpush1.msra.mxu0 0.0
        %3332 = vmatprep.subr.mxu0 0.0
        %3333 = vmatpush1.msra.mxu0 0.0
        %3334 = vmatprep.subr.mxu0 0.0
        %3335 = vmatpush1.msra.mxu0 0.0
        %3336 = vmatprep.subr.mxu0 0.0
        %3337 = vmatpush1.msra.mxu0 0.0
        %3338 = vmatprep.subr.mxu0 0.0
        %3339 = vmatpush1.msra.mxu0 0.0
        %3340 = vmatprep.subr.mxu0 0.0
        %3341 = vmatpush1.msra.mxu0 0.0
        %3342 = vmatprep.subr.mxu0 0.0
        %3343 = vmatpush1.msra.mxu0 0.0
        %3344 = vmatprep.subr.mxu0 0.0
        %3345 = vmatpush1.msra.mxu0 0.0
        %3346 = vmatprep.mubr.f32.mxu0 0.0
        %v3347 = vand.u32 %v264, 4294901760
        %3348 = vmatmul.mubr.f32.gmra.mrb[0].mxu0 %v3347
        %v3349 = vpop.f32.mrb[0].mxu0
        %v3350 = vadd.f32 %v3245, %v3349
        %v3351 = vpop.f32.mrb[0].mxu0
        %v3352 = vadd.f32 %v3247, %v3351
        %3353 = vmatprep.mubr.f32.mxu0 0.0
        %v3354 = vand.u32 %v267, 4294901760
        %3355 = vmatmul.mubr.f32.gmra.mrb[0].mxu0 %v3354
        %v3356 = vpop.f32.mrb[0].mxu0
        %v3357 = vadd.f32 %v3254, %v3356
        %v3358 = vpop.f32.mrb[0].mxu0
        %v3359 = vadd.f32 %v3256, %v3358
        %3360 = vmatprep.mubr.f32.mxu0 0.0
        %v3361 = vand.u32 %v270, 4294901760
        %3362 = vmatmul.mubr.f32.gmra.mrb[0].mxu0 %v3361
        %v3363 = vpop.f32.mrb[0].mxu0
        %v3364 = vadd.f32 %v3263, %v3363
        %v3365 = vpop.f32.mrb[0].mxu0
        %v3366 = vadd.f32 %v3265, %v3365
        %3367 = vmatprep.mubr.f32.mxu0 0.0
        %v3368 = vand.u32 %v273, 4294901760
        %3369 = vmatmul.mubr.f32.gmra.mrb[0].mxu0 %v3368
        %v3370 = vpop.f32.mrb[0].mxu0
        %v3371 = vadd.f32 %v3272, %v3370
        %v3372 = vpop.f32.mrb[0].mxu0
        %v3373 = vadd.f32 %v3274, %v3372
        %3374 = vdwg.mxu0
        %v3375 = vand.u32 %v2852, 4294901760
        %3376 = vmatprep.subr.mxu0 %v3375
        %v3377 = vand.u32 %v2850, 4294901760
        %3378 = vmatpush1.msra.mxu0 %v3377
        %3379 = vmatprep.subr.mxu0 0.0
        %3380 = vmatpush1.msra.mxu0 0.0
        %3381 = vmatprep.subr.mxu0 0.0
        %3382 = vmatpush1.msra.mxu0 0.0
        %3383 = vmatprep.subr.mxu0 0.0
        %3384 = vmatpush1.msra.mxu0 0.0
        %3385 = vmatprep.subr.mxu0 0.0
        %3386 = vmatpush1.msra.mxu0 0.0
        %3387 = vmatprep.subr.mxu0 0.0
        %3388 = vmatpush1.msra.mxu0 0.0
        %3389 = vmatprep.subr.mxu0 0.0
        %3390 = vmatpush1.msra.mxu0 0.0
        %3391 = vmatprep.subr.mxu0 0.0
        %3392 = vmatpush1.msra.mxu0 0.0
        %3393 = vmatprep.subr.mxu0 0.0
        %3394 = vmatpush1.msra.mxu0 0.0
        %3395 = vmatprep.subr.mxu0 0.0
        %3396 = vmatpush1.msra.mxu0 0.0
        %3397 = vmatprep.subr.mxu0 0.0
        %3398 = vmatpush1.msra.mxu0 0.0
        %3399 = vmatprep.subr.mxu0 0.0
        %3400 = vmatpush1.msra.mxu0 0.0
        %3401 = vmatprep.subr.mxu0 0.0
        %3402 = vmatpush1.msra.mxu0 0.0
        %3403 = vmatprep.subr.mxu0 0.0
        %3404 = vmatpush1.msra.mxu0 0.0
        %3405 = vmatprep.subr.mxu0 0.0
        %3406 = vmatpush1.msra.mxu0 0.0
        %3407 = vmatprep.subr.mxu0 0.0
        %3408 = vmatpush1.msra.mxu0 0.0
        %3409 = vmatprep.subr.mxu0 0.0
        %3410 = vmatpush1.msra.mxu0 0.0
        %3411 = vmatprep.subr.mxu0 0.0
        %3412 = vmatpush1.msra.mxu0 0.0
        %3413 = vmatprep.subr.mxu0 0.0
        %3414 = vmatpush1.msra.mxu0 0.0
        %3415 = vmatprep.subr.mxu0 0.0
        %3416 = vmatpush1.msra.mxu0 0.0
        %3417 = vmatprep.subr.mxu0 0.0
        %3418 = vmatpush1.msra.mxu0 0.0
        %3419 = vmatprep.subr.mxu0 0.0
        %3420 = vmatpush1.msra.mxu0 0.0
        %3421 = vmatprep.subr.mxu0 0.0
        %3422 = vmatpush1.msra.mxu0 0.0
        %3423 = vmatprep.subr.mxu0 0.0
        %3424 = vmatpush1.msra.mxu0 0.0
        %3425 = vmatprep.subr.mxu0 0.0
        %3426 = vmatpush1.msra.mxu0 0.0
        %3427 = vmatprep.subr.mxu0 0.0
        %3428 = vmatpush1.msra.mxu0 0.0
        %3429 = vmatprep.subr.mxu0 0.0
        %3430 = vmatpush1.msra.mxu0 0.0
        %3431 = vmatprep.subr.mxu0 0.0
        %3432 = vmatpush1.msra.mxu0 0.0
        %3433 = vmatprep.subr.mxu0 0.0
        %3434 = vmatpush1.msra.mxu0 0.0
        %3435 = vmatprep.subr.mxu0 0.0
        %3436 = vmatpush1.msra.mxu0 0.0
        %3437 = vmatprep.subr.mxu0 0.0
        %3438 = vmatpush1.msra.mxu0 0.0
        %3439 = vmatprep.subr.mxu0 0.0
        %3440 = vmatpush1.msra.mxu0 0.0
        %3441 = vmatprep.mubr.f32.mxu0 0.0
        %v3442 = vand.u32 %v264, 4294901760
        %3443 = vmatmul.mubr.f32.gmra.mrb[0].mxu0 %v3442
        %v3444 = vpop.f32.mrb[0].mxu0
        %v3445 = vadd.f32 %v3350, %v3444
        %v3446 = vpop.f32.mrb[0].mxu0
        %v3447 = vadd.f32 %v3352, %v3446
        %3448 = vmatprep.mubr.f32.mxu0 0.0
        %v3449 = vand.u32 %v267, 4294901760
        %3450 = vmatmul.mubr.f32.gmra.mrb[0].mxu0 %v3449
        %v3451 = vpop.f32.mrb[0].mxu0
        %v3452 = vadd.f32 %v3357, %v3451
        %v3453 = vpop.f32.mrb[0].mxu0
        %v3454 = vadd.f32 %v3359, %v3453
        %3455 = vmatprep.mubr.f32.mxu0 0.0
        %v3456 = vand.u32 %v270, 4294901760
        %3457 = vmatmul.mubr.f32.gmra.mrb[0].mxu0 %v3456
        %v3458 = vpop.f32.mrb[0].mxu0
        %v3459 = vadd.f32 %v3364, %v3458
        %v3460 = vpop.f32.mrb[0].mxu0
        %v3461 = vadd.f32 %v3366, %v3460
        %3462 = vmatprep.mubr.f32.mxu0 0.0
        %v3463 = vand.u32 %v273, 4294901760
        %3464 = vmatmul.mubr.f32.gmra.mrb[0].mxu0 %v3463
        %v3465 = vpop.f32.mrb[0].mxu0
        %v3466 = vadd.f32 %v3371, %v3465
        %v3467 = vpop.f32.mrb[0].mxu0
        %v3468 = vadd.f32 %v3373, %v3467
        %3469 = vdwg.mxu0
        %v3470 = vand.u32 %v2856, 4294901760
        %3471 = vmatprep.subr.mxu0 %v3470
        %v3472 = vand.u32 %v2854, 4294901760
        %3473 = vmatpush1.msra.mxu0 %v3472
        %3474 = vmatprep.subr.mxu0 0.0
        %3475 = vmatpush1.msra.mxu0 0.0
        %3476 = vmatprep.subr.mxu0 0.0
        %3477 = vmatpush1.msra.mxu0 0.0
        %3478 = vmatprep.subr.mxu0 0.0
        %3479 = vmatpush1.msra.mxu0 0.0
        %3480 = vmatprep.subr.mxu0 0.0
        %3481 = vmatpush1.msra.mxu0 0.0
        %3482 = vmatprep.subr.mxu0 0.0
        %3483 = vmatpush1.msra.mxu0 0.0
        %3484 = vmatprep.subr.mxu0 0.0
        %3485 = vmatpush1.msra.mxu0 0.0
        %3486 = vmatprep.subr.mxu0 0.0
        %3487 = vmatpush1.msra.mxu0 0.0
        %3488 = vmatprep.subr.mxu0 0.0
        %3489 = vmatpush1.msra.mxu0 0.0
        %3490 = vmatprep.subr.mxu0 0.0
        %3491 = vmatpush1.msra.mxu0 0.0
        %3492 = vmatprep.subr.mxu0 0.0
        %3493 = vmatpush1.msra.mxu0 0.0
        %3494 = vmatprep.subr.mxu0 0.0
        %3495 = vmatpush1.msra.mxu0 0.0
        %3496 = vmatprep.subr.mxu0 0.0
        %3497 = vmatpush1.msra.mxu0 0.0
        %3498 = vmatprep.subr.mxu0 0.0
        %3499 = vmatpush1.msra.mxu0 0.0
        %3500 = vmatprep.subr.mxu0 0.0
        %3501 = vmatpush1.msra.mxu0 0.0
        %3502 = vmatprep.subr.mxu0 0.0
        %3503 = vmatpush1.msra.mxu0 0.0
        %3504 = vmatprep.subr.mxu0 0.0
        %3505 = vmatpush1.msra.mxu0 0.0
        %3506 = vmatprep.subr.mxu0 0.0
        %3507 = vmatpush1.msra.mxu0 0.0
        %3508 = vmatprep.subr.mxu0 0.0
        %3509 = vmatpush1.msra.mxu0 0.0
        %3510 = vmatprep.subr.mxu0 0.0
        %3511 = vmatpush1.msra.mxu0 0.0
        %3512 = vmatprep.subr.mxu0 0.0
        %3513 = vmatpush1.msra.mxu0 0.0
        %3514 = vmatprep.subr.mxu0 0.0
        %3515 = vmatpush1.msra.mxu0 0.0
        %3516 = vmatprep.subr.mxu0 0.0
        %3517 = vmatpush1.msra.mxu0 0.0
        %3518 = vmatprep.subr.mxu0 0.0
        %3519 = vmatpush1.msra.mxu0 0.0
        %3520 = vmatprep.subr.mxu0 0.0
        %3521 = vmatpush1.msra.mxu0 0.0
        %3522 = vmatprep.subr.mxu0 0.0
        %3523 = vmatpush1.msra.mxu0 0.0
        %3524 = vmatprep.subr.mxu0 0.0
        %3525 = vmatpush1.msra.mxu0 0.0
        %3526 = vmatprep.subr.mxu0 0.0
        %3527 = vmatpush1.msra.mxu0 0.0
        %3528 = vmatprep.subr.mxu0 0.0
        %3529 = vmatpush1.msra.mxu0 0.0
        %3530 = vmatprep.subr.mxu0 0.0
        %3531 = vmatpush1.msra.mxu0 0.0
        %3532 = vmatprep.subr.mxu0 0.0
        %3533 = vmatpush1.msra.mxu0 0.0
        %3534 = vmatprep.subr.mxu0 0.0
        %3535 = vmatpush1.msra.mxu0 0.0
        %3536 = vmatprep.mubr.f32.mxu0 0.0
        %v3537 = vand.u32 %v264, 4294901760
        %v3538 = vsub.f32 %v264, %v3537
        %v3539 = vand.u32 %v3538, 4294901760
        %v3540 = vsub.f32 %v3538, %v3539
        %v3541 = vand.u32 %v3540, 4294901760
        %3542 = vmatmul.mubr.f32.gmra.mrb[0].mxu0 %v3541
        %v3543 = vpop.f32.mrb[0].mxu0
        %v3544 = vadd.f32 %v241, %v3543
        %v3545 = vpop.f32.mrb[0].mxu0
        %v3546 = vadd.f32 %v241, %v3545
        %3547 = vmatprep.mubr.f32.mxu0 0.0
        %v3548 = vand.u32 %v267, 4294901760
        %v3549 = vsub.f32 %v267, %v3548
        %v3550 = vand.u32 %v3549, 4294901760
        %v3551 = vsub.f32 %v3549, %v3550
        %v3552 = vand.u32 %v3551, 4294901760
        %3553 = vmatmul.mubr.f32.gmra.mrb[0].mxu0 %v3552
        %v3554 = vpop.f32.mrb[0].mxu0
        %v3555 = vadd.f32 %v246, %v3554
        %v3556 = vpop.f32.mrb[0].mxu0
        %v3557 = vadd.f32 %v246, %v3556
        %3558 = vmatprep.mubr.f32.mxu0 0.0
        %v3559 = vand.u32 %v270, 4294901760
        %v3560 = vsub.f32 %v270, %v3559
        %v3561 = vand.u32 %v3560, 4294901760
        %v3562 = vsub.f32 %v3560, %v3561
        %v3563 = vand.u32 %v3562, 4294901760
        %3564 = vmatmul.mubr.f32.gmra.mrb[0].mxu0 %v3563
        %v3565 = vpop.f32.mrb[0].mxu0
        %v3566 = vadd.f32 %v251, %v3565
        %v3567 = vpop.f32.mrb[0].mxu0
        %v3568 = vadd.f32 %v251, %v3567
        %3569 = vmatprep.mubr.f32.mxu0 0.0
        %v3570 = vand.u32 %v273, 4294901760
        %v3571 = vsub.f32 %v273, %v3570
        %v3572 = vand.u32 %v3571, 4294901760
        %v3573 = vsub.f32 %v3571, %v3572
        %v3574 = vand.u32 %v3573, 4294901760
        %3575 = vmatmul.mubr.f32.gmra.mrb[0].mxu0 %v3574
        %v3576 = vpop.f32.mrb[0].mxu0
        %v3577 = vadd.f32 %v256, %v3576
        %v3578 = vpop.f32.mrb[0].mxu0
        %v3579 = vadd.f32 %v256, %v3578
        %3580 = vdwg.mxu0
        %v3581 = vand.u32 %v2856, 4294901760
        %v3582 = vsub.f32 %v2856, %v3581
        %v3583 = vand.u32 %v3582, 4294901760
        %v3584 = vsub.f32 %v3582, %v3583
        %v3585 = vand.u32 %v3584, 4294901760
        %3586 = vmatprep.subr.mxu0 %v3585
        %v3587 = vand.u32 %v2854, 4294901760
        %v3588 = vsub.f32 %v2854, %v3587
        %v3589 = vand.u32 %v3588, 4294901760
        %v3590 = vsub.f32 %v3588, %v3589
        %v3591 = vand.u32 %v3590, 4294901760
        %3592 = vmatpush1.msra.mxu0 %v3591
        %3593 = vmatprep.subr.mxu0 0.0
        %3594 = vmatpush1.msra.mxu0 0.0
        %3595 = vmatprep.subr.mxu0 0.0
        %3596 = vmatpush1.msra.mxu0 0.0
        %3597 = vmatprep.subr.mxu0 0.0
        %3598 = vmatpush1.msra.mxu0 0.0
        %3599 = vmatprep.subr.mxu0 0.0
        %3600 = vmatpush1.msra.mxu0 0.0
        %3601 = vmatprep.subr.mxu0 0.0
        %3602 = vmatpush1.msra.mxu0 0.0
        %3603 = vmatprep.subr.mxu0 0.0
        %3604 = vmatpush1.msra.mxu0 0.0
        %3605 = vmatprep.subr.mxu0 0.0
        %3606 = vmatpush1.msra.mxu0 0.0
        %3607 = vmatprep.subr.mxu0 0.0
        %3608 = vmatpush1.msra.mxu0 0.0
        %3609 = vmatprep.subr.mxu0 0.0
        %3610 = vmatpush1.msra.mxu0 0.0
        %3611 = vmatprep.subr.mxu0 0.0
        %3612 = vmatpush1.msra.mxu0 0.0
        %3613 = vmatprep.subr.mxu0 0.0
        %3614 = vmatpush1.msra.mxu0 0.0
        %3615 = vmatprep.subr.mxu0 0.0
        %3616 = vmatpush1.msra.mxu0 0.0
        %3617 = vmatprep.subr.mxu0 0.0
        %3618 = vmatpush1.msra.mxu0 0.0
        %3619 = vmatprep.subr.mxu0 0.0
        %3620 = vmatpush1.msra.mxu0 0.0
        %3621 = vmatprep.subr.mxu0 0.0
        %3622 = vmatpush1.msra.mxu0 0.0
        %3623 = vmatprep.subr.mxu0 0.0
        %3624 = vmatpush1.msra.mxu0 0.0
        %3625 = vmatprep.subr.mxu0 0.0
        %3626 = vmatpush1.msra.mxu0 0.0
        %3627 = vmatprep.subr.mxu0 0.0
        %3628 = vmatpush1.msra.mxu0 0.0
        %3629 = vmatprep.subr.mxu0 0.0
        %3630 = vmatpush1.msra.mxu0 0.0
        %3631 = vmatprep.subr.mxu0 0.0
        %3632 = vmatpush1.msra.mxu0 0.0
        %3633 = vmatprep.subr.mxu0 0.0
        %3634 = vmatpush1.msra.mxu0 0.0
        %3635 = vmatprep.subr.mxu0 0.0
        %3636 = vmatpush1.msra.mxu0 0.0
        %3637 = vmatprep.subr.mxu0 0.0
        %3638 = vmatpush1.msra.mxu0 0.0
        %3639 = vmatprep.subr.mxu0 0.0
        %3640 = vmatpush1.msra.mxu0 0.0
        %3641 = vmatprep.subr.mxu0 0.0
        %3642 = vmatpush1.msra.mxu0 0.0
        %3643 = vmatprep.subr.mxu0 0.0
        %3644 = vmatpush1.msra.mxu0 0.0
        %3645 = vmatprep.subr.mxu0 0.0
        %3646 = vmatpush1.msra.mxu0 0.0
        %3647 = vmatprep.subr.mxu0 0.0
        %3648 = vmatpush1.msra.mxu0 0.0
        %3649 = vmatprep.subr.mxu0 0.0
        %3650 = vmatpush1.msra.mxu0 0.0
        %3651 = vmatprep.subr.mxu0 0.0
        %3652 = vmatpush1.msra.mxu0 0.0
        %3653 = vmatprep.subr.mxu0 0.0
        %3654 = vmatpush1.msra.mxu0 0.0
        %3655 = vmatprep.mubr.f32.mxu0 0.0
        %v3656 = vand.u32 %v264, 4294901760
        %3657 = vmatmul.mubr.f32.gmra.mrb[0].mxu0 %v3656
        %v3658 = vpop.f32.mrb[0].mxu0
        %v3659 = vadd.f32 %v3544, %v3658
        %v3660 = vpop.f32.mrb[0].mxu0
        %v3661 = vadd.f32 %v3546, %v3660
        %3662 = vmatprep.mubr.f32.mxu0 0.0
        %v3663 = vand.u32 %v267, 4294901760
        %3664 = vmatmul.mubr.f32.gmra.mrb[0].mxu0 %v3663
        %v3665 = vpop.f32.mrb[0].mxu0
        %v3666 = vadd.f32 %v3555, %v3665
        %v3667 = vpop.f32.mrb[0].mxu0
        %v3668 = vadd.f32 %v3557, %v3667
        %3669 = vmatprep.mubr.f32.mxu0 0.0
        %v3670 = vand.u32 %v270, 4294901760
        %3671 = vmatmul.mubr.f32.gmra.mrb[0].mxu0 %v3670
        %v3672 = vpop.f32.mrb[0].mxu0
        %v3673 = vadd.f32 %v3566, %v3672
        %v3674 = vpop.f32.mrb[0].mxu0
        %v3675 = vadd.f32 %v3568, %v3674
        %3676 = vmatprep.mubr.f32.mxu0 0.0
        %v3677 = vand.u32 %v273, 4294901760
        %3678 = vmatmul.mubr.f32.gmra.mrb[0].mxu0 %v3677
        %v3679 = vpop.f32.mrb[0].mxu0
        %v3680 = vadd.f32 %v3577, %v3679
        %v3681 = vpop.f32.mrb[0].mxu0
        %v3682 = vadd.f32 %v3579, %v3681
        %3683 = vdwg.mxu0
        %v3684 = vand.u32 %v2856, 4294901760
        %v3685 = vsub.f32 %v2856, %v3684
        %3686 = vmatprep.subr.mxu0 %v3685
        %v3687 = vand.u32 %v2854, 4294901760
        %v3688 = vsub.f32 %v2854, %v3687
        %3689 = vmatpush1.msra.mxu0 %v3688
        %3690 = vmatprep.subr.mxu0 0.0
        %3691 = vmatpush1.msra.mxu0 0.0
        %3692 = vmatprep.subr.mxu0 0.0
        %3693 = vmatpush1.msra.mxu0 0.0
        %3694 = vmatprep.subr.mxu0 0.0
        %3695 = vmatpush1.msra.mxu0 0.0
        %3696 = vmatprep.subr.mxu0 0.0
        %3697 = vmatpush1.msra.mxu0 0.0
        %3698 = vmatprep.subr.mxu0 0.0
        %3699 = vmatpush1.msra.mxu0 0.0
        %3700 = vmatprep.subr.mxu0 0.0
        %3701 = vmatpush1.msra.mxu0 0.0
        %3702 = vmatprep.subr.mxu0 0.0
        %3703 = vmatpush1.msra.mxu0 0.0
        %3704 = vmatprep.subr.mxu0 0.0
        %3705 = vmatpush1.msra.mxu0 0.0
        %3706 = vmatprep.subr.mxu0 0.0
        %3707 = vmatpush1.msra.mxu0 0.0
        %3708 = vmatprep.subr.mxu0 0.0
        %3709 = vmatpush1.msra.mxu0 0.0
        %3710 = vmatprep.subr.mxu0 0.0
        %3711 = vmatpush1.msra.mxu0 0.0
        %3712 = vmatprep.subr.mxu0 0.0
        %3713 = vmatpush1.msra.mxu0 0.0
        %3714 = vmatprep.subr.mxu0 0.0
        %3715 = vmatpush1.msra.mxu0 0.0
        %3716 = vmatprep.subr.mxu0 0.0
        %3717 = vmatpush1.msra.mxu0 0.0
        %3718 = vmatprep.subr.mxu0 0.0
        %3719 = vmatpush1.msra.mxu0 0.0
        %3720 = vmatprep.subr.mxu0 0.0
        %3721 = vmatpush1.msra.mxu0 0.0
        %3722 = vmatprep.subr.mxu0 0.0
        %3723 = vmatpush1.msra.mxu0 0.0
        %3724 = vmatprep.subr.mxu0 0.0
        %3725 = vmatpush1.msra.mxu0 0.0
        %3726 = vmatprep.subr.mxu0 0.0
        %3727 = vmatpush1.msra.mxu0 0.0
        %3728 = vmatprep.subr.mxu0 0.0
        %3729 = vmatpush1.msra.mxu0 0.0
        %3730 = vmatprep.subr.mxu0 0.0
        %3731 = vmatpush1.msra.mxu0 0.0
        %3732 = vmatprep.subr.mxu0 0.0
        %3733 = vmatpush1.msra.mxu0 0.0
        %3734 = vmatprep.subr.mxu0 0.0
        %3735 = vmatpush1.msra.mxu0 0.0
        %3736 = vmatprep.subr.mxu0 0.0
        %3737 = vmatpush1.msra.mxu0 0.0
        %3738 = vmatprep.subr.mxu0 0.0
        %3739 = vmatpush1.msra.mxu0 0.0
        %3740 = vmatprep.subr.mxu0 0.0
        %3741 = vmatpush1.msra.mxu0 0.0
        %3742 = vmatprep.subr.mxu0 0.0
        %3743 = vmatpush1.msra.mxu0 0.0
        %3744 = vmatprep.subr.mxu0 0.0
        %3745 = vmatpush1.msra.mxu0 0.0
        %3746 = vmatprep.subr.mxu0 0.0
        %3747 = vmatpush1.msra.mxu0 0.0
        %3748 = vmatprep.subr.mxu0 0.0
        %3749 = vmatpush1.msra.mxu0 0.0
        %3750 = vmatprep.subr.mxu0 0.0
        %3751 = vmatpush1.msra.mxu0 0.0
        %3752 = vmatprep.mubr.f32.mxu0 0.0
        %v3753 = vand.u32 %v264, 4294901760
        %v3754 = vsub.f32 %v264, %v3753
        %3755 = vmatmul.mubr.f32.gmra.mrb[0].mxu0 %v3754
        %v3756 = vpop.f32.mrb[0].mxu0
        %v3757 = vadd.f32 %v3659, %v3756
        %v3758 = vpop.f32.mrb[0].mxu0
        %v3759 = vadd.f32 %v3661, %v3758
        %3760 = vmatprep.mubr.f32.mxu0 0.0
        %v3761 = vand.u32 %v267, 4294901760
        %v3762 = vsub.f32 %v267, %v3761
        %3763 = vmatmul.mubr.f32.gmra.mrb[0].mxu0 %v3762
        %v3764 = vpop.f32.mrb[0].mxu0
        %v3765 = vadd.f32 %v3666, %v3764
        %v3766 = vpop.f32.mrb[0].mxu0
        %v3767 = vadd.f32 %v3668, %v3766
        %3768 = vmatprep.mubr.f32.mxu0 0.0
        %v3769 = vand.u32 %v270, 4294901760
        %v3770 = vsub.f32 %v270, %v3769
        %3771 = vmatmul.mubr.f32.gmra.mrb[0].mxu0 %v3770
        %v3772 = vpop.f32.mrb[0].mxu0
        %v3773 = vadd.f32 %v3673, %v3772
        %v3774 = vpop.f32.mrb[0].mxu0
        %v3775 = vadd.f32 %v3675, %v3774
        %3776 = vmatprep.mubr.f32.mxu0 0.0
        %v3777 = vand.u32 %v273, 4294901760
        %v3778 = vsub.f32 %v273, %v3777
        %3779 = vmatmul.mubr.f32.gmra.mrb[0].mxu0 %v3778
        %v3780 = vpop.f32.mrb[0].mxu0
        %v3781 = vadd.f32 %v3680, %v3780
        %v3782 = vpop.f32.mrb[0].mxu0
        %v3783 = vadd.f32 %v3682, %v3782
        %3784 = vdwg.mxu0
        %v3785 = vand.u32 %v2856, 4294901760
        %3786 = vmatprep.subr.mxu0 %v3785
        %v3787 = vand.u32 %v2854, 4294901760
        %3788 = vmatpush1.msra.mxu0 %v3787
        %3789 = vmatprep.subr.mxu0 0.0
        %3790 = vmatpush1.msra.mxu0 0.0
        %3791 = vmatprep.subr.mxu0 0.0
        %3792 = vmatpush1.msra.mxu0 0.0
        %3793 = vmatprep.subr.mxu0 0.0
        %3794 = vmatpush1.msra.mxu0 0.0
        %3795 = vmatprep.subr.mxu0 0.0
        %3796 = vmatpush1.msra.mxu0 0.0
        %3797 = vmatprep.subr.mxu0 0.0
        %3798 = vmatpush1.msra.mxu0 0.0
        %3799 = vmatprep.subr.mxu0 0.0
        %3800 = vmatpush1.msra.mxu0 0.0
        %3801 = vmatprep.subr.mxu0 0.0
        %3802 = vmatpush1.msra.mxu0 0.0
        %3803 = vmatprep.subr.mxu0 0.0
        %3804 = vmatpush1.msra.mxu0 0.0
        %3805 = vmatprep.subr.mxu0 0.0
        %3806 = vmatpush1.msra.mxu0 0.0
        %3807 = vmatprep.subr.mxu0 0.0
        %3808 = vmatpush1.msra.mxu0 0.0
        %3809 = vmatprep.subr.mxu0 0.0
        %3810 = vmatpush1.msra.mxu0 0.0
        %3811 = vmatprep.subr.mxu0 0.0
        %3812 = vmatpush1.msra.mxu0 0.0
        %3813 = vmatprep.subr.mxu0 0.0
        %3814 = vmatpush1.msra.mxu0 0.0
        %3815 = vmatprep.subr.mxu0 0.0
        %3816 = vmatpush1.msra.mxu0 0.0
        %3817 = vmatprep.subr.mxu0 0.0
        %3818 = vmatpush1.msra.mxu0 0.0
        %3819 = vmatprep.subr.mxu0 0.0
        %3820 = vmatpush1.msra.mxu0 0.0
        %3821 = vmatprep.subr.mxu0 0.0
        %3822 = vmatpush1.msra.mxu0 0.0
        %3823 = vmatprep.subr.mxu0 0.0
        %3824 = vmatpush1.msra.mxu0 0.0
        %3825 = vmatprep.subr.mxu0 0.0
        %3826 = vmatpush1.msra.mxu0 0.0
        %3827 = vmatprep.subr.mxu0 0.0
        %3828 = vmatpush1.msra.mxu0 0.0
        %3829 = vmatprep.subr.mxu0 0.0
        %3830 = vmatpush1.msra.mxu0 0.0
        %3831 = vmatprep.subr.mxu0 0.0
        %3832 = vmatpush1.msra.mxu0 0.0
        %3833 = vmatprep.subr.mxu0 0.0
        %3834 = vmatpush1.msra.mxu0 0.0
        %3835 = vmatprep.subr.mxu0 0.0
        %3836 = vmatpush1.msra.mxu0 0.0
        %3837 = vmatprep.subr.mxu0 0.0
        %3838 = vmatpush1.msra.mxu0 0.0
        %3839 = vmatprep.subr.mxu0 0.0
        %3840 = vmatpush1.msra.mxu0 0.0
        %3841 = vmatprep.subr.mxu0 0.0
        %3842 = vmatpush1.msra.mxu0 0.0
        %3843 = vmatprep.subr.mxu0 0.0
        %3844 = vmatpush1.msra.mxu0 0.0
        %3845 = vmatprep.subr.mxu0 0.0
        %3846 = vmatpush1.msra.mxu0 0.0
        %3847 = vmatprep.subr.mxu0 0.0
        %3848 = vmatpush1.msra.mxu0 0.0
        %3849 = vmatprep.subr.mxu0 0.0
        %3850 = vmatpush1.msra.mxu0 0.0
        %3851 = vmatprep.mubr.f32.mxu0 0.0
        %v3852 = vand.u32 %v264, 4294901760
        %v3853 = vsub.f32 %v264, %v3852
        %v3854 = vand.u32 %v3853, 4294901760
        %3855 = vmatmul.mubr.f32.gmra.mrb[0].mxu0 %v3854
        %v3856 = vpop.f32.mrb[0].mxu0
        %v3857 = vadd.f32 %v3757, %v3856
        %v3858 = vpop.f32.mrb[0].mxu0
        %v3859 = vadd.f32 %v3759, %v3858
        %3860 = vmatprep.mubr.f32.mxu0 0.0
        %v3861 = vand.u32 %v267, 4294901760
        %v3862 = vsub.f32 %v267, %v3861
        %v3863 = vand.u32 %v3862, 4294901760
        %3864 = vmatmul.mubr.f32.gmra.mrb[0].mxu0 %v3863
        %v3865 = vpop.f32.mrb[0].mxu0
        %v3866 = vadd.f32 %v3765, %v3865
        %v3867 = vpop.f32.mrb[0].mxu0
        %v3868 = vadd.f32 %v3767, %v3867
        %3869 = vmatprep.mubr.f32.mxu0 0.0
        %v3870 = vand.u32 %v270, 4294901760
        %v3871 = vsub.f32 %v270, %v3870
        %v3872 = vand.u32 %v3871, 4294901760
        %3873 = vmatmul.mubr.f32.gmra.mrb[0].mxu0 %v3872
        %v3874 = vpop.f32.mrb[0].mxu0
        %v3875 = vadd.f32 %v3773, %v3874
        %v3876 = vpop.f32.mrb[0].mxu0
        %v3877 = vadd.f32 %v3775, %v3876
        %3878 = vmatprep.mubr.f32.mxu0 0.0
        %v3879 = vand.u32 %v273, 4294901760
        %v3880 = vsub.f32 %v273, %v3879
        %v3881 = vand.u32 %v3880, 4294901760
        %3882 = vmatmul.mubr.f32.gmra.mrb[0].mxu0 %v3881
        %v3883 = vpop.f32.mrb[0].mxu0
        %v3884 = vadd.f32 %v3781, %v3883
        %v3885 = vpop.f32.mrb[0].mxu0
        %v3886 = vadd.f32 %v3783, %v3885
        %3887 = vdwg.mxu0
        %v3888 = vand.u32 %v2856, 4294901760
        %v3889 = vsub.f32 %v2856, %v3888
        %v3890 = vand.u32 %v3889, 4294901760
        %3891 = vmatprep.subr.mxu0 %v3890
        %v3892 = vand.u32 %v2854, 4294901760
        %v3893 = vsub.f32 %v2854, %v3892
        %v3894 = vand.u32 %v3893, 4294901760
        %3895 = vmatpush1.msra.mxu0 %v3894
        %3896 = vmatprep.subr.mxu0 0.0
        %3897 = vmatpush1.msra.mxu0 0.0
        %3898 = vmatprep.subr.mxu0 0.0
        %3899 = vmatpush1.msra.mxu0 0.0
        %3900 = vmatprep.subr.mxu0 0.0
        %3901 = vmatpush1.msra.mxu0 0.0
        %3902 = vmatprep.subr.mxu0 0.0
        %3903 = vmatpush1.msra.mxu0 0.0
        %3904 = vmatprep.subr.mxu0 0.0
        %3905 = vmatpush1.msra.mxu0 0.0
        %3906 = vmatprep.subr.mxu0 0.0
        %3907 = vmatpush1.msra.mxu0 0.0
        %3908 = vmatprep.subr.mxu0 0.0
        %3909 = vmatpush1.msra.mxu0 0.0
        %3910 = vmatprep.subr.mxu0 0.0
        %3911 = vmatpush1.msra.mxu0 0.0
        %3912 = vmatprep.subr.mxu0 0.0
        %3913 = vmatpush1.msra.mxu0 0.0
        %3914 = vmatprep.subr.mxu0 0.0
        %3915 = vmatpush1.msra.mxu0 0.0
        %3916 = vmatprep.subr.mxu0 0.0
        %3917 = vmatpush1.msra.mxu0 0.0
        %3918 = vmatprep.subr.mxu0 0.0
        %3919 = vmatpush1.msra.mxu0 0.0
        %3920 = vmatprep.subr.mxu0 0.0
        %3921 = vmatpush1.msra.mxu0 0.0
        %3922 = vmatprep.subr.mxu0 0.0
        %3923 = vmatpush1.msra.mxu0 0.0
        %3924 = vmatprep.subr.mxu0 0.0
        %3925 = vmatpush1.msra.mxu0 0.0
        %3926 = vmatprep.subr.mxu0 0.0
        %3927 = vmatpush1.msra.mxu0 0.0
        %3928 = vmatprep.subr.mxu0 0.0
        %3929 = vmatpush1.msra.mxu0 0.0
        %3930 = vmatprep.subr.mxu0 0.0
        %3931 = vmatpush1.msra.mxu0 0.0
        %3932 = vmatprep.subr.mxu0 0.0
        %3933 = vmatpush1.msra.mxu0 0.0
        %3934 = vmatprep.subr.mxu0 0.0
        %3935 = vmatpush1.msra.mxu0 0.0
        %3936 = vmatprep.subr.mxu0 0.0
        %3937 = vmatpush1.msra.mxu0 0.0
        %3938 = vmatprep.subr.mxu0 0.0
        %3939 = vmatpush1.msra.mxu0 0.0
        %3940 = vmatprep.subr.mxu0 0.0
        %3941 = vmatpush1.msra.mxu0 0.0
        %3942 = vmatprep.subr.mxu0 0.0
        %3943 = vmatpush1.msra.mxu0 0.0
        %3944 = vmatprep.subr.mxu0 0.0
        %3945 = vmatpush1.msra.mxu0 0.0
        %3946 = vmatprep.subr.mxu0 0.0
        %3947 = vmatpush1.msra.mxu0 0.0
        %3948 = vmatprep.subr.mxu0 0.0
        %3949 = vmatpush1.msra.mxu0 0.0
        %3950 = vmatprep.subr.mxu0 0.0
        %3951 = vmatpush1.msra.mxu0 0.0
        %3952 = vmatprep.subr.mxu0 0.0
        %3953 = vmatpush1.msra.mxu0 0.0
        %3954 = vmatprep.subr.mxu0 0.0
        %3955 = vmatpush1.msra.mxu0 0.0
        %3956 = vmatprep.subr.mxu0 0.0
        %3957 = vmatpush1.msra.mxu0 0.0
        %3958 = vmatprep.mubr.f32.mxu0 0.0
        %v3959 = vand.u32 %v264, 4294901760
        %3960 = vmatmul.mubr.f32.gmra.mrb[0].mxu0 %v3959
        %v3961 = vpop.f32.mrb[0].mxu0
        %v3962 = vadd.f32 %v3857, %v3961
        %v3963 = vpop.f32.mrb[0].mxu0
        %v3964 = vadd.f32 %v3859, %v3963
        %3965 = vmatprep.mubr.f32.mxu0 0.0
        %v3966 = vand.u32 %v267, 4294901760
        %3967 = vmatmul.mubr.f32.gmra.mrb[0].mxu0 %v3966
        %v3968 = vpop.f32.mrb[0].mxu0
        %v3969 = vadd.f32 %v3866, %v3968
        %v3970 = vpop.f32.mrb[0].mxu0
        %v3971 = vadd.f32 %v3868, %v3970
        %3972 = vmatprep.mubr.f32.mxu0 0.0
        %v3973 = vand.u32 %v270, 4294901760
        %3974 = vmatmul.mubr.f32.gmra.mrb[0].mxu0 %v3973
        %v3975 = vpop.f32.mrb[0].mxu0
        %v3976 = vadd.f32 %v3875, %v3975
        %v3977 = vpop.f32.mrb[0].mxu0
        %v3978 = vadd.f32 %v3877, %v3977
        %3979 = vmatprep.mubr.f32.mxu0 0.0
        %v3980 = vand.u32 %v273, 4294901760
        %3981 = vmatmul.mubr.f32.gmra.mrb[0].mxu0 %v3980
        %v3982 = vpop.f32.mrb[0].mxu0
        %v3983 = vadd.f32 %v3884, %v3982
        %v3984 = vpop.f32.mrb[0].mxu0
        %v3985 = vadd.f32 %v3886, %v3984
        %3986 = vdwg.mxu0
        %v3987 = vand.u32 %v2856, 4294901760
        %3988 = vmatprep.subr.mxu0 %v3987
        %v3989 = vand.u32 %v2854, 4294901760
        %3990 = vmatpush1.msra.mxu0 %v3989
        %3991 = vmatprep.subr.mxu0 0.0
        %3992 = vmatpush1.msra.mxu0 0.0
        %3993 = vmatprep.subr.mxu0 0.0
        %3994 = vmatpush1.msra.mxu0 0.0
        %3995 = vmatprep.subr.mxu0 0.0
        %3996 = vmatpush1.msra.mxu0 0.0
        %3997 = vmatprep.subr.mxu0 0.0
        %3998 = vmatpush1.msra.mxu0 0.0
        %3999 = vmatprep.subr.mxu0 0.0
        %4000 = vmatpush1.msra.mxu0 0.0
        %4001 = vmatprep.subr.mxu0 0.0
        %4002 = vmatpush1.msra.mxu0 0.0
        %4003 = vmatprep.subr.mxu0 0.0
        %4004 = vmatpush1.msra.mxu0 0.0
        %4005 = vmatprep.subr.mxu0 0.0
        %4006 = vmatpush1.msra.mxu0 0.0
        %4007 = vmatprep.subr.mxu0 0.0
        %4008 = vmatpush1.msra.mxu0 0.0
        %4009 = vmatprep.subr.mxu0 0.0
        %4010 = vmatpush1.msra.mxu0 0.0
        %4011 = vmatprep.subr.mxu0 0.0
        %4012 = vmatpush1.msra.mxu0 0.0
        %4013 = vmatprep.subr.mxu0 0.0
        %4014 = vmatpush1.msra.mxu0 0.0
        %4015 = vmatprep.subr.mxu0 0.0
        %4016 = vmatpush1.msra.mxu0 0.0
        %4017 = vmatprep.subr.mxu0 0.0
        %4018 = vmatpush1.msra.mxu0 0.0
        %4019 = vmatprep.subr.mxu0 0.0
        %4020 = vmatpush1.msra.mxu0 0.0
        %4021 = vmatprep.subr.mxu0 0.0
        %4022 = vmatpush1.msra.mxu0 0.0
        %4023 = vmatprep.subr.mxu0 0.0
        %4024 = vmatpush1.msra.mxu0 0.0
        %4025 = vmatprep.subr.mxu0 0.0
        %4026 = vmatpush1.msra.mxu0 0.0
        %4027 = vmatprep.subr.mxu0 0.0
        %4028 = vmatpush1.msra.mxu0 0.0
        %4029 = vmatprep.subr.mxu0 0.0
        %4030 = vmatpush1.msra.mxu0 0.0
        %4031 = vmatprep.subr.mxu0 0.0
        %4032 = vmatpush1.msra.mxu0 0.0
        %4033 = vmatprep.subr.mxu0 0.0
        %4034 = vmatpush1.msra.mxu0 0.0
        %4035 = vmatprep.subr.mxu0 0.0
        %4036 = vmatpush1.msra.mxu0 0.0
        %4037 = vmatprep.subr.mxu0 0.0
        %4038 = vmatpush1.msra.mxu0 0.0
        %4039 = vmatprep.subr.mxu0 0.0
        %4040 = vmatpush1.msra.mxu0 0.0
        %4041 = vmatprep.subr.mxu0 0.0
        %4042 = vmatpush1.msra.mxu0 0.0
        %4043 = vmatprep.subr.mxu0 0.0
        %4044 = vmatpush1.msra.mxu0 0.0
        %4045 = vmatprep.subr.mxu0 0.0
        %4046 = vmatpush1.msra.mxu0 0.0
        %4047 = vmatprep.subr.mxu0 0.0
        %4048 = vmatpush1.msra.mxu0 0.0
        %4049 = vmatprep.subr.mxu0 0.0
        %4050 = vmatpush1.msra.mxu0 0.0
        %4051 = vmatprep.subr.mxu0 0.0
        %4052 = vmatpush1.msra.mxu0 0.0
        %4053 = vmatprep.mubr.f32.mxu0 0.0
        %v4054 = vand.u32 %v264, 4294901760
        %4055 = vmatmul.mubr.f32.gmra.mrb[0].mxu0 %v4054
        %v4056 = vpop.f32.mrb[0].mxu0
        %v4057 = vadd.f32 %v3962, %v4056
        %v4058 = vpop.f32.mrb[0].mxu0
        %v4059 = vadd.f32 %v3964, %v4058
        %4060 = vmatprep.mubr.f32.mxu0 0.0
        %v4061 = vand.u32 %v267, 4294901760
        %4062 = vmatmul.mubr.f32.gmra.mrb[0].mxu0 %v4061
        %v4063 = vpop.f32.mrb[0].mxu0
        %v4064 = vadd.f32 %v3969, %v4063
        %v4065 = vpop.f32.mrb[0].mxu0
        %v4066 = vadd.f32 %v3971, %v4065
        %4067 = vmatprep.mubr.f32.mxu0 0.0
        %v4068 = vand.u32 %v270, 4294901760
        %4069 = vmatmul.mubr.f32.gmra.mrb[0].mxu0 %v4068
        %v4070 = vpop.f32.mrb[0].mxu0
        %v4071 = vadd.f32 %v3976, %v4070
        %v4072 = vpop.f32.mrb[0].mxu0
        %v4073 = vadd.f32 %v3978, %v4072
        %4074 = vmatprep.mubr.f32.mxu0 0.0
        %v4075 = vand.u32 %v273, 4294901760
        %4076 = vmatmul.mubr.f32.gmra.mrb[0].mxu0 %v4075
        %v4077 = vpop.f32.mrb[0].mxu0
        %v4078 = vadd.f32 %v3983, %v4077
        %v4079 = vpop.f32.mrb[0].mxu0
        %v4080 = vadd.f32 %v3985, %v4079
        %4081 = vdwg.mxu0
        %v4082 = vmax.f32 %v3445, 0.0
        %v4083 = vmax.f32 %v3447, 0.0
        %v4084 = vmax.f32 %v4057, 0.0
        %v4085 = vmax.f32 %v4059, 0.0
        %v4086 = vmax.f32 %v3452, 0.0
        %v4087 = vmax.f32 %v3454, 0.0
        %v4088 = vmax.f32 %v4064, 0.0
        %v4089 = vmax.f32 %v4066, 0.0
        %v4090 = vmax.f32 %v3459, 0.0
        %v4091 = vmax.f32 %v3461, 0.0
        %v4092 = vmax.f32 %v4071, 0.0
        %v4093 = vmax.f32 %v4073, 0.0
        %v4094 = vmax.f32 %v3466, 0.0
        %v4095 = vmax.f32 %v3468, 0.0
        %v4096 = vmax.f32 %v4078, 0.0
        %v4097 = vmax.f32 %v4080, 0.0
        %v4098 = vand.u32 %v4083, 4294901760
        %4099 = vmatprep.subr.mxu0 %v4098
        %v4100 = vand.u32 %v4082, 4294901760
        %4101 = vmatpush1.msra.mxu0 %v4100
        %v4102 = vand.u32 %v4087, 4294901760
        %4103 = vmatprep.subr.mxu0 %v4102
        %v4104 = vand.u32 %v4086, 4294901760
        %4105 = vmatpush1.msra.mxu0 %v4104
        %v4106 = vand.u32 %v4091, 4294901760
        %4107 = vmatprep.subr.mxu0 %v4106
        %v4108 = vand.u32 %v4090, 4294901760
        %4109 = vmatpush1.msra.mxu0 %v4108
        %v4110 = vand.u32 %v4095, 4294901760
        %4111 = vmatprep.subr.mxu0 %v4110
        %v4112 = vand.u32 %v4094, 4294901760
        %4113 = vmatpush1.msra.mxu0 %v4112
        %4114 = vmatprep.subr.mxu0 0.0
        %4115 = vmatpush1.msra.mxu0 0.0
        %4116 = vmatprep.subr.mxu0 0.0
        %4117 = vmatpush1.msra.mxu0 0.0
        %4118 = vmatprep.subr.mxu0 0.0
        %4119 = vmatpush1.msra.mxu0 0.0
        %4120 = vmatprep.subr.mxu0 0.0
        %4121 = vmatpush1.msra.mxu0 0.0
        %4122 = vmatprep.subr.mxu0 0.0
        %4123 = vmatpush1.msra.mxu0 0.0
        %4124 = vmatprep.subr.mxu0 0.0
        %4125 = vmatpush1.msra.mxu0 0.0
        %4126 = vmatprep.subr.mxu0 0.0
        %4127 = vmatpush1.msra.mxu0 0.0
        %4128 = vmatprep.subr.mxu0 0.0
        %4129 = vmatpush1.msra.mxu0 0.0
        %4130 = vmatprep.subr.mxu0 0.0
        %4131 = vmatpush1.msra.mxu0 0.0
        %4132 = vmatprep.subr.mxu0 0.0
        %4133 = vmatpush1.msra.mxu0 0.0
        %4134 = vmatprep.subr.mxu0 0.0
        %4135 = vmatpush1.msra.mxu0 0.0
        %4136 = vmatprep.subr.mxu0 0.0
        %4137 = vmatpush1.msra.mxu0 0.0
        %4138 = vmatprep.subr.mxu0 0.0
        %4139 = vmatpush1.msra.mxu0 0.0
        %4140 = vmatprep.subr.mxu0 0.0
        %4141 = vmatpush1.msra.mxu0 0.0
        %4142 = vmatprep.subr.mxu0 0.0
        %4143 = vmatpush1.msra.mxu0 0.0
        %4144 = vmatprep.subr.mxu0 0.0
        %4145 = vmatpush1.msra.mxu0 0.0
        %4146 = vmatprep.subr.mxu0 0.0
        %4147 = vmatpush1.msra.mxu0 0.0
        %4148 = vmatprep.subr.mxu0 0.0
        %4149 = vmatpush1.msra.mxu0 0.0
        %4150 = vmatprep.subr.mxu0 0.0
        %4151 = vmatpush1.msra.mxu0 0.0
        %4152 = vmatprep.subr.mxu0 0.0
        %4153 = vmatpush1.msra.mxu0 0.0
        %4154 = vmatprep.subr.mxu0 0.0
        %4155 = vmatpush1.msra.mxu0 0.0
        %4156 = vmatprep.subr.mxu0 0.0
        %4157 = vmatpush1.msra.mxu0 0.0
        %4158 = vmatprep.subr.mxu0 0.0
        %4159 = vmatpush1.msra.mxu0 0.0
        %4160 = vmatprep.subr.mxu0 0.0
        %4161 = vmatpush1.msra.mxu0 0.0
        %4162 = vmatprep.subr.mxu0 0.0
        %4163 = vmatpush1.msra.mxu0 0.0
        %4164 = vmatprep.subr.mxu0 0.0
        %4165 = vmatpush1.msra.mxu0 0.0
        %4166 = vmatprep.subr.mxu0 0.0
        %4167 = vmatpush1.msra.mxu0 0.0
        %4168 = vmatprep.subr.mxu0 0.0
        %4169 = vmatpush1.msra.mxu0 0.0
        %4170 = vmatprep.mubr.f32.mxu0 0.0
        %v4171 = vand.u32 %v1541, 4294901760
        %v4172 = vsub.f32 %v1541, %v4171
        %v4173 = vand.u32 %v4172, 4294901760
        %v4174 = vsub.f32 %v4172, %v4173
        %v4175 = vand.u32 %v4174, 4294901760
        %4176 = vmatmul.mubr.f32.gmra.mrb[0].mxu0 %v4175
        %v4177 = vpop.f32.mrb[0].mxu0
        %v4178 = vadd.f32 %v1527, %v4177
        %v4179 = vpop.f32.mrb[0].mxu0
        %v4180 = vadd.f32 %v1527, %v4179
        %4181 = vmatprep.mubr.f32.mxu0 0.0
        %v4182 = vand.u32 %v1544, 4294901760
        %v4183 = vsub.f32 %v1544, %v4182
        %v4184 = vand.u32 %v4183, 4294901760
        %v4185 = vsub.f32 %v4183, %v4184
        %v4186 = vand.u32 %v4185, 4294901760
        %4187 = vmatmul.mubr.f32.gmra.mrb[0].mxu0 %v4186
        %v4188 = vpop.f32.mrb[0].mxu0
        %v4189 = vadd.f32 %v1532, %v4188
        %v4190 = vpop.f32.mrb[0].mxu0
        %v4191 = vadd.f32 %v1532, %v4190
        %4192 = vmatprep.mubr.f32.mxu0 0.0
        %v4193 = vand.u32 %v1547, 4294901760
        %v4194 = vsub.f32 %v1547, %v4193
        %v4195 = vand.u32 %v4194, 4294901760
        %v4196 = vsub.f32 %v4194, %v4195
        %v4197 = vand.u32 %v4196, 4294901760
        %4198 = vmatmul.mubr.f32.gmra.mrb[0].mxu0 %v4197
        %v4199 = vpop.f32.mrb[0].mxu0
        %v4200 = vadd.f32 %v1537, %v4199
        %v4201 = vpop.f32.mrb[0].mxu0
        %v4202 = vadd.f32 %v1537, %v4201
        %4203 = vdwg.mxu0
        %v4204 = vand.u32 %v4083, 4294901760
        %v4205 = vsub.f32 %v4083, %v4204
        %v4206 = vand.u32 %v4205, 4294901760
        %v4207 = vsub.f32 %v4205, %v4206
        %v4208 = vand.u32 %v4207, 4294901760
        %4209 = vmatprep.subr.mxu0 %v4208
        %v4210 = vand.u32 %v4082, 4294901760
        %v4211 = vsub.f32 %v4082, %v4210
        %v4212 = vand.u32 %v4211, 4294901760
        %v4213 = vsub.f32 %v4211, %v4212
        %v4214 = vand.u32 %v4213, 4294901760
        %4215 = vmatpush1.msra.mxu0 %v4214
        %v4216 = vand.u32 %v4087, 4294901760
        %v4217 = vsub.f32 %v4087, %v4216
        %v4218 = vand.u32 %v4217, 4294901760
        %v4219 = vsub.f32 %v4217, %v4218
        %v4220 = vand.u32 %v4219, 4294901760
        %4221 = vmatprep.subr.mxu0 %v4220
        %v4222 = vand.u32 %v4086, 4294901760
        %v4223 = vsub.f32 %v4086, %v4222
        %v4224 = vand.u32 %v4223, 4294901760
        %v4225 = vsub.f32 %v4223, %v4224
        %v4226 = vand.u32 %v4225, 4294901760
        %4227 = vmatpush1.msra.mxu0 %v4226
        %v4228 = vand.u32 %v4091, 4294901760
        %v4229 = vsub.f32 %v4091, %v4228
        %v4230 = vand.u32 %v4229, 4294901760
        %v4231 = vsub.f32 %v4229, %v4230
        %v4232 = vand.u32 %v4231, 4294901760
        %4233 = vmatprep.subr.mxu0 %v4232
        %v4234 = vand.u32 %v4090, 4294901760
        %v4235 = vsub.f32 %v4090, %v4234
        %v4236 = vand.u32 %v4235, 4294901760
        %v4237 = vsub.f32 %v4235, %v4236
        %v4238 = vand.u32 %v4237, 4294901760
        %4239 = vmatpush1.msra.mxu0 %v4238
        %v4240 = vand.u32 %v4095, 4294901760
        %v4241 = vsub.f32 %v4095, %v4240
        %v4242 = vand.u32 %v4241, 4294901760
        %v4243 = vsub.f32 %v4241, %v4242
        %v4244 = vand.u32 %v4243, 4294901760
        %4245 = vmatprep.subr.mxu0 %v4244
        %v4246 = vand.u32 %v4094, 4294901760
        %v4247 = vsub.f32 %v4094, %v4246
        %v4248 = vand.u32 %v4247, 4294901760
        %v4249 = vsub.f32 %v4247, %v4248
        %v4250 = vand.u32 %v4249, 4294901760
        %4251 = vmatpush1.msra.mxu0 %v4250
        %4252 = vmatprep.subr.mxu0 0.0
        %4253 = vmatpush1.msra.mxu0 0.0
        %4254 = vmatprep.subr.mxu0 0.0
        %4255 = vmatpush1.msra.mxu0 0.0
        %4256 = vmatprep.subr.mxu0 0.0
        %4257 = vmatpush1.msra.mxu0 0.0
        %4258 = vmatprep.subr.mxu0 0.0
        %4259 = vmatpush1.msra.mxu0 0.0
        %4260 = vmatprep.subr.mxu0 0.0
        %4261 = vmatpush1.msra.mxu0 0.0
        %4262 = vmatprep.subr.mxu0 0.0
        %4263 = vmatpush1.msra.mxu0 0.0
        %4264 = vmatprep.subr.mxu0 0.0
        %4265 = vmatpush1.msra.mxu0 0.0
        %4266 = vmatprep.subr.mxu0 0.0
        %4267 = vmatpush1.msra.mxu0 0.0
        %4268 = vmatprep.subr.mxu0 0.0
        %4269 = vmatpush1.msra.mxu0 0.0
        %4270 = vmatprep.subr.mxu0 0.0
        %4271 = vmatpush1.msra.mxu0 0.0
        %4272 = vmatprep.subr.mxu0 0.0
        %4273 = vmatpush1.msra.mxu0 0.0
        %4274 = vmatprep.subr.mxu0 0.0
        %4275 = vmatpush1.msra.mxu0 0.0
        %4276 = vmatprep.subr.mxu0 0.0
        %4277 = vmatpush1.msra.mxu0 0.0
        %4278 = vmatprep.subr.mxu0 0.0
        %4279 = vmatpush1.msra.mxu0 0.0
        %4280 = vmatprep.subr.mxu0 0.0
        %4281 = vmatpush1.msra.mxu0 0.0
        %4282 = vmatprep.subr.mxu0 0.0
        %4283 = vmatpush1.msra.mxu0 0.0
        %4284 = vmatprep.subr.mxu0 0.0
        %4285 = vmatpush1.msra.mxu0 0.0
        %4286 = vmatprep.subr.mxu0 0.0
        %4287 = vmatpush1.msra.mxu0 0.0
        %4288 = vmatprep.subr.mxu0 0.0
        %4289 = vmatpush1.msra.mxu0 0.0
        %4290 = vmatprep.subr.mxu0 0.0
        %4291 = vmatpush1.msra.mxu0 0.0
        %4292 = vmatprep.subr.mxu0 0.0
        %4293 = vmatpush1.msra.mxu0 0.0
        %4294 = vmatprep.subr.mxu0 0.0
        %4295 = vmatpush1.msra.mxu0 0.0
        %4296 = vmatprep.subr.mxu0 0.0
        %4297 = vmatpush1.msra.mxu0 0.0
        %4298 = vmatprep.subr.mxu0 0.0
        %4299 = vmatpush1.msra.mxu0 0.0
        %4300 = vmatprep.subr.mxu0 0.0
        %4301 = vmatpush1.msra.mxu0 0.0
        %4302 = vmatprep.subr.mxu0 0.0
        %4303 = vmatpush1.msra.mxu0 0.0
        %4304 = vmatprep.subr.mxu0 0.0
        %4305 = vmatpush1.msra.mxu0 0.0
        %4306 = vmatprep.subr.mxu0 0.0
        %4307 = vmatpush1.msra.mxu0 0.0
        %4308 = vmatprep.mubr.f32.mxu0 0.0
        %v4309 = vand.u32 %v1541, 4294901760
        %4310 = vmatmul.mubr.f32.gmra.mrb[0].mxu0 %v4309
        %v4311 = vpop.f32.mrb[0].mxu0
        %v4312 = vadd.f32 %v4178, %v4311
        %v4313 = vpop.f32.mrb[0].mxu0
        %v4314 = vadd.f32 %v4180, %v4313
        %4315 = vmatprep.mubr.f32.mxu0 0.0
        %v4316 = vand.u32 %v1544, 4294901760
        %4317 = vmatmul.mubr.f32.gmra.mrb[0].mxu0 %v4316
        %v4318 = vpop.f32.mrb[0].mxu0
        %v4319 = vadd.f32 %v4189, %v4318
        %v4320 = vpop.f32.mrb[0].mxu0
        %v4321 = vadd.f32 %v4191, %v4320
        %4322 = vmatprep.mubr.f32.mxu0 0.0
        %v4323 = vand.u32 %v1547, 4294901760
        %4324 = vmatmul.mubr.f32.gmra.mrb[0].mxu0 %v4323
        %v4325 = vpop.f32.mrb[0].mxu0
        %v4326 = vadd.f32 %v4200, %v4325
        %v4327 = vpop.f32.mrb[0].mxu0
        %v4328 = vadd.f32 %v4202, %v4327
        %4329 = vdwg.mxu0
        %v4330 = vand.u32 %v4083, 4294901760
        %v4331 = vsub.f32 %v4083, %v4330
        %4332 = vmatprep.subr.mxu0 %v4331
        %v4333 = vand.u32 %v4082, 4294901760
        %v4334 = vsub.f32 %v4082, %v4333
        %4335 = vmatpush1.msra.mxu0 %v4334
        %v4336 = vand.u32 %v4087, 4294901760
        %v4337 = vsub.f32 %v4087, %v4336
        %4338 = vmatprep.subr.mxu0 %v4337
        %v4339 = vand.u32 %v4086, 4294901760
        %v4340 = vsub.f32 %v4086, %v4339
        %4341 = vmatpush1.msra.mxu0 %v4340
        %v4342 = vand.u32 %v4091, 4294901760
        %v4343 = vsub.f32 %v4091, %v4342
        %4344 = vmatprep.subr.mxu0 %v4343
        %v4345 = vand.u32 %v4090, 4294901760
        %v4346 = vsub.f32 %v4090, %v4345
        %4347 = vmatpush1.msra.mxu0 %v4346
        %v4348 = vand.u32 %v4095, 4294901760
        %v4349 = vsub.f32 %v4095, %v4348
        %4350 = vmatprep.subr.mxu0 %v4349
        %v4351 = vand.u32 %v4094, 4294901760
        %v4352 = vsub.f32 %v4094, %v4351
        %4353 = vmatpush1.msra.mxu0 %v4352
        %4354 = vmatprep.subr.mxu0 0.0
        %4355 = vmatpush1.msra.mxu0 0.0
        %4356 = vmatprep.subr.mxu0 0.0
        %4357 = vmatpush1.msra.mxu0 0.0
        %4358 = vmatprep.subr.mxu0 0.0
        %4359 = vmatpush1.msra.mxu0 0.0
        %4360 = vmatprep.subr.mxu0 0.0
        %4361 = vmatpush1.msra.mxu0 0.0
        %4362 = vmatprep.subr.mxu0 0.0
        %4363 = vmatpush1.msra.mxu0 0.0
        %4364 = vmatprep.subr.mxu0 0.0
        %4365 = vmatpush1.msra.mxu0 0.0
        %4366 = vmatprep.subr.mxu0 0.0
        %4367 = vmatpush1.msra.mxu0 0.0
        %4368 = vmatprep.subr.mxu0 0.0
        %4369 = vmatpush1.msra.mxu0 0.0
        %4370 = vmatprep.subr.mxu0 0.0
        %4371 = vmatpush1.msra.mxu0 0.0
        %4372 = vmatprep.subr.mxu0 0.0
        %4373 = vmatpush1.msra.mxu0 0.0
        %4374 = vmatprep.subr.mxu0 0.0
        %4375 = vmatpush1.msra.mxu0 0.0
        %4376 = vmatprep.subr.mxu0 0.0
        %4377 = vmatpush1.msra.mxu0 0.0
        %4378 = vmatprep.subr.mxu0 0.0
        %4379 = vmatpush1.msra.mxu0 0.0
        %4380 = vmatprep.subr.mxu0 0.0
        %4381 = vmatpush1.msra.mxu0 0.0
        %4382 = vmatprep.subr.mxu0 0.0
        %4383 = vmatpush1.msra.mxu0 0.0
        %4384 = vmatprep.subr.mxu0 0.0
        %4385 = vmatpush1.msra.mxu0 0.0
        %4386 = vmatprep.subr.mxu0 0.0
        %4387 = vmatpush1.msra.mxu0 0.0
        %4388 = vmatprep.subr.mxu0 0.0
        %4389 = vmatpush1.msra.mxu0 0.0
        %4390 = vmatprep.subr.mxu0 0.0
        %4391 = vmatpush1.msra.mxu0 0.0
        %4392 = vmatprep.subr.mxu0 0.0
        %4393 = vmatpush1.msra.mxu0 0.0
        %4394 = vmatprep.subr.mxu0 0.0
        %4395 = vmatpush1.msra.mxu0 0.0
        %4396 = vmatprep.subr.mxu0 0.0
        %4397 = vmatpush1.msra.mxu0 0.0
        %4398 = vmatprep.subr.mxu0 0.0
        %4399 = vmatpush1.msra.mxu0 0.0
        %4400 = vmatprep.subr.mxu0 0.0
        %4401 = vmatpush1.msra.mxu0 0.0
        %4402 = vmatprep.subr.mxu0 0.0
        %4403 = vmatpush1.msra.mxu0 0.0
        %4404 = vmatprep.subr.mxu0 0.0
        %4405 = vmatpush1.msra.mxu0 0.0
        %4406 = vmatprep.subr.mxu0 0.0
        %4407 = vmatpush1.msra.mxu0 0.0
        %4408 = vmatprep.subr.mxu0 0.0
        %4409 = vmatpush1.msra.mxu0 0.0
        %4410 = vmatprep.mubr.f32.mxu0 0.0
        %v4411 = vand.u32 %v1541, 4294901760
        %v4412 = vsub.f32 %v1541, %v4411
        %4413 = vmatmul.mubr.f32.gmra.mrb[0].mxu0 %v4412
        %v4414 = vpop.f32.mrb[0].mxu0
        %v4415 = vadd.f32 %v4312, %v4414
        %v4416 = vpop.f32.mrb[0].mxu0
        %v4417 = vadd.f32 %v4314, %v4416
        %4418 = vmatprep.mubr.f32.mxu0 0.0
        %v4419 = vand.u32 %v1544, 4294901760
        %v4420 = vsub.f32 %v1544, %v4419
        %4421 = vmatmul.mubr.f32.gmra.mrb[0].mxu0 %v4420
        %v4422 = vpop.f32.mrb[0].mxu0
        %v4423 = vadd.f32 %v4319, %v4422
        %v4424 = vpop.f32.mrb[0].mxu0
        %v4425 = vadd.f32 %v4321, %v4424
        %4426 = vmatprep.mubr.f32.mxu0 0.0
        %v4427 = vand.u32 %v1547, 4294901760
        %v4428 = vsub.f32 %v1547, %v4427
        %4429 = vmatmul.mubr.f32.gmra.mrb[0].mxu0 %v4428
        %v4430 = vpop.f32.mrb[0].mxu0
        %v4431 = vadd.f32 %v4326, %v4430
        %v4432 = vpop.f32.mrb[0].mxu0
        %v4433 = vadd.f32 %v4328, %v4432
        %4434 = vdwg.mxu0
        %v4435 = vand.u32 %v4083, 4294901760
        %4436 = vmatprep.subr.mxu0 %v4435
        %v4437 = vand.u32 %v4082, 4294901760
        %4438 = vmatpush1.msra.mxu0 %v4437
        %v4439 = vand.u32 %v4087, 4294901760
        %4440 = vmatprep.subr.mxu0 %v4439
        %v4441 = vand.u32 %v4086, 4294901760
        %4442 = vmatpush1.msra.mxu0 %v4441
        %v4443 = vand.u32 %v4091, 4294901760
        %4444 = vmatprep.subr.mxu0 %v4443
        %v4445 = vand.u32 %v4090, 4294901760
        %4446 = vmatpush1.msra.mxu0 %v4445
        %v4447 = vand.u32 %v4095, 4294901760
        %4448 = vmatprep.subr.mxu0 %v4447
        %v4449 = vand.u32 %v4094, 4294901760
        %4450 = vmatpush1.msra.mxu0 %v4449
        %4451 = vmatprep.subr.mxu0 0.0
        %4452 = vmatpush1.msra.mxu0 0.0
        %4453 = vmatprep.subr.mxu0 0.0
        %4454 = vmatpush1.msra.mxu0 0.0
        %4455 = vmatprep.subr.mxu0 0.0
        %4456 = vmatpush1.msra.mxu0 0.0
        %4457 = vmatprep.subr.mxu0 0.0
        %4458 = vmatpush1.msra.mxu0 0.0
        %4459 = vmatprep.subr.mxu0 0.0
        %4460 = vmatpush1.msra.mxu0 0.0
        %4461 = vmatprep.subr.mxu0 0.0
        %4462 = vmatpush1.msra.mxu0 0.0
        %4463 = vmatprep.subr.mxu0 0.0
        %4464 = vmatpush1.msra.mxu0 0.0
        %4465 = vmatprep.subr.mxu0 0.0
        %4466 = vmatpush1.msra.mxu0 0.0
        %4467 = vmatprep.subr.mxu0 0.0
        %4468 = vmatpush1.msra.mxu0 0.0
        %4469 = vmatprep.subr.mxu0 0.0
        %4470 = vmatpush1.msra.mxu0 0.0
        %4471 = vmatprep.subr.mxu0 0.0
        %4472 = vmatpush1.msra.mxu0 0.0
        %4473 = vmatprep.subr.mxu0 0.0
        %4474 = vmatpush1.msra.mxu0 0.0
        %4475 = vmatprep.subr.mxu0 0.0
        %4476 = vmatpush1.msra.mxu0 0.0
        %4477 = vmatprep.subr.mxu0 0.0
        %4478 = vmatpush1.msra.mxu0 0.0
        %4479 = vmatprep.subr.mxu0 0.0
        %4480 = vmatpush1.msra.mxu0 0.0
        %4481 = vmatprep.subr.mxu0 0.0
        %4482 = vmatpush1.msra.mxu0 0.0
        %4483 = vmatprep.subr.mxu0 0.0
        %4484 = vmatpush1.msra.mxu0 0.0
        %4485 = vmatprep.subr.mxu0 0.0
        %4486 = vmatpush1.msra.mxu0 0.0
        %4487 = vmatprep.subr.mxu0 0.0
        %4488 = vmatpush1.msra.mxu0 0.0
        %4489 = vmatprep.subr.mxu0 0.0
        %4490 = vmatpush1.msra.mxu0 0.0
        %4491 = vmatprep.subr.mxu0 0.0
        %4492 = vmatpush1.msra.mxu0 0.0
        %4493 = vmatprep.subr.mxu0 0.0
        %4494 = vmatpush1.msra.mxu0 0.0
        %4495 = vmatprep.subr.mxu0 0.0
        %4496 = vmatpush1.msra.mxu0 0.0
        %4497 = vmatprep.subr.mxu0 0.0
        %4498 = vmatpush1.msra.mxu0 0.0
        %4499 = vmatprep.subr.mxu0 0.0
        %4500 = vmatpush1.msra.mxu0 0.0
        %4501 = vmatprep.subr.mxu0 0.0
        %4502 = vmatpush1.msra.mxu0 0.0
        %4503 = vmatprep.subr.mxu0 0.0
        %4504 = vmatpush1.msra.mxu0 0.0
        %4505 = vmatprep.subr.mxu0 0.0
        %4506 = vmatpush1.msra.mxu0 0.0
        %4507 = vmatprep.mubr.f32.mxu0 0.0
        %v4508 = vand.u32 %v1541, 4294901760
        %v4509 = vsub.f32 %v1541, %v4508
        %v4510 = vand.u32 %v4509, 4294901760
        %4511 = vmatmul.mubr.f32.gmra.mrb[0].mxu0 %v4510
        %v4512 = vpop.f32.mrb[0].mxu0
        %v4513 = vadd.f32 %v4415, %v4512
        %v4514 = vpop.f32.mrb[0].mxu0
        %v4515 = vadd.f32 %v4417, %v4514
        %4516 = vmatprep.mubr.f32.mxu0 0.0
        %v4517 = vand.u32 %v1544, 4294901760
        %v4518 = vsub.f32 %v1544, %v4517
        %v4519 = vand.u32 %v4518, 4294901760
        %4520 = vmatmul.mubr.f32.gmra.mrb[0].mxu0 %v4519
        %v4521 = vpop.f32.mrb[0].mxu0
        %v4522 = vadd.f32 %v4423, %v4521
        %v4523 = vpop.f32.mrb[0].mxu0
        %v4524 = vadd.f32 %v4425, %v4523
        %4525 = vmatprep.mubr.f32.mxu0 0.0
        %v4526 = vand.u32 %v1547, 4294901760
        %v4527 = vsub.f32 %v1547, %v4526
        %v4528 = vand.u32 %v4527, 4294901760
        %4529 = vmatmul.mubr.f32.gmra.mrb[0].mxu0 %v4528
        %v4530 = vpop.f32.mrb[0].mxu0
        %v4531 = vadd.f32 %v4431, %v4530
        %v4532 = vpop.f32.mrb[0].mxu0
        %v4533 = vadd.f32 %v4433, %v4532
        %4534 = vdwg.mxu0
        %v4535 = vand.u32 %v4083, 4294901760
        %v4536 = vsub.f32 %v4083, %v4535
        %v4537 = vand.u32 %v4536, 4294901760
        %4538 = vmatprep.subr.mxu0 %v4537
        %v4539 = vand.u32 %v4082, 4294901760
        %v4540 = vsub.f32 %v4082, %v4539
        %v4541 = vand.u32 %v4540, 4294901760
        %4542 = vmatpush1.msra.mxu0 %v4541
        %v4543 = vand.u32 %v4087, 4294901760
        %v4544 = vsub.f32 %v4087, %v4543
        %v4545 = vand.u32 %v4544, 4294901760
        %4546 = vmatprep.subr.mxu0 %v4545
        %v4547 = vand.u32 %v4086, 4294901760
        %v4548 = vsub.f32 %v4086, %v4547
        %v4549 = vand.u32 %v4548, 4294901760
        %4550 = vmatpush1.msra.mxu0 %v4549
        %v4551 = vand.u32 %v4091, 4294901760
        %v4552 = vsub.f32 %v4091, %v4551
        %v4553 = vand.u32 %v4552, 4294901760
        %4554 = vmatprep.subr.mxu0 %v4553
        %v4555 = vand.u32 %v4090, 4294901760
        %v4556 = vsub.f32 %v4090, %v4555
        %v4557 = vand.u32 %v4556, 4294901760
        %4558 = vmatpush1.msra.mxu0 %v4557
        %v4559 = vand.u32 %v4095, 4294901760
        %v4560 = vsub.f32 %v4095, %v4559
        %v4561 = vand.u32 %v4560, 4294901760
        %4562 = vmatprep.subr.mxu0 %v4561
        %v4563 = vand.u32 %v4094, 4294901760
        %v4564 = vsub.f32 %v4094, %v4563
        %v4565 = vand.u32 %v4564, 4294901760
        %4566 = vmatpush1.msra.mxu0 %v4565
        %4567 = vmatprep.subr.mxu0 0.0
        %4568 = vmatpush1.msra.mxu0 0.0
        %4569 = vmatprep.subr.mxu0 0.0
        %4570 = vmatpush1.msra.mxu0 0.0
        %4571 = vmatprep.subr.mxu0 0.0
        %4572 = vmatpush1.msra.mxu0 0.0
        %4573 = vmatprep.subr.mxu0 0.0
        %4574 = vmatpush1.msra.mxu0 0.0
        %4575 = vmatprep.subr.mxu0 0.0
        %4576 = vmatpush1.msra.mxu0 0.0
        %4577 = vmatprep.subr.mxu0 0.0
        %4578 = vmatpush1.msra.mxu0 0.0
        %4579 = vmatprep.subr.mxu0 0.0
        %4580 = vmatpush1.msra.mxu0 0.0
        %4581 = vmatprep.subr.mxu0 0.0
        %4582 = vmatpush1.msra.mxu0 0.0
        %4583 = vmatprep.subr.mxu0 0.0
        %4584 = vmatpush1.msra.mxu0 0.0
        %4585 = vmatprep.subr.mxu0 0.0
        %4586 = vmatpush1.msra.mxu0 0.0
        %4587 = vmatprep.subr.mxu0 0.0
        %4588 = vmatpush1.msra.mxu0 0.0
        %4589 = vmatprep.subr.mxu0 0.0
        %4590 = vmatpush1.msra.mxu0 0.0
        %4591 = vmatprep.subr.mxu0 0.0
        %4592 = vmatpush1.msra.mxu0 0.0
        %4593 = vmatprep.subr.mxu0 0.0
        %4594 = vmatpush1.msra.mxu0 0.0
        %4595 = vmatprep.subr.mxu0 0.0
        %4596 = vmatpush1.msra.mxu0 0.0
        %4597 = vmatprep.subr.mxu0 0.0
        %4598 = vmatpush1.msra.mxu0 0.0
        %4599 = vmatprep.subr.mxu0 0.0
        %4600 = vmatpush1.msra.mxu0 0.0
        %4601 = vmatprep.subr.mxu0 0.0
        %4602 = vmatpush1.msra.mxu0 0.0
        %4603 = vmatprep.subr.mxu0 0.0
        %4604 = vmatpush1.msra.mxu0 0.0
        %4605 = vmatprep.subr.mxu0 0.0
        %4606 = vmatpush1.msra.mxu0 0.0
        %4607 = vmatprep.subr.mxu0 0.0
        %4608 = vmatpush1.msra.mxu0 0.0
        %4609 = vmatprep.subr.mxu0 0.0
        %4610 = vmatpush1.msra.mxu0 0.0
        %4611 = vmatprep.subr.mxu0 0.0
        %4612 = vmatpush1.msra.mxu0 0.0
        %4613 = vmatprep.subr.mxu0 0.0
        %4614 = vmatpush1.msra.mxu0 0.0
        %4615 = vmatprep.subr.mxu0 0.0
        %4616 = vmatpush1.msra.mxu0 0.0
        %4617 = vmatprep.subr.mxu0 0.0
        %4618 = vmatpush1.msra.mxu0 0.0
        %4619 = vmatprep.subr.mxu0 0.0
        %4620 = vmatpush1.msra.mxu0 0.0
        %4621 = vmatprep.subr.mxu0 0.0
        %4622 = vmatpush1.msra.mxu0 0.0
        %4623 = vmatprep.mubr.f32.mxu0 0.0
        %v4624 = vand.u32 %v1541, 4294901760
        %4625 = vmatmul.mubr.f32.gmra.mrb[0].mxu0 %v4624
        %v4626 = vpop.f32.mrb[0].mxu0
        %v4627 = vadd.f32 %v4513, %v4626
        %v4628 = vpop.f32.mrb[0].mxu0
        %v4629 = vadd.f32 %v4515, %v4628
        %4630 = vmatprep.mubr.f32.mxu0 0.0
        %v4631 = vand.u32 %v1544, 4294901760
        %4632 = vmatmul.mubr.f32.gmra.mrb[0].mxu0 %v4631
        %v4633 = vpop.f32.mrb[0].mxu0
        %v4634 = vadd.f32 %v4522, %v4633
        %v4635 = vpop.f32.mrb[0].mxu0
        %v4636 = vadd.f32 %v4524, %v4635
        %4637 = vmatprep.mubr.f32.mxu0 0.0
        %v4638 = vand.u32 %v1547, 4294901760
        %4639 = vmatmul.mubr.f32.gmra.mrb[0].mxu0 %v4638
        %v4640 = vpop.f32.mrb[0].mxu0
        %v4641 = vadd.f32 %v4531, %v4640
        %v4642 = vpop.f32.mrb[0].mxu0
        %v4643 = vadd.f32 %v4533, %v4642
        %4644 = vdwg.mxu0
        %v4645 = vand.u32 %v4083, 4294901760
        %4646 = vmatprep.subr.mxu0 %v4645
        %v4647 = vand.u32 %v4082, 4294901760
        %4648 = vmatpush1.msra.mxu0 %v4647
        %v4649 = vand.u32 %v4087, 4294901760
        %4650 = vmatprep.subr.mxu0 %v4649
        %v4651 = vand.u32 %v4086, 4294901760
        %4652 = vmatpush1.msra.mxu0 %v4651
        %v4653 = vand.u32 %v4091, 4294901760
        %4654 = vmatprep.subr.mxu0 %v4653
        %v4655 = vand.u32 %v4090, 4294901760
        %4656 = vmatpush1.msra.mxu0 %v4655
        %v4657 = vand.u32 %v4095, 4294901760
        %4658 = vmatprep.subr.mxu0 %v4657
        %v4659 = vand.u32 %v4094, 4294901760
        %4660 = vmatpush1.msra.mxu0 %v4659
        %4661 = vmatprep.subr.mxu0 0.0
        %4662 = vmatpush1.msra.mxu0 0.0
        %4663 = vmatprep.subr.mxu0 0.0
        %4664 = vmatpush1.msra.mxu0 0.0
        %4665 = vmatprep.subr.mxu0 0.0
        %4666 = vmatpush1.msra.mxu0 0.0
        %4667 = vmatprep.subr.mxu0 0.0
        %4668 = vmatpush1.msra.mxu0 0.0
        %4669 = vmatprep.subr.mxu0 0.0
        %4670 = vmatpush1.msra.mxu0 0.0
        %4671 = vmatprep.subr.mxu0 0.0
        %4672 = vmatpush1.msra.mxu0 0.0
        %4673 = vmatprep.subr.mxu0 0.0
        %4674 = vmatpush1.msra.mxu0 0.0
        %4675 = vmatprep.subr.mxu0 0.0
        %4676 = vmatpush1.msra.mxu0 0.0
        %4677 = vmatprep.subr.mxu0 0.0
        %4678 = vmatpush1.msra.mxu0 0.0
        %4679 = vmatprep.subr.mxu0 0.0
        %4680 = vmatpush1.msra.mxu0 0.0
        %4681 = vmatprep.subr.mxu0 0.0
        %4682 = vmatpush1.msra.mxu0 0.0
        %4683 = vmatprep.subr.mxu0 0.0
        %4684 = vmatpush1.msra.mxu0 0.0
        %4685 = vmatprep.subr.mxu0 0.0
        %4686 = vmatpush1.msra.mxu0 0.0
        %4687 = vmatprep.subr.mxu0 0.0
        %4688 = vmatpush1.msra.mxu0 0.0
        %4689 = vmatprep.subr.mxu0 0.0
        %4690 = vmatpush1.msra.mxu0 0.0
        %4691 = vmatprep.subr.mxu0 0.0
        %4692 = vmatpush1.msra.mxu0 0.0
        %4693 = vmatprep.subr.mxu0 0.0
        %4694 = vmatpush1.msra.mxu0 0.0
        %4695 = vmatprep.subr.mxu0 0.0
        %4696 = vmatpush1.msra.mxu0 0.0
        %4697 = vmatprep.subr.mxu0 0.0
        %4698 = vmatpush1.msra.mxu0 0.0
        %4699 = vmatprep.subr.mxu0 0.0
        %4700 = vmatpush1.msra.mxu0 0.0
        %4701 = vmatprep.subr.mxu0 0.0
        %4702 = vmatpush1.msra.mxu0 0.0
        %4703 = vmatprep.subr.mxu0 0.0
        %4704 = vmatpush1.msra.mxu0 0.0
        %4705 = vmatprep.subr.mxu0 0.0
        %4706 = vmatpush1.msra.mxu0 0.0
        %4707 = vmatprep.subr.mxu0 0.0
        %4708 = vmatpush1.msra.mxu0 0.0
        %4709 = vmatprep.subr.mxu0 0.0
        %4710 = vmatpush1.msra.mxu0 0.0
        %4711 = vmatprep.subr.mxu0 0.0
        %4712 = vmatpush1.msra.mxu0 0.0
        %4713 = vmatprep.subr.mxu0 0.0
        %4714 = vmatpush1.msra.mxu0 0.0
        %4715 = vmatprep.subr.mxu0 0.0
        %4716 = vmatpush1.msra.mxu0 0.0
        %4717 = vmatprep.mubr.f32.mxu0 0.0
        %v4718 = vand.u32 %v1541, 4294901760
        %4719 = vmatmul.mubr.f32.gmra.mrb[0].mxu0 %v4718
        %v4720 = vpop.f32.mrb[0].mxu0
        %v4721 = vadd.f32 %v4627, %v4720
        %v4722 = vpop.f32.mrb[0].mxu0
        %v4723 = vadd.f32 %v4629, %v4722
        %4724 = vmatprep.mubr.f32.mxu0 0.0
        %v4725 = vand.u32 %v1544, 4294901760
        %4726 = vmatmul.mubr.f32.gmra.mrb[0].mxu0 %v4725
        %v4727 = vpop.f32.mrb[0].mxu0
        %v4728 = vadd.f32 %v4634, %v4727
        %v4729 = vpop.f32.mrb[0].mxu0
        %v4730 = vadd.f32 %v4636, %v4729
        %4731 = vmatprep.mubr.f32.mxu0 0.0
        %v4732 = vand.u32 %v1547, 4294901760
        %4733 = vmatmul.mubr.f32.gmra.mrb[0].mxu0 %v4732
        %v4734 = vpop.f32.mrb[0].mxu0
        %v4735 = vadd.f32 %v4641, %v4734
        %v4736 = vpop.f32.mrb[0].mxu0
        %v4737 = vadd.f32 %v4643, %v4736
        %4738 = vdwg.mxu0
        %v4739 = vand.u32 %v4085, 4294901760
        %4740 = vmatprep.subr.mxu0 %v4739
        %v4741 = vand.u32 %v4084, 4294901760
        %4742 = vmatpush1.msra.mxu0 %v4741
        %v4743 = vand.u32 %v4089, 4294901760
        %4744 = vmatprep.subr.mxu0 %v4743
        %v4745 = vand.u32 %v4088, 4294901760
        %4746 = vmatpush1.msra.mxu0 %v4745
        %v4747 = vand.u32 %v4093, 4294901760
        %4748 = vmatprep.subr.mxu0 %v4747
        %v4749 = vand.u32 %v4092, 4294901760
        %4750 = vmatpush1.msra.mxu0 %v4749
        %v4751 = vand.u32 %v4097, 4294901760
        %4752 = vmatprep.subr.mxu0 %v4751
        %v4753 = vand.u32 %v4096, 4294901760
        %4754 = vmatpush1.msra.mxu0 %v4753
        %4755 = vmatprep.subr.mxu0 0.0
        %4756 = vmatpush1.msra.mxu0 0.0
        %4757 = vmatprep.subr.mxu0 0.0
        %4758 = vmatpush1.msra.mxu0 0.0
        %4759 = vmatprep.subr.mxu0 0.0
        %4760 = vmatpush1.msra.mxu0 0.0
        %4761 = vmatprep.subr.mxu0 0.0
        %4762 = vmatpush1.msra.mxu0 0.0
        %4763 = vmatprep.subr.mxu0 0.0
        %4764 = vmatpush1.msra.mxu0 0.0
        %4765 = vmatprep.subr.mxu0 0.0
        %4766 = vmatpush1.msra.mxu0 0.0
        %4767 = vmatprep.subr.mxu0 0.0
        %4768 = vmatpush1.msra.mxu0 0.0
        %4769 = vmatprep.subr.mxu0 0.0
        %4770 = vmatpush1.msra.mxu0 0.0
        %4771 = vmatprep.subr.mxu0 0.0
        %4772 = vmatpush1.msra.mxu0 0.0
        %4773 = vmatprep.subr.mxu0 0.0
        %4774 = vmatpush1.msra.mxu0 0.0
        %4775 = vmatprep.subr.mxu0 0.0
        %4776 = vmatpush1.msra.mxu0 0.0
        %4777 = vmatprep.subr.mxu0 0.0
        %4778 = vmatpush1.msra.mxu0 0.0
        %4779 = vmatprep.subr.mxu0 0.0
        %4780 = vmatpush1.msra.mxu0 0.0
        %4781 = vmatprep.subr.mxu0 0.0
        %4782 = vmatpush1.msra.mxu0 0.0
        %4783 = vmatprep.subr.mxu0 0.0
        %4784 = vmatpush1.msra.mxu0 0.0
        %4785 = vmatprep.subr.mxu0 0.0
        %4786 = vmatpush1.msra.mxu0 0.0
        %4787 = vmatprep.subr.mxu0 0.0
        %4788 = vmatpush1.msra.mxu0 0.0
        %4789 = vmatprep.subr.mxu0 0.0
        %4790 = vmatpush1.msra.mxu0 0.0
        %4791 = vmatprep.subr.mxu0 0.0
        %4792 = vmatpush1.msra.mxu0 0.0
        %4793 = vmatprep.subr.mxu0 0.0
        %4794 = vmatpush1.msra.mxu0 0.0
        %4795 = vmatprep.subr.mxu0 0.0
        %4796 = vmatpush1.msra.mxu0 0.0
        %4797 = vmatprep.subr.mxu0 0.0
        %4798 = vmatpush1.msra.mxu0 0.0
        %4799 = vmatprep.subr.mxu0 0.0
        %4800 = vmatpush1.msra.mxu0 0.0
        %4801 = vmatprep.subr.mxu0 0.0
        %4802 = vmatpush1.msra.mxu0 0.0
        %4803 = vmatprep.subr.mxu0 0.0
        %4804 = vmatpush1.msra.mxu0 0.0
        %4805 = vmatprep.subr.mxu0 0.0
        %4806 = vmatpush1.msra.mxu0 0.0
        %4807 = vmatprep.subr.mxu0 0.0
        %4808 = vmatpush1.msra.mxu0 0.0
        %4809 = vmatprep.subr.mxu0 0.0
        %4810 = vmatpush1.msra.mxu0 0.0
        %4811 = vmatprep.mubr.f32.mxu0 0.0
        %v4812 = vand.u32 %v1541, 4294901760
        %v4813 = vsub.f32 %v1541, %v4812
        %v4814 = vand.u32 %v4813, 4294901760
        %v4815 = vsub.f32 %v4813, %v4814
        %v4816 = vand.u32 %v4815, 4294901760
        %4817 = vmatmul.mubr.f32.gmra.mrb[0].mxu0 %v4816
        %v4818 = vpop.f32.mrb[0].mxu0
        %v4819 = vadd.f32 %v1527, %v4818
        %v4820 = vpop.f32.mrb[0].mxu0
        %v4821 = vadd.f32 %v1527, %v4820
        %4822 = vmatprep.mubr.f32.mxu0 0.0
        %v4823 = vand.u32 %v1544, 4294901760
        %v4824 = vsub.f32 %v1544, %v4823
        %v4825 = vand.u32 %v4824, 4294901760
        %v4826 = vsub.f32 %v4824, %v4825
        %v4827 = vand.u32 %v4826, 4294901760
        %4828 = vmatmul.mubr.f32.gmra.mrb[0].mxu0 %v4827
        %v4829 = vpop.f32.mrb[0].mxu0
        %v4830 = vadd.f32 %v1532, %v4829
        %v4831 = vpop.f32.mrb[0].mxu0
        %v4832 = vadd.f32 %v1532, %v4831
        %4833 = vmatprep.mubr.f32.mxu0 0.0
        %v4834 = vand.u32 %v1547, 4294901760
        %v4835 = vsub.f32 %v1547, %v4834
        %v4836 = vand.u32 %v4835, 4294901760
        %v4837 = vsub.f32 %v4835, %v4836
        %v4838 = vand.u32 %v4837, 4294901760
        %4839 = vmatmul.mubr.f32.gmra.mrb[0].mxu0 %v4838
        %v4840 = vpop.f32.mrb[0].mxu0
        %v4841 = vadd.f32 %v1537, %v4840
        %v4842 = vpop.f32.mrb[0].mxu0
        %v4843 = vadd.f32 %v1537, %v4842
        %4844 = vdwg.mxu0
        %v4845 = vand.u32 %v4085, 4294901760
        %v4846 = vsub.f32 %v4085, %v4845
        %v4847 = vand.u32 %v4846, 4294901760
        %v4848 = vsub.f32 %v4846, %v4847
        %v4849 = vand.u32 %v4848, 4294901760
        %4850 = vmatprep.subr.mxu0 %v4849
        %v4851 = vand.u32 %v4084, 4294901760
        %v4852 = vsub.f32 %v4084, %v4851
        %v4853 = vand.u32 %v4852, 4294901760
        %v4854 = vsub.f32 %v4852, %v4853
        %v4855 = vand.u32 %v4854, 4294901760
        %4856 = vmatpush1.msra.mxu0 %v4855
        %v4857 = vand.u32 %v4089, 4294901760
        %v4858 = vsub.f32 %v4089, %v4857
        %v4859 = vand.u32 %v4858, 4294901760
        %v4860 = vsub.f32 %v4858, %v4859
        %v4861 = vand.u32 %v4860, 4294901760
        %4862 = vmatprep.subr.mxu0 %v4861
        %v4863 = vand.u32 %v4088, 4294901760
        %v4864 = vsub.f32 %v4088, %v4863
        %v4865 = vand.u32 %v4864, 4294901760
        %v4866 = vsub.f32 %v4864, %v4865
        %v4867 = vand.u32 %v4866, 4294901760
        %4868 = vmatpush1.msra.mxu0 %v4867
        %v4869 = vand.u32 %v4093, 4294901760
        %v4870 = vsub.f32 %v4093, %v4869
        %v4871 = vand.u32 %v4870, 4294901760
        %v4872 = vsub.f32 %v4870, %v4871
        %v4873 = vand.u32 %v4872, 4294901760
        %4874 = vmatprep.subr.mxu0 %v4873
        %v4875 = vand.u32 %v4092, 4294901760
        %v4876 = vsub.f32 %v4092, %v4875
        %v4877 = vand.u32 %v4876, 4294901760
        %v4878 = vsub.f32 %v4876, %v4877
        %v4879 = vand.u32 %v4878, 4294901760
        %4880 = vmatpush1.msra.mxu0 %v4879
        %v4881 = vand.u32 %v4097, 4294901760
        %v4882 = vsub.f32 %v4097, %v4881
        %v4883 = vand.u32 %v4882, 4294901760
        %v4884 = vsub.f32 %v4882, %v4883
        %v4885 = vand.u32 %v4884, 4294901760
        %4886 = vmatprep.subr.mxu0 %v4885
        %v4887 = vand.u32 %v4096, 4294901760
        %v4888 = vsub.f32 %v4096, %v4887
        %v4889 = vand.u32 %v4888, 4294901760
        %v4890 = vsub.f32 %v4888, %v4889
        %v4891 = vand.u32 %v4890, 4294901760
        %4892 = vmatpush1.msra.mxu0 %v4891
        %4893 = vmatprep.subr.mxu0 0.0
        %4894 = vmatpush1.msra.mxu0 0.0
        %4895 = vmatprep.subr.mxu0 0.0
        %4896 = vmatpush1.msra.mxu0 0.0
        %4897 = vmatprep.subr.mxu0 0.0
        %4898 = vmatpush1.msra.mxu0 0.0
        %4899 = vmatprep.subr.mxu0 0.0
        %4900 = vmatpush1.msra.mxu0 0.0
        %4901 = vmatprep.subr.mxu0 0.0
        %4902 = vmatpush1.msra.mxu0 0.0
        %4903 = vmatprep.subr.mxu0 0.0
        %4904 = vmatpush1.msra.mxu0 0.0
        %4905 = vmatprep.subr.mxu0 0.0
        %4906 = vmatpush1.msra.mxu0 0.0
        %4907 = vmatprep.subr.mxu0 0.0
        %4908 = vmatpush1.msra.mxu0 0.0
        %4909 = vmatprep.subr.mxu0 0.0
        %4910 = vmatpush1.msra.mxu0 0.0
        %4911 = vmatprep.subr.mxu0 0.0
        %4912 = vmatpush1.msra.mxu0 0.0
        %4913 = vmatprep.subr.mxu0 0.0
        %4914 = vmatpush1.msra.mxu0 0.0
        %4915 = vmatprep.subr.mxu0 0.0
        %4916 = vmatpush1.msra.mxu0 0.0
        %4917 = vmatprep.subr.mxu0 0.0
        %4918 = vmatpush1.msra.mxu0 0.0
        %4919 = vmatprep.subr.mxu0 0.0
        %4920 = vmatpush1.msra.mxu0 0.0
        %4921 = vmatprep.subr.mxu0 0.0
        %4922 = vmatpush1.msra.mxu0 0.0
        %4923 = vmatprep.subr.mxu0 0.0
        %4924 = vmatpush1.msra.mxu0 0.0
        %4925 = vmatprep.subr.mxu0 0.0
        %4926 = vmatpush1.msra.mxu0 0.0
        %4927 = vmatprep.subr.mxu0 0.0
        %4928 = vmatpush1.msra.mxu0 0.0
        %4929 = vmatprep.subr.mxu0 0.0
        %4930 = vmatpush1.msra.mxu0 0.0
        %4931 = vmatprep.subr.mxu0 0.0
        %4932 = vmatpush1.msra.mxu0 0.0
        %4933 = vmatprep.subr.mxu0 0.0
        %4934 = vmatpush1.msra.mxu0 0.0
        %4935 = vmatprep.subr.mxu0 0.0
        %4936 = vmatpush1.msra.mxu0 0.0
        %4937 = vmatprep.subr.mxu0 0.0
        %4938 = vmatpush1.msra.mxu0 0.0
        %4939 = vmatprep.subr.mxu0 0.0
        %4940 = vmatpush1.msra.mxu0 0.0
        %4941 = vmatprep.subr.mxu0 0.0
        %4942 = vmatpush1.msra.mxu0 0.0
        %4943 = vmatprep.subr.mxu0 0.0
        %4944 = vmatpush1.msra.mxu0 0.0
        %4945 = vmatprep.subr.mxu0 0.0
        %4946 = vmatpush1.msra.mxu0 0.0
        %4947 = vmatprep.subr.mxu0 0.0
        %4948 = vmatpush1.msra.mxu0 0.0
        %4949 = vmatprep.mubr.f32.mxu0 0.0
        %v4950 = vand.u32 %v1541, 4294901760
        %4951 = vmatmul.mubr.f32.gmra.mrb[0].mxu0 %v4950
        %v4952 = vpop.f32.mrb[0].mxu0
        %v4953 = vadd.f32 %v4819, %v4952
        %v4954 = vpop.f32.mrb[0].mxu0
        %v4955 = vadd.f32 %v4821, %v4954
        %4956 = vmatprep.mubr.f32.mxu0 0.0
        %v4957 = vand.u32 %v1544, 4294901760
        %4958 = vmatmul.mubr.f32.gmra.mrb[0].mxu0 %v4957
        %v4959 = vpop.f32.mrb[0].mxu0
        %v4960 = vadd.f32 %v4830, %v4959
        %v4961 = vpop.f32.mrb[0].mxu0
        %v4962 = vadd.f32 %v4832, %v4961
        %4963 = vmatprep.mubr.f32.mxu0 0.0
        %v4964 = vand.u32 %v1547, 4294901760
        %4965 = vmatmul.mubr.f32.gmra.mrb[0].mxu0 %v4964
        %v4966 = vpop.f32.mrb[0].mxu0
        %v4967 = vadd.f32 %v4841, %v4966
        %v4968 = vpop.f32.mrb[0].mxu0
        %v4969 = vadd.f32 %v4843, %v4968
        %4970 = vdwg.mxu0
        %v4971 = vand.u32 %v4085, 4294901760
        %v4972 = vsub.f32 %v4085, %v4971
        %4973 = vmatprep.subr.mxu0 %v4972
        %v4974 = vand.u32 %v4084, 4294901760
        %v4975 = vsub.f32 %v4084, %v4974
        %4976 = vmatpush1.msra.mxu0 %v4975
        %v4977 = vand.u32 %v4089, 4294901760
        %v4978 = vsub.f32 %v4089, %v4977
        %4979 = vmatprep.subr.mxu0 %v4978
        %v4980 = vand.u32 %v4088, 4294901760
        %v4981 = vsub.f32 %v4088, %v4980
        %4982 = vmatpush1.msra.mxu0 %v4981
        %v4983 = vand.u32 %v4093, 4294901760
        %v4984 = vsub.f32 %v4093, %v4983
        %4985 = vmatprep.subr.mxu0 %v4984
        %v4986 = vand.u32 %v4092, 4294901760
        %v4987 = vsub.f32 %v4092, %v4986
        %4988 = vmatpush1.msra.mxu0 %v4987
        %v4989 = vand.u32 %v4097, 4294901760
        %v4990 = vsub.f32 %v4097, %v4989
        %4991 = vmatprep.subr.mxu0 %v4990
        %v4992 = vand.u32 %v4096, 4294901760
        %v4993 = vsub.f32 %v4096, %v4992
        %4994 = vmatpush1.msra.mxu0 %v4993
        %4995 = vmatprep.subr.mxu0 0.0
        %4996 = vmatpush1.msra.mxu0 0.0
        %4997 = vmatprep.subr.mxu0 0.0
        %4998 = vmatpush1.msra.mxu0 0.0
        %4999 = vmatprep.subr.mxu0 0.0
        %5000 = vmatpush1.msra.mxu0 0.0
        %5001 = vmatprep.subr.mxu0 0.0
        %5002 = vmatpush1.msra.mxu0 0.0
        %5003 = vmatprep.subr.mxu0 0.0
        %5004 = vmatpush1.msra.mxu0 0.0
        %5005 = vmatprep.subr.mxu0 0.0
        %5006 = vmatpush1.msra.mxu0 0.0
        %5007 = vmatprep.subr.mxu0 0.0
        %5008 = vmatpush1.msra.mxu0 0.0
        %5009 = vmatprep.subr.mxu0 0.0
        %5010 = vmatpush1.msra.mxu0 0.0
        %5011 = vmatprep.subr.mxu0 0.0
        %5012 = vmatpush1.msra.mxu0 0.0
        %5013 = vmatprep.subr.mxu0 0.0
        %5014 = vmatpush1.msra.mxu0 0.0
        %5015 = vmatprep.subr.mxu0 0.0
        %5016 = vmatpush1.msra.mxu0 0.0
        %5017 = vmatprep.subr.mxu0 0.0
        %5018 = vmatpush1.msra.mxu0 0.0
        %5019 = vmatprep.subr.mxu0 0.0
        %5020 = vmatpush1.msra.mxu0 0.0
        %5021 = vmatprep.subr.mxu0 0.0
        %5022 = vmatpush1.msra.mxu0 0.0
        %5023 = vmatprep.subr.mxu0 0.0
        %5024 = vmatpush1.msra.mxu0 0.0
        %5025 = vmatprep.subr.mxu0 0.0
        %5026 = vmatpush1.msra.mxu0 0.0
        %5027 = vmatprep.subr.mxu0 0.0
        %5028 = vmatpush1.msra.mxu0 0.0
        %5029 = vmatprep.subr.mxu0 0.0
        %5030 = vmatpush1.msra.mxu0 0.0
        %5031 = vmatprep.subr.mxu0 0.0
        %5032 = vmatpush1.msra.mxu0 0.0
        %5033 = vmatprep.subr.mxu0 0.0
        %5034 = vmatpush1.msra.mxu0 0.0
        %5035 = vmatprep.subr.mxu0 0.0
        %5036 = vmatpush1.msra.mxu0 0.0
        %5037 = vmatprep.subr.mxu0 0.0
        %5038 = vmatpush1.msra.mxu0 0.0
        %5039 = vmatprep.subr.mxu0 0.0
        %5040 = vmatpush1.msra.mxu0 0.0
        %5041 = vmatprep.subr.mxu0 0.0
        %5042 = vmatpush1.msra.mxu0 0.0
        %5043 = vmatprep.subr.mxu0 0.0
        %5044 = vmatpush1.msra.mxu0 0.0
        %5045 = vmatprep.subr.mxu0 0.0
        %5046 = vmatpush1.msra.mxu0 0.0
        %5047 = vmatprep.subr.mxu0 0.0
        %5048 = vmatpush1.msra.mxu0 0.0
        %5049 = vmatprep.subr.mxu0 0.0
        %5050 = vmatpush1.msra.mxu0 0.0
        %5051 = vmatprep.mubr.f32.mxu0 0.0
        %v5052 = vand.u32 %v1541, 4294901760
        %v5053 = vsub.f32 %v1541, %v5052
        %5054 = vmatmul.mubr.f32.gmra.mrb[0].mxu0 %v5053
        %v5055 = vpop.f32.mrb[0].mxu0
        %v5056 = vadd.f32 %v4953, %v5055
        %v5057 = vpop.f32.mrb[0].mxu0
        %v5058 = vadd.f32 %v4955, %v5057
        %5059 = vmatprep.mubr.f32.mxu0 0.0
        %v5060 = vand.u32 %v1544, 4294901760
        %v5061 = vsub.f32 %v1544, %v5060
        %5062 = vmatmul.mubr.f32.gmra.mrb[0].mxu0 %v5061
        %v5063 = vpop.f32.mrb[0].mxu0
        %v5064 = vadd.f32 %v4960, %v5063
        %v5065 = vpop.f32.mrb[0].mxu0
        %v5066 = vadd.f32 %v4962, %v5065
        %5067 = vmatprep.mubr.f32.mxu0 0.0
        %v5068 = vand.u32 %v1547, 4294901760
        %v5069 = vsub.f32 %v1547, %v5068
        %5070 = vmatmul.mubr.f32.gmra.mrb[0].mxu0 %v5069
        %v5071 = vpop.f32.mrb[0].mxu0
        %v5072 = vadd.f32 %v4967, %v5071
        %v5073 = vpop.f32.mrb[0].mxu0
        %v5074 = vadd.f32 %v4969, %v5073
        %5075 = vdwg.mxu0
        %v5076 = vand.u32 %v4085, 4294901760
        %5077 = vmatprep.subr.mxu0 %v5076
        %v5078 = vand.u32 %v4084, 4294901760
        %5079 = vmatpush1.msra.mxu0 %v5078
        %v5080 = vand.u32 %v4089, 4294901760
        %5081 = vmatprep.subr.mxu0 %v5080
        %v5082 = vand.u32 %v4088, 4294901760
        %5083 = vmatpush1.msra.mxu0 %v5082
        %v5084 = vand.u32 %v4093, 4294901760
        %5085 = vmatprep.subr.mxu0 %v5084
        %v5086 = vand.u32 %v4092, 4294901760
        %5087 = vmatpush1.msra.mxu0 %v5086
        %v5088 = vand.u32 %v4097, 4294901760
        %5089 = vmatprep.subr.mxu0 %v5088
        %v5090 = vand.u32 %v4096, 4294901760
        %5091 = vmatpush1.msra.mxu0 %v5090
        %5092 = vmatprep.subr.mxu0 0.0
        %5093 = vmatpush1.msra.mxu0 0.0
        %5094 = vmatprep.subr.mxu0 0.0
        %5095 = vmatpush1.msra.mxu0 0.0
        %5096 = vmatprep.subr.mxu0 0.0
        %5097 = vmatpush1.msra.mxu0 0.0
        %5098 = vmatprep.subr.mxu0 0.0
        %5099 = vmatpush1.msra.mxu0 0.0
        %5100 = vmatprep.subr.mxu0 0.0
        %5101 = vmatpush1.msra.mxu0 0.0
        %5102 = vmatprep.subr.mxu0 0.0
        %5103 = vmatpush1.msra.mxu0 0.0
        %5104 = vmatprep.subr.mxu0 0.0
        %5105 = vmatpush1.msra.mxu0 0.0
        %5106 = vmatprep.subr.mxu0 0.0
        %5107 = vmatpush1.msra.mxu0 0.0
        %5108 = vmatprep.subr.mxu0 0.0
        %5109 = vmatpush1.msra.mxu0 0.0
        %5110 = vmatprep.subr.mxu0 0.0
        %5111 = vmatpush1.msra.mxu0 0.0
        %5112 = vmatprep.subr.mxu0 0.0
        %5113 = vmatpush1.msra.mxu0 0.0
        %5114 = vmatprep.subr.mxu0 0.0
        %5115 = vmatpush1.msra.mxu0 0.0
        %5116 = vmatprep.subr.mxu0 0.0
        %5117 = vmatpush1.msra.mxu0 0.0
        %5118 = vmatprep.subr.mxu0 0.0
        %5119 = vmatpush1.msra.mxu0 0.0
        %5120 = vmatprep.subr.mxu0 0.0
        %5121 = vmatpush1.msra.mxu0 0.0
        %5122 = vmatprep.subr.mxu0 0.0
        %5123 = vmatpush1.msra.mxu0 0.0
        %5124 = vmatprep.subr.mxu0 0.0
        %5125 = vmatpush1.msra.mxu0 0.0
        %5126 = vmatprep.subr.mxu0 0.0
        %5127 = vmatpush1.msra.mxu0 0.0
        %5128 = vmatprep.subr.mxu0 0.0
        %5129 = vmatpush1.msra.mxu0 0.0
        %5130 = vmatprep.subr.mxu0 0.0
        %5131 = vmatpush1.msra.mxu0 0.0
        %5132 = vmatprep.subr.mxu0 0.0
        %5133 = vmatpush1.msra.mxu0 0.0
        %5134 = vmatprep.subr.mxu0 0.0
        %5135 = vmatpush1.msra.mxu0 0.0
        %5136 = vmatprep.subr.mxu0 0.0
        %5137 = vmatpush1.msra.mxu0 0.0
        %5138 = vmatprep.subr.mxu0 0.0
        %5139 = vmatpush1.msra.mxu0 0.0
        %5140 = vmatprep.subr.mxu0 0.0
        %5141 = vmatpush1.msra.mxu0 0.0
        %5142 = vmatprep.subr.mxu0 0.0
        %5143 = vmatpush1.msra.mxu0 0.0
        %5144 = vmatprep.subr.mxu0 0.0
        %5145 = vmatpush1.msra.mxu0 0.0
        %5146 = vmatprep.subr.mxu0 0.0
        %5147 = vmatpush1.msra.mxu0 0.0
        %5148 = vmatprep.mubr.f32.mxu0 0.0
        %v5149 = vand.u32 %v1541, 4294901760
        %v5150 = vsub.f32 %v1541, %v5149
        %v5151 = vand.u32 %v5150, 4294901760
        %5152 = vmatmul.mubr.f32.gmra.mrb[0].mxu0 %v5151
        %v5153 = vpop.f32.mrb[0].mxu0
        %v5154 = vadd.f32 %v5056, %v5153
        %v5155 = vpop.f32.mrb[0].mxu0
        %v5156 = vadd.f32 %v5058, %v5155
        %5157 = vmatprep.mubr.f32.mxu0 0.0
        %v5158 = vand.u32 %v1544, 4294901760
        %v5159 = vsub.f32 %v1544, %v5158
        %v5160 = vand.u32 %v5159, 4294901760
        %5161 = vmatmul.mubr.f32.gmra.mrb[0].mxu0 %v5160
        %v5162 = vpop.f32.mrb[0].mxu0
        %v5163 = vadd.f32 %v5064, %v5162
        %v5164 = vpop.f32.mrb[0].mxu0
        %v5165 = vadd.f32 %v5066, %v5164
        %5166 = vmatprep.mubr.f32.mxu0 0.0
        %v5167 = vand.u32 %v1547, 4294901760
        %v5168 = vsub.f32 %v1547, %v5167
        %v5169 = vand.u32 %v5168, 4294901760
        %5170 = vmatmul.mubr.f32.gmra.mrb[0].mxu0 %v5169
        %v5171 = vpop.f32.mrb[0].mxu0
        %v5172 = vadd.f32 %v5072, %v5171
        %v5173 = vpop.f32.mrb[0].mxu0
        %v5174 = vadd.f32 %v5074, %v5173
        %5175 = vdwg.mxu0
        %v5176 = vand.u32 %v4085, 4294901760
        %v5177 = vsub.f32 %v4085, %v5176
        %v5178 = vand.u32 %v5177, 4294901760
        %5179 = vmatprep.subr.mxu0 %v5178
        %v5180 = vand.u32 %v4084, 4294901760
        %v5181 = vsub.f32 %v4084, %v5180
        %v5182 = vand.u32 %v5181, 4294901760
        %5183 = vmatpush1.msra.mxu0 %v5182
        %v5184 = vand.u32 %v4089, 4294901760
        %v5185 = vsub.f32 %v4089, %v5184
        %v5186 = vand.u32 %v5185, 4294901760
        %5187 = vmatprep.subr.mxu0 %v5186
        %v5188 = vand.u32 %v4088, 4294901760
        %v5189 = vsub.f32 %v4088, %v5188
        %v5190 = vand.u32 %v5189, 4294901760
        %5191 = vmatpush1.msra.mxu0 %v5190
        %v5192 = vand.u32 %v4093, 4294901760
        %v5193 = vsub.f32 %v4093, %v5192
        %v5194 = vand.u32 %v5193, 4294901760
        %5195 = vmatprep.subr.mxu0 %v5194
        %v5196 = vand.u32 %v4092, 4294901760
        %v5197 = vsub.f32 %v4092, %v5196
        %v5198 = vand.u32 %v5197, 4294901760
        %5199 = vmatpush1.msra.mxu0 %v5198
        %v5200 = vand.u32 %v4097, 4294901760
        %v5201 = vsub.f32 %v4097, %v5200
        %v5202 = vand.u32 %v5201, 4294901760
        %5203 = vmatprep.subr.mxu0 %v5202
        %v5204 = vand.u32 %v4096, 4294901760
        %v5205 = vsub.f32 %v4096, %v5204
        %v5206 = vand.u32 %v5205, 4294901760
        %5207 = vmatpush1.msra.mxu0 %v5206
        %5208 = vmatprep.subr.mxu0 0.0
        %5209 = vmatpush1.msra.mxu0 0.0
        %5210 = vmatprep.subr.mxu0 0.0
        %5211 = vmatpush1.msra.mxu0 0.0
        %5212 = vmatprep.subr.mxu0 0.0
        %5213 = vmatpush1.msra.mxu0 0.0
        %5214 = vmatprep.subr.mxu0 0.0
        %5215 = vmatpush1.msra.mxu0 0.0
        %5216 = vmatprep.subr.mxu0 0.0
        %5217 = vmatpush1.msra.mxu0 0.0
        %5218 = vmatprep.subr.mxu0 0.0
        %5219 = vmatpush1.msra.mxu0 0.0
        %5220 = vmatprep.subr.mxu0 0.0
        %5221 = vmatpush1.msra.mxu0 0.0
        %5222 = vmatprep.subr.mxu0 0.0
        %5223 = vmatpush1.msra.mxu0 0.0
        %5224 = vmatprep.subr.mxu0 0.0
        %5225 = vmatpush1.msra.mxu0 0.0
        %5226 = vmatprep.subr.mxu0 0.0
        %5227 = vmatpush1.msra.mxu0 0.0
        %5228 = vmatprep.subr.mxu0 0.0
        %5229 = vmatpush1.msra.mxu0 0.0
        %5230 = vmatprep.subr.mxu0 0.0
        %5231 = vmatpush1.msra.mxu0 0.0
        %5232 = vmatprep.subr.mxu0 0.0
        %5233 = vmatpush1.msra.mxu0 0.0
        %5234 = vmatprep.subr.mxu0 0.0
        %5235 = vmatpush1.msra.mxu0 0.0
        %5236 = vmatprep.subr.mxu0 0.0
        %5237 = vmatpush1.msra.mxu0 0.0
        %5238 = vmatprep.subr.mxu0 0.0
        %5239 = vmatpush1.msra.mxu0 0.0
        %5240 = vmatprep.subr.mxu0 0.0
        %5241 = vmatpush1.msra.mxu0 0.0
        %5242 = vmatprep.subr.mxu0 0.0
        %5243 = vmatpush1.msra.mxu0 0.0
        %5244 = vmatprep.subr.mxu0 0.0
        %5245 = vmatpush1.msra.mxu0 0.0
        %5246 = vmatprep.subr.mxu0 0.0
        %5247 = vmatpush1.msra.mxu0 0.0
        %5248 = vmatprep.subr.mxu0 0.0
        %5249 = vmatpush1.msra.mxu0 0.0
        %5250 = vmatprep.subr.mxu0 0.0
        %5251 = vmatpush1.msra.mxu0 0.0
        %5252 = vmatprep.subr.mxu0 0.0
        %5253 = vmatpush1.msra.mxu0 0.0
        %5254 = vmatprep.subr.mxu0 0.0
        %5255 = vmatpush1.msra.mxu0 0.0
        %5256 = vmatprep.subr.mxu0 0.0
        %5257 = vmatpush1.msra.mxu0 0.0
        %5258 = vmatprep.subr.mxu0 0.0
        %5259 = vmatpush1.msra.mxu0 0.0
        %5260 = vmatprep.subr.mxu0 0.0
        %5261 = vmatpush1.msra.mxu0 0.0
        %5262 = vmatprep.subr.mxu0 0.0
        %5263 = vmatpush1.msra.mxu0 0.0
        %5264 = vmatprep.mubr.f32.mxu0 0.0
        %v5265 = vand.u32 %v1541, 4294901760
        %5266 = vmatmul.mubr.f32.gmra.mrb[0].mxu0 %v5265
        %v5267 = vpop.f32.mrb[0].mxu0
        %v5268 = vadd.f32 %v5154, %v5267
        %v5269 = vpop.f32.mrb[0].mxu0
        %v5270 = vadd.f32 %v5156, %v5269
        %5271 = vmatprep.mubr.f32.mxu0 0.0
        %v5272 = vand.u32 %v1544, 4294901760
        %5273 = vmatmul.mubr.f32.gmra.mrb[0].mxu0 %v5272
        %v5274 = vpop.f32.mrb[0].mxu0
        %v5275 = vadd.f32 %v5163, %v5274
        %v5276 = vpop.f32.mrb[0].mxu0
        %v5277 = vadd.f32 %v5165, %v5276
        %5278 = vmatprep.mubr.f32.mxu0 0.0
        %v5279 = vand.u32 %v1547, 4294901760
        %5280 = vmatmul.mubr.f32.gmra.mrb[0].mxu0 %v5279
        %v5281 = vpop.f32.mrb[0].mxu0
        %v5282 = vadd.f32 %v5172, %v5281
        %v5283 = vpop.f32.mrb[0].mxu0
        %v5284 = vadd.f32 %v5174, %v5283
        %5285 = vdwg.mxu0
        %v5286 = vand.u32 %v4085, 4294901760
        %5287 = vmatprep.subr.mxu0 %v5286
        %v5288 = vand.u32 %v4084, 4294901760
        %5289 = vmatpush1.msra.mxu0 %v5288
        %v5290 = vand.u32 %v4089, 4294901760
        %5291 = vmatprep.subr.mxu0 %v5290
        %v5292 = vand.u32 %v4088, 4294901760
        %5293 = vmatpush1.msra.mxu0 %v5292
        %v5294 = vand.u32 %v4093, 4294901760
        %5295 = vmatprep.subr.mxu0 %v5294
        %v5296 = vand.u32 %v4092, 4294901760
        %5297 = vmatpush1.msra.mxu0 %v5296
        %v5298 = vand.u32 %v4097, 4294901760
        %5299 = vmatprep.subr.mxu0 %v5298
        %v5300 = vand.u32 %v4096, 4294901760
        %5301 = vmatpush1.msra.mxu0 %v5300
        %5302 = vmatprep.subr.mxu0 0.0
        %5303 = vmatpush1.msra.mxu0 0.0
        %5304 = vmatprep.subr.mxu0 0.0
        %5305 = vmatpush1.msra.mxu0 0.0
        %5306 = vmatprep.subr.mxu0 0.0
        %5307 = vmatpush1.msra.mxu0 0.0
        %5308 = vmatprep.subr.mxu0 0.0
        %5309 = vmatpush1.msra.mxu0 0.0
        %5310 = vmatprep.subr.mxu0 0.0
        %5311 = vmatpush1.msra.mxu0 0.0
        %5312 = vmatprep.subr.mxu0 0.0
        %5313 = vmatpush1.msra.mxu0 0.0
        %5314 = vmatprep.subr.mxu0 0.0
        %5315 = vmatpush1.msra.mxu0 0.0
        %5316 = vmatprep.subr.mxu0 0.0
        %5317 = vmatpush1.msra.mxu0 0.0
        %5318 = vmatprep.subr.mxu0 0.0
        %5319 = vmatpush1.msra.mxu0 0.0
        %5320 = vmatprep.subr.mxu0 0.0
        %5321 = vmatpush1.msra.mxu0 0.0
        %5322 = vmatprep.subr.mxu0 0.0
        %5323 = vmatpush1.msra.mxu0 0.0
        %5324 = vmatprep.subr.mxu0 0.0
        %5325 = vmatpush1.msra.mxu0 0.0
        %5326 = vmatprep.subr.mxu0 0.0
        %5327 = vmatpush1.msra.mxu0 0.0
        %5328 = vmatprep.subr.mxu0 0.0
        %5329 = vmatpush1.msra.mxu0 0.0
        %5330 = vmatprep.subr.mxu0 0.0
        %5331 = vmatpush1.msra.mxu0 0.0
        %5332 = vmatprep.subr.mxu0 0.0
        %5333 = vmatpush1.msra.mxu0 0.0
        %5334 = vmatprep.subr.mxu0 0.0
        %5335 = vmatpush1.msra.mxu0 0.0
        %5336 = vmatprep.subr.mxu0 0.0
        %5337 = vmatpush1.msra.mxu0 0.0
        %5338 = vmatprep.subr.mxu0 0.0
        %5339 = vmatpush1.msra.mxu0 0.0
        %5340 = vmatprep.subr.mxu0 0.0
        %5341 = vmatpush1.msra.mxu0 0.0
        %5342 = vmatprep.subr.mxu0 0.0
        %5343 = vmatpush1.msra.mxu0 0.0
        %5344 = vmatprep.subr.mxu0 0.0
        %5345 = vmatpush1.msra.mxu0 0.0
        %5346 = vmatprep.subr.mxu0 0.0
        %5347 = vmatpush1.msra.mxu0 0.0
        %5348 = vmatprep.subr.mxu0 0.0
        %5349 = vmatpush1.msra.mxu0 0.0
        %5350 = vmatprep.subr.mxu0 0.0
        %5351 = vmatpush1.msra.mxu0 0.0
        %5352 = vmatprep.subr.mxu0 0.0
        %5353 = vmatpush1.msra.mxu0 0.0
        %5354 = vmatprep.subr.mxu0 0.0
        %5355 = vmatpush1.msra.mxu0 0.0
        %5356 = vmatprep.subr.mxu0 0.0
        %5357 = vmatpush1.msra.mxu0 0.0
        %5358 = vmatprep.mubr.f32.mxu0 0.0
        %v5359 = vand.u32 %v1541, 4294901760
        %5360 = vmatmul.mubr.f32.gmra.mrb[0].mxu0 %v5359
        %v5361 = vpop.f32.mrb[0].mxu0
        %v5362 = vadd.f32 %v5268, %v5361
        %v5363 = vpop.f32.mrb[0].mxu0
        %v5364 = vadd.f32 %v5270, %v5363
        %5365 = vmatprep.mubr.f32.mxu0 0.0
        %v5366 = vand.u32 %v1544, 4294901760
        %5367 = vmatmul.mubr.f32.gmra.mrb[0].mxu0 %v5366
        %v5368 = vpop.f32.mrb[0].mxu0
        %v5369 = vadd.f32 %v5275, %v5368
        %v5370 = vpop.f32.mrb[0].mxu0
        %v5371 = vadd.f32 %v5277, %v5370
        %5372 = vmatprep.mubr.f32.mxu0 0.0
        %v5373 = vand.u32 %v1547, 4294901760
        %5374 = vmatmul.mubr.f32.gmra.mrb[0].mxu0 %v5373
        %v5375 = vpop.f32.mrb[0].mxu0
        %v5376 = vadd.f32 %v5282, %v5375
        %v5377 = vpop.f32.mrb[0].mxu0
        %v5378 = vadd.f32 %v5284, %v5377
        %5379 = vdwg.mxu0
        %s5380 = scalar_lea.vmem %s214, 32 [#allocation2]
        %5381 = vst [vmem:[%s5380] sm:$0xff] %v4721
        %5382 = vst [vmem:[%s5380 + $0x8] sm:$0xff] %v4723
        %5383 = vst [vmem:[%s5380 + $0x10] sm:$0xff] %v5362
        %5384 = vst [vmem:[%s5380 + $0x18] sm:$0xff] %v5364
        %5385 = vst [vmem:[%s5380 + $0x60] sm:$0xff] %v4728
        %5386 = vst [vmem:[%s5380 + $0x68] sm:$0xff] %v4730
        %5387 = vst [vmem:[%s5380 + $0x70] sm:$0xff] %v5369
        %5388 = vst [vmem:[%s5380 + $0x78] sm:$0xff] %v5371
        %5389 = vst [vmem:[%s5380 + $0xc0] sm:$0xf] %v4735
        %5390 = vst [vmem:[%s5380 + $0xc8] sm:$0xf] %v4737
        %5391 = vst [vmem:[%s5380 + $0xd0] sm:$0xf] %v5376
        %5392 = vst [vmem:[%s5380 + $0xd8] sm:$0xf] %v5378
        %s5393 = scalar_lea.vmem %s219, 32
        %v5394 = vld [vmem:[%s5393] sm:$0x77]
        %v5395 = vld [vmem:[%s5393 + $0x8] sm:$0x77]
        %v5398 = vcombine.high %v5394, %v5394
        %v5399 = vcombine.high %v5395, %v5395
        %v5400 = vsel %vm275, %v5394, 0
        %v5402 = vsel %vm275, %v5398, 0
        %v5404 = vsel %vm275, %v5395, 0
        %v5406 = vsel %vm275, %v5399, 0
        %v5408 = vand.u32 %v5402, 4294901760
        %5409 = vmatprep.subr.mxu0 %v5408
        %v5410 = vand.u32 %v5400, 4294901760
        %5411 = vmatpush1.msra.mxu0 %v5410
        %5412 = vmatprep.subr.mxu0 0.0
        %5413 = vmatpush1.msra.mxu0 0.0
        %5414 = vmatprep.subr.mxu0 0.0
        %5415 = vmatpush1.msra.mxu0 0.0
        %5416 = vmatprep.subr.mxu0 0.0
        %5417 = vmatpush1.msra.mxu0 0.0
        %5418 = vmatprep.subr.mxu0 0.0
        %5419 = vmatpush1.msra.mxu0 0.0
        %5420 = vmatprep.subr.mxu0 0.0
        %5421 = vmatpush1.msra.mxu0 0.0
        %5422 = vmatprep.subr.mxu0 0.0
        %5423 = vmatpush1.msra.mxu0 0.0
        %5424 = vmatprep.subr.mxu0 0.0
        %5425 = vmatpush1.msra.mxu0 0.0
        %5426 = vmatprep.subr.mxu0 0.0
        %5427 = vmatpush1.msra.mxu0 0.0
        %5428 = vmatprep.subr.mxu0 0.0
        %5429 = vmatpush1.msra.mxu0 0.0
        %5430 = vmatprep.subr.mxu0 0.0
        %5431 = vmatpush1.msra.mxu0 0.0
        %5432 = vmatprep.subr.mxu0 0.0
        %5433 = vmatpush1.msra.mxu0 0.0
        %5434 = vmatprep.subr.mxu0 0.0
        %5435 = vmatpush1.msra.mxu0 0.0
        %5436 = vmatprep.subr.mxu0 0.0
        %5437 = vmatpush1.msra.mxu0 0.0
        %5438 = vmatprep.subr.mxu0 0.0
        %5439 = vmatpush1.msra.mxu0 0.0
        %5440 = vmatprep.subr.mxu0 0.0
        %5441 = vmatpush1.msra.mxu0 0.0
        %5442 = vmatprep.subr.mxu0 0.0
        %5443 = vmatpush1.msra.mxu0 0.0
        %5444 = vmatprep.subr.mxu0 0.0
        %5445 = vmatpush1.msra.mxu0 0.0
        %5446 = vmatprep.subr.mxu0 0.0
        %5447 = vmatpush1.msra.mxu0 0.0
        %5448 = vmatprep.subr.mxu0 0.0
        %5449 = vmatpush1.msra.mxu0 0.0
        %5450 = vmatprep.subr.mxu0 0.0
        %5451 = vmatpush1.msra.mxu0 0.0
        %5452 = vmatprep.subr.mxu0 0.0
        %5453 = vmatpush1.msra.mxu0 0.0
        %5454 = vmatprep.subr.mxu0 0.0
        %5455 = vmatpush1.msra.mxu0 0.0
        %5456 = vmatprep.subr.mxu0 0.0
        %5457 = vmatpush1.msra.mxu0 0.0
        %5458 = vmatprep.subr.mxu0 0.0
        %5459 = vmatpush1.msra.mxu0 0.0
        %5460 = vmatprep.subr.mxu0 0.0
        %5461 = vmatpush1.msra.mxu0 0.0
        %5462 = vmatprep.subr.mxu0 0.0
        %5463 = vmatpush1.msra.mxu0 0.0
        %5464 = vmatprep.subr.mxu0 0.0
        %5465 = vmatpush1.msra.mxu0 0.0
        %5466 = vmatprep.subr.mxu0 0.0
        %5467 = vmatpush1.msra.mxu0 0.0
        %5468 = vmatprep.subr.mxu0 0.0
        %5469 = vmatpush1.msra.mxu0 0.0
        %5470 = vmatprep.subr.mxu0 0.0
        %5471 = vmatpush1.msra.mxu0 0.0
        %5472 = vmatprep.subr.mxu0 0.0
        %5473 = vmatpush1.msra.mxu0 0.0
        %5474 = vmatprep.mubr.f32.mxu0 0.0
        %v5475 = vand.u32 %v264, 4294901760
        %v5476 = vsub.f32 %v264, %v5475
        %v5477 = vand.u32 %v5476, 4294901760
        %v5478 = vsub.f32 %v5476, %v5477
        %v5479 = vand.u32 %v5478, 4294901760
        %5480 = vmatmul.mubr.f32.gmra.mrb[0].mxu0 %v5479
        %v5481 = vpop.f32.mrb[0].mxu0
        %v5482 = vadd.f32 %v241, %v5481
        %v5483 = vpop.f32.mrb[0].mxu0
        %v5484 = vadd.f32 %v241, %v5483
        %5485 = vmatprep.mubr.f32.mxu0 0.0
        %v5486 = vand.u32 %v267, 4294901760
        %v5487 = vsub.f32 %v267, %v5486
        %v5488 = vand.u32 %v5487, 4294901760
        %v5489 = vsub.f32 %v5487, %v5488
        %v5490 = vand.u32 %v5489, 4294901760
        %5491 = vmatmul.mubr.f32.gmra.mrb[0].mxu0 %v5490
        %v5492 = vpop.f32.mrb[0].mxu0
        %v5493 = vadd.f32 %v246, %v5492
        %v5494 = vpop.f32.mrb[0].mxu0
        %v5495 = vadd.f32 %v246, %v5494
        %5496 = vmatprep.mubr.f32.mxu0 0.0
        %v5497 = vand.u32 %v270, 4294901760
        %v5498 = vsub.f32 %v270, %v5497
        %v5499 = vand.u32 %v5498, 4294901760
        %v5500 = vsub.f32 %v5498, %v5499
        %v5501 = vand.u32 %v5500, 4294901760
        %5502 = vmatmul.mubr.f32.gmra.mrb[0].mxu0 %v5501
        %v5503 = vpop.f32.mrb[0].mxu0
        %v5504 = vadd.f32 %v251, %v5503
        %v5505 = vpop.f32.mrb[0].mxu0
        %v5506 = vadd.f32 %v251, %v5505
        %5507 = vmatprep.mubr.f32.mxu0 0.0
        %v5508 = vand.u32 %v273, 4294901760
        %v5509 = vsub.f32 %v273, %v5508
        %v5510 = vand.u32 %v5509, 4294901760
        %v5511 = vsub.f32 %v5509, %v5510
        %v5512 = vand.u32 %v5511, 4294901760
        %5513 = vmatmul.mubr.f32.gmra.mrb[0].mxu0 %v5512
        %v5514 = vpop.f32.mrb[0].mxu0
        %v5515 = vadd.f32 %v256, %v5514
        %v5516 = vpop.f32.mrb[0].mxu0
        %v5517 = vadd.f32 %v256, %v5516
        %5518 = vdwg.mxu0
        %v5519 = vand.u32 %v5402, 4294901760
        %v5520 = vsub.f32 %v5402, %v5519
        %v5521 = vand.u32 %v5520, 4294901760
        %v5522 = vsub.f32 %v5520, %v5521
        %v5523 = vand.u32 %v5522, 4294901760
        %5524 = vmatprep.subr.mxu0 %v5523
        %v5525 = vand.u32 %v5400, 4294901760
        %v5526 = vsub.f32 %v5400, %v5525
        %v5527 = vand.u32 %v5526, 4294901760
        %v5528 = vsub.f32 %v5526, %v5527
        %v5529 = vand.u32 %v5528, 4294901760
        %5530 = vmatpush1.msra.mxu0 %v5529
        %5531 = vmatprep.subr.mxu0 0.0
        %5532 = vmatpush1.msra.mxu0 0.0
        %5533 = vmatprep.subr.mxu0 0.0
        %5534 = vmatpush1.msra.mxu0 0.0
        %5535 = vmatprep.subr.mxu0 0.0
        %5536 = vmatpush1.msra.mxu0 0.0
        %5537 = vmatprep.subr.mxu0 0.0
        %5538 = vmatpush1.msra.mxu0 0.0
        %5539 = vmatprep.subr.mxu0 0.0
        %5540 = vmatpush1.msra.mxu0 0.0
        %5541 = vmatprep.subr.mxu0 0.0
        %5542 = vmatpush1.msra.mxu0 0.0
        %5543 = vmatprep.subr.mxu0 0.0
        %5544 = vmatpush1.msra.mxu0 0.0
        %5545 = vmatprep.subr.mxu0 0.0
        %5546 = vmatpush1.msra.mxu0 0.0
        %5547 = vmatprep.subr.mxu0 0.0
        %5548 = vmatpush1.msra.mxu0 0.0
        %5549 = vmatprep.subr.mxu0 0.0
        %5550 = vmatpush1.msra.mxu0 0.0
        %5551 = vmatprep.subr.mxu0 0.0
        %5552 = vmatpush1.msra.mxu0 0.0
        %5553 = vmatprep.subr.mxu0 0.0
        %5554 = vmatpush1.msra.mxu0 0.0
        %5555 = vmatprep.subr.mxu0 0.0
        %5556 = vmatpush1.msra.mxu0 0.0
        %5557 = vmatprep.subr.mxu0 0.0
        %5558 = vmatpush1.msra.mxu0 0.0
        %5559 = vmatprep.subr.mxu0 0.0
        %5560 = vmatpush1.msra.mxu0 0.0
        %5561 = vmatprep.subr.mxu0 0.0
        %5562 = vmatpush1.msra.mxu0 0.0
        %5563 = vmatprep.subr.mxu0 0.0
        %5564 = vmatpush1.msra.mxu0 0.0
        %5565 = vmatprep.subr.mxu0 0.0
        %5566 = vmatpush1.msra.mxu0 0.0
        %5567 = vmatprep.subr.mxu0 0.0
        %5568 = vmatpush1.msra.mxu0 0.0
        %5569 = vmatprep.subr.mxu0 0.0
        %5570 = vmatpush1.msra.mxu0 0.0
        %5571 = vmatprep.subr.mxu0 0.0
        %5572 = vmatpush1.msra.mxu0 0.0
        %5573 = vmatprep.subr.mxu0 0.0
        %5574 = vmatpush1.msra.mxu0 0.0
        %5575 = vmatprep.subr.mxu0 0.0
        %5576 = vmatpush1.msra.mxu0 0.0
        %5577 = vmatprep.subr.mxu0 0.0
        %5578 = vmatpush1.msra.mxu0 0.0
        %5579 = vmatprep.subr.mxu0 0.0
        %5580 = vmatpush1.msra.mxu0 0.0
        %5581 = vmatprep.subr.mxu0 0.0
        %5582 = vmatpush1.msra.mxu0 0.0
        %5583 = vmatprep.subr.mxu0 0.0
        %5584 = vmatpush1.msra.mxu0 0.0
        %5585 = vmatprep.subr.mxu0 0.0
        %5586 = vmatpush1.msra.mxu0 0.0
        %5587 = vmatprep.subr.mxu0 0.0
        %5588 = vmatpush1.msra.mxu0 0.0
        %5589 = vmatprep.subr.mxu0 0.0
        %5590 = vmatpush1.msra.mxu0 0.0
        %5591 = vmatprep.subr.mxu0 0.0
        %5592 = vmatpush1.msra.mxu0 0.0
        %5593 = vmatprep.mubr.f32.mxu0 0.0
        %v5594 = vand.u32 %v264, 4294901760
        %5595 = vmatmul.mubr.f32.gmra.mrb[0].mxu0 %v5594
        %v5596 = vpop.f32.mrb[0].mxu0
        %v5597 = vadd.f32 %v5482, %v5596
        %v5598 = vpop.f32.mrb[0].mxu0
        %v5599 = vadd.f32 %v5484, %v5598
        %5600 = vmatprep.mubr.f32.mxu0 0.0
        %v5601 = vand.u32 %v267, 4294901760
        %5602 = vmatmul.mubr.f32.gmra.mrb[0].mxu0 %v5601
        %v5603 = vpop.f32.mrb[0].mxu0
        %v5604 = vadd.f32 %v5493, %v5603
        %v5605 = vpop.f32.mrb[0].mxu0
        %v5606 = vadd.f32 %v5495, %v5605
        %5607 = vmatprep.mubr.f32.mxu0 0.0
        %v5608 = vand.u32 %v270, 4294901760
        %5609 = vmatmul.mubr.f32.gmra.mrb[0].mxu0 %v5608
        %v5610 = vpop.f32.mrb[0].mxu0
        %v5611 = vadd.f32 %v5504, %v5610
        %v5612 = vpop.f32.mrb[0].mxu0
        %v5613 = vadd.f32 %v5506, %v5612
        %5614 = vmatprep.mubr.f32.mxu0 0.0
        %v5615 = vand.u32 %v273, 4294901760
        %5616 = vmatmul.mubr.f32.gmra.mrb[0].mxu0 %v5615
        %v5617 = vpop.f32.mrb[0].mxu0
        %v5618 = vadd.f32 %v5515, %v5617
        %v5619 = vpop.f32.mrb[0].mxu0
        %v5620 = vadd.f32 %v5517, %v5619
        %5621 = vdwg.mxu0
        %v5622 = vand.u32 %v5402, 4294901760
        %v5623 = vsub.f32 %v5402, %v5622
        %5624 = vmatprep.subr.mxu0 %v5623
        %v5625 = vand.u32 %v5400, 4294901760
        %v5626 = vsub.f32 %v5400, %v5625
        %5627 = vmatpush1.msra.mxu0 %v5626
        %5628 = vmatprep.subr.mxu0 0.0
        %5629 = vmatpush1.msra.mxu0 0.0
        %5630 = vmatprep.subr.mxu0 0.0
        %5631 = vmatpush1.msra.mxu0 0.0
        %5632 = vmatprep.subr.mxu0 0.0
        %5633 = vmatpush1.msra.mxu0 0.0
        %5634 = vmatprep.subr.mxu0 0.0
        %5635 = vmatpush1.msra.mxu0 0.0
        %5636 = vmatprep.subr.mxu0 0.0
        %5637 = vmatpush1.msra.mxu0 0.0
        %5638 = vmatprep.subr.mxu0 0.0
        %5639 = vmatpush1.msra.mxu0 0.0
        %5640 = vmatprep.subr.mxu0 0.0
        %5641 = vmatpush1.msra.mxu0 0.0
        %5642 = vmatprep.subr.mxu0 0.0
        %5643 = vmatpush1.msra.mxu0 0.0
        %5644 = vmatprep.subr.mxu0 0.0
        %5645 = vmatpush1.msra.mxu0 0.0
        %5646 = vmatprep.subr.mxu0 0.0
        %5647 = vmatpush1.msra.mxu0 0.0
        %5648 = vmatprep.subr.mxu0 0.0
        %5649 = vmatpush1.msra.mxu0 0.0
        %5650 = vmatprep.subr.mxu0 0.0
        %5651 = vmatpush1.msra.mxu0 0.0
        %5652 = vmatprep.subr.mxu0 0.0
        %5653 = vmatpush1.msra.mxu0 0.0
        %5654 = vmatprep.subr.mxu0 0.0
        %5655 = vmatpush1.msra.mxu0 0.0
        %5656 = vmatprep.subr.mxu0 0.0
        %5657 = vmatpush1.msra.mxu0 0.0
        %5658 = vmatprep.subr.mxu0 0.0
        %5659 = vmatpush1.msra.mxu0 0.0
        %5660 = vmatprep.subr.mxu0 0.0
        %5661 = vmatpush1.msra.mxu0 0.0
        %5662 = vmatprep.subr.mxu0 0.0
        %5663 = vmatpush1.msra.mxu0 0.0
        %5664 = vmatprep.subr.mxu0 0.0
        %5665 = vmatpush1.msra.mxu0 0.0
        %5666 = vmatprep.subr.mxu0 0.0
        %5667 = vmatpush1.msra.mxu0 0.0
        %5668 = vmatprep.subr.mxu0 0.0
        %5669 = vmatpush1.msra.mxu0 0.0
        %5670 = vmatprep.subr.mxu0 0.0
        %5671 = vmatpush1.msra.mxu0 0.0
        %5672 = vmatprep.subr.mxu0 0.0
        %5673 = vmatpush1.msra.mxu0 0.0
        %5674 = vmatprep.subr.mxu0 0.0
        %5675 = vmatpush1.msra.mxu0 0.0
        %5676 = vmatprep.subr.mxu0 0.0
        %5677 = vmatpush1.msra.mxu0 0.0
        %5678 = vmatprep.subr.mxu0 0.0
        %5679 = vmatpush1.msra.mxu0 0.0
        %5680 = vmatprep.subr.mxu0 0.0
        %5681 = vmatpush1.msra.mxu0 0.0
        %5682 = vmatprep.subr.mxu0 0.0
        %5683 = vmatpush1.msra.mxu0 0.0
        %5684 = vmatprep.subr.mxu0 0.0
        %5685 = vmatpush1.msra.mxu0 0.0
        %5686 = vmatprep.subr.mxu0 0.0
        %5687 = vmatpush1.msra.mxu0 0.0
        %5688 = vmatprep.subr.mxu0 0.0
        %5689 = vmatpush1.msra.mxu0 0.0
        %5690 = vmatprep.mubr.f32.mxu0 0.0
        %v5691 = vand.u32 %v264, 4294901760
        %v5692 = vsub.f32 %v264, %v5691
        %5693 = vmatmul.mubr.f32.gmra.mrb[0].mxu0 %v5692
        %v5694 = vpop.f32.mrb[0].mxu0
        %v5695 = vadd.f32 %v5597, %v5694
        %v5696 = vpop.f32.mrb[0].mxu0
        %v5697 = vadd.f32 %v5599, %v5696
        %5698 = vmatprep.mubr.f32.mxu0 0.0
        %v5699 = vand.u32 %v267, 4294901760
        %v5700 = vsub.f32 %v267, %v5699
        %5701 = vmatmul.mubr.f32.gmra.mrb[0].mxu0 %v5700
        %v5702 = vpop.f32.mrb[0].mxu0
        %v5703 = vadd.f32 %v5604, %v5702
        %v5704 = vpop.f32.mrb[0].mxu0
        %v5705 = vadd.f32 %v5606, %v5704
        %5706 = vmatprep.mubr.f32.mxu0 0.0
        %v5707 = vand.u32 %v270, 4294901760
        %v5708 = vsub.f32 %v270, %v5707
        %5709 = vmatmul.mubr.f32.gmra.mrb[0].mxu0 %v5708
        %v5710 = vpop.f32.mrb[0].mxu0
        %v5711 = vadd.f32 %v5611, %v5710
        %v5712 = vpop.f32.mrb[0].mxu0
        %v5713 = vadd.f32 %v5613, %v5712
        %5714 = vmatprep.mubr.f32.mxu0 0.0
        %v5715 = vand.u32 %v273, 4294901760
        %v5716 = vsub.f32 %v273, %v5715
        %5717 = vmatmul.mubr.f32.gmra.mrb[0].mxu0 %v5716
        %v5718 = vpop.f32.mrb[0].mxu0
        %v5719 = vadd.f32 %v5618, %v5718
        %v5720 = vpop.f32.mrb[0].mxu0
        %v5721 = vadd.f32 %v5620, %v5720
        %5722 = vdwg.mxu0
        %v5723 = vand.u32 %v5402, 4294901760
        %5724 = vmatprep.subr.mxu0 %v5723
        %v5725 = vand.u32 %v5400, 4294901760
        %5726 = vmatpush1.msra.mxu0 %v5725
        %5727 = vmatprep.subr.mxu0 0.0
        %5728 = vmatpush1.msra.mxu0 0.0
        %5729 = vmatprep.subr.mxu0 0.0
        %5730 = vmatpush1.msra.mxu0 0.0
        %5731 = vmatprep.subr.mxu0 0.0
        %5732 = vmatpush1.msra.mxu0 0.0
        %5733 = vmatprep.subr.mxu0 0.0
        %5734 = vmatpush1.msra.mxu0 0.0
        %5735 = vmatprep.subr.mxu0 0.0
        %5736 = vmatpush1.msra.mxu0 0.0
        %5737 = vmatprep.subr.mxu0 0.0
        %5738 = vmatpush1.msra.mxu0 0.0
        %5739 = vmatprep.subr.mxu0 0.0
        %5740 = vmatpush1.msra.mxu0 0.0
        %5741 = vmatprep.subr.mxu0 0.0
        %5742 = vmatpush1.msra.mxu0 0.0
        %5743 = vmatprep.subr.mxu0 0.0
        %5744 = vmatpush1.msra.mxu0 0.0
        %5745 = vmatprep.subr.mxu0 0.0
        %5746 = vmatpush1.msra.mxu0 0.0
        %5747 = vmatprep.subr.mxu0 0.0
        %5748 = vmatpush1.msra.mxu0 0.0
        %5749 = vmatprep.subr.mxu0 0.0
        %5750 = vmatpush1.msra.mxu0 0.0
        %5751 = vmatprep.subr.mxu0 0.0
        %5752 = vmatpush1.msra.mxu0 0.0
        %5753 = vmatprep.subr.mxu0 0.0
        %5754 = vmatpush1.msra.mxu0 0.0
        %5755 = vmatprep.subr.mxu0 0.0
        %5756 = vmatpush1.msra.mxu0 0.0
        %5757 = vmatprep.subr.mxu0 0.0
        %5758 = vmatpush1.msra.mxu0 0.0
        %5759 = vmatprep.subr.mxu0 0.0
        %5760 = vmatpush1.msra.mxu0 0.0
        %5761 = vmatprep.subr.mxu0 0.0
        %5762 = vmatpush1.msra.mxu0 0.0
        %5763 = vmatprep.subr.mxu0 0.0
        %5764 = vmatpush1.msra.mxu0 0.0
        %5765 = vmatprep.subr.mxu0 0.0
        %5766 = vmatpush1.msra.mxu0 0.0
        %5767 = vmatprep.subr.mxu0 0.0
        %5768 = vmatpush1.msra.mxu0 0.0
        %5769 = vmatprep.subr.mxu0 0.0
        %5770 = vmatpush1.msra.mxu0 0.0
        %5771 = vmatprep.subr.mxu0 0.0
        %5772 = vmatpush1.msra.mxu0 0.0
        %5773 = vmatprep.subr.mxu0 0.0
        %5774 = vmatpush1.msra.mxu0 0.0
        %5775 = vmatprep.subr.mxu0 0.0
        %5776 = vmatpush1.msra.mxu0 0.0
        %5777 = vmatprep.subr.mxu0 0.0
        %5778 = vmatpush1.msra.mxu0 0.0
        %5779 = vmatprep.subr.mxu0 0.0
        %5780 = vmatpush1.msra.mxu0 0.0
        %5781 = vmatprep.subr.mxu0 0.0
        %5782 = vmatpush1.msra.mxu0 0.0
        %5783 = vmatprep.subr.mxu0 0.0
        %5784 = vmatpush1.msra.mxu0 0.0
        %5785 = vmatprep.subr.mxu0 0.0
        %5786 = vmatpush1.msra.mxu0 0.0
        %5787 = vmatprep.subr.mxu0 0.0
        %5788 = vmatpush1.msra.mxu0 0.0
        %5789 = vmatprep.mubr.f32.mxu0 0.0
        %v5790 = vand.u32 %v264, 4294901760
        %v5791 = vsub.f32 %v264, %v5790
        %v5792 = vand.u32 %v5791, 4294901760
        %5793 = vmatmul.mubr.f32.gmra.mrb[0].mxu0 %v5792
        %v5794 = vpop.f32.mrb[0].mxu0
        %v5795 = vadd.f32 %v5695, %v5794
        %v5796 = vpop.f32.mrb[0].mxu0
        %v5797 = vadd.f32 %v5697, %v5796
        %5798 = vmatprep.mubr.f32.mxu0 0.0
        %v5799 = vand.u32 %v267, 4294901760
        %v5800 = vsub.f32 %v267, %v5799
        %v5801 = vand.u32 %v5800, 4294901760
        %5802 = vmatmul.mubr.f32.gmra.mrb[0].mxu0 %v5801
        %v5803 = vpop.f32.mrb[0].mxu0
        %v5804 = vadd.f32 %v5703, %v5803
        %v5805 = vpop.f32.mrb[0].mxu0
        %v5806 = vadd.f32 %v5705, %v5805
        %5807 = vmatprep.mubr.f32.mxu0 0.0
        %v5808 = vand.u32 %v270, 4294901760
        %v5809 = vsub.f32 %v270, %v5808
        %v5810 = vand.u32 %v5809, 4294901760
        %5811 = vmatmul.mubr.f32.gmra.mrb[0].mxu0 %v5810
        %v5812 = vpop.f32.mrb[0].mxu0
        %v5813 = vadd.f32 %v5711, %v5812
        %v5814 = vpop.f32.mrb[0].mxu0
        %v5815 = vadd.f32 %v5713, %v5814
        %5816 = vmatprep.mubr.f32.mxu0 0.0
        %v5817 = vand.u32 %v273, 4294901760
        %v5818 = vsub.f32 %v273, %v5817
        %v5819 = vand.u32 %v5818, 4294901760
        %5820 = vmatmul.mubr.f32.gmra.mrb[0].mxu0 %v5819
        %v5821 = vpop.f32.mrb[0].mxu0
        %v5822 = vadd.f32 %v5719, %v5821
        %v5823 = vpop.f32.mrb[0].mxu0
        %v5824 = vadd.f32 %v5721, %v5823
        %5825 = vdwg.mxu0
        %v5826 = vand.u32 %v5402, 4294901760
        %v5827 = vsub.f32 %v5402, %v5826
        %v5828 = vand.u32 %v5827, 4294901760
        %5829 = vmatprep.subr.mxu0 %v5828
        %v5830 = vand.u32 %v5400, 4294901760
        %v5831 = vsub.f32 %v5400, %v5830
        %v5832 = vand.u32 %v5831, 4294901760
        %5833 = vmatpush1.msra.mxu0 %v5832
        %5834 = vmatprep.subr.mxu0 0.0
        %5835 = vmatpush1.msra.mxu0 0.0
        %5836 = vmatprep.subr.mxu0 0.0
        %5837 = vmatpush1.msra.mxu0 0.0
        %5838 = vmatprep.subr.mxu0 0.0
        %5839 = vmatpush1.msra.mxu0 0.0
        %5840 = vmatprep.subr.mxu0 0.0
        %5841 = vmatpush1.msra.mxu0 0.0
        %5842 = vmatprep.subr.mxu0 0.0
        %5843 = vmatpush1.msra.mxu0 0.0
        %5844 = vmatprep.subr.mxu0 0.0
        %5845 = vmatpush1.msra.mxu0 0.0
        %5846 = vmatprep.subr.mxu0 0.0
        %5847 = vmatpush1.msra.mxu0 0.0
        %5848 = vmatprep.subr.mxu0 0.0
        %5849 = vmatpush1.msra.mxu0 0.0
        %5850 = vmatprep.subr.mxu0 0.0
        %5851 = vmatpush1.msra.mxu0 0.0
        %5852 = vmatprep.subr.mxu0 0.0
        %5853 = vmatpush1.msra.mxu0 0.0
        %5854 = vmatprep.subr.mxu0 0.0
        %5855 = vmatpush1.msra.mxu0 0.0
        %5856 = vmatprep.subr.mxu0 0.0
        %5857 = vmatpush1.msra.mxu0 0.0
        %5858 = vmatprep.subr.mxu0 0.0
        %5859 = vmatpush1.msra.mxu0 0.0
        %5860 = vmatprep.subr.mxu0 0.0
        %5861 = vmatpush1.msra.mxu0 0.0
        %5862 = vmatprep.subr.mxu0 0.0
        %5863 = vmatpush1.msra.mxu0 0.0
        %5864 = vmatprep.subr.mxu0 0.0
        %5865 = vmatpush1.msra.mxu0 0.0
        %5866 = vmatprep.subr.mxu0 0.0
        %5867 = vmatpush1.msra.mxu0 0.0
        %5868 = vmatprep.subr.mxu0 0.0
        %5869 = vmatpush1.msra.mxu0 0.0
        %5870 = vmatprep.subr.mxu0 0.0
        %5871 = vmatpush1.msra.mxu0 0.0
        %5872 = vmatprep.subr.mxu0 0.0
        %5873 = vmatpush1.msra.mxu0 0.0
        %5874 = vmatprep.subr.mxu0 0.0
        %5875 = vmatpush1.msra.mxu0 0.0
        %5876 = vmatprep.subr.mxu0 0.0
        %5877 = vmatpush1.msra.mxu0 0.0
        %5878 = vmatprep.subr.mxu0 0.0
        %5879 = vmatpush1.msra.mxu0 0.0
        %5880 = vmatprep.subr.mxu0 0.0
        %5881 = vmatpush1.msra.mxu0 0.0
        %5882 = vmatprep.subr.mxu0 0.0
        %5883 = vmatpush1.msra.mxu0 0.0
        %5884 = vmatprep.subr.mxu0 0.0
        %5885 = vmatpush1.msra.mxu0 0.0
        %5886 = vmatprep.subr.mxu0 0.0
        %5887 = vmatpush1.msra.mxu0 0.0
        %5888 = vmatprep.subr.mxu0 0.0
        %5889 = vmatpush1.msra.mxu0 0.0
        %5890 = vmatprep.subr.mxu0 0.0
        %5891 = vmatpush1.msra.mxu0 0.0
        %5892 = vmatprep.subr.mxu0 0.0
        %5893 = vmatpush1.msra.mxu0 0.0
        %5894 = vmatprep.subr.mxu0 0.0
        %5895 = vmatpush1.msra.mxu0 0.0
        %5896 = vmatprep.mubr.f32.mxu0 0.0
        %v5897 = vand.u32 %v264, 4294901760
        %5898 = vmatmul.mubr.f32.gmra.mrb[0].mxu0 %v5897
        %v5899 = vpop.f32.mrb[0].mxu0
        %v5900 = vadd.f32 %v5795, %v5899
        %v5901 = vpop.f32.mrb[0].mxu0
        %v5902 = vadd.f32 %v5797, %v5901
        %5903 = vmatprep.mubr.f32.mxu0 0.0
        %v5904 = vand.u32 %v267, 4294901760
        %5905 = vmatmul.mubr.f32.gmra.mrb[0].mxu0 %v5904
        %v5906 = vpop.f32.mrb[0].mxu0
        %v5907 = vadd.f32 %v5804, %v5906
        %v5908 = vpop.f32.mrb[0].mxu0
        %v5909 = vadd.f32 %v5806, %v5908
        %5910 = vmatprep.mubr.f32.mxu0 0.0
        %v5911 = vand.u32 %v270, 4294901760
        %5912 = vmatmul.mubr.f32.gmra.mrb[0].mxu0 %v5911
        %v5913 = vpop.f32.mrb[0].mxu0
        %v5914 = vadd.f32 %v5813, %v5913
        %v5915 = vpop.f32.mrb[0].mxu0
        %v5916 = vadd.f32 %v5815, %v5915
        %5917 = vmatprep.mubr.f32.mxu0 0.0
        %v5918 = vand.u32 %v273, 4294901760
        %5919 = vmatmul.mubr.f32.gmra.mrb[0].mxu0 %v5918
        %v5920 = vpop.f32.mrb[0].mxu0
        %v5921 = vadd.f32 %v5822, %v5920
        %v5922 = vpop.f32.mrb[0].mxu0
        %v5923 = vadd.f32 %v5824, %v5922
        %5924 = vdwg.mxu0
        %v5925 = vand.u32 %v5402, 4294901760
        %5926 = vmatprep.subr.mxu0 %v5925
        %v5927 = vand.u32 %v5400, 4294901760
        %5928 = vmatpush1.msra.mxu0 %v5927
        %5929 = vmatprep.subr.mxu0 0.0
        %5930 = vmatpush1.msra.mxu0 0.0
        %5931 = vmatprep.subr.mxu0 0.0
        %5932 = vmatpush1.msra.mxu0 0.0
        %5933 = vmatprep.subr.mxu0 0.0
        %5934 = vmatpush1.msra.mxu0 0.0
        %5935 = vmatprep.subr.mxu0 0.0
        %5936 = vmatpush1.msra.mxu0 0.0
        %5937 = vmatprep.subr.mxu0 0.0
        %5938 = vmatpush1.msra.mxu0 0.0
        %5939 = vmatprep.subr.mxu0 0.0
        %5940 = vmatpush1.msra.mxu0 0.0
        %5941 = vmatprep.subr.mxu0 0.0
        %5942 = vmatpush1.msra.mxu0 0.0
        %5943 = vmatprep.subr.mxu0 0.0
        %5944 = vmatpush1.msra.mxu0 0.0
        %5945 = vmatprep.subr.mxu0 0.0
        %5946 = vmatpush1.msra.mxu0 0.0
        %5947 = vmatprep.subr.mxu0 0.0
        %5948 = vmatpush1.msra.mxu0 0.0
        %5949 = vmatprep.subr.mxu0 0.0
        %5950 = vmatpush1.msra.mxu0 0.0
        %5951 = vmatprep.subr.mxu0 0.0
        %5952 = vmatpush1.msra.mxu0 0.0
        %5953 = vmatprep.subr.mxu0 0.0
        %5954 = vmatpush1.msra.mxu0 0.0
        %5955 = vmatprep.subr.mxu0 0.0
        %5956 = vmatpush1.msra.mxu0 0.0
        %5957 = vmatprep.subr.mxu0 0.0
        %5958 = vmatpush1.msra.mxu0 0.0
        %5959 = vmatprep.subr.mxu0 0.0
        %5960 = vmatpush1.msra.mxu0 0.0
        %5961 = vmatprep.subr.mxu0 0.0
        %5962 = vmatpush1.msra.mxu0 0.0
        %5963 = vmatprep.subr.mxu0 0.0
        %5964 = vmatpush1.msra.mxu0 0.0
        %5965 = vmatprep.subr.mxu0 0.0
        %5966 = vmatpush1.msra.mxu0 0.0
        %5967 = vmatprep.subr.mxu0 0.0
        %5968 = vmatpush1.msra.mxu0 0.0
        %5969 = vmatprep.subr.mxu0 0.0
        %5970 = vmatpush1.msra.mxu0 0.0
        %5971 = vmatprep.subr.mxu0 0.0
        %5972 = vmatpush1.msra.mxu0 0.0
        %5973 = vmatprep.subr.mxu0 0.0
        %5974 = vmatpush1.msra.mxu0 0.0
        %5975 = vmatprep.subr.mxu0 0.0
        %5976 = vmatpush1.msra.mxu0 0.0
        %5977 = vmatprep.subr.mxu0 0.0
        %5978 = vmatpush1.msra.mxu0 0.0
        %5979 = vmatprep.subr.mxu0 0.0
        %5980 = vmatpush1.msra.mxu0 0.0
        %5981 = vmatprep.subr.mxu0 0.0
        %5982 = vmatpush1.msra.mxu0 0.0
        %5983 = vmatprep.subr.mxu0 0.0
        %5984 = vmatpush1.msra.mxu0 0.0
        %5985 = vmatprep.subr.mxu0 0.0
        %5986 = vmatpush1.msra.mxu0 0.0
        %5987 = vmatprep.subr.mxu0 0.0
        %5988 = vmatpush1.msra.mxu0 0.0
        %5989 = vmatprep.subr.mxu0 0.0
        %5990 = vmatpush1.msra.mxu0 0.0
        %5991 = vmatprep.mubr.f32.mxu0 0.0
        %v5992 = vand.u32 %v264, 4294901760
        %5993 = vmatmul.mubr.f32.gmra.mrb[0].mxu0 %v5992
        %v5994 = vpop.f32.mrb[0].mxu0
        %v5995 = vadd.f32 %v5900, %v5994
        %v5996 = vpop.f32.mrb[0].mxu0
        %v5997 = vadd.f32 %v5902, %v5996
        %5998 = vmatprep.mubr.f32.mxu0 0.0
        %v5999 = vand.u32 %v267, 4294901760
        %6000 = vmatmul.mubr.f32.gmra.mrb[0].mxu0 %v5999
        %v6001 = vpop.f32.mrb[0].mxu0
        %v6002 = vadd.f32 %v5907, %v6001
        %v6003 = vpop.f32.mrb[0].mxu0
        %v6004 = vadd.f32 %v5909, %v6003
        %6005 = vmatprep.mubr.f32.mxu0 0.0
        %v6006 = vand.u32 %v270, 4294901760
        %6007 = vmatmul.mubr.f32.gmra.mrb[0].mxu0 %v6006
        %v6008 = vpop.f32.mrb[0].mxu0
        %v6009 = vadd.f32 %v5914, %v6008
        %v6010 = vpop.f32.mrb[0].mxu0
        %v6011 = vadd.f32 %v5916, %v6010
        %6012 = vmatprep.mubr.f32.mxu0 0.0
        %v6013 = vand.u32 %v273, 4294901760
        %6014 = vmatmul.mubr.f32.gmra.mrb[0].mxu0 %v6013
        %v6015 = vpop.f32.mrb[0].mxu0
        %v6016 = vadd.f32 %v5921, %v6015
        %v6017 = vpop.f32.mrb[0].mxu0
        %v6018 = vadd.f32 %v5923, %v6017
        %6019 = vdwg.mxu0
        %v6020 = vand.u32 %v5406, 4294901760
        %6021 = vmatprep.subr.mxu0 %v6020
        %v6022 = vand.u32 %v5404, 4294901760
        %6023 = vmatpush1.msra.mxu0 %v6022
        %6024 = vmatprep.subr.mxu0 0.0
        %6025 = vmatpush1.msra.mxu0 0.0
        %6026 = vmatprep.subr.mxu0 0.0
        %6027 = vmatpush1.msra.mxu0 0.0
        %6028 = vmatprep.subr.mxu0 0.0
        %6029 = vmatpush1.msra.mxu0 0.0
        %6030 = vmatprep.subr.mxu0 0.0
        %6031 = vmatpush1.msra.mxu0 0.0
        %6032 = vmatprep.subr.mxu0 0.0
        %6033 = vmatpush1.msra.mxu0 0.0
        %6034 = vmatprep.subr.mxu0 0.0
        %6035 = vmatpush1.msra.mxu0 0.0
        %6036 = vmatprep.subr.mxu0 0.0
        %6037 = vmatpush1.msra.mxu0 0.0
        %6038 = vmatprep.subr.mxu0 0.0
        %6039 = vmatpush1.msra.mxu0 0.0
        %6040 = vmatprep.subr.mxu0 0.0
        %6041 = vmatpush1.msra.mxu0 0.0
        %6042 = vmatprep.subr.mxu0 0.0
        %6043 = vmatpush1.msra.mxu0 0.0
        %6044 = vmatprep.subr.mxu0 0.0
        %6045 = vmatpush1.msra.mxu0 0.0
        %6046 = vmatprep.subr.mxu0 0.0
        %6047 = vmatpush1.msra.mxu0 0.0
        %6048 = vmatprep.subr.mxu0 0.0
        %6049 = vmatpush1.msra.mxu0 0.0
        %6050 = vmatprep.subr.mxu0 0.0
        %6051 = vmatpush1.msra.mxu0 0.0
        %6052 = vmatprep.subr.mxu0 0.0
        %6053 = vmatpush1.msra.mxu0 0.0
        %6054 = vmatprep.subr.mxu0 0.0
        %6055 = vmatpush1.msra.mxu0 0.0
        %6056 = vmatprep.subr.mxu0 0.0
        %6057 = vmatpush1.msra.mxu0 0.0
        %6058 = vmatprep.subr.mxu0 0.0
        %6059 = vmatpush1.msra.mxu0 0.0
        %6060 = vmatprep.subr.mxu0 0.0
        %6061 = vmatpush1.msra.mxu0 0.0
        %6062 = vmatprep.subr.mxu0 0.0
        %6063 = vmatpush1.msra.mxu0 0.0
        %6064 = vmatprep.subr.mxu0 0.0
        %6065 = vmatpush1.msra.mxu0 0.0
        %6066 = vmatprep.subr.mxu0 0.0
        %6067 = vmatpush1.msra.mxu0 0.0
        %6068 = vmatprep.subr.mxu0 0.0
        %6069 = vmatpush1.msra.mxu0 0.0
        %6070 = vmatprep.subr.mxu0 0.0
        %6071 = vmatpush1.msra.mxu0 0.0
        %6072 = vmatprep.subr.mxu0 0.0
        %6073 = vmatpush1.msra.mxu0 0.0
        %6074 = vmatprep.subr.mxu0 0.0
        %6075 = vmatpush1.msra.mxu0 0.0
        %6076 = vmatprep.subr.mxu0 0.0
        %6077 = vmatpush1.msra.mxu0 0.0
        %6078 = vmatprep.subr.mxu0 0.0
        %6079 = vmatpush1.msra.mxu0 0.0
        %6080 = vmatprep.subr.mxu0 0.0
        %6081 = vmatpush1.msra.mxu0 0.0
        %6082 = vmatprep.subr.mxu0 0.0
        %6083 = vmatpush1.msra.mxu0 0.0
        %6084 = vmatprep.subr.mxu0 0.0
        %6085 = vmatpush1.msra.mxu0 0.0
        %6086 = vmatprep.mubr.f32.mxu0 0.0
        %v6087 = vand.u32 %v264, 4294901760
        %v6088 = vsub.f32 %v264, %v6087
        %v6089 = vand.u32 %v6088, 4294901760
        %v6090 = vsub.f32 %v6088, %v6089
        %v6091 = vand.u32 %v6090, 4294901760
        %6092 = vmatmul.mubr.f32.gmra.mrb[0].mxu0 %v6091
        %v6093 = vpop.f32.mrb[0].mxu0
        %v6094 = vadd.f32 %v241, %v6093
        %v6095 = vpop.f32.mrb[0].mxu0
        %v6096 = vadd.f32 %v241, %v6095
        %6097 = vmatprep.mubr.f32.mxu0 0.0
        %v6098 = vand.u32 %v267, 4294901760
        %v6099 = vsub.f32 %v267, %v6098
        %v6100 = vand.u32 %v6099, 4294901760
        %v6101 = vsub.f32 %v6099, %v6100
        %v6102 = vand.u32 %v6101, 4294901760
        %6103 = vmatmul.mubr.f32.gmra.mrb[0].mxu0 %v6102
        %v6104 = vpop.f32.mrb[0].mxu0
        %v6105 = vadd.f32 %v246, %v6104
        %v6106 = vpop.f32.mrb[0].mxu0
        %v6107 = vadd.f32 %v246, %v6106
        %6108 = vmatprep.mubr.f32.mxu0 0.0
        %v6109 = vand.u32 %v270, 4294901760
        %v6110 = vsub.f32 %v270, %v6109
        %v6111 = vand.u32 %v6110, 4294901760
        %v6112 = vsub.f32 %v6110, %v6111
        %v6113 = vand.u32 %v6112, 4294901760
        %6114 = vmatmul.mubr.f32.gmra.mrb[0].mxu0 %v6113
        %v6115 = vpop.f32.mrb[0].mxu0
        %v6116 = vadd.f32 %v251, %v6115
        %v6117 = vpop.f32.mrb[0].mxu0
        %v6118 = vadd.f32 %v251, %v6117
        %6119 = vmatprep.mubr.f32.mxu0 0.0
        %v6120 = vand.u32 %v273, 4294901760
        %v6121 = vsub.f32 %v273, %v6120
        %v6122 = vand.u32 %v6121, 4294901760
        %v6123 = vsub.f32 %v6121, %v6122
        %v6124 = vand.u32 %v6123, 4294901760
        %6125 = vmatmul.mubr.f32.gmra.mrb[0].mxu0 %v6124
        %v6126 = vpop.f32.mrb[0].mxu0
        %v6127 = vadd.f32 %v256, %v6126
        %v6128 = vpop.f32.mrb[0].mxu0
        %v6129 = vadd.f32 %v256, %v6128
        %6130 = vdwg.mxu0
        %v6131 = vand.u32 %v5406, 4294901760
        %v6132 = vsub.f32 %v5406, %v6131
        %v6133 = vand.u32 %v6132, 4294901760
        %v6134 = vsub.f32 %v6132, %v6133
        %v6135 = vand.u32 %v6134, 4294901760
        %6136 = vmatprep.subr.mxu0 %v6135
        %v6137 = vand.u32 %v5404, 4294901760
        %v6138 = vsub.f32 %v5404, %v6137
        %v6139 = vand.u32 %v6138, 4294901760
        %v6140 = vsub.f32 %v6138, %v6139
        %v6141 = vand.u32 %v6140, 4294901760
        %6142 = vmatpush1.msra.mxu0 %v6141
        %6143 = vmatprep.subr.mxu0 0.0
        %6144 = vmatpush1.msra.mxu0 0.0
        %6145 = vmatprep.subr.mxu0 0.0
        %6146 = vmatpush1.msra.mxu0 0.0
        %6147 = vmatprep.subr.mxu0 0.0
        %6148 = vmatpush1.msra.mxu0 0.0
        %6149 = vmatprep.subr.mxu0 0.0
        %6150 = vmatpush1.msra.mxu0 0.0
        %6151 = vmatprep.subr.mxu0 0.0
        %6152 = vmatpush1.msra.mxu0 0.0
        %6153 = vmatprep.subr.mxu0 0.0
        %6154 = vmatpush1.msra.mxu0 0.0
        %6155 = vmatprep.subr.mxu0 0.0
        %6156 = vmatpush1.msra.mxu0 0.0
        %6157 = vmatprep.subr.mxu0 0.0
        %6158 = vmatpush1.msra.mxu0 0.0
        %6159 = vmatprep.subr.mxu0 0.0
        %6160 = vmatpush1.msra.mxu0 0.0
        %6161 = vmatprep.subr.mxu0 0.0
        %6162 = vmatpush1.msra.mxu0 0.0
        %6163 = vmatprep.subr.mxu0 0.0
        %6164 = vmatpush1.msra.mxu0 0.0
        %6165 = vmatprep.subr.mxu0 0.0
        %6166 = vmatpush1.msra.mxu0 0.0
        %6167 = vmatprep.subr.mxu0 0.0
        %6168 = vmatpush1.msra.mxu0 0.0
        %6169 = vmatprep.subr.mxu0 0.0
        %6170 = vmatpush1.msra.mxu0 0.0
        %6171 = vmatprep.subr.mxu0 0.0
        %6172 = vmatpush1.msra.mxu0 0.0
        %6173 = vmatprep.subr.mxu0 0.0
        %6174 = vmatpush1.msra.mxu0 0.0
        %6175 = vmatprep.subr.mxu0 0.0
        %6176 = vmatpush1.msra.mxu0 0.0
        %6177 = vmatprep.subr.mxu0 0.0
        %6178 = vmatpush1.msra.mxu0 0.0
        %6179 = vmatprep.subr.mxu0 0.0
        %6180 = vmatpush1.msra.mxu0 0.0
        %6181 = vmatprep.subr.mxu0 0.0
        %6182 = vmatpush1.msra.mxu0 0.0
        %6183 = vmatprep.subr.mxu0 0.0
        %6184 = vmatpush1.msra.mxu0 0.0
        %6185 = vmatprep.subr.mxu0 0.0
        %6186 = vmatpush1.msra.mxu0 0.0
        %6187 = vmatprep.subr.mxu0 0.0
        %6188 = vmatpush1.msra.mxu0 0.0
        %6189 = vmatprep.subr.mxu0 0.0
        %6190 = vmatpush1.msra.mxu0 0.0
        %6191 = vmatprep.subr.mxu0 0.0
        %6192 = vmatpush1.msra.mxu0 0.0
        %6193 = vmatprep.subr.mxu0 0.0
        %6194 = vmatpush1.msra.mxu0 0.0
        %6195 = vmatprep.subr.mxu0 0.0
        %6196 = vmatpush1.msra.mxu0 0.0
        %6197 = vmatprep.subr.mxu0 0.0
        %6198 = vmatpush1.msra.mxu0 0.0
        %6199 = vmatprep.subr.mxu0 0.0
        %6200 = vmatpush1.msra.mxu0 0.0
        %6201 = vmatprep.subr.mxu0 0.0
        %6202 = vmatpush1.msra.mxu0 0.0
        %6203 = vmatprep.subr.mxu0 0.0
        %6204 = vmatpush1.msra.mxu0 0.0
        %6205 = vmatprep.mubr.f32.mxu0 0.0
        %v6206 = vand.u32 %v264, 4294901760
        %6207 = vmatmul.mubr.f32.gmra.mrb[0].mxu0 %v6206
        %v6208 = vpop.f32.mrb[0].mxu0
        %v6209 = vadd.f32 %v6094, %v6208
        %v6210 = vpop.f32.mrb[0].mxu0
        %v6211 = vadd.f32 %v6096, %v6210
        %6212 = vmatprep.mubr.f32.mxu0 0.0
        %v6213 = vand.u32 %v267, 4294901760
        %6214 = vmatmul.mubr.f32.gmra.mrb[0].mxu0 %v6213
        %v6215 = vpop.f32.mrb[0].mxu0
        %v6216 = vadd.f32 %v6105, %v6215
        %v6217 = vpop.f32.mrb[0].mxu0
        %v6218 = vadd.f32 %v6107, %v6217
        %6219 = vmatprep.mubr.f32.mxu0 0.0
        %v6220 = vand.u32 %v270, 4294901760
        %6221 = vmatmul.mubr.f32.gmra.mrb[0].mxu0 %v6220
        %v6222 = vpop.f32.mrb[0].mxu0
        %v6223 = vadd.f32 %v6116, %v6222
        %v6224 = vpop.f32.mrb[0].mxu0
        %v6225 = vadd.f32 %v6118, %v6224
        %6226 = vmatprep.mubr.f32.mxu0 0.0
        %v6227 = vand.u32 %v273, 4294901760
        %6228 = vmatmul.mubr.f32.gmra.mrb[0].mxu0 %v6227
        %v6229 = vpop.f32.mrb[0].mxu0
        %v6230 = vadd.f32 %v6127, %v6229
        %v6231 = vpop.f32.mrb[0].mxu0
        %v6232 = vadd.f32 %v6129, %v6231
        %6233 = vdwg.mxu0
        %v6234 = vand.u32 %v5406, 4294901760
        %v6235 = vsub.f32 %v5406, %v6234
        %6236 = vmatprep.subr.mxu0 %v6235
        %v6237 = vand.u32 %v5404, 4294901760
        %v6238 = vsub.f32 %v5404, %v6237
        %6239 = vmatpush1.msra.mxu0 %v6238
        %6240 = vmatprep.subr.mxu0 0.0
        %6241 = vmatpush1.msra.mxu0 0.0
        %6242 = vmatprep.subr.mxu0 0.0
        %6243 = vmatpush1.msra.mxu0 0.0
        %6244 = vmatprep.subr.mxu0 0.0
        %6245 = vmatpush1.msra.mxu0 0.0
        %6246 = vmatprep.subr.mxu0 0.0
        %6247 = vmatpush1.msra.mxu0 0.0
        %6248 = vmatprep.subr.mxu0 0.0
        %6249 = vmatpush1.msra.mxu0 0.0
        %6250 = vmatprep.subr.mxu0 0.0
        %6251 = vmatpush1.msra.mxu0 0.0
        %6252 = vmatprep.subr.mxu0 0.0
        %6253 = vmatpush1.msra.mxu0 0.0
        %6254 = vmatprep.subr.mxu0 0.0
        %6255 = vmatpush1.msra.mxu0 0.0
        %6256 = vmatprep.subr.mxu0 0.0
        %6257 = vmatpush1.msra.mxu0 0.0
        %6258 = vmatprep.subr.mxu0 0.0
        %6259 = vmatpush1.msra.mxu0 0.0
        %6260 = vmatprep.subr.mxu0 0.0
        %6261 = vmatpush1.msra.mxu0 0.0
        %6262 = vmatprep.subr.mxu0 0.0
        %6263 = vmatpush1.msra.mxu0 0.0
        %6264 = vmatprep.subr.mxu0 0.0
        %6265 = vmatpush1.msra.mxu0 0.0
        %6266 = vmatprep.subr.mxu0 0.0
        %6267 = vmatpush1.msra.mxu0 0.0
        %6268 = vmatprep.subr.mxu0 0.0
        %6269 = vmatpush1.msra.mxu0 0.0
        %6270 = vmatprep.subr.mxu0 0.0
        %6271 = vmatpush1.msra.mxu0 0.0
        %6272 = vmatprep.subr.mxu0 0.0
        %6273 = vmatpush1.msra.mxu0 0.0
        %6274 = vmatprep.subr.mxu0 0.0
        %6275 = vmatpush1.msra.mxu0 0.0
        %6276 = vmatprep.subr.mxu0 0.0
        %6277 = vmatpush1.msra.mxu0 0.0
        %6278 = vmatprep.subr.mxu0 0.0
        %6279 = vmatpush1.msra.mxu0 0.0
        %6280 = vmatprep.subr.mxu0 0.0
        %6281 = vmatpush1.msra.mxu0 0.0
        %6282 = vmatprep.subr.mxu0 0.0
        %6283 = vmatpush1.msra.mxu0 0.0
        %6284 = vmatprep.subr.mxu0 0.0
        %6285 = vmatpush1.msra.mxu0 0.0
        %6286 = vmatprep.subr.mxu0 0.0
        %6287 = vmatpush1.msra.mxu0 0.0
        %6288 = vmatprep.subr.mxu0 0.0
        %6289 = vmatpush1.msra.mxu0 0.0
        %6290 = vmatprep.subr.mxu0 0.0
        %6291 = vmatpush1.msra.mxu0 0.0
        %6292 = vmatprep.subr.mxu0 0.0
        %6293 = vmatpush1.msra.mxu0 0.0
        %6294 = vmatprep.subr.mxu0 0.0
        %6295 = vmatpush1.msra.mxu0 0.0
        %6296 = vmatprep.subr.mxu0 0.0
        %6297 = vmatpush1.msra.mxu0 0.0
        %6298 = vmatprep.subr.mxu0 0.0
        %6299 = vmatpush1.msra.mxu0 0.0
        %6300 = vmatprep.subr.mxu0 0.0
        %6301 = vmatpush1.msra.mxu0 0.0
        %6302 = vmatprep.mubr.f32.mxu0 0.0
        %v6303 = vand.u32 %v264, 4294901760
        %v6304 = vsub.f32 %v264, %v6303
        %6305 = vmatmul.mubr.f32.gmra.mrb[0].mxu0 %v6304
        %v6306 = vpop.f32.mrb[0].mxu0
        %v6307 = vadd.f32 %v6209, %v6306
        %v6308 = vpop.f32.mrb[0].mxu0
        %v6309 = vadd.f32 %v6211, %v6308
        %6310 = vmatprep.mubr.f32.mxu0 0.0
        %v6311 = vand.u32 %v267, 4294901760
        %v6312 = vsub.f32 %v267, %v6311
        %6313 = vmatmul.mubr.f32.gmra.mrb[0].mxu0 %v6312
        %v6314 = vpop.f32.mrb[0].mxu0
        %v6315 = vadd.f32 %v6216, %v6314
        %v6316 = vpop.f32.mrb[0].mxu0
        %v6317 = vadd.f32 %v6218, %v6316
        %6318 = vmatprep.mubr.f32.mxu0 0.0
        %v6319 = vand.u32 %v270, 4294901760
        %v6320 = vsub.f32 %v270, %v6319
        %6321 = vmatmul.mubr.f32.gmra.mrb[0].mxu0 %v6320
        %v6322 = vpop.f32.mrb[0].mxu0
        %v6323 = vadd.f32 %v6223, %v6322
        %v6324 = vpop.f32.mrb[0].mxu0
        %v6325 = vadd.f32 %v6225, %v6324
        %6326 = vmatprep.mubr.f32.mxu0 0.0
        %v6327 = vand.u32 %v273, 4294901760
        %v6328 = vsub.f32 %v273, %v6327
        %6329 = vmatmul.mubr.f32.gmra.mrb[0].mxu0 %v6328
        %v6330 = vpop.f32.mrb[0].mxu0
        %v6331 = vadd.f32 %v6230, %v6330
        %v6332 = vpop.f32.mrb[0].mxu0
        %v6333 = vadd.f32 %v6232, %v6332
        %6334 = vdwg.mxu0
        %v6335 = vand.u32 %v5406, 4294901760
        %6336 = vmatprep.subr.mxu0 %v6335
        %v6337 = vand.u32 %v5404, 4294901760
        %6338 = vmatpush1.msra.mxu0 %v6337
        %6339 = vmatprep.subr.mxu0 0.0
        %6340 = vmatpush1.msra.mxu0 0.0
        %6341 = vmatprep.subr.mxu0 0.0
        %6342 = vmatpush1.msra.mxu0 0.0
        %6343 = vmatprep.subr.mxu0 0.0
        %6344 = vmatpush1.msra.mxu0 0.0
        %6345 = vmatprep.subr.mxu0 0.0
        %6346 = vmatpush1.msra.mxu0 0.0
        %6347 = vmatprep.subr.mxu0 0.0
        %6348 = vmatpush1.msra.mxu0 0.0
        %6349 = vmatprep.subr.mxu0 0.0
        %6350 = vmatpush1.msra.mxu0 0.0
        %6351 = vmatprep.subr.mxu0 0.0
        %6352 = vmatpush1.msra.mxu0 0.0
        %6353 = vmatprep.subr.mxu0 0.0
        %6354 = vmatpush1.msra.mxu0 0.0
        %6355 = vmatprep.subr.mxu0 0.0
        %6356 = vmatpush1.msra.mxu0 0.0
        %6357 = vmatprep.subr.mxu0 0.0
        %6358 = vmatpush1.msra.mxu0 0.0
        %6359 = vmatprep.subr.mxu0 0.0
        %6360 = vmatpush1.msra.mxu0 0.0
        %6361 = vmatprep.subr.mxu0 0.0
        %6362 = vmatpush1.msra.mxu0 0.0
        %6363 = vmatprep.subr.mxu0 0.0
        %6364 = vmatpush1.msra.mxu0 0.0
        %6365 = vmatprep.subr.mxu0 0.0
        %6366 = vmatpush1.msra.mxu0 0.0
        %6367 = vmatprep.subr.mxu0 0.0
        %6368 = vmatpush1.msra.mxu0 0.0
        %6369 = vmatprep.subr.mxu0 0.0
        %6370 = vmatpush1.msra.mxu0 0.0
        %6371 = vmatprep.subr.mxu0 0.0
        %6372 = vmatpush1.msra.mxu0 0.0
        %6373 = vmatprep.subr.mxu0 0.0
        %6374 = vmatpush1.msra.mxu0 0.0
        %6375 = vmatprep.subr.mxu0 0.0
        %6376 = vmatpush1.msra.mxu0 0.0
        %6377 = vmatprep.subr.mxu0 0.0
        %6378 = vmatpush1.msra.mxu0 0.0
        %6379 = vmatprep.subr.mxu0 0.0
        %6380 = vmatpush1.msra.mxu0 0.0
        %6381 = vmatprep.subr.mxu0 0.0
        %6382 = vmatpush1.msra.mxu0 0.0
        %6383 = vmatprep.subr.mxu0 0.0
        %6384 = vmatpush1.msra.mxu0 0.0
        %6385 = vmatprep.subr.mxu0 0.0
        %6386 = vmatpush1.msra.mxu0 0.0
        %6387 = vmatprep.subr.mxu0 0.0
        %6388 = vmatpush1.msra.mxu0 0.0
        %6389 = vmatprep.subr.mxu0 0.0
        %6390 = vmatpush1.msra.mxu0 0.0
        %6391 = vmatprep.subr.mxu0 0.0
        %6392 = vmatpush1.msra.mxu0 0.0
        %6393 = vmatprep.subr.mxu0 0.0
        %6394 = vmatpush1.msra.mxu0 0.0
        %6395 = vmatprep.subr.mxu0 0.0
        %6396 = vmatpush1.msra.mxu0 0.0
        %6397 = vmatprep.subr.mxu0 0.0
        %6398 = vmatpush1.msra.mxu0 0.0
        %6399 = vmatprep.subr.mxu0 0.0
        %6400 = vmatpush1.msra.mxu0 0.0
        %6401 = vmatprep.mubr.f32.mxu0 0.0
        %v6402 = vand.u32 %v264, 4294901760
        %v6403 = vsub.f32 %v264, %v6402
        %v6404 = vand.u32 %v6403, 4294901760
        %6405 = vmatmul.mubr.f32.gmra.mrb[0].mxu0 %v6404
        %v6406 = vpop.f32.mrb[0].mxu0
        %v6407 = vadd.f32 %v6307, %v6406
        %v6408 = vpop.f32.mrb[0].mxu0
        %v6409 = vadd.f32 %v6309, %v6408
        %6410 = vmatprep.mubr.f32.mxu0 0.0
        %v6411 = vand.u32 %v267, 4294901760
        %v6412 = vsub.f32 %v267, %v6411
        %v6413 = vand.u32 %v6412, 4294901760
        %6414 = vmatmul.mubr.f32.gmra.mrb[0].mxu0 %v6413
        %v6415 = vpop.f32.mrb[0].mxu0
        %v6416 = vadd.f32 %v6315, %v6415
        %v6417 = vpop.f32.mrb[0].mxu0
        %v6418 = vadd.f32 %v6317, %v6417
        %6419 = vmatprep.mubr.f32.mxu0 0.0
        %v6420 = vand.u32 %v270, 4294901760
        %v6421 = vsub.f32 %v270, %v6420
        %v6422 = vand.u32 %v6421, 4294901760
        %6423 = vmatmul.mubr.f32.gmra.mrb[0].mxu0 %v6422
        %v6424 = vpop.f32.mrb[0].mxu0
        %v6425 = vadd.f32 %v6323, %v6424
        %v6426 = vpop.f32.mrb[0].mxu0
        %v6427 = vadd.f32 %v6325, %v6426
        %6428 = vmatprep.mubr.f32.mxu0 0.0
        %v6429 = vand.u32 %v273, 4294901760
        %v6430 = vsub.f32 %v273, %v6429
        %v6431 = vand.u32 %v6430, 4294901760
        %6432 = vmatmul.mubr.f32.gmra.mrb[0].mxu0 %v6431
        %v6433 = vpop.f32.mrb[0].mxu0
        %v6434 = vadd.f32 %v6331, %v6433
        %v6435 = vpop.f32.mrb[0].mxu0
        %v6436 = vadd.f32 %v6333, %v6435
        %6437 = vdwg.mxu0
        %v6438 = vand.u32 %v5406, 4294901760
        %v6439 = vsub.f32 %v5406, %v6438
        %v6440 = vand.u32 %v6439, 4294901760
        %6441 = vmatprep.subr.mxu0 %v6440
        %v6442 = vand.u32 %v5404, 4294901760
        %v6443 = vsub.f32 %v5404, %v6442
        %v6444 = vand.u32 %v6443, 4294901760
        %6445 = vmatpush1.msra.mxu0 %v6444
        %6446 = vmatprep.subr.mxu0 0.0
        %6447 = vmatpush1.msra.mxu0 0.0
        %6448 = vmatprep.subr.mxu0 0.0
        %6449 = vmatpush1.msra.mxu0 0.0
        %6450 = vmatprep.subr.mxu0 0.0
        %6451 = vmatpush1.msra.mxu0 0.0
        %6452 = vmatprep.subr.mxu0 0.0
        %6453 = vmatpush1.msra.mxu0 0.0
        %6454 = vmatprep.subr.mxu0 0.0
        %6455 = vmatpush1.msra.mxu0 0.0
        %6456 = vmatprep.subr.mxu0 0.0
        %6457 = vmatpush1.msra.mxu0 0.0
        %6458 = vmatprep.subr.mxu0 0.0
        %6459 = vmatpush1.msra.mxu0 0.0
        %6460 = vmatprep.subr.mxu0 0.0
        %6461 = vmatpush1.msra.mxu0 0.0
        %6462 = vmatprep.subr.mxu0 0.0
        %6463 = vmatpush1.msra.mxu0 0.0
        %6464 = vmatprep.subr.mxu0 0.0
        %6465 = vmatpush1.msra.mxu0 0.0
        %6466 = vmatprep.subr.mxu0 0.0
        %6467 = vmatpush1.msra.mxu0 0.0
        %6468 = vmatprep.subr.mxu0 0.0
        %6469 = vmatpush1.msra.mxu0 0.0
        %6470 = vmatprep.subr.mxu0 0.0
        %6471 = vmatpush1.msra.mxu0 0.0
        %6472 = vmatprep.subr.mxu0 0.0
        %6473 = vmatpush1.msra.mxu0 0.0
        %6474 = vmatprep.subr.mxu0 0.0
        %6475 = vmatpush1.msra.mxu0 0.0
        %6476 = vmatprep.subr.mxu0 0.0
        %6477 = vmatpush1.msra.mxu0 0.0
        %6478 = vmatprep.subr.mxu0 0.0
        %6479 = vmatpush1.msra.mxu0 0.0
        %6480 = vmatprep.subr.mxu0 0.0
        %6481 = vmatpush1.msra.mxu0 0.0
        %6482 = vmatprep.subr.mxu0 0.0
        %6483 = vmatpush1.msra.mxu0 0.0
        %6484 = vmatprep.subr.mxu0 0.0
        %6485 = vmatpush1.msra.mxu0 0.0
        %6486 = vmatprep.subr.mxu0 0.0
        %6487 = vmatpush1.msra.mxu0 0.0
        %6488 = vmatprep.subr.mxu0 0.0
        %6489 = vmatpush1.msra.mxu0 0.0
        %6490 = vmatprep.subr.mxu0 0.0
        %6491 = vmatpush1.msra.mxu0 0.0
        %6492 = vmatprep.subr.mxu0 0.0
        %6493 = vmatpush1.msra.mxu0 0.0
        %6494 = vmatprep.subr.mxu0 0.0
        %6495 = vmatpush1.msra.mxu0 0.0
        %6496 = vmatprep.subr.mxu0 0.0
        %6497 = vmatpush1.msra.mxu0 0.0
        %6498 = vmatprep.subr.mxu0 0.0
        %6499 = vmatpush1.msra.mxu0 0.0
        %6500 = vmatprep.subr.mxu0 0.0
        %6501 = vmatpush1.msra.mxu0 0.0
        %6502 = vmatprep.subr.mxu0 0.0
        %6503 = vmatpush1.msra.mxu0 0.0
        %6504 = vmatprep.subr.mxu0 0.0
        %6505 = vmatpush1.msra.mxu0 0.0
        %6506 = vmatprep.subr.mxu0 0.0
        %6507 = vmatpush1.msra.mxu0 0.0
        %6508 = vmatprep.mubr.f32.mxu0 0.0
        %v6509 = vand.u32 %v264, 4294901760
        %6510 = vmatmul.mubr.f32.gmra.mrb[0].mxu0 %v6509
        %v6511 = vpop.f32.mrb[0].mxu0
        %v6512 = vadd.f32 %v6407, %v6511
        %v6513 = vpop.f32.mrb[0].mxu0
        %v6514 = vadd.f32 %v6409, %v6513
        %6515 = vmatprep.mubr.f32.mxu0 0.0
        %v6516 = vand.u32 %v267, 4294901760
        %6517 = vmatmul.mubr.f32.gmra.mrb[0].mxu0 %v6516
        %v6518 = vpop.f32.mrb[0].mxu0
        %v6519 = vadd.f32 %v6416, %v6518
        %v6520 = vpop.f32.mrb[0].mxu0
        %v6521 = vadd.f32 %v6418, %v6520
        %6522 = vmatprep.mubr.f32.mxu0 0.0
        %v6523 = vand.u32 %v270, 4294901760
        %6524 = vmatmul.mubr.f32.gmra.mrb[0].mxu0 %v6523
        %v6525 = vpop.f32.mrb[0].mxu0
        %v6526 = vadd.f32 %v6425, %v6525
        %v6527 = vpop.f32.mrb[0].mxu0
        %v6528 = vadd.f32 %v6427, %v6527
        %6529 = vmatprep.mubr.f32.mxu0 0.0
        %v6530 = vand.u32 %v273, 4294901760
        %6531 = vmatmul.mubr.f32.gmra.mrb[0].mxu0 %v6530
        %v6532 = vpop.f32.mrb[0].mxu0
        %v6533 = vadd.f32 %v6434, %v6532
        %v6534 = vpop.f32.mrb[0].mxu0
        %v6535 = vadd.f32 %v6436, %v6534
        %6536 = vdwg.mxu0
        %v6537 = vand.u32 %v5406, 4294901760
        %6538 = vmatprep.subr.mxu0 %v6537
        %v6539 = vand.u32 %v5404, 4294901760
        %6540 = vmatpush1.msra.mxu0 %v6539
        %6541 = vmatprep.subr.mxu0 0.0
        %6542 = vmatpush1.msra.mxu0 0.0
        %6543 = vmatprep.subr.mxu0 0.0
        %6544 = vmatpush1.msra.mxu0 0.0
        %6545 = vmatprep.subr.mxu0 0.0
        %6546 = vmatpush1.msra.mxu0 0.0
        %6547 = vmatprep.subr.mxu0 0.0
        %6548 = vmatpush1.msra.mxu0 0.0
        %6549 = vmatprep.subr.mxu0 0.0
        %6550 = vmatpush1.msra.mxu0 0.0
        %6551 = vmatprep.subr.mxu0 0.0
        %6552 = vmatpush1.msra.mxu0 0.0
        %6553 = vmatprep.subr.mxu0 0.0
        %6554 = vmatpush1.msra.mxu0 0.0
        %6555 = vmatprep.subr.mxu0 0.0
        %6556 = vmatpush1.msra.mxu0 0.0
        %6557 = vmatprep.subr.mxu0 0.0
        %6558 = vmatpush1.msra.mxu0 0.0
        %6559 = vmatprep.subr.mxu0 0.0
        %6560 = vmatpush1.msra.mxu0 0.0
        %6561 = vmatprep.subr.mxu0 0.0
        %6562 = vmatpush1.msra.mxu0 0.0
        %6563 = vmatprep.subr.mxu0 0.0
        %6564 = vmatpush1.msra.mxu0 0.0
        %6565 = vmatprep.subr.mxu0 0.0
        %6566 = vmatpush1.msra.mxu0 0.0
        %6567 = vmatprep.subr.mxu0 0.0
        %6568 = vmatpush1.msra.mxu0 0.0
        %6569 = vmatprep.subr.mxu0 0.0
        %6570 = vmatpush1.msra.mxu0 0.0
        %6571 = vmatprep.subr.mxu0 0.0
        %6572 = vmatpush1.msra.mxu0 0.0
        %6573 = vmatprep.subr.mxu0 0.0
        %6574 = vmatpush1.msra.mxu0 0.0
        %6575 = vmatprep.subr.mxu0 0.0
        %6576 = vmatpush1.msra.mxu0 0.0
        %6577 = vmatprep.subr.mxu0 0.0
        %6578 = vmatpush1.msra.mxu0 0.0
        %6579 = vmatprep.subr.mxu0 0.0
        %6580 = vmatpush1.msra.mxu0 0.0
        %6581 = vmatprep.subr.mxu0 0.0
        %6582 = vmatpush1.msra.mxu0 0.0
        %6583 = vmatprep.subr.mxu0 0.0
        %6584 = vmatpush1.msra.mxu0 0.0
        %6585 = vmatprep.subr.mxu0 0.0
        %6586 = vmatpush1.msra.mxu0 0.0
        %6587 = vmatprep.subr.mxu0 0.0
        %6588 = vmatpush1.msra.mxu0 0.0
        %6589 = vmatprep.subr.mxu0 0.0
        %6590 = vmatpush1.msra.mxu0 0.0
        %6591 = vmatprep.subr.mxu0 0.0
        %6592 = vmatpush1.msra.mxu0 0.0
        %6593 = vmatprep.subr.mxu0 0.0
        %6594 = vmatpush1.msra.mxu0 0.0
        %6595 = vmatprep.subr.mxu0 0.0
        %6596 = vmatpush1.msra.mxu0 0.0
        %6597 = vmatprep.subr.mxu0 0.0
        %6598 = vmatpush1.msra.mxu0 0.0
        %6599 = vmatprep.subr.mxu0 0.0
        %6600 = vmatpush1.msra.mxu0 0.0
        %6601 = vmatprep.subr.mxu0 0.0
        %6602 = vmatpush1.msra.mxu0 0.0
        %6603 = vmatprep.mubr.f32.mxu0 0.0
        %v6604 = vand.u32 %v264, 4294901760
        %6605 = vmatmul.mubr.f32.gmra.mrb[0].mxu0 %v6604
        %v6606 = vpop.f32.mrb[0].mxu0
        %v6607 = vadd.f32 %v6512, %v6606
        %v6608 = vpop.f32.mrb[0].mxu0
        %v6609 = vadd.f32 %v6514, %v6608
        %6610 = vmatprep.mubr.f32.mxu0 0.0
        %v6611 = vand.u32 %v267, 4294901760
        %6612 = vmatmul.mubr.f32.gmra.mrb[0].mxu0 %v6611
        %v6613 = vpop.f32.mrb[0].mxu0
        %v6614 = vadd.f32 %v6519, %v6613
        %v6615 = vpop.f32.mrb[0].mxu0
        %v6616 = vadd.f32 %v6521, %v6615
        %6617 = vmatprep.mubr.f32.mxu0 0.0
        %v6618 = vand.u32 %v270, 4294901760
        %6619 = vmatmul.mubr.f32.gmra.mrb[0].mxu0 %v6618
        %v6620 = vpop.f32.mrb[0].mxu0
        %v6621 = vadd.f32 %v6526, %v6620
        %v6622 = vpop.f32.mrb[0].mxu0
        %v6623 = vadd.f32 %v6528, %v6622
        %6624 = vmatprep.mubr.f32.mxu0 0.0
        %v6625 = vand.u32 %v273, 4294901760
        %6626 = vmatmul.mubr.f32.gmra.mrb[0].mxu0 %v6625
        %v6627 = vpop.f32.mrb[0].mxu0
        %v6628 = vadd.f32 %v6533, %v6627
        %v6629 = vpop.f32.mrb[0].mxu0
        %v6630 = vadd.f32 %v6535, %v6629
        %6631 = vdwg.mxu0
        %v6632 = vmax.f32 %v5995, 0.0
        %v6633 = vmax.f32 %v5997, 0.0
        %v6634 = vmax.f32 %v6607, 0.0
        %v6635 = vmax.f32 %v6609, 0.0
        %v6636 = vmax.f32 %v6002, 0.0
        %v6637 = vmax.f32 %v6004, 0.0
        %v6638 = vmax.f32 %v6614, 0.0
        %v6639 = vmax.f32 %v6616, 0.0
        %v6640 = vmax.f32 %v6009, 0.0
        %v6641 = vmax.f32 %v6011, 0.0
        %v6642 = vmax.f32 %v6621, 0.0
        %v6643 = vmax.f32 %v6623, 0.0
        %v6644 = vmax.f32 %v6016, 0.0
        %v6645 = vmax.f32 %v6018, 0.0
        %v6646 = vmax.f32 %v6628, 0.0
        %v6647 = vmax.f32 %v6630, 0.0
        %v6648 = vand.u32 %v6633, 4294901760
        %6649 = vmatprep.subr.mxu0 %v6648
        %v6650 = vand.u32 %v6632, 4294901760
        %6651 = vmatpush1.msra.mxu0 %v6650
        %v6652 = vand.u32 %v6637, 4294901760
        %6653 = vmatprep.subr.mxu0 %v6652
        %v6654 = vand.u32 %v6636, 4294901760
        %6655 = vmatpush1.msra.mxu0 %v6654
        %v6656 = vand.u32 %v6641, 4294901760
        %6657 = vmatprep.subr.mxu0 %v6656
        %v6658 = vand.u32 %v6640, 4294901760
        %6659 = vmatpush1.msra.mxu0 %v6658
        %v6660 = vand.u32 %v6645, 4294901760
        %6661 = vmatprep.subr.mxu0 %v6660
        %v6662 = vand.u32 %v6644, 4294901760
        %6663 = vmatpush1.msra.mxu0 %v6662
        %6664 = vmatprep.subr.mxu0 0.0
        %6665 = vmatpush1.msra.mxu0 0.0
        %6666 = vmatprep.subr.mxu0 0.0
        %6667 = vmatpush1.msra.mxu0 0.0
        %6668 = vmatprep.subr.mxu0 0.0
        %6669 = vmatpush1.msra.mxu0 0.0
        %6670 = vmatprep.subr.mxu0 0.0
        %6671 = vmatpush1.msra.mxu0 0.0
        %6672 = vmatprep.subr.mxu0 0.0
        %6673 = vmatpush1.msra.mxu0 0.0
        %6674 = vmatprep.subr.mxu0 0.0
        %6675 = vmatpush1.msra.mxu0 0.0
        %6676 = vmatprep.subr.mxu0 0.0
        %6677 = vmatpush1.msra.mxu0 0.0
        %6678 = vmatprep.subr.mxu0 0.0
        %6679 = vmatpush1.msra.mxu0 0.0
        %6680 = vmatprep.subr.mxu0 0.0
        %6681 = vmatpush1.msra.mxu0 0.0
        %6682 = vmatprep.subr.mxu0 0.0
        %6683 = vmatpush1.msra.mxu0 0.0
        %6684 = vmatprep.subr.mxu0 0.0
        %6685 = vmatpush1.msra.mxu0 0.0
        %6686 = vmatprep.subr.mxu0 0.0
        %6687 = vmatpush1.msra.mxu0 0.0
        %6688 = vmatprep.subr.mxu0 0.0
        %6689 = vmatpush1.msra.mxu0 0.0
        %6690 = vmatprep.subr.mxu0 0.0
        %6691 = vmatpush1.msra.mxu0 0.0
        %6692 = vmatprep.subr.mxu0 0.0
        %6693 = vmatpush1.msra.mxu0 0.0
        %6694 = vmatprep.subr.mxu0 0.0
        %6695 = vmatpush1.msra.mxu0 0.0
        %6696 = vmatprep.subr.mxu0 0.0
        %6697 = vmatpush1.msra.mxu0 0.0
        %6698 = vmatprep.subr.mxu0 0.0
        %6699 = vmatpush1.msra.mxu0 0.0
        %6700 = vmatprep.subr.mxu0 0.0
        %6701 = vmatpush1.msra.mxu0 0.0
        %6702 = vmatprep.subr.mxu0 0.0
        %6703 = vmatpush1.msra.mxu0 0.0
        %6704 = vmatprep.subr.mxu0 0.0
        %6705 = vmatpush1.msra.mxu0 0.0
        %6706 = vmatprep.subr.mxu0 0.0
        %6707 = vmatpush1.msra.mxu0 0.0
        %6708 = vmatprep.subr.mxu0 0.0
        %6709 = vmatpush1.msra.mxu0 0.0
        %6710 = vmatprep.subr.mxu0 0.0
        %6711 = vmatpush1.msra.mxu0 0.0
        %6712 = vmatprep.subr.mxu0 0.0
        %6713 = vmatpush1.msra.mxu0 0.0
        %6714 = vmatprep.subr.mxu0 0.0
        %6715 = vmatpush1.msra.mxu0 0.0
        %6716 = vmatprep.subr.mxu0 0.0
        %6717 = vmatpush1.msra.mxu0 0.0
        %6718 = vmatprep.subr.mxu0 0.0
        %6719 = vmatpush1.msra.mxu0 0.0
        %6720 = vmatprep.mubr.f32.mxu0 0.0
        %v6721 = vand.u32 %v1541, 4294901760
        %v6722 = vsub.f32 %v1541, %v6721
        %v6723 = vand.u32 %v6722, 4294901760
        %v6724 = vsub.f32 %v6722, %v6723
        %v6725 = vand.u32 %v6724, 4294901760
        %6726 = vmatmul.mubr.f32.gmra.mrb[0].mxu0 %v6725
        %v6727 = vpop.f32.mrb[0].mxu0
        %v6728 = vadd.f32 %v1527, %v6727
        %v6729 = vpop.f32.mrb[0].mxu0
        %v6730 = vadd.f32 %v1527, %v6729
        %6731 = vmatprep.mubr.f32.mxu0 0.0
        %v6732 = vand.u32 %v1544, 4294901760
        %v6733 = vsub.f32 %v1544, %v6732
        %v6734 = vand.u32 %v6733, 4294901760
        %v6735 = vsub.f32 %v6733, %v6734
        %v6736 = vand.u32 %v6735, 4294901760
        %6737 = vmatmul.mubr.f32.gmra.mrb[0].mxu0 %v6736
        %v6738 = vpop.f32.mrb[0].mxu0
        %v6739 = vadd.f32 %v1532, %v6738
        %v6740 = vpop.f32.mrb[0].mxu0
        %v6741 = vadd.f32 %v1532, %v6740
        %6742 = vmatprep.mubr.f32.mxu0 0.0
        %v6743 = vand.u32 %v1547, 4294901760
        %v6744 = vsub.f32 %v1547, %v6743
        %v6745 = vand.u32 %v6744, 4294901760
        %v6746 = vsub.f32 %v6744, %v6745
        %v6747 = vand.u32 %v6746, 4294901760
        %6748 = vmatmul.mubr.f32.gmra.mrb[0].mxu0 %v6747
        %v6749 = vpop.f32.mrb[0].mxu0
        %v6750 = vadd.f32 %v1537, %v6749
        %v6751 = vpop.f32.mrb[0].mxu0
        %v6752 = vadd.f32 %v1537, %v6751
        %6753 = vdwg.mxu0
        %v6754 = vand.u32 %v6633, 4294901760
        %v6755 = vsub.f32 %v6633, %v6754
        %v6756 = vand.u32 %v6755, 4294901760
        %v6757 = vsub.f32 %v6755, %v6756
        %v6758 = vand.u32 %v6757, 4294901760
        %6759 = vmatprep.subr.mxu0 %v6758
        %v6760 = vand.u32 %v6632, 4294901760
        %v6761 = vsub.f32 %v6632, %v6760
        %v6762 = vand.u32 %v6761, 4294901760
        %v6763 = vsub.f32 %v6761, %v6762
        %v6764 = vand.u32 %v6763, 4294901760
        %6765 = vmatpush1.msra.mxu0 %v6764
        %v6766 = vand.u32 %v6637, 4294901760
        %v6767 = vsub.f32 %v6637, %v6766
        %v6768 = vand.u32 %v6767, 4294901760
        %v6769 = vsub.f32 %v6767, %v6768
        %v6770 = vand.u32 %v6769, 4294901760
        %6771 = vmatprep.subr.mxu0 %v6770
        %v6772 = vand.u32 %v6636, 4294901760
        %v6773 = vsub.f32 %v6636, %v6772
        %v6774 = vand.u32 %v6773, 4294901760
        %v6775 = vsub.f32 %v6773, %v6774
        %v6776 = vand.u32 %v6775, 4294901760
        %6777 = vmatpush1.msra.mxu0 %v6776
        %v6778 = vand.u32 %v6641, 4294901760
        %v6779 = vsub.f32 %v6641, %v6778
        %v6780 = vand.u32 %v6779, 4294901760
        %v6781 = vsub.f32 %v6779, %v6780
        %v6782 = vand.u32 %v6781, 4294901760
        %6783 = vmatprep.subr.mxu0 %v6782
        %v6784 = vand.u32 %v6640, 4294901760
        %v6785 = vsub.f32 %v6640, %v6784
        %v6786 = vand.u32 %v6785, 4294901760
        %v6787 = vsub.f32 %v6785, %v6786
        %v6788 = vand.u32 %v6787, 4294901760
        %6789 = vmatpush1.msra.mxu0 %v6788
        %v6790 = vand.u32 %v6645, 4294901760
        %v6791 = vsub.f32 %v6645, %v6790
        %v6792 = vand.u32 %v6791, 4294901760
        %v6793 = vsub.f32 %v6791, %v6792
        %v6794 = vand.u32 %v6793, 4294901760
        %6795 = vmatprep.subr.mxu0 %v6794
        %v6796 = vand.u32 %v6644, 4294901760
        %v6797 = vsub.f32 %v6644, %v6796
        %v6798 = vand.u32 %v6797, 4294901760
        %v6799 = vsub.f32 %v6797, %v6798
        %v6800 = vand.u32 %v6799, 4294901760
        %6801 = vmatpush1.msra.mxu0 %v6800
        %6802 = vmatprep.subr.mxu0 0.0
        %6803 = vmatpush1.msra.mxu0 0.0
        %6804 = vmatprep.subr.mxu0 0.0
        %6805 = vmatpush1.msra.mxu0 0.0
        %6806 = vmatprep.subr.mxu0 0.0
        %6807 = vmatpush1.msra.mxu0 0.0
        %6808 = vmatprep.subr.mxu0 0.0
        %6809 = vmatpush1.msra.mxu0 0.0
        %6810 = vmatprep.subr.mxu0 0.0
        %6811 = vmatpush1.msra.mxu0 0.0
        %6812 = vmatprep.subr.mxu0 0.0
        %6813 = vmatpush1.msra.mxu0 0.0
        %6814 = vmatprep.subr.mxu0 0.0
        %6815 = vmatpush1.msra.mxu0 0.0
        %6816 = vmatprep.subr.mxu0 0.0
        %6817 = vmatpush1.msra.mxu0 0.0
        %6818 = vmatprep.subr.mxu0 0.0
        %6819 = vmatpush1.msra.mxu0 0.0
        %6820 = vmatprep.subr.mxu0 0.0
        %6821 = vmatpush1.msra.mxu0 0.0
        %6822 = vmatprep.subr.mxu0 0.0
        %6823 = vmatpush1.msra.mxu0 0.0
        %6824 = vmatprep.subr.mxu0 0.0
        %6825 = vmatpush1.msra.mxu0 0.0
        %6826 = vmatprep.subr.mxu0 0.0
        %6827 = vmatpush1.msra.mxu0 0.0
        %6828 = vmatprep.subr.mxu0 0.0
        %6829 = vmatpush1.msra.mxu0 0.0
        %6830 = vmatprep.subr.mxu0 0.0
        %6831 = vmatpush1.msra.mxu0 0.0
        %6832 = vmatprep.subr.mxu0 0.0
        %6833 = vmatpush1.msra.mxu0 0.0
        %6834 = vmatprep.subr.mxu0 0.0
        %6835 = vmatpush1.msra.mxu0 0.0
        %6836 = vmatprep.subr.mxu0 0.0
        %6837 = vmatpush1.msra.mxu0 0.0
        %6838 = vmatprep.subr.mxu0 0.0
        %6839 = vmatpush1.msra.mxu0 0.0
        %6840 = vmatprep.subr.mxu0 0.0
        %6841 = vmatpush1.msra.mxu0 0.0
        %6842 = vmatprep.subr.mxu0 0.0
        %6843 = vmatpush1.msra.mxu0 0.0
        %6844 = vmatprep.subr.mxu0 0.0
        %6845 = vmatpush1.msra.mxu0 0.0
        %6846 = vmatprep.subr.mxu0 0.0
        %6847 = vmatpush1.msra.mxu0 0.0
        %6848 = vmatprep.subr.mxu0 0.0
        %6849 = vmatpush1.msra.mxu0 0.0
        %6850 = vmatprep.subr.mxu0 0.0
        %6851 = vmatpush1.msra.mxu0 0.0
        %6852 = vmatprep.subr.mxu0 0.0
        %6853 = vmatpush1.msra.mxu0 0.0
        %6854 = vmatprep.subr.mxu0 0.0
        %6855 = vmatpush1.msra.mxu0 0.0
        %6856 = vmatprep.subr.mxu0 0.0
        %6857 = vmatpush1.msra.mxu0 0.0
        %6858 = vmatprep.mubr.f32.mxu0 0.0
        %v6859 = vand.u32 %v1541, 4294901760
        %6860 = vmatmul.mubr.f32.gmra.mrb[0].mxu0 %v6859
        %v6861 = vpop.f32.mrb[0].mxu0
        %v6862 = vadd.f32 %v6728, %v6861
        %v6863 = vpop.f32.mrb[0].mxu0
        %v6864 = vadd.f32 %v6730, %v6863
        %6865 = vmatprep.mubr.f32.mxu0 0.0
        %v6866 = vand.u32 %v1544, 4294901760
        %6867 = vmatmul.mubr.f32.gmra.mrb[0].mxu0 %v6866
        %v6868 = vpop.f32.mrb[0].mxu0
        %v6869 = vadd.f32 %v6739, %v6868
        %v6870 = vpop.f32.mrb[0].mxu0
        %v6871 = vadd.f32 %v6741, %v6870
        %6872 = vmatprep.mubr.f32.mxu0 0.0
        %v6873 = vand.u32 %v1547, 4294901760
        %6874 = vmatmul.mubr.f32.gmra.mrb[0].mxu0 %v6873
        %v6875 = vpop.f32.mrb[0].mxu0
        %v6876 = vadd.f32 %v6750, %v6875
        %v6877 = vpop.f32.mrb[0].mxu0
        %v6878 = vadd.f32 %v6752, %v6877
        %6879 = vdwg.mxu0
        %v6880 = vand.u32 %v6633, 4294901760
        %v6881 = vsub.f32 %v6633, %v6880
        %6882 = vmatprep.subr.mxu0 %v6881
        %v6883 = vand.u32 %v6632, 4294901760
        %v6884 = vsub.f32 %v6632, %v6883
        %6885 = vmatpush1.msra.mxu0 %v6884
        %v6886 = vand.u32 %v6637, 4294901760
        %v6887 = vsub.f32 %v6637, %v6886
        %6888 = vmatprep.subr.mxu0 %v6887
        %v6889 = vand.u32 %v6636, 4294901760
        %v6890 = vsub.f32 %v6636, %v6889
        %6891 = vmatpush1.msra.mxu0 %v6890
        %v6892 = vand.u32 %v6641, 4294901760
        %v6893 = vsub.f32 %v6641, %v6892
        %6894 = vmatprep.subr.mxu0 %v6893
        %v6895 = vand.u32 %v6640, 4294901760
        %v6896 = vsub.f32 %v6640, %v6895
        %6897 = vmatpush1.msra.mxu0 %v6896
        %v6898 = vand.u32 %v6645, 4294901760
        %v6899 = vsub.f32 %v6645, %v6898
        %6900 = vmatprep.subr.mxu0 %v6899
        %v6901 = vand.u32 %v6644, 4294901760
        %v6902 = vsub.f32 %v6644, %v6901
        %6903 = vmatpush1.msra.mxu0 %v6902
        %6904 = vmatprep.subr.mxu0 0.0
        %6905 = vmatpush1.msra.mxu0 0.0
        %6906 = vmatprep.subr.mxu0 0.0
        %6907 = vmatpush1.msra.mxu0 0.0
        %6908 = vmatprep.subr.mxu0 0.0
        %6909 = vmatpush1.msra.mxu0 0.0
        %6910 = vmatprep.subr.mxu0 0.0
        %6911 = vmatpush1.msra.mxu0 0.0
        %6912 = vmatprep.subr.mxu0 0.0
        %6913 = vmatpush1.msra.mxu0 0.0
        %6914 = vmatprep.subr.mxu0 0.0
        %6915 = vmatpush1.msra.mxu0 0.0
        %6916 = vmatprep.subr.mxu0 0.0
        %6917 = vmatpush1.msra.mxu0 0.0
        %6918 = vmatprep.subr.mxu0 0.0
        %6919 = vmatpush1.msra.mxu0 0.0
        %6920 = vmatprep.subr.mxu0 0.0
        %6921 = vmatpush1.msra.mxu0 0.0
        %6922 = vmatprep.subr.mxu0 0.0
        %6923 = vmatpush1.msra.mxu0 0.0
        %6924 = vmatprep.subr.mxu0 0.0
        %6925 = vmatpush1.msra.mxu0 0.0
        %6926 = vmatprep.subr.mxu0 0.0
        %6927 = vmatpush1.msra.mxu0 0.0
        %6928 = vmatprep.subr.mxu0 0.0
        %6929 = vmatpush1.msra.mxu0 0.0
        %6930 = vmatprep.subr.mxu0 0.0
        %6931 = vmatpush1.msra.mxu0 0.0
        %6932 = vmatprep.subr.mxu0 0.0
        %6933 = vmatpush1.msra.mxu0 0.0
        %6934 = vmatprep.subr.mxu0 0.0
        %6935 = vmatpush1.msra.mxu0 0.0
        %6936 = vmatprep.subr.mxu0 0.0
        %6937 = vmatpush1.msra.mxu0 0.0
        %6938 = vmatprep.subr.mxu0 0.0
        %6939 = vmatpush1.msra.mxu0 0.0
        %6940 = vmatprep.subr.mxu0 0.0
        %6941 = vmatpush1.msra.mxu0 0.0
        %6942 = vmatprep.subr.mxu0 0.0
        %6943 = vmatpush1.msra.mxu0 0.0
        %6944 = vmatprep.subr.mxu0 0.0
        %6945 = vmatpush1.msra.mxu0 0.0
        %6946 = vmatprep.subr.mxu0 0.0
        %6947 = vmatpush1.msra.mxu0 0.0
        %6948 = vmatprep.subr.mxu0 0.0
        %6949 = vmatpush1.msra.mxu0 0.0
        %6950 = vmatprep.subr.mxu0 0.0
        %6951 = vmatpush1.msra.mxu0 0.0
        %6952 = vmatprep.subr.mxu0 0.0
        %6953 = vmatpush1.msra.mxu0 0.0
        %6954 = vmatprep.subr.mxu0 0.0
        %6955 = vmatpush1.msra.mxu0 0.0
        %6956 = vmatprep.subr.mxu0 0.0
        %6957 = vmatpush1.msra.mxu0 0.0
        %6958 = vmatprep.subr.mxu0 0.0
        %6959 = vmatpush1.msra.mxu0 0.0
        %6960 = vmatprep.mubr.f32.mxu0 0.0
        %v6961 = vand.u32 %v1541, 4294901760
        %v6962 = vsub.f32 %v1541, %v6961
        %6963 = vmatmul.mubr.f32.gmra.mrb[0].mxu0 %v6962
        %v6964 = vpop.f32.mrb[0].mxu0
        %v6965 = vadd.f32 %v6862, %v6964
        %v6966 = vpop.f32.mrb[0].mxu0
        %v6967 = vadd.f32 %v6864, %v6966
        %6968 = vmatprep.mubr.f32.mxu0 0.0
        %v6969 = vand.u32 %v1544, 4294901760
        %v6970 = vsub.f32 %v1544, %v6969
        %6971 = vmatmul.mubr.f32.gmra.mrb[0].mxu0 %v6970
        %v6972 = vpop.f32.mrb[0].mxu0
        %v6973 = vadd.f32 %v6869, %v6972
        %v6974 = vpop.f32.mrb[0].mxu0
        %v6975 = vadd.f32 %v6871, %v6974
        %6976 = vmatprep.mubr.f32.mxu0 0.0
        %v6977 = vand.u32 %v1547, 4294901760
        %v6978 = vsub.f32 %v1547, %v6977
        %6979 = vmatmul.mubr.f32.gmra.mrb[0].mxu0 %v6978
        %v6980 = vpop.f32.mrb[0].mxu0
        %v6981 = vadd.f32 %v6876, %v6980
        %v6982 = vpop.f32.mrb[0].mxu0
        %v6983 = vadd.f32 %v6878, %v6982
        %6984 = vdwg.mxu0
        %v6985 = vand.u32 %v6633, 4294901760
        %6986 = vmatprep.subr.mxu0 %v6985
        %v6987 = vand.u32 %v6632, 4294901760
        %6988 = vmatpush1.msra.mxu0 %v6987
        %v6989 = vand.u32 %v6637, 4294901760
        %6990 = vmatprep.subr.mxu0 %v6989
        %v6991 = vand.u32 %v6636, 4294901760
        %6992 = vmatpush1.msra.mxu0 %v6991
        %v6993 = vand.u32 %v6641, 4294901760
        %6994 = vmatprep.subr.mxu0 %v6993
        %v6995 = vand.u32 %v6640, 4294901760
        %6996 = vmatpush1.msra.mxu0 %v6995
        %v6997 = vand.u32 %v6645, 4294901760
        %6998 = vmatprep.subr.mxu0 %v6997
        %v6999 = vand.u32 %v6644, 4294901760
        %7000 = vmatpush1.msra.mxu0 %v6999
        %7001 = vmatprep.subr.mxu0 0.0
        %7002 = vmatpush1.msra.mxu0 0.0
        %7003 = vmatprep.subr.mxu0 0.0
        %7004 = vmatpush1.msra.mxu0 0.0
        %7005 = vmatprep.subr.mxu0 0.0
        %7006 = vmatpush1.msra.mxu0 0.0
        %7007 = vmatprep.subr.mxu0 0.0
        %7008 = vmatpush1.msra.mxu0 0.0
        %7009 = vmatprep.subr.mxu0 0.0
        %7010 = vmatpush1.msra.mxu0 0.0
        %7011 = vmatprep.subr.mxu0 0.0
        %7012 = vmatpush1.msra.mxu0 0.0
        %7013 = vmatprep.subr.mxu0 0.0
        %7014 = vmatpush1.msra.mxu0 0.0
        %7015 = vmatprep.subr.mxu0 0.0
        %7016 = vmatpush1.msra.mxu0 0.0
        %7017 = vmatprep.subr.mxu0 0.0
        %7018 = vmatpush1.msra.mxu0 0.0
        %7019 = vmatprep.subr.mxu0 0.0
        %7020 = vmatpush1.msra.mxu0 0.0
        %7021 = vmatprep.subr.mxu0 0.0
        %7022 = vmatpush1.msra.mxu0 0.0
        %7023 = vmatprep.subr.mxu0 0.0
        %7024 = vmatpush1.msra.mxu0 0.0
        %7025 = vmatprep.subr.mxu0 0.0
        %7026 = vmatpush1.msra.mxu0 0.0
        %7027 = vmatprep.subr.mxu0 0.0
        %7028 = vmatpush1.msra.mxu0 0.0
        %7029 = vmatprep.subr.mxu0 0.0
        %7030 = vmatpush1.msra.mxu0 0.0
        %7031 = vmatprep.subr.mxu0 0.0
        %7032 = vmatpush1.msra.mxu0 0.0
        %7033 = vmatprep.subr.mxu0 0.0
        %7034 = vmatpush1.msra.mxu0 0.0
        %7035 = vmatprep.subr.mxu0 0.0
        %7036 = vmatpush1.msra.mxu0 0.0
        %7037 = vmatprep.subr.mxu0 0.0
        %7038 = vmatpush1.msra.mxu0 0.0
        %7039 = vmatprep.subr.mxu0 0.0
        %7040 = vmatpush1.msra.mxu0 0.0
        %7041 = vmatprep.subr.mxu0 0.0
        %7042 = vmatpush1.msra.mxu0 0.0
        %7043 = vmatprep.subr.mxu0 0.0
        %7044 = vmatpush1.msra.mxu0 0.0
        %7045 = vmatprep.subr.mxu0 0.0
        %7046 = vmatpush1.msra.mxu0 0.0
        %7047 = vmatprep.subr.mxu0 0.0
        %7048 = vmatpush1.msra.mxu0 0.0
        %7049 = vmatprep.subr.mxu0 0.0
        %7050 = vmatpush1.msra.mxu0 0.0
        %7051 = vmatprep.subr.mxu0 0.0
        %7052 = vmatpush1.msra.mxu0 0.0
        %7053 = vmatprep.subr.mxu0 0.0
        %7054 = vmatpush1.msra.mxu0 0.0
        %7055 = vmatprep.subr.mxu0 0.0
        %7056 = vmatpush1.msra.mxu0 0.0
        %7057 = vmatprep.mubr.f32.mxu0 0.0
        %v7058 = vand.u32 %v1541, 4294901760
        %v7059 = vsub.f32 %v1541, %v7058
        %v7060 = vand.u32 %v7059, 4294901760
        %7061 = vmatmul.mubr.f32.gmra.mrb[0].mxu0 %v7060
        %v7062 = vpop.f32.mrb[0].mxu0
        %v7063 = vadd.f32 %v6965, %v7062
        %v7064 = vpop.f32.mrb[0].mxu0
        %v7065 = vadd.f32 %v6967, %v7064
        %7066 = vmatprep.mubr.f32.mxu0 0.0
        %v7067 = vand.u32 %v1544, 4294901760
        %v7068 = vsub.f32 %v1544, %v7067
        %v7069 = vand.u32 %v7068, 4294901760
        %7070 = vmatmul.mubr.f32.gmra.mrb[0].mxu0 %v7069
        %v7071 = vpop.f32.mrb[0].mxu0
        %v7072 = vadd.f32 %v6973, %v7071
        %v7073 = vpop.f32.mrb[0].mxu0
        %v7074 = vadd.f32 %v6975, %v7073
        %7075 = vmatprep.mubr.f32.mxu0 0.0
        %v7076 = vand.u32 %v1547, 4294901760
        %v7077 = vsub.f32 %v1547, %v7076
        %v7078 = vand.u32 %v7077, 4294901760
        %7079 = vmatmul.mubr.f32.gmra.mrb[0].mxu0 %v7078
        %v7080 = vpop.f32.mrb[0].mxu0
        %v7081 = vadd.f32 %v6981, %v7080
        %v7082 = vpop.f32.mrb[0].mxu0
        %v7083 = vadd.f32 %v6983, %v7082
        %7084 = vdwg.mxu0
        %v7085 = vand.u32 %v6633, 4294901760
        %v7086 = vsub.f32 %v6633, %v7085
        %v7087 = vand.u32 %v7086, 4294901760
        %7088 = vmatprep.subr.mxu0 %v7087
        %v7089 = vand.u32 %v6632, 4294901760
        %v7090 = vsub.f32 %v6632, %v7089
        %v7091 = vand.u32 %v7090, 4294901760
        %7092 = vmatpush1.msra.mxu0 %v7091
        %v7093 = vand.u32 %v6637, 4294901760
        %v7094 = vsub.f32 %v6637, %v7093
        %v7095 = vand.u32 %v7094, 4294901760
        %7096 = vmatprep.subr.mxu0 %v7095
        %v7097 = vand.u32 %v6636, 4294901760
        %v7098 = vsub.f32 %v6636, %v7097
        %v7099 = vand.u32 %v7098, 4294901760
        %7100 = vmatpush1.msra.mxu0 %v7099
        %v7101 = vand.u32 %v6641, 4294901760
        %v7102 = vsub.f32 %v6641, %v7101
        %v7103 = vand.u32 %v7102, 4294901760
        %7104 = vmatprep.subr.mxu0 %v7103
        %v7105 = vand.u32 %v6640, 4294901760
        %v7106 = vsub.f32 %v6640, %v7105
        %v7107 = vand.u32 %v7106, 4294901760
        %7108 = vmatpush1.msra.mxu0 %v7107
        %v7109 = vand.u32 %v6645, 4294901760
        %v7110 = vsub.f32 %v6645, %v7109
        %v7111 = vand.u32 %v7110, 4294901760
        %7112 = vmatprep.subr.mxu0 %v7111
        %v7113 = vand.u32 %v6644, 4294901760
        %v7114 = vsub.f32 %v6644, %v7113
        %v7115 = vand.u32 %v7114, 4294901760
        %7116 = vmatpush1.msra.mxu0 %v7115
        %7117 = vmatprep.subr.mxu0 0.0
        %7118 = vmatpush1.msra.mxu0 0.0
        %7119 = vmatprep.subr.mxu0 0.0
        %7120 = vmatpush1.msra.mxu0 0.0
        %7121 = vmatprep.subr.mxu0 0.0
        %7122 = vmatpush1.msra.mxu0 0.0
        %7123 = vmatprep.subr.mxu0 0.0
        %7124 = vmatpush1.msra.mxu0 0.0
        %7125 = vmatprep.subr.mxu0 0.0
        %7126 = vmatpush1.msra.mxu0 0.0
        %7127 = vmatprep.subr.mxu0 0.0
        %7128 = vmatpush1.msra.mxu0 0.0
        %7129 = vmatprep.subr.mxu0 0.0
        %7130 = vmatpush1.msra.mxu0 0.0
        %7131 = vmatprep.subr.mxu0 0.0
        %7132 = vmatpush1.msra.mxu0 0.0
        %7133 = vmatprep.subr.mxu0 0.0
        %7134 = vmatpush1.msra.mxu0 0.0
        %7135 = vmatprep.subr.mxu0 0.0
        %7136 = vmatpush1.msra.mxu0 0.0
        %7137 = vmatprep.subr.mxu0 0.0
        %7138 = vmatpush1.msra.mxu0 0.0
        %7139 = vmatprep.subr.mxu0 0.0
        %7140 = vmatpush1.msra.mxu0 0.0
        %7141 = vmatprep.subr.mxu0 0.0
        %7142 = vmatpush1.msra.mxu0 0.0
        %7143 = vmatprep.subr.mxu0 0.0
        %7144 = vmatpush1.msra.mxu0 0.0
        %7145 = vmatprep.subr.mxu0 0.0
        %7146 = vmatpush1.msra.mxu0 0.0
        %7147 = vmatprep.subr.mxu0 0.0
        %7148 = vmatpush1.msra.mxu0 0.0
        %7149 = vmatprep.subr.mxu0 0.0
        %7150 = vmatpush1.msra.mxu0 0.0
        %7151 = vmatprep.subr.mxu0 0.0
        %7152 = vmatpush1.msra.mxu0 0.0
        %7153 = vmatprep.subr.mxu0 0.0
        %7154 = vmatpush1.msra.mxu0 0.0
        %7155 = vmatprep.subr.mxu0 0.0
        %7156 = vmatpush1.msra.mxu0 0.0
        %7157 = vmatprep.subr.mxu0 0.0
        %7158 = vmatpush1.msra.mxu0 0.0
        %7159 = vmatprep.subr.mxu0 0.0
        %7160 = vmatpush1.msra.mxu0 0.0
        %7161 = vmatprep.subr.mxu0 0.0
        %7162 = vmatpush1.msra.mxu0 0.0
        %7163 = vmatprep.subr.mxu0 0.0
        %7164 = vmatpush1.msra.mxu0 0.0
        %7165 = vmatprep.subr.mxu0 0.0
        %7166 = vmatpush1.msra.mxu0 0.0
        %7167 = vmatprep.subr.mxu0 0.0
        %7168 = vmatpush1.msra.mxu0 0.0
        %7169 = vmatprep.subr.mxu0 0.0
        %7170 = vmatpush1.msra.mxu0 0.0
        %7171 = vmatprep.subr.mxu0 0.0
        %7172 = vmatpush1.msra.mxu0 0.0
        %7173 = vmatprep.mubr.f32.mxu0 0.0
        %v7174 = vand.u32 %v1541, 4294901760
        %7175 = vmatmul.mubr.f32.gmra.mrb[0].mxu0 %v7174
        %v7176 = vpop.f32.mrb[0].mxu0
        %v7177 = vadd.f32 %v7063, %v7176
        %v7178 = vpop.f32.mrb[0].mxu0
        %v7179 = vadd.f32 %v7065, %v7178
        %7180 = vmatprep.mubr.f32.mxu0 0.0
        %v7181 = vand.u32 %v1544, 4294901760
        %7182 = vmatmul.mubr.f32.gmra.mrb[0].mxu0 %v7181
        %v7183 = vpop.f32.mrb[0].mxu0
        %v7184 = vadd.f32 %v7072, %v7183
        %v7185 = vpop.f32.mrb[0].mxu0
        %v7186 = vadd.f32 %v7074, %v7185
        %7187 = vmatprep.mubr.f32.mxu0 0.0
        %v7188 = vand.u32 %v1547, 4294901760
        %7189 = vmatmul.mubr.f32.gmra.mrb[0].mxu0 %v7188
        %v7190 = vpop.f32.mrb[0].mxu0
        %v7191 = vadd.f32 %v7081, %v7190
        %v7192 = vpop.f32.mrb[0].mxu0
        %v7193 = vadd.f32 %v7083, %v7192
        %7194 = vdwg.mxu0
        %v7195 = vand.u32 %v6633, 4294901760
        %7196 = vmatprep.subr.mxu0 %v7195
        %v7197 = vand.u32 %v6632, 4294901760
        %7198 = vmatpush1.msra.mxu0 %v7197
        %v7199 = vand.u32 %v6637, 4294901760
        %7200 = vmatprep.subr.mxu0 %v7199
        %v7201 = vand.u32 %v6636, 4294901760
        %7202 = vmatpush1.msra.mxu0 %v7201
        %v7203 = vand.u32 %v6641, 4294901760
        %7204 = vmatprep.subr.mxu0 %v7203
        %v7205 = vand.u32 %v6640, 4294901760
        %7206 = vmatpush1.msra.mxu0 %v7205
        %v7207 = vand.u32 %v6645, 4294901760
        %7208 = vmatprep.subr.mxu0 %v7207
        %v7209 = vand.u32 %v6644, 4294901760
        %7210 = vmatpush1.msra.mxu0 %v7209
        %7211 = vmatprep.subr.mxu0 0.0
        %7212 = vmatpush1.msra.mxu0 0.0
        %7213 = vmatprep.subr.mxu0 0.0
        %7214 = vmatpush1.msra.mxu0 0.0
        %7215 = vmatprep.subr.mxu0 0.0
        %7216 = vmatpush1.msra.mxu0 0.0
        %7217 = vmatprep.subr.mxu0 0.0
        %7218 = vmatpush1.msra.mxu0 0.0
        %7219 = vmatprep.subr.mxu0 0.0
        %7220 = vmatpush1.msra.mxu0 0.0
        %7221 = vmatprep.subr.mxu0 0.0
        %7222 = vmatpush1.msra.mxu0 0.0
        %7223 = vmatprep.subr.mxu0 0.0
        %7224 = vmatpush1.msra.mxu0 0.0
        %7225 = vmatprep.subr.mxu0 0.0
        %7226 = vmatpush1.msra.mxu0 0.0
        %7227 = vmatprep.subr.mxu0 0.0
        %7228 = vmatpush1.msra.mxu0 0.0
        %7229 = vmatprep.subr.mxu0 0.0
        %7230 = vmatpush1.msra.mxu0 0.0
        %7231 = vmatprep.subr.mxu0 0.0
        %7232 = vmatpush1.msra.mxu0 0.0
        %7233 = vmatprep.subr.mxu0 0.0
        %7234 = vmatpush1.msra.mxu0 0.0
        %7235 = vmatprep.subr.mxu0 0.0
        %7236 = vmatpush1.msra.mxu0 0.0
        %7237 = vmatprep.subr.mxu0 0.0
        %7238 = vmatpush1.msra.mxu0 0.0
        %7239 = vmatprep.subr.mxu0 0.0
        %7240 = vmatpush1.msra.mxu0 0.0
        %7241 = vmatprep.subr.mxu0 0.0
        %7242 = vmatpush1.msra.mxu0 0.0
        %7243 = vmatprep.subr.mxu0 0.0
        %7244 = vmatpush1.msra.mxu0 0.0
        %7245 = vmatprep.subr.mxu0 0.0
        %7246 = vmatpush1.msra.mxu0 0.0
        %7247 = vmatprep.subr.mxu0 0.0
        %7248 = vmatpush1.msra.mxu0 0.0
        %7249 = vmatprep.subr.mxu0 0.0
        %7250 = vmatpush1.msra.mxu0 0.0
        %7251 = vmatprep.subr.mxu0 0.0
        %7252 = vmatpush1.msra.mxu0 0.0
        %7253 = vmatprep.subr.mxu0 0.0
        %7254 = vmatpush1.msra.mxu0 0.0
        %7255 = vmatprep.subr.mxu0 0.0
        %7256 = vmatpush1.msra.mxu0 0.0
        %7257 = vmatprep.subr.mxu0 0.0
        %7258 = vmatpush1.msra.mxu0 0.0
        %7259 = vmatprep.subr.mxu0 0.0
        %7260 = vmatpush1.msra.mxu0 0.0
        %7261 = vmatprep.subr.mxu0 0.0
        %7262 = vmatpush1.msra.mxu0 0.0
        %7263 = vmatprep.subr.mxu0 0.0
        %7264 = vmatpush1.msra.mxu0 0.0
        %7265 = vmatprep.subr.mxu0 0.0
        %7266 = vmatpush1.msra.mxu0 0.0
        %7267 = vmatprep.mubr.f32.mxu0 0.0
        %v7268 = vand.u32 %v1541, 4294901760
        %7269 = vmatmul.mubr.f32.gmra.mrb[0].mxu0 %v7268
        %v7270 = vpop.f32.mrb[0].mxu0
        %v7271 = vadd.f32 %v7177, %v7270
        %v7272 = vpop.f32.mrb[0].mxu0
        %v7273 = vadd.f32 %v7179, %v7272
        %7274 = vmatprep.mubr.f32.mxu0 0.0
        %v7275 = vand.u32 %v1544, 4294901760
        %7276 = vmatmul.mubr.f32.gmra.mrb[0].mxu0 %v7275
        %v7277 = vpop.f32.mrb[0].mxu0
        %v7278 = vadd.f32 %v7184, %v7277
        %v7279 = vpop.f32.mrb[0].mxu0
        %v7280 = vadd.f32 %v7186, %v7279
        %7281 = vmatprep.mubr.f32.mxu0 0.0
        %v7282 = vand.u32 %v1547, 4294901760
        %7283 = vmatmul.mubr.f32.gmra.mrb[0].mxu0 %v7282
        %v7284 = vpop.f32.mrb[0].mxu0
        %v7285 = vadd.f32 %v7191, %v7284
        %v7286 = vpop.f32.mrb[0].mxu0
        %v7287 = vadd.f32 %v7193, %v7286
        %7288 = vdwg.mxu0
        %v7289 = vand.u32 %v6635, 4294901760
        %7290 = vmatprep.subr.mxu0 %v7289
        %v7291 = vand.u32 %v6634, 4294901760
        %7292 = vmatpush1.msra.mxu0 %v7291
        %v7293 = vand.u32 %v6639, 4294901760
        %7294 = vmatprep.subr.mxu0 %v7293
        %v7295 = vand.u32 %v6638, 4294901760
        %7296 = vmatpush1.msra.mxu0 %v7295
        %v7297 = vand.u32 %v6643, 4294901760
        %7298 = vmatprep.subr.mxu0 %v7297
        %v7299 = vand.u32 %v6642, 4294901760
        %7300 = vmatpush1.msra.mxu0 %v7299
        %v7301 = vand.u32 %v6647, 4294901760
        %7302 = vmatprep.subr.mxu0 %v7301
        %v7303 = vand.u32 %v6646, 4294901760
        %7304 = vmatpush1.msra.mxu0 %v7303
        %7305 = vmatprep.subr.mxu0 0.0
        %7306 = vmatpush1.msra.mxu0 0.0
        %7307 = vmatprep.subr.mxu0 0.0
        %7308 = vmatpush1.msra.mxu0 0.0
        %7309 = vmatprep.subr.mxu0 0.0
        %7310 = vmatpush1.msra.mxu0 0.0
        %7311 = vmatprep.subr.mxu0 0.0
        %7312 = vmatpush1.msra.mxu0 0.0
        %7313 = vmatprep.subr.mxu0 0.0
        %7314 = vmatpush1.msra.mxu0 0.0
        %7315 = vmatprep.subr.mxu0 0.0
        %7316 = vmatpush1.msra.mxu0 0.0
        %7317 = vmatprep.subr.mxu0 0.0
        %7318 = vmatpush1.msra.mxu0 0.0
        %7319 = vmatprep.subr.mxu0 0.0
        %7320 = vmatpush1.msra.mxu0 0.0
        %7321 = vmatprep.subr.mxu0 0.0
        %7322 = vmatpush1.msra.mxu0 0.0
        %7323 = vmatprep.subr.mxu0 0.0
        %7324 = vmatpush1.msra.mxu0 0.0
        %7325 = vmatprep.subr.mxu0 0.0
        %7326 = vmatpush1.msra.mxu0 0.0
        %7327 = vmatprep.subr.mxu0 0.0
        %7328 = vmatpush1.msra.mxu0 0.0
        %7329 = vmatprep.subr.mxu0 0.0
        %7330 = vmatpush1.msra.mxu0 0.0
        %7331 = vmatprep.subr.mxu0 0.0
        %7332 = vmatpush1.msra.mxu0 0.0
        %7333 = vmatprep.subr.mxu0 0.0
        %7334 = vmatpush1.msra.mxu0 0.0
        %7335 = vmatprep.subr.mxu0 0.0
        %7336 = vmatpush1.msra.mxu0 0.0
        %7337 = vmatprep.subr.mxu0 0.0
        %7338 = vmatpush1.msra.mxu0 0.0
        %7339 = vmatprep.subr.mxu0 0.0
        %7340 = vmatpush1.msra.mxu0 0.0
        %7341 = vmatprep.subr.mxu0 0.0
        %7342 = vmatpush1.msra.mxu0 0.0
        %7343 = vmatprep.subr.mxu0 0.0
        %7344 = vmatpush1.msra.mxu0 0.0
        %7345 = vmatprep.subr.mxu0 0.0
        %7346 = vmatpush1.msra.mxu0 0.0
        %7347 = vmatprep.subr.mxu0 0.0
        %7348 = vmatpush1.msra.mxu0 0.0
        %7349 = vmatprep.subr.mxu0 0.0
        %7350 = vmatpush1.msra.mxu0 0.0
        %7351 = vmatprep.subr.mxu0 0.0
        %7352 = vmatpush1.msra.mxu0 0.0
        %7353 = vmatprep.subr.mxu0 0.0
        %7354 = vmatpush1.msra.mxu0 0.0
        %7355 = vmatprep.subr.mxu0 0.0
        %7356 = vmatpush1.msra.mxu0 0.0
        %7357 = vmatprep.subr.mxu0 0.0
        %7358 = vmatpush1.msra.mxu0 0.0
        %7359 = vmatprep.subr.mxu0 0.0
        %7360 = vmatpush1.msra.mxu0 0.0
        %7361 = vmatprep.mubr.f32.mxu0 0.0
        %v7362 = vand.u32 %v1541, 4294901760
        %v7363 = vsub.f32 %v1541, %v7362
        %v7364 = vand.u32 %v7363, 4294901760
        %v7365 = vsub.f32 %v7363, %v7364
        %v7366 = vand.u32 %v7365, 4294901760
        %7367 = vmatmul.mubr.f32.gmra.mrb[0].mxu0 %v7366
        %v7368 = vpop.f32.mrb[0].mxu0
        %v7369 = vadd.f32 %v1527, %v7368
        %v7370 = vpop.f32.mrb[0].mxu0
        %v7371 = vadd.f32 %v1527, %v7370
        %7372 = vmatprep.mubr.f32.mxu0 0.0
        %v7373 = vand.u32 %v1544, 4294901760
        %v7374 = vsub.f32 %v1544, %v7373
        %v7375 = vand.u32 %v7374, 4294901760
        %v7376 = vsub.f32 %v7374, %v7375
        %v7377 = vand.u32 %v7376, 4294901760
        %7378 = vmatmul.mubr.f32.gmra.mrb[0].mxu0 %v7377
        %v7379 = vpop.f32.mrb[0].mxu0
        %v7380 = vadd.f32 %v1532, %v7379
        %v7381 = vpop.f32.mrb[0].mxu0
        %v7382 = vadd.f32 %v1532, %v7381
        %7383 = vmatprep.mubr.f32.mxu0 0.0
        %v7384 = vand.u32 %v1547, 4294901760
        %v7385 = vsub.f32 %v1547, %v7384
        %v7386 = vand.u32 %v7385, 4294901760
        %v7387 = vsub.f32 %v7385, %v7386
        %v7388 = vand.u32 %v7387, 4294901760
        %7389 = vmatmul.mubr.f32.gmra.mrb[0].mxu0 %v7388
        %v7390 = vpop.f32.mrb[0].mxu0
        %v7391 = vadd.f32 %v1537, %v7390
        %v7392 = vpop.f32.mrb[0].mxu0
        %v7393 = vadd.f32 %v1537, %v7392
        %7394 = vdwg.mxu0
        %v7395 = vand.u32 %v6635, 4294901760
        %v7396 = vsub.f32 %v6635, %v7395
        %v7397 = vand.u32 %v7396, 4294901760
        %v7398 = vsub.f32 %v7396, %v7397
        %v7399 = vand.u32 %v7398, 4294901760
        %7400 = vmatprep.subr.mxu0 %v7399
        %v7401 = vand.u32 %v6634, 4294901760
        %v7402 = vsub.f32 %v6634, %v7401
        %v7403 = vand.u32 %v7402, 4294901760
        %v7404 = vsub.f32 %v7402, %v7403
        %v7405 = vand.u32 %v7404, 4294901760
        %7406 = vmatpush1.msra.mxu0 %v7405
        %v7407 = vand.u32 %v6639, 4294901760
        %v7408 = vsub.f32 %v6639, %v7407
        %v7409 = vand.u32 %v7408, 4294901760
        %v7410 = vsub.f32 %v7408, %v7409
        %v7411 = vand.u32 %v7410, 4294901760
        %7412 = vmatprep.subr.mxu0 %v7411
        %v7413 = vand.u32 %v6638, 4294901760
        %v7414 = vsub.f32 %v6638, %v7413
        %v7415 = vand.u32 %v7414, 4294901760
        %v7416 = vsub.f32 %v7414, %v7415
        %v7417 = vand.u32 %v7416, 4294901760
        %7418 = vmatpush1.msra.mxu0 %v7417
        %v7419 = vand.u32 %v6643, 4294901760
        %v7420 = vsub.f32 %v6643, %v7419
        %v7421 = vand.u32 %v7420, 4294901760
        %v7422 = vsub.f32 %v7420, %v7421
        %v7423 = vand.u32 %v7422, 4294901760
        %7424 = vmatprep.subr.mxu0 %v7423
        %v7425 = vand.u32 %v6642, 4294901760
        %v7426 = vsub.f32 %v6642, %v7425
        %v7427 = vand.u32 %v7426, 4294901760
        %v7428 = vsub.f32 %v7426, %v7427
        %v7429 = vand.u32 %v7428, 4294901760
        %7430 = vmatpush1.msra.mxu0 %v7429
        %v7431 = vand.u32 %v6647, 4294901760
        %v7432 = vsub.f32 %v6647, %v7431
        %v7433 = vand.u32 %v7432, 4294901760
        %v7434 = vsub.f32 %v7432, %v7433
        %v7435 = vand.u32 %v7434, 4294901760
        %7436 = vmatprep.subr.mxu0 %v7435
        %v7437 = vand.u32 %v6646, 4294901760
        %v7438 = vsub.f32 %v6646, %v7437
        %v7439 = vand.u32 %v7438, 4294901760
        %v7440 = vsub.f32 %v7438, %v7439
        %v7441 = vand.u32 %v7440, 4294901760
        %7442 = vmatpush1.msra.mxu0 %v7441
        %7443 = vmatprep.subr.mxu0 0.0
        %7444 = vmatpush1.msra.mxu0 0.0
        %7445 = vmatprep.subr.mxu0 0.0
        %7446 = vmatpush1.msra.mxu0 0.0
        %7447 = vmatprep.subr.mxu0 0.0
        %7448 = vmatpush1.msra.mxu0 0.0
        %7449 = vmatprep.subr.mxu0 0.0
        %7450 = vmatpush1.msra.mxu0 0.0
        %7451 = vmatprep.subr.mxu0 0.0
        %7452 = vmatpush1.msra.mxu0 0.0
        %7453 = vmatprep.subr.mxu0 0.0
        %7454 = vmatpush1.msra.mxu0 0.0
        %7455 = vmatprep.subr.mxu0 0.0
        %7456 = vmatpush1.msra.mxu0 0.0
        %7457 = vmatprep.subr.mxu0 0.0
        %7458 = vmatpush1.msra.mxu0 0.0
        %7459 = vmatprep.subr.mxu0 0.0
        %7460 = vmatpush1.msra.mxu0 0.0
        %7461 = vmatprep.subr.mxu0 0.0
        %7462 = vmatpush1.msra.mxu0 0.0
        %7463 = vmatprep.subr.mxu0 0.0
        %7464 = vmatpush1.msra.mxu0 0.0
        %7465 = vmatprep.subr.mxu0 0.0
        %7466 = vmatpush1.msra.mxu0 0.0
        %7467 = vmatprep.subr.mxu0 0.0
        %7468 = vmatpush1.msra.mxu0 0.0
        %7469 = vmatprep.subr.mxu0 0.0
        %7470 = vmatpush1.msra.mxu0 0.0
        %7471 = vmatprep.subr.mxu0 0.0
        %7472 = vmatpush1.msra.mxu0 0.0
        %7473 = vmatprep.subr.mxu0 0.0
        %7474 = vmatpush1.msra.mxu0 0.0
        %7475 = vmatprep.subr.mxu0 0.0
        %7476 = vmatpush1.msra.mxu0 0.0
        %7477 = vmatprep.subr.mxu0 0.0
        %7478 = vmatpush1.msra.mxu0 0.0
        %7479 = vmatprep.subr.mxu0 0.0
        %7480 = vmatpush1.msra.mxu0 0.0
        %7481 = vmatprep.subr.mxu0 0.0
        %7482 = vmatpush1.msra.mxu0 0.0
        %7483 = vmatprep.subr.mxu0 0.0
        %7484 = vmatpush1.msra.mxu0 0.0
        %7485 = vmatprep.subr.mxu0 0.0
        %7486 = vmatpush1.msra.mxu0 0.0
        %7487 = vmatprep.subr.mxu0 0.0
        %7488 = vmatpush1.msra.mxu0 0.0
        %7489 = vmatprep.subr.mxu0 0.0
        %7490 = vmatpush1.msra.mxu0 0.0
        %7491 = vmatprep.subr.mxu0 0.0
        %7492 = vmatpush1.msra.mxu0 0.0
        %7493 = vmatprep.subr.mxu0 0.0
        %7494 = vmatpush1.msra.mxu0 0.0
        %7495 = vmatprep.subr.mxu0 0.0
        %7496 = vmatpush1.msra.mxu0 0.0
        %7497 = vmatprep.subr.mxu0 0.0
        %7498 = vmatpush1.msra.mxu0 0.0
        %7499 = vmatprep.mubr.f32.mxu0 0.0
        %v7500 = vand.u32 %v1541, 4294901760
        %7501 = vmatmul.mubr.f32.gmra.mrb[0].mxu0 %v7500
        %v7502 = vpop.f32.mrb[0].mxu0
        %v7503 = vadd.f32 %v7369, %v7502
        %v7504 = vpop.f32.mrb[0].mxu0
        %v7505 = vadd.f32 %v7371, %v7504
        %7506 = vmatprep.mubr.f32.mxu0 0.0
        %v7507 = vand.u32 %v1544, 4294901760
        %7508 = vmatmul.mubr.f32.gmra.mrb[0].mxu0 %v7507
        %v7509 = vpop.f32.mrb[0].mxu0
        %v7510 = vadd.f32 %v7380, %v7509
        %v7511 = vpop.f32.mrb[0].mxu0
        %v7512 = vadd.f32 %v7382, %v7511
        %7513 = vmatprep.mubr.f32.mxu0 0.0
        %v7514 = vand.u32 %v1547, 4294901760
        %7515 = vmatmul.mubr.f32.gmra.mrb[0].mxu0 %v7514
        %v7516 = vpop.f32.mrb[0].mxu0
        %v7517 = vadd.f32 %v7391, %v7516
        %v7518 = vpop.f32.mrb[0].mxu0
        %v7519 = vadd.f32 %v7393, %v7518
        %7520 = vdwg.mxu0
        %v7521 = vand.u32 %v6635, 4294901760
        %v7522 = vsub.f32 %v6635, %v7521
        %7523 = vmatprep.subr.mxu0 %v7522
        %v7524 = vand.u32 %v6634, 4294901760
        %v7525 = vsub.f32 %v6634, %v7524
        %7526 = vmatpush1.msra.mxu0 %v7525
        %v7527 = vand.u32 %v6639, 4294901760
        %v7528 = vsub.f32 %v6639, %v7527
        %7529 = vmatprep.subr.mxu0 %v7528
        %v7530 = vand.u32 %v6638, 4294901760
        %v7531 = vsub.f32 %v6638, %v7530
        %7532 = vmatpush1.msra.mxu0 %v7531
        %v7533 = vand.u32 %v6643, 4294901760
        %v7534 = vsub.f32 %v6643, %v7533
        %7535 = vmatprep.subr.mxu0 %v7534
        %v7536 = vand.u32 %v6642, 4294901760
        %v7537 = vsub.f32 %v6642, %v7536
        %7538 = vmatpush1.msra.mxu0 %v7537
        %v7539 = vand.u32 %v6647, 4294901760
        %v7540 = vsub.f32 %v6647, %v7539
        %7541 = vmatprep.subr.mxu0 %v7540
        %v7542 = vand.u32 %v6646, 4294901760
        %v7543 = vsub.f32 %v6646, %v7542
        %7544 = vmatpush1.msra.mxu0 %v7543
        %7545 = vmatprep.subr.mxu0 0.0
        %7546 = vmatpush1.msra.mxu0 0.0
        %7547 = vmatprep.subr.mxu0 0.0
        %7548 = vmatpush1.msra.mxu0 0.0
        %7549 = vmatprep.subr.mxu0 0.0
        %7550 = vmatpush1.msra.mxu0 0.0
        %7551 = vmatprep.subr.mxu0 0.0
        %7552 = vmatpush1.msra.mxu0 0.0
        %7553 = vmatprep.subr.mxu0 0.0
        %7554 = vmatpush1.msra.mxu0 0.0
        %7555 = vmatprep.subr.mxu0 0.0
        %7556 = vmatpush1.msra.mxu0 0.0
        %7557 = vmatprep.subr.mxu0 0.0
        %7558 = vmatpush1.msra.mxu0 0.0
        %7559 = vmatprep.subr.mxu0 0.0
        %7560 = vmatpush1.msra.mxu0 0.0
        %7561 = vmatprep.subr.mxu0 0.0
        %7562 = vmatpush1.msra.mxu0 0.0
        %7563 = vmatprep.subr.mxu0 0.0
        %7564 = vmatpush1.msra.mxu0 0.0
        %7565 = vmatprep.subr.mxu0 0.0
        %7566 = vmatpush1.msra.mxu0 0.0
        %7567 = vmatprep.subr.mxu0 0.0
        %7568 = vmatpush1.msra.mxu0 0.0
        %7569 = vmatprep.subr.mxu0 0.0
        %7570 = vmatpush1.msra.mxu0 0.0
        %7571 = vmatprep.subr.mxu0 0.0
        %7572 = vmatpush1.msra.mxu0 0.0
        %7573 = vmatprep.subr.mxu0 0.0
        %7574 = vmatpush1.msra.mxu0 0.0
        %7575 = vmatprep.subr.mxu0 0.0
        %7576 = vmatpush1.msra.mxu0 0.0
        %7577 = vmatprep.subr.mxu0 0.0
        %7578 = vmatpush1.msra.mxu0 0.0
        %7579 = vmatprep.subr.mxu0 0.0
        %7580 = vmatpush1.msra.mxu0 0.0
        %7581 = vmatprep.subr.mxu0 0.0
        %7582 = vmatpush1.msra.mxu0 0.0
        %7583 = vmatprep.subr.mxu0 0.0
        %7584 = vmatpush1.msra.mxu0 0.0
        %7585 = vmatprep.subr.mxu0 0.0
        %7586 = vmatpush1.msra.mxu0 0.0
        %7587 = vmatprep.subr.mxu0 0.0
        %7588 = vmatpush1.msra.mxu0 0.0
        %7589 = vmatprep.subr.mxu0 0.0
        %7590 = vmatpush1.msra.mxu0 0.0
        %7591 = vmatprep.subr.mxu0 0.0
        %7592 = vmatpush1.msra.mxu0 0.0
        %7593 = vmatprep.subr.mxu0 0.0
        %7594 = vmatpush1.msra.mxu0 0.0
        %7595 = vmatprep.subr.mxu0 0.0
        %7596 = vmatpush1.msra.mxu0 0.0
        %7597 = vmatprep.subr.mxu0 0.0
        %7598 = vmatpush1.msra.mxu0 0.0
        %7599 = vmatprep.subr.mxu0 0.0
        %7600 = vmatpush1.msra.mxu0 0.0
        %7601 = vmatprep.mubr.f32.mxu0 0.0
        %v7602 = vand.u32 %v1541, 4294901760
        %v7603 = vsub.f32 %v1541, %v7602
        %7604 = vmatmul.mubr.f32.gmra.mrb[0].mxu0 %v7603
        %v7605 = vpop.f32.mrb[0].mxu0
        %v7606 = vadd.f32 %v7503, %v7605
        %v7607 = vpop.f32.mrb[0].mxu0
        %v7608 = vadd.f32 %v7505, %v7607
        %7609 = vmatprep.mubr.f32.mxu0 0.0
        %v7610 = vand.u32 %v1544, 4294901760
        %v7611 = vsub.f32 %v1544, %v7610
        %7612 = vmatmul.mubr.f32.gmra.mrb[0].mxu0 %v7611
        %v7613 = vpop.f32.mrb[0].mxu0
        %v7614 = vadd.f32 %v7510, %v7613
        %v7615 = vpop.f32.mrb[0].mxu0
        %v7616 = vadd.f32 %v7512, %v7615
        %7617 = vmatprep.mubr.f32.mxu0 0.0
        %v7618 = vand.u32 %v1547, 4294901760
        %v7619 = vsub.f32 %v1547, %v7618
        %7620 = vmatmul.mubr.f32.gmra.mrb[0].mxu0 %v7619
        %v7621 = vpop.f32.mrb[0].mxu0
        %v7622 = vadd.f32 %v7517, %v7621
        %v7623 = vpop.f32.mrb[0].mxu0
        %v7624 = vadd.f32 %v7519, %v7623
        %7625 = vdwg.mxu0
        %v7626 = vand.u32 %v6635, 4294901760
        %7627 = vmatprep.subr.mxu0 %v7626
        %v7628 = vand.u32 %v6634, 4294901760
        %7629 = vmatpush1.msra.mxu0 %v7628
        %v7630 = vand.u32 %v6639, 4294901760
        %7631 = vmatprep.subr.mxu0 %v7630
        %v7632 = vand.u32 %v6638, 4294901760
        %7633 = vmatpush1.msra.mxu0 %v7632
        %v7634 = vand.u32 %v6643, 4294901760
        %7635 = vmatprep.subr.mxu0 %v7634
        %v7636 = vand.u32 %v6642, 4294901760
        %7637 = vmatpush1.msra.mxu0 %v7636
        %v7638 = vand.u32 %v6647, 4294901760
        %7639 = vmatprep.subr.mxu0 %v7638
        %v7640 = vand.u32 %v6646, 4294901760
        %7641 = vmatpush1.msra.mxu0 %v7640
        %7642 = vmatprep.subr.mxu0 0.0
        %7643 = vmatpush1.msra.mxu0 0.0
        %7644 = vmatprep.subr.mxu0 0.0
        %7645 = vmatpush1.msra.mxu0 0.0
        %7646 = vmatprep.subr.mxu0 0.0
        %7647 = vmatpush1.msra.mxu0 0.0
        %7648 = vmatprep.subr.mxu0 0.0
        %7649 = vmatpush1.msra.mxu0 0.0
        %7650 = vmatprep.subr.mxu0 0.0
        %7651 = vmatpush1.msra.mxu0 0.0
        %7652 = vmatprep.subr.mxu0 0.0
        %7653 = vmatpush1.msra.mxu0 0.0
        %7654 = vmatprep.subr.mxu0 0.0
        %7655 = vmatpush1.msra.mxu0 0.0
        %7656 = vmatprep.subr.mxu0 0.0
        %7657 = vmatpush1.msra.mxu0 0.0
        %7658 = vmatprep.subr.mxu0 0.0
        %7659 = vmatpush1.msra.mxu0 0.0
        %7660 = vmatprep.subr.mxu0 0.0
        %7661 = vmatpush1.msra.mxu0 0.0
        %7662 = vmatprep.subr.mxu0 0.0
        %7663 = vmatpush1.msra.mxu0 0.0
        %7664 = vmatprep.subr.mxu0 0.0
        %7665 = vmatpush1.msra.mxu0 0.0
        %7666 = vmatprep.subr.mxu0 0.0
        %7667 = vmatpush1.msra.mxu0 0.0
        %7668 = vmatprep.subr.mxu0 0.0
        %7669 = vmatpush1.msra.mxu0 0.0
        %7670 = vmatprep.subr.mxu0 0.0
        %7671 = vmatpush1.msra.mxu0 0.0
        %7672 = vmatprep.subr.mxu0 0.0
        %7673 = vmatpush1.msra.mxu0 0.0
        %7674 = vmatprep.subr.mxu0 0.0
        %7675 = vmatpush1.msra.mxu0 0.0
        %7676 = vmatprep.subr.mxu0 0.0
        %7677 = vmatpush1.msra.mxu0 0.0
        %7678 = vmatprep.subr.mxu0 0.0
        %7679 = vmatpush1.msra.mxu0 0.0
        %7680 = vmatprep.subr.mxu0 0.0
        %7681 = vmatpush1.msra.mxu0 0.0
        %7682 = vmatprep.subr.mxu0 0.0
        %7683 = vmatpush1.msra.mxu0 0.0
        %7684 = vmatprep.subr.mxu0 0.0
        %7685 = vmatpush1.msra.mxu0 0.0
        %7686 = vmatprep.subr.mxu0 0.0
        %7687 = vmatpush1.msra.mxu0 0.0
        %7688 = vmatprep.subr.mxu0 0.0
        %7689 = vmatpush1.msra.mxu0 0.0
        %7690 = vmatprep.subr.mxu0 0.0
        %7691 = vmatpush1.msra.mxu0 0.0
        %7692 = vmatprep.subr.mxu0 0.0
        %7693 = vmatpush1.msra.mxu0 0.0
        %7694 = vmatprep.subr.mxu0 0.0
        %7695 = vmatpush1.msra.mxu0 0.0
        %7696 = vmatprep.subr.mxu0 0.0
        %7697 = vmatpush1.msra.mxu0 0.0
        %7698 = vmatprep.mubr.f32.mxu0 0.0
        %v7699 = vand.u32 %v1541, 4294901760
        %v7700 = vsub.f32 %v1541, %v7699
        %v7701 = vand.u32 %v7700, 4294901760
        %7702 = vmatmul.mubr.f32.gmra.mrb[0].mxu0 %v7701
        %v7703 = vpop.f32.mrb[0].mxu0
        %v7704 = vadd.f32 %v7606, %v7703
        %v7705 = vpop.f32.mrb[0].mxu0
        %v7706 = vadd.f32 %v7608, %v7705
        %7707 = vmatprep.mubr.f32.mxu0 0.0
        %v7708 = vand.u32 %v1544, 4294901760
        %v7709 = vsub.f32 %v1544, %v7708
        %v7710 = vand.u32 %v7709, 4294901760
        %7711 = vmatmul.mubr.f32.gmra.mrb[0].mxu0 %v7710
        %v7712 = vpop.f32.mrb[0].mxu0
        %v7713 = vadd.f32 %v7614, %v7712
        %v7714 = vpop.f32.mrb[0].mxu0
        %v7715 = vadd.f32 %v7616, %v7714
        %7716 = vmatprep.mubr.f32.mxu0 0.0
        %v7717 = vand.u32 %v1547, 4294901760
        %v7718 = vsub.f32 %v1547, %v7717
        %v7719 = vand.u32 %v7718, 4294901760
        %7720 = vmatmul.mubr.f32.gmra.mrb[0].mxu0 %v7719
        %v7721 = vpop.f32.mrb[0].mxu0
        %v7722 = vadd.f32 %v7622, %v7721
        %v7723 = vpop.f32.mrb[0].mxu0
        %v7724 = vadd.f32 %v7624, %v7723
        %7725 = vdwg.mxu0
        %v7726 = vand.u32 %v6635, 4294901760
        %v7727 = vsub.f32 %v6635, %v7726
        %v7728 = vand.u32 %v7727, 4294901760
        %7729 = vmatprep.subr.mxu0 %v7728
        %v7730 = vand.u32 %v6634, 4294901760
        %v7731 = vsub.f32 %v6634, %v7730
        %v7732 = vand.u32 %v7731, 4294901760
        %7733 = vmatpush1.msra.mxu0 %v7732
        %v7734 = vand.u32 %v6639, 4294901760
        %v7735 = vsub.f32 %v6639, %v7734
        %v7736 = vand.u32 %v7735, 4294901760
        %7737 = vmatprep.subr.mxu0 %v7736
        %v7738 = vand.u32 %v6638, 4294901760
        %v7739 = vsub.f32 %v6638, %v7738
        %v7740 = vand.u32 %v7739, 4294901760
        %7741 = vmatpush1.msra.mxu0 %v7740
        %v7742 = vand.u32 %v6643, 4294901760
        %v7743 = vsub.f32 %v6643, %v7742
        %v7744 = vand.u32 %v7743, 4294901760
        %7745 = vmatprep.subr.mxu0 %v7744
        %v7746 = vand.u32 %v6642, 4294901760
        %v7747 = vsub.f32 %v6642, %v7746
        %v7748 = vand.u32 %v7747, 4294901760
        %7749 = vmatpush1.msra.mxu0 %v7748
        %v7750 = vand.u32 %v6647, 4294901760
        %v7751 = vsub.f32 %v6647, %v7750
        %v7752 = vand.u32 %v7751, 4294901760
        %7753 = vmatprep.subr.mxu0 %v7752
        %v7754 = vand.u32 %v6646, 4294901760
        %v7755 = vsub.f32 %v6646, %v7754
        %v7756 = vand.u32 %v7755, 4294901760
        %7757 = vmatpush1.msra.mxu0 %v7756
        %7758 = vmatprep.subr.mxu0 0.0
        %7759 = vmatpush1.msra.mxu0 0.0
        %7760 = vmatprep.subr.mxu0 0.0
        %7761 = vmatpush1.msra.mxu0 0.0
        %7762 = vmatprep.subr.mxu0 0.0
        %7763 = vmatpush1.msra.mxu0 0.0
        %7764 = vmatprep.subr.mxu0 0.0
        %7765 = vmatpush1.msra.mxu0 0.0
        %7766 = vmatprep.subr.mxu0 0.0
        %7767 = vmatpush1.msra.mxu0 0.0
        %7768 = vmatprep.subr.mxu0 0.0
        %7769 = vmatpush1.msra.mxu0 0.0
        %7770 = vmatprep.subr.mxu0 0.0
        %7771 = vmatpush1.msra.mxu0 0.0
        %7772 = vmatprep.subr.mxu0 0.0
        %7773 = vmatpush1.msra.mxu0 0.0
        %7774 = vmatprep.subr.mxu0 0.0
        %7775 = vmatpush1.msra.mxu0 0.0
        %7776 = vmatprep.subr.mxu0 0.0
        %7777 = vmatpush1.msra.mxu0 0.0
        %7778 = vmatprep.subr.mxu0 0.0
        %7779 = vmatpush1.msra.mxu0 0.0
        %7780 = vmatprep.subr.mxu0 0.0
        %7781 = vmatpush1.msra.mxu0 0.0
        %7782 = vmatprep.subr.mxu0 0.0
        %7783 = vmatpush1.msra.mxu0 0.0
        %7784 = vmatprep.subr.mxu0 0.0
        %7785 = vmatpush1.msra.mxu0 0.0
        %7786 = vmatprep.subr.mxu0 0.0
        %7787 = vmatpush1.msra.mxu0 0.0
        %7788 = vmatprep.subr.mxu0 0.0
        %7789 = vmatpush1.msra.mxu0 0.0
        %7790 = vmatprep.subr.mxu0 0.0
        %7791 = vmatpush1.msra.mxu0 0.0
        %7792 = vmatprep.subr.mxu0 0.0
        %7793 = vmatpush1.msra.mxu0 0.0
        %7794 = vmatprep.subr.mxu0 0.0
        %7795 = vmatpush1.msra.mxu0 0.0
        %7796 = vmatprep.subr.mxu0 0.0
        %7797 = vmatpush1.msra.mxu0 0.0
        %7798 = vmatprep.subr.mxu0 0.0
        %7799 = vmatpush1.msra.mxu0 0.0
        %7800 = vmatprep.subr.mxu0 0.0
        %7801 = vmatpush1.msra.mxu0 0.0
        %7802 = vmatprep.subr.mxu0 0.0
        %7803 = vmatpush1.msra.mxu0 0.0
        %7804 = vmatprep.subr.mxu0 0.0
        %7805 = vmatpush1.msra.mxu0 0.0
        %7806 = vmatprep.subr.mxu0 0.0
        %7807 = vmatpush1.msra.mxu0 0.0
        %7808 = vmatprep.subr.mxu0 0.0
        %7809 = vmatpush1.msra.mxu0 0.0
        %7810 = vmatprep.subr.mxu0 0.0
        %7811 = vmatpush1.msra.mxu0 0.0
        %7812 = vmatprep.subr.mxu0 0.0
        %7813 = vmatpush1.msra.mxu0 0.0
        %7814 = vmatprep.mubr.f32.mxu0 0.0
        %v7815 = vand.u32 %v1541, 4294901760
        %7816 = vmatmul.mubr.f32.gmra.mrb[0].mxu0 %v7815
        %v7817 = vpop.f32.mrb[0].mxu0
        %v7818 = vadd.f32 %v7704, %v7817
        %v7819 = vpop.f32.mrb[0].mxu0
        %v7820 = vadd.f32 %v7706, %v7819
        %7821 = vmatprep.mubr.f32.mxu0 0.0
        %v7822 = vand.u32 %v1544, 4294901760
        %7823 = vmatmul.mubr.f32.gmra.mrb[0].mxu0 %v7822
        %v7824 = vpop.f32.mrb[0].mxu0
        %v7825 = vadd.f32 %v7713, %v7824
        %v7826 = vpop.f32.mrb[0].mxu0
        %v7827 = vadd.f32 %v7715, %v7826
        %7828 = vmatprep.mubr.f32.mxu0 0.0
        %v7829 = vand.u32 %v1547, 4294901760
        %7830 = vmatmul.mubr.f32.gmra.mrb[0].mxu0 %v7829
        %v7831 = vpop.f32.mrb[0].mxu0
        %v7832 = vadd.f32 %v7722, %v7831
        %v7833 = vpop.f32.mrb[0].mxu0
        %v7834 = vadd.f32 %v7724, %v7833
        %7835 = vdwg.mxu0
        %v7836 = vand.u32 %v6635, 4294901760
        %7837 = vmatprep.subr.mxu0 %v7836
        %v7838 = vand.u32 %v6634, 4294901760
        %7839 = vmatpush1.msra.mxu0 %v7838
        %v7840 = vand.u32 %v6639, 4294901760
        %7841 = vmatprep.subr.mxu0 %v7840
        %v7842 = vand.u32 %v6638, 4294901760
        %7843 = vmatpush1.msra.mxu0 %v7842
        %v7844 = vand.u32 %v6643, 4294901760
        %7845 = vmatprep.subr.mxu0 %v7844
        %v7846 = vand.u32 %v6642, 4294901760
        %7847 = vmatpush1.msra.mxu0 %v7846
        %v7848 = vand.u32 %v6647, 4294901760
        %7849 = vmatprep.subr.mxu0 %v7848
        %v7850 = vand.u32 %v6646, 4294901760
        %7851 = vmatpush1.msra.mxu0 %v7850
        %7852 = vmatprep.subr.mxu0 0.0
        %7853 = vmatpush1.msra.mxu0 0.0
        %7854 = vmatprep.subr.mxu0 0.0
        %7855 = vmatpush1.msra.mxu0 0.0
        %7856 = vmatprep.subr.mxu0 0.0
        %7857 = vmatpush1.msra.mxu0 0.0
        %7858 = vmatprep.subr.mxu0 0.0
        %7859 = vmatpush1.msra.mxu0 0.0
        %7860 = vmatprep.subr.mxu0 0.0
        %7861 = vmatpush1.msra.mxu0 0.0
        %7862 = vmatprep.subr.mxu0 0.0
        %7863 = vmatpush1.msra.mxu0 0.0
        %7864 = vmatprep.subr.mxu0 0.0
        %7865 = vmatpush1.msra.mxu0 0.0
        %7866 = vmatprep.subr.mxu0 0.0
        %7867 = vmatpush1.msra.mxu0 0.0
        %7868 = vmatprep.subr.mxu0 0.0
        %7869 = vmatpush1.msra.mxu0 0.0
        %7870 = vmatprep.subr.mxu0 0.0
        %7871 = vmatpush1.msra.mxu0 0.0
        %7872 = vmatprep.subr.mxu0 0.0
        %7873 = vmatpush1.msra.mxu0 0.0
        %7874 = vmatprep.subr.mxu0 0.0
        %7875 = vmatpush1.msra.mxu0 0.0
        %7876 = vmatprep.subr.mxu0 0.0
        %7877 = vmatpush1.msra.mxu0 0.0
        %7878 = vmatprep.subr.mxu0 0.0
        %7879 = vmatpush1.msra.mxu0 0.0
        %7880 = vmatprep.subr.mxu0 0.0
        %7881 = vmatpush1.msra.mxu0 0.0
        %7882 = vmatprep.subr.mxu0 0.0
        %7883 = vmatpush1.msra.mxu0 0.0
        %7884 = vmatprep.subr.mxu0 0.0
        %7885 = vmatpush1.msra.mxu0 0.0
        %7886 = vmatprep.subr.mxu0 0.0
        %7887 = vmatpush1.msra.mxu0 0.0
        %7888 = vmatprep.subr.mxu0 0.0
        %7889 = vmatpush1.msra.mxu0 0.0
        %7890 = vmatprep.subr.mxu0 0.0
        %7891 = vmatpush1.msra.mxu0 0.0
        %7892 = vmatprep.subr.mxu0 0.0
        %7893 = vmatpush1.msra.mxu0 0.0
        %7894 = vmatprep.subr.mxu0 0.0
        %7895 = vmatpush1.msra.mxu0 0.0
        %7896 = vmatprep.subr.mxu0 0.0
        %7897 = vmatpush1.msra.mxu0 0.0
        %7898 = vmatprep.subr.mxu0 0.0
        %7899 = vmatpush1.msra.mxu0 0.0
        %7900 = vmatprep.subr.mxu0 0.0
        %7901 = vmatpush1.msra.mxu0 0.0
        %7902 = vmatprep.subr.mxu0 0.0
        %7903 = vmatpush1.msra.mxu0 0.0
        %7904 = vmatprep.subr.mxu0 0.0
        %7905 = vmatpush1.msra.mxu0 0.0
        %7906 = vmatprep.subr.mxu0 0.0
        %7907 = vmatpush1.msra.mxu0 0.0
        %7908 = vmatprep.mubr.f32.mxu0 0.0
        %v7909 = vand.u32 %v1541, 4294901760
        %7910 = vmatmul.mubr.f32.gmra.mrb[0].mxu0 %v7909
        %v7911 = vpop.f32.mrb[0].mxu0
        %v7912 = vadd.f32 %v7818, %v7911
        %v7913 = vpop.f32.mrb[0].mxu0
        %v7914 = vadd.f32 %v7820, %v7913
        %7915 = vmatprep.mubr.f32.mxu0 0.0
        %v7916 = vand.u32 %v1544, 4294901760
        %7917 = vmatmul.mubr.f32.gmra.mrb[0].mxu0 %v7916
        %v7918 = vpop.f32.mrb[0].mxu0
        %v7919 = vadd.f32 %v7825, %v7918
        %v7920 = vpop.f32.mrb[0].mxu0
        %v7921 = vadd.f32 %v7827, %v7920
        %7922 = vmatprep.mubr.f32.mxu0 0.0
        %v7923 = vand.u32 %v1547, 4294901760
        %7924 = vmatmul.mubr.f32.gmra.mrb[0].mxu0 %v7923
        %v7925 = vpop.f32.mrb[0].mxu0
        %v7926 = vadd.f32 %v7832, %v7925
        %v7927 = vpop.f32.mrb[0].mxu0
        %v7928 = vadd.f32 %v7834, %v7927
        %7929 = vdwg.mxu0
        %s7930 = scalar_lea.vmem %s214, 64 [#allocation2]
        %7931 = vst [vmem:[%s7930] sm:$0xff] %v7271
        %7932 = vst [vmem:[%s7930 + $0x8] sm:$0xff] %v7273
        %7933 = vst [vmem:[%s7930 + $0x10] sm:$0xff] %v7912
        %7934 = vst [vmem:[%s7930 + $0x18] sm:$0xff] %v7914
        %7935 = vst [vmem:[%s7930 + $0x60] sm:$0xff] %v7278
        %7936 = vst [vmem:[%s7930 + $0x68] sm:$0xff] %v7280
        %7937 = vst [vmem:[%s7930 + $0x70] sm:$0xff] %v7919
        %7938 = vst [vmem:[%s7930 + $0x78] sm:$0xff] %v7921
        %7939 = vst [vmem:[%s7930 + $0xc0] sm:$0xf] %v7285
        %7940 = vst [vmem:[%s7930 + $0xc8] sm:$0xf] %v7287
        %7941 = vst [vmem:[%s7930 + $0xd0] sm:$0xf] %v7926
        %7942 = vst [vmem:[%s7930 + $0xd8] sm:$0xf] %v7928
        %s7943 = sand.u32 %s134, 1
        %s7944 = sand.u32 %s134, 1
        %s7945 = smul.addr %s7944, 288
        %s7946 = scalar_lea.vmem [#allocation2], %s7945
        // Predicated region
        $region41: #{model_forward.3} parent=39 // pred_check
          %p7947 = pneg %p144
        $region42: #{model_forward.3} parent=39 // pred_check_branch
          %7949 = sbr.rel (%p7947) target = $region44
        $region43: #{model_forward.3} parent=39 // pred_region
          %s7950 = smul.u32 12, %s16
          %s7951 = smul.addr %s7950, 8
          %s7952 = scalar_lea.vmem %s5, %s7951
          // Predicated region
          $region45: #{model_forward.3} parent=43 // pred_check
            _
          $region46: #{model_forward.3} parent=43 // pred_check_branch
            %7954 = sbr.rel (0) target = $region48
          $region47: #{model_forward.3} parent=43 // pred_region
            // Predicated region
            $region49: #{model_forward.3} parent=47 // pred_check
              _
            $region50: #{model_forward.3} parent=47 // pred_check_branch
              %7956 = sbr.rel (0) target = $region52
            $region51: #{model_forward.3} parent=47 // pred_region
              loop: start=0, step=1, limit=1
              $region53: #{model_forward.3} parent=51 // loop_pre_header
                _
              $region54: #{model_forward.3} parent=51 // loop_header
                %s7958 = sphi 0, %s7962
                %p7959 = scmp.ge.s32.totalorder %s7958, 1
                %s7963 = sphi %s7946, %s7946
                %s7964 = sphi %s7952, %s7952
              $region55: #{model_forward.3} parent=51 // loop_header_branch
                %7961 = sbr.rel (%p7959) target = $region59
              $region56: #{model_forward.3} parent=51 // loop_body
                %v7965 = vld [vmem:[%s7963] sm:$0xff]
                %7966 = vst [vmem:[%s7964] sm:$0xff] %v7965
                %v7967 = vld [vmem:[%s7963 + $0x8] sm:$0xff]
                %7968 = vst [vmem:[%s7964 + $0x8] sm:$0xff] %v7967
                %v7969 = vld [vmem:[%s7963 + $0x10] sm:$0xff]
                %7970 = vst [vmem:[%s7964 + $0x10] sm:$0xff] %v7969
                %v7971 = vld [vmem:[%s7963 + $0x18] sm:$0xff]
                %7972 = vst [vmem:[%s7964 + $0x18] sm:$0xff] %v7971
                %v7973 = vld [vmem:[%s7963 + $0x20] sm:$0xff]
                %7974 = vst [vmem:[%s7964 + $0x20] sm:$0xff] %v7973
                %v7975 = vld [vmem:[%s7963 + $0x28] sm:$0xff]
                %7976 = vst [vmem:[%s7964 + $0x28] sm:$0xff] %v7975
                %v7977 = vld [vmem:[%s7963 + $0x30] sm:$0xff]
                %7978 = vst [vmem:[%s7964 + $0x30] sm:$0xff] %v7977
                %v7979 = vld [vmem:[%s7963 + $0x38] sm:$0xff]
                %7980 = vst [vmem:[%s7964 + $0x38] sm:$0xff] %v7979
                %v7981 = vld [vmem:[%s7963 + $0x40] sm:$0xff]
                %7982 = vst [vmem:[%s7964 + $0x40] sm:$0xff] %v7981
                %v7983 = vld [vmem:[%s7963 + $0x48] sm:$0xff]
                %7984 = vst [vmem:[%s7964 + $0x48] sm:$0xff] %v7983
                %v7985 = vld [vmem:[%s7963 + $0x50] sm:$0xff]
                %7986 = vst [vmem:[%s7964 + $0x50] sm:$0xff] %v7985
                %v7987 = vld [vmem:[%s7963 + $0x58] sm:$0xff]
                %7988 = vst [vmem:[%s7964 + $0x58] sm:$0xff] %v7987
                %v7989 = vld [vmem:[%s7963 + $0x60] sm:$0xff]
                %7990 = vst [vmem:[%s7964 + $0x2a0] sm:$0xff] %v7989
                %v7991 = vld [vmem:[%s7963 + $0x68] sm:$0xff]
                %7992 = vst [vmem:[%s7964 + $0x2a8] sm:$0xff] %v7991
                %v7993 = vld [vmem:[%s7963 + $0x70] sm:$0xff]
                %7994 = vst [vmem:[%s7964 + $0x2b0] sm:$0xff] %v7993
                %v7995 = vld [vmem:[%s7963 + $0x78] sm:$0xff]
                %7996 = vst [vmem:[%s7964 + $0x2b8] sm:$0xff] %v7995
                %v7997 = vld [vmem:[%s7963 + $0x80] sm:$0xff]
                %7998 = vst [vmem:[%s7964 + $0x2c0] sm:$0xff] %v7997
                %v7999 = vld [vmem:[%s7963 + $0x88] sm:$0xff]
                %8000 = vst [vmem:[%s7964 + $0x2c8] sm:$0xff] %v7999
                %v8001 = vld [vmem:[%s7963 + $0x90] sm:$0xff]
                %8002 = vst [vmem:[%s7964 + $0x2d0] sm:$0xff] %v8001
                %v8003 = vld [vmem:[%s7963 + $0x98] sm:$0xff]
                %8004 = vst [vmem:[%s7964 + $0x2d8] sm:$0xff] %v8003
                %v8005 = vld [vmem:[%s7963 + $0xa0] sm:$0xff]
                %8006 = vst [vmem:[%s7964 + $0x2e0] sm:$0xff] %v8005
                %v8007 = vld [vmem:[%s7963 + $0xa8] sm:$0xff]
                %8008 = vst [vmem:[%s7964 + $0x2e8] sm:$0xff] %v8007
                %v8009 = vld [vmem:[%s7963 + $0xb0] sm:$0xff]
                %8010 = vst [vmem:[%s7964 + $0x2f0] sm:$0xff] %v8009
                %v8011 = vld [vmem:[%s7963 + $0xb8] sm:$0xff]
                %8012 = vst [vmem:[%s7964 + $0x2f8] sm:$0xff] %v8011
                %v8013 = vld [vmem:[%s7963 + $0xc0] sm:$0xff]
                %8014 = vst [vmem:[%s7964 + $0x540] sm:$0xff] %v8013
                %v8015 = vld [vmem:[%s7963 + $0xc8] sm:$0xff]
                %8016 = vst [vmem:[%s7964 + $0x548] sm:$0xff] %v8015
                %v8017 = vld [vmem:[%s7963 + $0xd0] sm:$0xff]
                %8018 = vst [vmem:[%s7964 + $0x550] sm:$0xff] %v8017
                %v8019 = vld [vmem:[%s7963 + $0xd8] sm:$0xff]
                %8020 = vst [vmem:[%s7964 + $0x558] sm:$0xff] %v8019
                %v8021 = vld [vmem:[%s7963 + $0xe0] sm:$0xff]
                %8022 = vst [vmem:[%s7964 + $0x560] sm:$0xff] %v8021
                %v8023 = vld [vmem:[%s7963 + $0xe8] sm:$0xff]
                %8024 = vst [vmem:[%s7964 + $0x568] sm:$0xff] %v8023
                %v8025 = vld [vmem:[%s7963 + $0xf0] sm:$0xff]
                %8026 = vst [vmem:[%s7964 + $0x570] sm:$0xff] %v8025
                %v8027 = vld [vmem:[%s7963 + $0xf8] sm:$0xff]
                %8028 = vst [vmem:[%s7964 + $0x578] sm:$0xff] %v8027
                %v8029 = vld [vmem:[%s7963 + $0x100] sm:$0xff]
                %8030 = vst [vmem:[%s7964 + $0x580] sm:$0xff] %v8029
                %v8031 = vld [vmem:[%s7963 + $0x108] sm:$0xff]
                %8032 = vst [vmem:[%s7964 + $0x588] sm:$0xff] %v8031
                %v8033 = vld [vmem:[%s7963 + $0x110] sm:$0xff]
                %8034 = vst [vmem:[%s7964 + $0x590] sm:$0xff] %v8033
                %v8035 = vld [vmem:[%s7963 + $0x118] sm:$0xff]
                %8036 = vst [vmem:[%s7964 + $0x598] sm:$0xff] %v8035
              $region57: #{model_forward.3} parent=51 // loop_footer
                %s7962 = sadd.s32 1, %s7958
              $region58: #{model_forward.3} parent=51 // loop_footer_branch
                %7957 = sbr.rel target = $region54
              $region59: #{model_forward.3} parent=51 // loop_exit
                _
            $region52: #{model_forward.3} parent=47 // pred_fallthru
              _
            // Predicated region
            $region60: #{model_forward.3} parent=47 // pred_check
              _
            $region61: #{model_forward.3} parent=47 // pred_check_branch
              %8038 = sbr.rel target = $region63
            $region62: #{model_forward.3} parent=47 // pred_region
              _
            $region63: #{model_forward.3} parent=47 // pred_fallthru
              _
          $region48: #{model_forward.3} parent=43 // pred_fallthru
            _
          %8039 = vnop
        $region44: #{model_forward.3} parent=39 // pred_fallthru
          _
      $region40: #{model_forward.3} parent=5 // pred_fallthru
        _
      %p8040 = scmp.le.s32.totalorder 2, %s11
      // Predicated region
      $region64: #{model_forward.3} parent=5 // pred_check
        %p8041 = pneg %p8040
      $region65: #{model_forward.3} parent=5 // pred_check_branch
        %8043 = sbr.rel (%p8041) target = $region67
      $region66: #{model_forward.3} parent=5 // pred_region
        %s8044 = ssub.s32 %s11, 2
        // Predicated region
        $region68: #{model_forward.3} parent=66 // pred_check
          %p8045 = pneg %p150
        $region69: #{model_forward.3} parent=66 // pred_check_branch
          %8047 = sbr.rel (%p8045) target = $region71
        $region70: #{model_forward.3} parent=66 // pred_region
          %s8048 = sand.u32 %s135, 1
          %s8049 = sand.u32 %s135, 1
          %s8050 = smul.addr %s8049, 288
          %s8051 = scalar_lea.vmem [#allocation2], %s8050
        $region71: #{model_forward.3} parent=66 // pred_fallthru
          _
      $region67: #{model_forward.3} parent=5 // pred_fallthru
        _
    $region6: #{model_forward.3} parent=1 // loop_footer
      %s15 = sadd.s32 1, %s11
    $region7: #{model_forward.3} parent=1 // loop_footer_branch
      %10 = sbr.rel target = $region3
    $region8: #{model_forward.3} parent=1 // loop_exit
      _

</llo_original>
